<compile_context>
chip_gen: v6e
topology: v6e:2x2x1
jax: 0.10.0
libtpu: 0.0.40
codegen_flags: <defaults>
</compile_context>

<pallas_src>
import functools

import jax
import jax.numpy as jnp
from jax.experimental import pallas as pl
from jax.experimental.pallas import tpu as pltpu

HIDDEN = 64          # hidden_dim
HEADS = 4            # num_heads
F_OUT = HIDDEN       # per-head out_channels (concat=False -> mean over heads)
NUM_LAYERS = 4
CONTRASTIVE = 8      # contrastive_dim
NEG_SLOPE = 0.2      # GATConv LeakyReLU slope
MASK_NEG = -1e30     # additive mask value (representable in bf16)

_VMEM = pl.BlockSpec(memory_space=pltpu.MemorySpace.VMEM)
_ANY = pl.BlockSpec(memory_space=pl.ANY)


def _elu(x):
    # ELU(alpha=1); clamp exp arg to avoid inf in the unselected branch.
    return jnp.where(x > 0, x, jnp.exp(jnp.minimum(x, 0.0)) - 1.0)


def _device_kind():
    try:
        return jax.devices()[0].device_kind.lower()
    except Exception:
        return ""


def _attention_compute_dtype():
    # bf16 VPU/EUP exists on v6e/v7x; v5e/v4/older would just pay for converts.
    kind = _device_kind()
    if any(t in kind for t in ("v2", "v3", "v4", "v5")):
        return jnp.float32
    return jnp.bfloat16


def _vmem_limit_bytes():
    kind = _device_kind()
    if "v7" in kind:
        return 48 * 1024 * 1024        # 64 MiB physical on v7x -> leave headroom
    return 100 * 1024 * 1024           # 128 MiB physical on v5e/v6e


# ------------------------------------------------------------ fused kernel ---
def _net_kernel(compute_dtype,
                x_ref, mask_hbm,
                enc_w1_ref, enc_b1_ref, enc_w2_ref, enc_b2_ref,
                gat_w_ref, gat_att_ref, gat_bias_ref,
                out_w1_ref, out_b1_ref, out_w2_ref, out_b2_ref,
                out_w3_ref, out_b3_ref,
                o_ref, mask_vmem, dma_sem):
    f32 = jnp.float32
    bf16 = jnp.bfloat16
    cdt = compute_dtype

    # Kick off the only large HBM transfer (the (N,N) mask) immediately and hide
    # it behind the encoder matmuls.
    mask_cp = pltpu.make_async_copy(mask_hbm, mask_vmem, dma_sem)
    mask_cp.start()

    # ---- lc_encode (doesn't need the mask) -----------------------------------
    x = x_ref[...]                                                   # (N, 8)
    h = jnp.dot(x, enc_w1_ref[...], preferred_element_type=f32) + enc_b1_ref[...]
    h = _elu(h)
    h = jnp.dot(h, enc_w2_ref[...], preferred_element_type=f32) + enc_b2_ref[...]
    h = _elu(h)                                                      # (N, HIDDEN)

    mask_cp.wait()
    # Hoisted once: additive mask in the attention compute dtype (no-op if bf16).
    mask_c = mask_vmem[...].astype(cdt)                              # (N, N)
    n = mask_c.shape[0]
    inv_heads = f32(1.0 / HEADS)

    # ---- 4x GATConv (heads=4, concat=False) + ELU ----------------------------
    for l in range(NUM_LAYERS):
        w = gat_w_ref[l]                       # (HIDDEN, HEADS*F_OUT)  bf16
        att = gat_att_ref[l]                   # (HEADS*F_OUT, 2*HEADS) f32
        bias = gat_bias_ref[l]                 # (1, F_OUT)             f32

        h_b = h.astype(bf16)
        hp = jnp.dot(h_b, w, preferred_element_type=f32)             # (N, HEADS*F_OUT)
        # fused src/dst attention logits: columns [0:H)=src, [H:2H)=dst
        a = jnp.dot(hp, att, preferred_element_type=f32)             # (N, 2*HEADS)
        a_src_t = jnp.transpose(a[:, :HEADS]).astype(cdt)            # (HEADS, N) — one transpose
        a_dst = a[:, HEADS:2 * HEADS].astype(cdt)                    # (N, HEADS)
        hp_b = hp.astype(bf16)                                       # MXU operand for aggregation

        agg = jnp.zeros((n, F_OUT), f32)
        for hd in range(HEADS):
            # e[i, j] = LeakyReLU(a_src[j] + a_dst[i] + mask[i, j]) for message j -> i
            # (mask folded before LeakyReLU: masked entries stay ~-2e29 -> exp -> 0)
            e = a_dst[:, hd:hd + 1] + a_src_t[hd:hd + 1, :] + mask_c  # (N, N)
            e = jnp.maximum(e, e * NEG_SLOPE)                         # LeakyReLU, 2 VPU ops
            e = e - jnp.max(e, axis=1, keepdims=True)
            p = jnp.exp(e)                                            # masked -> exactly 0
            s = jnp.sum(p, axis=1, keepdims=True, dtype=f32)          # (N, 1) f32
            inv = pl.reciprocal(s, approx=True)                       # EUP slot
            # un-normalized aggregation, normalization applied on the (N, F_OUT) result
            pm = jnp.dot(p.astype(bf16), hp_b[:, hd * F_OUT:(hd + 1) * F_OUT],
                         preferred_element_type=f32)                  # (N, F_OUT)
            agg = agg + inv * pm

        h = _elu(agg * inv_heads + bias)       # mean over heads + bias, then ELU

    # ---- output MLP -----------------------------------------------------------
    h = _elu(jnp.dot(h, out_w1_ref[...], preferred_element_type=f32) + out_b1_ref[...])
    h = _elu(jnp.dot(h, out_w2_ref[...], preferred_element_type=f32) + out_b2_ref[...])
    o_ref[...] = jnp.dot(h, out_w3_ref[...], preferred_element_type=f32) + out_b3_ref[...]


# ------------------------------------------------------------- parameters ----
def init_params(key):
    def lin(k, fan_in, fan_out):
        kw, kb = jax.random.split(k)
        scale = 1.0 / jnp.sqrt(jnp.float32(fan_in))
        w = jax.random.uniform(kw, (fan_in, fan_out), jnp.float32, -scale, scale)
        b = jax.random.uniform(kb, (1, fan_out), jnp.float32, -scale, scale)
        return w, b

    keys = iter(jax.random.split(key, 16))
    p = {}
    # lc_encode
    p["enc_w1"], p["enc_b1"] = lin(next(keys), 8, HIDDEN)
    p["enc_w2"], p["enc_b2"] = lin(next(keys), HIDDEN, HIDDEN)
    # GAT layers (stacked so the fused kernel can loop over them)
    gat_w, gat_att, gat_bias = [], [], []
    for _ in range(NUM_LAYERS):
        kw, ka, kd = jax.random.split(next(keys), 3)
        w = jax.random.normal(kw, (HIDDEN, HEADS * F_OUT), jnp.float32) * 0.05
        att_src = jax.random.normal(ka, (HEADS, F_OUT), jnp.float32) * 0.1
        att_dst = jax.random.normal(kd, (HEADS, F_OUT), jnp.float32) * 0.1
        # block-diagonal projection: hp @ att_mat gives per-head <hp_hd, att_hd>
        # columns [0:HEADS) -> src logits, [HEADS:2*HEADS) -> dst logits
        att_mat = jnp.zeros((HEADS * F_OUT, 2 * HEADS), jnp.float32)
        for hd in range(HEADS):
            att_mat = att_mat.at[hd * F_OUT:(hd + 1) * F_OUT, hd].set(att_src[hd])
            att_mat = att_mat.at[hd * F_OUT:(hd + 1) * F_OUT, HEADS + hd].set(att_dst[hd])
        gat_w.append(w)
        gat_att.append(att_mat)
        gat_bias.append(jnp.zeros((1, F_OUT), jnp.float32))
    p["gat_w"] = jnp.stack(gat_w)        # (L, HIDDEN, HEADS*F_OUT)
    p["gat_att"] = jnp.stack(gat_att)    # (L, HEADS*F_OUT, 2*HEADS)
    p["gat_bias"] = jnp.stack(gat_bias)  # (L, 1, F_OUT)
    # output MLP
    p["out_w1"], p["out_b1"] = lin(next(keys), HIDDEN, 64)
    p["out_w2"], p["out_b2"] = lin(next(keys), 64, 32)
    p["out_w3"], p["out_b3"] = lin(next(keys), 32, CONTRASTIVE)
    return p


# ------------------------------------------------------------- full model ----
def net_forward(params, x, edge_index, batch=None):
    n = x.shape[0]
    # pad node count to a multiple of 128 so all (N,*) operands are lane-dense
    n_pad = max(128, ((n + 127) // 128) * 128)

    x_pad = jnp.zeros((n_pad, x.shape[1]), jnp.float32).at[:n].set(x)

    # dense adjacency: adj[target, source] = 1, plus self-loops (PyG default).
    # Padded nodes only get a self-loop, so they never contribute to real nodes.
    adj = jnp.zeros((n_pad, n_pad), jnp.float32)
    adj = adj.at[edge_index[1], edge_index[0]].set(1.0)
    adj = adj.at[jnp.arange(n_pad), jnp.arange(n_pad)].set(1.0)
    # additive attention mask in bf16 (half the HBM bytes of f32)
    mask_bias = jnp.where(adj > 0, 0.0, MASK_NEG).astype(jnp.bfloat16)

    gat_w_b = params["gat_w"].astype(jnp.bfloat16)   # bf16 MXU operand

    operands = (
        x_pad, mask_bias,
        params["enc_w1"], params["enc_b1"], params["enc_w2"], params["enc_b2"],
        gat_w_b, params["gat_att"], params["gat_bias"],
        params["out_w1"], params["out_b1"], params["out_w2"], params["out_b2"],
        params["out_w3"], params["out_b3"],
    )

    # advisory cost estimate for XLA scheduling
    m = n_pad
    flops = 2 * m * 8 * HIDDEN + 2 * m * HIDDEN * HIDDEN
    flops += NUM_LAYERS * (
        2 * m * HIDDEN * (HEADS * F_OUT)
        + 2 * m * (HEADS * F_OUT) * (2 * HEADS)
        + HEADS * (5 * m * m + 2 * m * m * F_OUT + 3 * m * F_OUT))
    flops += 2 * m * HIDDEN * 64 + 2 * m * 64 * 32 + 2 * m * 32 * CONTRASTIVE
    transcendentals = NUM_LAYERS * HEADS * (m * m + m) + 4 * m * HIDDEN
    bytes_accessed = (sum(int(a.size) * a.dtype.itemsize for a in operands)
                      + m * CONTRASTIVE * 4)
    cost = pl.CostEstimate(flops=int(flops),
                           transcendentals=int(transcendentals),
                           bytes_accessed=int(bytes_accessed))

    kernel = functools.partial(_net_kernel, _attention_compute_dtype())

    out = pl.pallas_call(
        kernel,
        out_shape=jax.ShapeDtypeStruct((n_pad, CONTRASTIVE), jnp.float32),
        in_specs=[_VMEM, _ANY] + [_VMEM] * 13,
        out_specs=_VMEM,
        scratch_shapes=[
            pltpu.VMEM((n_pad, n_pad), jnp.bfloat16),   # mask landing buffer
            pltpu.SemaphoreType.DMA(()),
        ],
        compiler_params=pltpu.CompilerParams(vmem_limit_bytes=_vmem_limit_bytes()),
        cost_estimate=cost,
    )(*operands)
    return out[:n], batch


if __name__ == "__main__":
    key = jax.random.PRNGKey(0)
    k_param, k_x, k_e = jax.random.split(key, 3)

    N, E = 64, 256
    x = jax.random.normal(k_x, (N, 8), jnp.float32)
    edge_index = jax.random.randint(k_e, (2, E), 0, N, jnp.int32)

    params = init_params(k_param)
    out, batch = net_forward(params, x, edge_index, batch=None)
    out = jax.block_until_ready(out)

    assert out.shape == (N, CONTRASTIVE)
    assert bool(jnp.all(jnp.isfinite(out)))
    print("KERNEL_OK")
</pallas_src>

<mosaic_0001>
module attributes {stable_mosaic.version = 11 : i64} {
  func.func @_net_kernel(%arg0: memref<128x8xf32, #tpu.memory_space<vmem>>, %arg1: memref<128x128xbf16, #tpu.memory_space<any>>, %arg2: memref<8x64xf32, #tpu.memory_space<vmem>>, %arg3: memref<1x64xf32, #tpu.memory_space<vmem>>, %arg4: memref<64x64xf32, #tpu.memory_space<vmem>>, %arg5: memref<1x64xf32, #tpu.memory_space<vmem>>, %arg6: memref<4x64x256xbf16, #tpu.memory_space<vmem>>, %arg7: memref<4x256x8xf32, #tpu.memory_space<vmem>>, %arg8: memref<4x1x64xf32, #tpu.memory_space<vmem>>, %arg9: memref<64x64xf32, #tpu.memory_space<vmem>>, %arg10: memref<1x64xf32, #tpu.memory_space<vmem>>, %arg11: memref<64x32xf32, #tpu.memory_space<vmem>>, %arg12: memref<1x32xf32, #tpu.memory_space<vmem>>, %arg13: memref<32x8xf32, #tpu.memory_space<vmem>>, %arg14: memref<1x8xf32, #tpu.memory_space<vmem>>, %arg15: memref<128x8xf32, #tpu.memory_space<vmem>>, %arg16: memref<128x128xbf16, #tpu.memory_space<vmem>>, %arg17: memref<!tpu.dma_semaphore, #tpu.memory_space<semaphore_mem>>) attributes {dimension_semantics = [], scalar_prefetch = 0 : i64, scratch_operands = 2 : i64, tpu.core_type = #tpu.core_type<tc>} {
    tpu.enqueue_dma source(%arg1 : memref<128x128xbf16, #tpu.memory_space<any>>) target(%arg16 : memref<128x128xbf16, #tpu.memory_space<vmem>>) target_semaphore(%arg17 : memref<!tpu.dma_semaphore, #tpu.memory_space<semaphore_mem>>)
    %c0 = arith.constant 0 : index
    %c0_0 = arith.constant 0 : index
    %0 = vector.load %arg0[%c0, %c0_0] : memref<128x8xf32, #tpu.memory_space<vmem>>, vector<128x8xf32>
    %c0_1 = arith.constant 0 : index
    %c0_2 = arith.constant 0 : index
    %1 = vector.load %arg2[%c0_1, %c0_2] : memref<8x64xf32, #tpu.memory_space<vmem>>, vector<8x64xf32>
    %cst = arith.constant dense<0.000000e+00> : vector<128x64xf32>
    %2 = tpu.matmul %0, %1, %cst {dimension_numbers = #tpu.dot_dimension_numbers<[1], [0], [0], [1], [0, 0, 1, 1], [], []>} : vector<128x8xf32>, vector<8x64xf32>, vector<128x64xf32> -> vector<128x64xf32>
    %c0_3 = arith.constant 0 : index
    %c0_4 = arith.constant 0 : index
    %3 = vector.load %arg3[%c0_3, %c0_4] : memref<1x64xf32, #tpu.memory_space<vmem>>, vector<1x64xf32>
    %4 = vector.broadcast %3 : vector<1x64xf32> to vector<128x64xf32>
    %5 = arith.addf %2, %4 : vector<128x64xf32>
    %cst_5 = arith.constant 0.000000e+00 : f32
    %6 = vector.broadcast %cst_5 : f32 to vector<128x64xf32>
    %7 = arith.cmpf ogt, %5, %6 : vector<128x64xf32>
    %cst_6 = arith.constant 0.000000e+00 : f32
    %8 = vector.broadcast %cst_6 : f32 to vector<128x64xf32>
    %9 = arith.minimumf %5, %8 : vector<128x64xf32>
    %10 = math.exp %9 : vector<128x64xf32>
    %cst_7 = arith.constant 1.000000e+00 : f32
    %11 = vector.broadcast %cst_7 : f32 to vector<128x64xf32>
    %12 = arith.subf %10, %11 : vector<128x64xf32>
    %13 = arith.select %7, %5, %12 : vector<128x64xi1>, vector<128x64xf32>
    %c0_8 = arith.constant 0 : index
    %c0_9 = arith.constant 0 : index
    %14 = vector.load %arg4[%c0_8, %c0_9] : memref<64x64xf32, #tpu.memory_space<vmem>>, vector<64x64xf32>
    %cst_10 = arith.constant dense<0.000000e+00> : vector<128x64xf32>
    %15 = tpu.matmul %13, %14, %cst_10 {dimension_numbers = #tpu.dot_dimension_numbers<[1], [0], [0], [1], [0, 0, 1, 1], [], []>} : vector<128x64xf32>, vector<64x64xf32>, vector<128x64xf32> -> vector<128x64xf32>
    %c0_11 = arith.constant 0 : index
    %c0_12 = arith.constant 0 : index
    %16 = vector.load %arg5[%c0_11, %c0_12] : memref<1x64xf32, #tpu.memory_space<vmem>>, vector<1x64xf32>
    %17 = vector.broadcast %16 : vector<1x64xf32> to vector<128x64xf32>
    %18 = arith.addf %15, %17 : vector<128x64xf32>
    %cst_13 = arith.constant 0.000000e+00 : f32
    %19 = vector.broadcast %cst_13 : f32 to vector<128x64xf32>
    %20 = arith.cmpf ogt, %18, %19 : vector<128x64xf32>
    %cst_14 = arith.constant 0.000000e+00 : f32
    %21 = vector.broadcast %cst_14 : f32 to vector<128x64xf32>
    %22 = arith.minimumf %18, %21 : vector<128x64xf32>
    %23 = math.exp %22 : vector<128x64xf32>
    %cst_15 = arith.constant 1.000000e+00 : f32
    %24 = vector.broadcast %cst_15 : f32 to vector<128x64xf32>
    %25 = arith.subf %23, %24 : vector<128x64xf32>
    %26 = arith.select %20, %18, %25 : vector<128x64xi1>, vector<128x64xf32>
    tpu.wait_dma2 semaphore(%arg17 : memref<!tpu.dma_semaphore, #tpu.memory_space<semaphore_mem>>) src(%arg1 : memref<128x128xbf16, #tpu.memory_space<any>>) dst(%arg16 : memref<128x128xbf16, #tpu.memory_space<vmem>>)
    %c0_16 = arith.constant 0 : index
    %c0_17 = arith.constant 0 : index
    %27 = vector.load %arg16[%c0_16, %c0_17] : memref<128x128xbf16, #tpu.memory_space<vmem>>, vector<128x128xbf16>
    %c0_18 = arith.constant 0 : index
    %c0_19 = arith.constant 0 : index
    %c0_20 = arith.constant 0 : index
    %28 = vector.load %arg6[%c0_18, %c0_19, %c0_20] : memref<4x64x256xbf16, #tpu.memory_space<vmem>>, vector<1x64x256xbf16>
    %29 = vector.shape_cast %28 : vector<1x64x256xbf16> to vector<64x256xbf16>
    %c0_21 = arith.constant 0 : index
    %c0_22 = arith.constant 0 : index
    %c0_23 = arith.constant 0 : index
    %30 = vector.load %arg7[%c0_21, %c0_22, %c0_23] : memref<4x256x8xf32, #tpu.memory_space<vmem>>, vector<1x256x8xf32>
    %31 = vector.shape_cast %30 : vector<1x256x8xf32> to vector<256x8xf32>
    %c0_24 = arith.constant 0 : index
    %c0_25 = arith.constant 0 : index
    %c0_26 = arith.constant 0 : index
    %32 = vector.load %arg8[%c0_24, %c0_25, %c0_26] : memref<4x1x64xf32, #tpu.memory_space<vmem>>, vector<1x1x64xf32>
    %33 = vector.shape_cast %32 : vector<1x1x64xf32> to vector<1x64xf32>
    %34 = arith.truncf %26 : vector<128x64xf32> to vector<128x64xbf16>
    %cst_27 = arith.constant dense<0.000000e+00> : vector<128x256xf32>
    %35 = tpu.matmul %34, %29, %cst_27 {dimension_numbers = #tpu.dot_dimension_numbers<[1], [0], [0], [1], [0, 0, 1, 1], [], []>} : vector<128x64xbf16>, vector<64x256xbf16>, vector<128x256xf32> -> vector<128x256xf32>
    %cst_28 = arith.constant dense<0.000000e+00> : vector<128x8xf32>
    %36 = tpu.matmul %35, %31, %cst_28 {dimension_numbers = #tpu.dot_dimension_numbers<[1], [0], [0], [1], [0, 0, 1, 1], [], []>} : vector<128x256xf32>, vector<256x8xf32>, vector<128x8xf32> -> vector<128x8xf32>
    %37 = vector.extract_strided_slice %36 {offsets = [0, 0], sizes = [128, 4], strides = [1, 1]} : vector<128x8xf32> to vector<128x4xf32>
    %38 = tpu.transpose %37, [1, 0] : vector<128x4xf32> -> vector<4x128xf32>
    %39 = arith.truncf %38 : vector<4x128xf32> to vector<4x128xbf16>
    %40 = vector.extract_strided_slice %36 {offsets = [0, 4], sizes = [128, 4], strides = [1, 1]} : vector<128x8xf32> to vector<128x4xf32>
    %41 = arith.truncf %40 : vector<128x4xf32> to vector<128x4xbf16>
    %42 = arith.truncf %35 : vector<128x256xf32> to vector<128x256xbf16>
    %cst_29 = arith.constant 0.000000e+00 : f32
    %43 = vector.broadcast %cst_29 : f32 to vector<128x64xf32>
    %44 = vector.extract_strided_slice %41 {offsets = [0, 0], sizes = [128, 1], strides = [1, 1]} : vector<128x4xbf16> to vector<128x1xbf16>
    %45 = vector.extract_strided_slice %39 {offsets = [0, 0], sizes = [1, 128], strides = [1, 1]} : vector<4x128xbf16> to vector<1x128xbf16>
    %46 = vector.broadcast %44 : vector<128x1xbf16> to vector<128x128xbf16>
    %47 = vector.broadcast %45 : vector<1x128xbf16> to vector<128x128xbf16>
    %48 = arith.addf %46, %47 : vector<128x128xbf16>
    %49 = arith.addf %48, %27 : vector<128x128xbf16>
    %cst_30 = arith.constant 2.001950e-01 : bf16
    %50 = vector.broadcast %cst_30 : bf16 to vector<128x128xbf16>
    %51 = arith.mulf %49, %50 : vector<128x128xbf16>
    %52 = arith.maximumf %49, %51 : vector<128x128xbf16>
    %cst_31 = arith.constant dense<0xFF80> : vector<128xbf16>
    %53 = vector.multi_reduction <maximumf>, %52, %cst_31 [1] : vector<128x128xbf16> to vector<128xbf16>
    %54 = vector.shape_cast %53 : vector<128xbf16> to vector<128x1xbf16>
    %55 = vector.broadcast %54 : vector<128x1xbf16> to vector<128x128xbf16>
    %56 = arith.subf %52, %55 : vector<128x128xbf16>
    %57 = math.exp %56 : vector<128x128xbf16>
    %58 = arith.extf %57 : vector<128x128xbf16> to vector<128x128xf32>
    %cst_32 = arith.constant dense<0.000000e+00> : vector<128xf32>
    %59 = vector.multi_reduction <add>, %58, %cst_32 [1] : vector<128x128xf32> to vector<128xf32>
    %60 = vector.shape_cast %59 : vector<128xf32> to vector<128x1xf32>
    %61 = tpu.reciprocal %60 {approx = true} : vector<128x1xf32> -> vector<128x1xf32>
    %62 = vector.extract_strided_slice %42 {offsets = [0, 0], sizes = [128, 64], strides = [1, 1]} : vector<128x256xbf16> to vector<128x64xbf16>
    %cst_33 = arith.constant dense<0.000000e+00> : vector<128x64xf32>
    %63 = tpu.matmul %57, %62, %cst_33 {dimension_numbers = #tpu.dot_dimension_numbers<[1], [0], [0], [1], [0, 0, 1, 1], [], []>} : vector<128x128xbf16>, vector<128x64xbf16>, vector<128x64xf32> -> vector<128x64xf32>
    %64 = vector.broadcast %61 : vector<128x1xf32> to vector<128x64xf32>
    %65 = arith.mulf %64, %63 : vector<128x64xf32>
    %66 = arith.addf %43, %65 : vector<128x64xf32>
    %67 = vector.extract_strided_slice %41 {offsets = [0, 1], sizes = [128, 1], strides = [1, 1]} : vector<128x4xbf16> to vector<128x1xbf16>
    %68 = vector.extract_strided_slice %39 {offsets = [1, 0], sizes = [1, 128], strides = [1, 1]} : vector<4x128xbf16> to vector<1x128xbf16>
    %69 = vector.broadcast %67 : vector<128x1xbf16> to vector<128x128xbf16>
    %70 = vector.broadcast %68 : vector<1x128xbf16> to vector<128x128xbf16>
    %71 = arith.addf %69, %70 : vector<128x128xbf16>
    %72 = arith.addf %71, %27 : vector<128x128xbf16>
    %cst_34 = arith.constant 2.001950e-01 : bf16
    %73 = vector.broadcast %cst_34 : bf16 to vector<128x128xbf16>
    %74 = arith.mulf %72, %73 : vector<128x128xbf16>
    %75 = arith.maximumf %72, %74 : vector<128x128xbf16>
    %cst_35 = arith.constant dense<0xFF80> : vector<128xbf16>
    %76 = vector.multi_reduction <maximumf>, %75, %cst_35 [1] : vector<128x128xbf16> to vector<128xbf16>
    %77 = vector.shape_cast %76 : vector<128xbf16> to vector<128x1xbf16>
    %78 = vector.broadcast %77 : vector<128x1xbf16> to vector<128x128xbf16>
    %79 = arith.subf %75, %78 : vector<128x128xbf16>
    %80 = math.exp %79 : vector<128x128xbf16>
    %81 = arith.extf %80 : vector<128x128xbf16> to vector<128x128xf32>
    %cst_36 = arith.constant dense<0.000000e+00> : vector<128xf32>
    %82 = vector.multi_reduction <add>, %81, %cst_36 [1] : vector<128x128xf32> to vector<128xf32>
    %83 = vector.shape_cast %82 : vector<128xf32> to vector<128x1xf32>
    %84 = tpu.reciprocal %83 {approx = true} : vector<128x1xf32> -> vector<128x1xf32>
    %85 = vector.extract_strided_slice %42 {offsets = [0, 64], sizes = [128, 64], strides = [1, 1]} : vector<128x256xbf16> to vector<128x64xbf16>
    %cst_37 = arith.constant dense<0.000000e+00> : vector<128x64xf32>
    %86 = tpu.matmul %80, %85, %cst_37 {dimension_numbers = #tpu.dot_dimension_numbers<[1], [0], [0], [1], [0, 0, 1, 1], [], []>} : vector<128x128xbf16>, vector<128x64xbf16>, vector<128x64xf32> -> vector<128x64xf32>
    %87 = vector.broadcast %84 : vector<128x1xf32> to vector<128x64xf32>
    %88 = arith.mulf %87, %86 : vector<128x64xf32>
    %89 = arith.addf %66, %88 : vector<128x64xf32>
    %90 = vector.extract_strided_slice %41 {offsets = [0, 2], sizes = [128, 1], strides = [1, 1]} : vector<128x4xbf16> to vector<128x1xbf16>
    %91 = vector.extract_strided_slice %39 {offsets = [2, 0], sizes = [1, 128], strides = [1, 1]} : vector<4x128xbf16> to vector<1x128xbf16>
    %92 = vector.broadcast %90 : vector<128x1xbf16> to vector<128x128xbf16>
    %93 = vector.broadcast %91 : vector<1x128xbf16> to vector<128x128xbf16>
    %94 = arith.addf %92, %93 : vector<128x128xbf16>
    %95 = arith.addf %94, %27 : vector<128x128xbf16>
    %cst_38 = arith.constant 2.001950e-01 : bf16
    %96 = vector.broadcast %cst_38 : bf16 to vector<128x128xbf16>
    %97 = arith.mulf %95, %96 : vector<128x128xbf16>
    %98 = arith.maximumf %95, %97 : vector<128x128xbf16>
    %cst_39 = arith.constant dense<0xFF80> : vector<128xbf16>
    %99 = vector.multi_reduction <maximumf>, %98, %cst_39 [1] : vector<128x128xbf16> to vector<128xbf16>
    %100 = vector.shape_cast %99 : vector<128xbf16> to vector<128x1xbf16>
    %101 = vector.broadcast %100 : vector<128x1xbf16> to vector<128x128xbf16>
    %102 = arith.subf %98, %101 : vector<128x128xbf16>
    %103 = math.exp %102 : vector<128x128xbf16>
    %104 = arith.extf %103 : vector<128x128xbf16> to vector<128x128xf32>
    %cst_40 = arith.constant dense<0.000000e+00> : vector<128xf32>
    %105 = vector.multi_reduction <add>, %104, %cst_40 [1] : vector<128x128xf32> to vector<128xf32>
    %106 = vector.shape_cast %105 : vector<128xf32> to vector<128x1xf32>
    %107 = tpu.reciprocal %106 {approx = true} : vector<128x1xf32> -> vector<128x1xf32>
    %108 = vector.extract_strided_slice %42 {offsets = [0, 128], sizes = [128, 64], strides = [1, 1]} : vector<128x256xbf16> to vector<128x64xbf16>
    %cst_41 = arith.constant dense<0.000000e+00> : vector<128x64xf32>
    %109 = tpu.matmul %103, %108, %cst_41 {dimension_numbers = #tpu.dot_dimension_numbers<[1], [0], [0], [1], [0, 0, 1, 1], [], []>} : vector<128x128xbf16>, vector<128x64xbf16>, vector<128x64xf32> -> vector<128x64xf32>
    %110 = vector.broadcast %107 : vector<128x1xf32> to vector<128x64xf32>
    %111 = arith.mulf %110, %109 : vector<128x64xf32>
    %112 = arith.addf %89, %111 : vector<128x64xf32>
    %113 = vector.extract_strided_slice %41 {offsets = [0, 3], sizes = [128, 1], strides = [1, 1]} : vector<128x4xbf16> to vector<128x1xbf16>
    %114 = vector.extract_strided_slice %39 {offsets = [3, 0], sizes = [1, 128], strides = [1, 1]} : vector<4x128xbf16> to vector<1x128xbf16>
    %115 = vector.broadcast %113 : vector<128x1xbf16> to vector<128x128xbf16>
    %116 = vector.broadcast %114 : vector<1x128xbf16> to vector<128x128xbf16>
    %117 = arith.addf %115, %116 : vector<128x128xbf16>
    %118 = arith.addf %117, %27 : vector<128x128xbf16>
    %cst_42 = arith.constant 2.001950e-01 : bf16
    %119 = vector.broadcast %cst_42 : bf16 to vector<128x128xbf16>
    %120 = arith.mulf %118, %119 : vector<128x128xbf16>
    %121 = arith.maximumf %118, %120 : vector<128x128xbf16>
    %cst_43 = arith.constant dense<0xFF80> : vector<128xbf16>
    %122 = vector.multi_reduction <maximumf>, %121, %cst_43 [1] : vector<128x128xbf16> to vector<128xbf16>
    %123 = vector.shape_cast %122 : vector<128xbf16> to vector<128x1xbf16>
    %124 = vector.broadcast %123 : vector<128x1xbf16> to vector<128x128xbf16>
    %125 = arith.subf %121, %124 : vector<128x128xbf16>
    %126 = math.exp %125 : vector<128x128xbf16>
    %127 = arith.extf %126 : vector<128x128xbf16> to vector<128x128xf32>
    %cst_44 = arith.constant dense<0.000000e+00> : vector<128xf32>
    %128 = vector.multi_reduction <add>, %127, %cst_44 [1] : vector<128x128xf32> to vector<128xf32>
    %129 = vector.shape_cast %128 : vector<128xf32> to vector<128x1xf32>
    %130 = tpu.reciprocal %129 {approx = true} : vector<128x1xf32> -> vector<128x1xf32>
    %131 = vector.extract_strided_slice %42 {offsets = [0, 192], sizes = [128, 64], strides = [1, 1]} : vector<128x256xbf16> to vector<128x64xbf16>
    %cst_45 = arith.constant dense<0.000000e+00> : vector<128x64xf32>
    %132 = tpu.matmul %126, %131, %cst_45 {dimension_numbers = #tpu.dot_dimension_numbers<[1], [0], [0], [1], [0, 0, 1, 1], [], []>} : vector<128x128xbf16>, vector<128x64xbf16>, vector<128x64xf32> -> vector<128x64xf32>
    %133 = vector.broadcast %130 : vector<128x1xf32> to vector<128x64xf32>
    %134 = arith.mulf %133, %132 : vector<128x64xf32>
    %135 = arith.addf %112, %134 : vector<128x64xf32>
    %cst_46 = arith.constant 2.500000e-01 : f32
    %136 = vector.broadcast %cst_46 : f32 to vector<128x64xf32>
    %137 = arith.mulf %135, %136 : vector<128x64xf32>
    %138 = vector.broadcast %33 : vector<1x64xf32> to vector<128x64xf32>
    %139 = arith.addf %137, %138 : vector<128x64xf32>
    %cst_47 = arith.constant 0.000000e+00 : f32
    %140 = vector.broadcast %cst_47 : f32 to vector<128x64xf32>
    %141 = arith.cmpf ogt, %139, %140 : vector<128x64xf32>
    %cst_48 = arith.constant 0.000000e+00 : f32
    %142 = vector.broadcast %cst_48 : f32 to vector<128x64xf32>
    %143 = arith.minimumf %139, %142 : vector<128x64xf32>
    %144 = math.exp %143 : vector<128x64xf32>
    %cst_49 = arith.constant 1.000000e+00 : f32
    %145 = vector.broadcast %cst_49 : f32 to vector<128x64xf32>
    %146 = arith.subf %144, %145 : vector<128x64xf32>
    %147 = arith.select %141, %139, %146 : vector<128x64xi1>, vector<128x64xf32>
    %c1 = arith.constant 1 : index
    %c0_50 = arith.constant 0 : index
    %c0_51 = arith.constant 0 : index
    %148 = vector.load %arg6[%c1, %c0_50, %c0_51] : memref<4x64x256xbf16, #tpu.memory_space<vmem>>, vector<1x64x256xbf16>
    %149 = vector.shape_cast %148 : vector<1x64x256xbf16> to vector<64x256xbf16>
    %c1_52 = arith.constant 1 : index
    %c0_53 = arith.constant 0 : index
    %c0_54 = arith.constant 0 : index
    %150 = vector.load %arg7[%c1_52, %c0_53, %c0_54] : memref<4x256x8xf32, #tpu.memory_space<vmem>>, vector<1x256x8xf32>
    %151 = vector.shape_cast %150 : vector<1x256x8xf32> to vector<256x8xf32>
    %c1_55 = arith.constant 1 : index
    %c0_56 = arith.constant 0 : index
    %c0_57 = arith.constant 0 : index
    %152 = vector.load %arg8[%c1_55, %c0_56, %c0_57] : memref<4x1x64xf32, #tpu.memory_space<vmem>>, vector<1x1x64xf32>
    %153 = vector.shape_cast %152 : vector<1x1x64xf32> to vector<1x64xf32>
    %154 = arith.truncf %147 : vector<128x64xf32> to vector<128x64xbf16>
    %cst_58 = arith.constant dense<0.000000e+00> : vector<128x256xf32>
    %155 = tpu.matmul %154, %149, %cst_58 {dimension_numbers = #tpu.dot_dimension_numbers<[1], [0], [0], [1], [0, 0, 1, 1], [], []>} : vector<128x64xbf16>, vector<64x256xbf16>, vector<128x256xf32> -> vector<128x256xf32>
    %cst_59 = arith.constant dense<0.000000e+00> : vector<128x8xf32>
    %156 = tpu.matmul %155, %151, %cst_59 {dimension_numbers = #tpu.dot_dimension_numbers<[1], [0], [0], [1], [0, 0, 1, 1], [], []>} : vector<128x256xf32>, vector<256x8xf32>, vector<128x8xf32> -> vector<128x8xf32>
    %157 = vector.extract_strided_slice %156 {offsets = [0, 0], sizes = [128, 4], strides = [1, 1]} : vector<128x8xf32> to vector<128x4xf32>
    %158 = tpu.transpose %157, [1, 0] : vector<128x4xf32> -> vector<4x128xf32>
    %159 = arith.truncf %158 : vector<4x128xf32> to vector<4x128xbf16>
    %160 = vector.extract_strided_slice %156 {offsets = [0, 4], sizes = [128, 4], strides = [1, 1]} : vector<128x8xf32> to vector<128x4xf32>
    %161 = arith.truncf %160 : vector<128x4xf32> to vector<128x4xbf16>
    %162 = arith.truncf %155 : vector<128x256xf32> to vector<128x256xbf16>
    %cst_60 = arith.constant 0.000000e+00 : f32
    %163 = vector.broadcast %cst_60 : f32 to vector<128x64xf32>
    %164 = vector.extract_strided_slice %161 {offsets = [0, 0], sizes = [128, 1], strides = [1, 1]} : vector<128x4xbf16> to vector<128x1xbf16>
    %165 = vector.extract_strided_slice %159 {offsets = [0, 0], sizes = [1, 128], strides = [1, 1]} : vector<4x128xbf16> to vector<1x128xbf16>
    %166 = vector.broadcast %164 : vector<128x1xbf16> to vector<128x128xbf16>
    %167 = vector.broadcast %165 : vector<1x128xbf16> to vector<128x128xbf16>
    %168 = arith.addf %166, %167 : vector<128x128xbf16>
    %169 = arith.addf %168, %27 : vector<128x128xbf16>
    %cst_61 = arith.constant 2.001950e-01 : bf16
    %170 = vector.broadcast %cst_61 : bf16 to vector<128x128xbf16>
    %171 = arith.mulf %169, %170 : vector<128x128xbf16>
    %172 = arith.maximumf %169, %171 : vector<128x128xbf16>
    %cst_62 = arith.constant dense<0xFF80> : vector<128xbf16>
    %173 = vector.multi_reduction <maximumf>, %172, %cst_62 [1] : vector<128x128xbf16> to vector<128xbf16>
    %174 = vector.shape_cast %173 : vector<128xbf16> to vector<128x1xbf16>
    %175 = vector.broadcast %174 : vector<128x1xbf16> to vector<128x128xbf16>
    %176 = arith.subf %172, %175 : vector<128x128xbf16>
    %177 = math.exp %176 : vector<128x128xbf16>
    %178 = arith.extf %177 : vector<128x128xbf16> to vector<128x128xf32>
    %cst_63 = arith.constant dense<0.000000e+00> : vector<128xf32>
    %179 = vector.multi_reduction <add>, %178, %cst_63 [1] : vector<128x128xf32> to vector<128xf32>
    %180 = vector.shape_cast %179 : vector<128xf32> to vector<128x1xf32>
    %181 = tpu.reciprocal %180 {approx = true} : vector<128x1xf32> -> vector<128x1xf32>
    %182 = vector.extract_strided_slice %162 {offsets = [0, 0], sizes = [128, 64], strides = [1, 1]} : vector<128x256xbf16> to vector<128x64xbf16>
    %cst_64 = arith.constant dense<0.000000e+00> : vector<128x64xf32>
    %183 = tpu.matmul %177, %182, %cst_64 {dimension_numbers = #tpu.dot_dimension_numbers<[1], [0], [0], [1], [0, 0, 1, 1], [], []>} : vector<128x128xbf16>, vector<128x64xbf16>, vector<128x64xf32> -> vector<128x64xf32>
    %184 = vector.broadcast %181 : vector<128x1xf32> to vector<128x64xf32>
    %185 = arith.mulf %184, %183 : vector<128x64xf32>
    %186 = arith.addf %163, %185 : vector<128x64xf32>
    %187 = vector.extract_strided_slice %161 {offsets = [0, 1], sizes = [128, 1], strides = [1, 1]} : vector<128x4xbf16> to vector<128x1xbf16>
    %188 = vector.extract_strided_slice %159 {offsets = [1, 0], sizes = [1, 128], strides = [1, 1]} : vector<4x128xbf16> to vector<1x128xbf16>
    %189 = vector.broadcast %187 : vector<128x1xbf16> to vector<128x128xbf16>
    %190 = vector.broadcast %188 : vector<1x128xbf16> to vector<128x128xbf16>
    %191 = arith.addf %189, %190 : vector<128x128xbf16>
    %192 = arith.addf %191, %27 : vector<128x128xbf16>
    %cst_65 = arith.constant 2.001950e-01 : bf16
    %193 = vector.broadcast %cst_65 : bf16 to vector<128x128xbf16>
    %194 = arith.mulf %192, %193 : vector<128x128xbf16>
    %195 = arith.maximumf %192, %194 : vector<128x128xbf16>
    %cst_66 = arith.constant dense<0xFF80> : vector<128xbf16>
    %196 = vector.multi_reduction <maximumf>, %195, %cst_66 [1] : vector<128x128xbf16> to vector<128xbf16>
    %197 = vector.shape_cast %196 : vector<128xbf16> to vector<128x1xbf16>
    %198 = vector.broadcast %197 : vector<128x1xbf16> to vector<128x128xbf16>
    %199 = arith.subf %195, %198 : vector<128x128xbf16>
    %200 = math.exp %199 : vector<128x128xbf16>
    %201 = arith.extf %200 : vector<128x128xbf16> to vector<128x128xf32>
    %cst_67 = arith.constant dense<0.000000e+00> : vector<128xf32>
    %202 = vector.multi_reduction <add>, %201, %cst_67 [1] : vector<128x128xf32> to vector<128xf32>
    %203 = vector.shape_cast %202 : vector<128xf32> to vector<128x1xf32>
    %204 = tpu.reciprocal %203 {approx = true} : vector<128x1xf32> -> vector<128x1xf32>
    %205 = vector.extract_strided_slice %162 {offsets = [0, 64], sizes = [128, 64], strides = [1, 1]} : vector<128x256xbf16> to vector<128x64xbf16>
    %cst_68 = arith.constant dense<0.000000e+00> : vector<128x64xf32>
    %206 = tpu.matmul %200, %205, %cst_68 {dimension_numbers = #tpu.dot_dimension_numbers<[1], [0], [0], [1], [0, 0, 1, 1], [], []>} : vector<128x128xbf16>, vector<128x64xbf16>, vector<128x64xf32> -> vector<128x64xf32>
    %207 = vector.broadcast %204 : vector<128x1xf32> to vector<128x64xf32>
    %208 = arith.mulf %207, %206 : vector<128x64xf32>
    %209 = arith.addf %186, %208 : vector<128x64xf32>
    %210 = vector.extract_strided_slice %161 {offsets = [0, 2], sizes = [128, 1], strides = [1, 1]} : vector<128x4xbf16> to vector<128x1xbf16>
    %211 = vector.extract_strided_slice %159 {offsets = [2, 0], sizes = [1, 128], strides = [1, 1]} : vector<4x128xbf16> to vector<1x128xbf16>
    %212 = vector.broadcast %210 : vector<128x1xbf16> to vector<128x128xbf16>
    %213 = vector.broadcast %211 : vector<1x128xbf16> to vector<128x128xbf16>
    %214 = arith.addf %212, %213 : vector<128x128xbf16>
    %215 = arith.addf %214, %27 : vector<128x128xbf16>
    %cst_69 = arith.constant 2.001950e-01 : bf16
    %216 = vector.broadcast %cst_69 : bf16 to vector<128x128xbf16>
    %217 = arith.mulf %215, %216 : vector<128x128xbf16>
    %218 = arith.maximumf %215, %217 : vector<128x128xbf16>
    %cst_70 = arith.constant dense<0xFF80> : vector<128xbf16>
    %219 = vector.multi_reduction <maximumf>, %218, %cst_70 [1] : vector<128x128xbf16> to vector<128xbf16>
    %220 = vector.shape_cast %219 : vector<128xbf16> to vector<128x1xbf16>
    %221 = vector.broadcast %220 : vector<128x1xbf16> to vector<128x128xbf16>
    %222 = arith.subf %218, %221 : vector<128x128xbf16>
    %223 = math.exp %222 : vector<128x128xbf16>
    %224 = arith.extf %223 : vector<128x128xbf16> to vector<128x128xf32>
    %cst_71 = arith.constant dense<0.000000e+00> : vector<128xf32>
    %225 = vector.multi_reduction <add>, %224, %cst_71 [1] : vector<128x128xf32> to vector<128xf32>
    %226 = vector.shape_cast %225 : vector<128xf32> to vector<128x1xf32>
    %227 = tpu.reciprocal %226 {approx = true} : vector<128x1xf32> -> vector<128x1xf32>
    %228 = vector.extract_strided_slice %162 {offsets = [0, 128], sizes = [128, 64], strides = [1, 1]} : vector<128x256xbf16> to vector<128x64xbf16>
    %cst_72 = arith.constant dense<0.000000e+00> : vector<128x64xf32>
    %229 = tpu.matmul %223, %228, %cst_72 {dimension_numbers = #tpu.dot_dimension_numbers<[1], [0], [0], [1], [0, 0, 1, 1], [], []>} : vector<128x128xbf16>, vector<128x64xbf16>, vector<128x64xf32> -> vector<128x64xf32>
    %230 = vector.broadcast %227 : vector<128x1xf32> to vector<128x64xf32>
    %231 = arith.mulf %230, %229 : vector<128x64xf32>
    %232 = arith.addf %209, %231 : vector<128x64xf32>
    %233 = vector.extract_strided_slice %161 {offsets = [0, 3], sizes = [128, 1], strides = [1, 1]} : vector<128x4xbf16> to vector<128x1xbf16>
    %234 = vector.extract_strided_slice %159 {offsets = [3, 0], sizes = [1, 128], strides = [1, 1]} : vector<4x128xbf16> to vector<1x128xbf16>
    %235 = vector.broadcast %233 : vector<128x1xbf16> to vector<128x128xbf16>
    %236 = vector.broadcast %234 : vector<1x128xbf16> to vector<128x128xbf16>
    %237 = arith.addf %235, %236 : vector<128x128xbf16>
    %238 = arith.addf %237, %27 : vector<128x128xbf16>
    %cst_73 = arith.constant 2.001950e-01 : bf16
    %239 = vector.broadcast %cst_73 : bf16 to vector<128x128xbf16>
    %240 = arith.mulf %238, %239 : vector<128x128xbf16>
    %241 = arith.maximumf %238, %240 : vector<128x128xbf16>
    %cst_74 = arith.constant dense<0xFF80> : vector<128xbf16>
    %242 = vector.multi_reduction <maximumf>, %241, %cst_74 [1] : vector<128x128xbf16> to vector<128xbf16>
    %243 = vector.shape_cast %242 : vector<128xbf16> to vector<128x1xbf16>
    %244 = vector.broadcast %243 : vector<128x1xbf16> to vector<128x128xbf16>
    %245 = arith.subf %241, %244 : vector<128x128xbf16>
    %246 = math.exp %245 : vector<128x128xbf16>
    %247 = arith.extf %246 : vector<128x128xbf16> to vector<128x128xf32>
    %cst_75 = arith.constant dense<0.000000e+00> : vector<128xf32>
    %248 = vector.multi_reduction <add>, %247, %cst_75 [1] : vector<128x128xf32> to vector<128xf32>
    %249 = vector.shape_cast %248 : vector<128xf32> to vector<128x1xf32>
    %250 = tpu.reciprocal %249 {approx = true} : vector<128x1xf32> -> vector<128x1xf32>
    %251 = vector.extract_strided_slice %162 {offsets = [0, 192], sizes = [128, 64], strides = [1, 1]} : vector<128x256xbf16> to vector<128x64xbf16>
    %cst_76 = arith.constant dense<0.000000e+00> : vector<128x64xf32>
    %252 = tpu.matmul %246, %251, %cst_76 {dimension_numbers = #tpu.dot_dimension_numbers<[1], [0], [0], [1], [0, 0, 1, 1], [], []>} : vector<128x128xbf16>, vector<128x64xbf16>, vector<128x64xf32> -> vector<128x64xf32>
    %253 = vector.broadcast %250 : vector<128x1xf32> to vector<128x64xf32>
    %254 = arith.mulf %253, %252 : vector<128x64xf32>
    %255 = arith.addf %232, %254 : vector<128x64xf32>
    %cst_77 = arith.constant 2.500000e-01 : f32
    %256 = vector.broadcast %cst_77 : f32 to vector<128x64xf32>
    %257 = arith.mulf %255, %256 : vector<128x64xf32>
    %258 = vector.broadcast %153 : vector<1x64xf32> to vector<128x64xf32>
    %259 = arith.addf %257, %258 : vector<128x64xf32>
    %cst_78 = arith.constant 0.000000e+00 : f32
    %260 = vector.broadcast %cst_78 : f32 to vector<128x64xf32>
    %261 = arith.cmpf ogt, %259, %260 : vector<128x64xf32>
    %cst_79 = arith.constant 0.000000e+00 : f32
    %262 = vector.broadcast %cst_79 : f32 to vector<128x64xf32>
    %263 = arith.minimumf %259, %262 : vector<128x64xf32>
    %264 = math.exp %263 : vector<128x64xf32>
    %cst_80 = arith.constant 1.000000e+00 : f32
    %265 = vector.broadcast %cst_80 : f32 to vector<128x64xf32>
    %266 = arith.subf %264, %265 : vector<128x64xf32>
    %267 = arith.select %261, %259, %266 : vector<128x64xi1>, vector<128x64xf32>
    %c2 = arith.constant 2 : index
    %c0_81 = arith.constant 0 : index
    %c0_82 = arith.constant 0 : index
    %268 = vector.load %arg6[%c2, %c0_81, %c0_82] : memref<4x64x256xbf16, #tpu.memory_space<vmem>>, vector<1x64x256xbf16>
    %269 = vector.shape_cast %268 : vector<1x64x256xbf16> to vector<64x256xbf16>
    %c2_83 = arith.constant 2 : index
    %c0_84 = arith.constant 0 : index
    %c0_85 = arith.constant 0 : index
    %270 = vector.load %arg7[%c2_83, %c0_84, %c0_85] : memref<4x256x8xf32, #tpu.memory_space<vmem>>, vector<1x256x8xf32>
    %271 = vector.shape_cast %270 : vector<1x256x8xf32> to vector<256x8xf32>
    %c2_86 = arith.constant 2 : index
    %c0_87 = arith.constant 0 : index
    %c0_88 = arith.constant 0 : index
    %272 = vector.load %arg8[%c2_86, %c0_87, %c0_88] : memref<4x1x64xf32, #tpu.memory_space<vmem>>, vector<1x1x64xf32>
    %273 = vector.shape_cast %272 : vector<1x1x64xf32> to vector<1x64xf32>
    %274 = arith.truncf %267 : vector<128x64xf32> to vector<128x64xbf16>
    %cst_89 = arith.constant dense<0.000000e+00> : vector<128x256xf32>
    %275 = tpu.matmul %274, %269, %cst_89 {dimension_numbers = #tpu.dot_dimension_numbers<[1], [0], [0], [1], [0, 0, 1, 1], [], []>} : vector<128x64xbf16>, vector<64x256xbf16>, vector<128x256xf32> -> vector<128x256xf32>
    %cst_90 = arith.constant dense<0.000000e+00> : vector<128x8xf32>
    %276 = tpu.matmul %275, %271, %cst_90 {dimension_numbers = #tpu.dot_dimension_numbers<[1], [0], [0], [1], [0, 0, 1, 1], [], []>} : vector<128x256xf32>, vector<256x8xf32>, vector<128x8xf32> -> vector<128x8xf32>
    %277 = vector.extract_strided_slice %276 {offsets = [0, 0], sizes = [128, 4], strides = [1, 1]} : vector<128x8xf32> to vector<128x4xf32>
    %278 = tpu.transpose %277, [1, 0] : vector<128x4xf32> -> vector<4x128xf32>
    %279 = arith.truncf %278 : vector<4x128xf32> to vector<4x128xbf16>
    %280 = vector.extract_strided_slice %276 {offsets = [0, 4], sizes = [128, 4], strides = [1, 1]} : vector<128x8xf32> to vector<128x4xf32>
    %281 = arith.truncf %280 : vector<128x4xf32> to vector<128x4xbf16>
    %282 = arith.truncf %275 : vector<128x256xf32> to vector<128x256xbf16>
    %cst_91 = arith.constant 0.000000e+00 : f32
    %283 = vector.broadcast %cst_91 : f32 to vector<128x64xf32>
    %284 = vector.extract_strided_slice %281 {offsets = [0, 0], sizes = [128, 1], strides = [1, 1]} : vector<128x4xbf16> to vector<128x1xbf16>
    %285 = vector.extract_strided_slice %279 {offsets = [0, 0], sizes = [1, 128], strides = [1, 1]} : vector<4x128xbf16> to vector<1x128xbf16>
    %286 = vector.broadcast %284 : vector<128x1xbf16> to vector<128x128xbf16>
    %287 = vector.broadcast %285 : vector<1x128xbf16> to vector<128x128xbf16>
    %288 = arith.addf %286, %287 : vector<128x128xbf16>
    %289 = arith.addf %288, %27 : vector<128x128xbf16>
    %cst_92 = arith.constant 2.001950e-01 : bf16
    %290 = vector.broadcast %cst_92 : bf16 to vector<128x128xbf16>
    %291 = arith.mulf %289, %290 : vector<128x128xbf16>
    %292 = arith.maximumf %289, %291 : vector<128x128xbf16>
    %cst_93 = arith.constant dense<0xFF80> : vector<128xbf16>
    %293 = vector.multi_reduction <maximumf>, %292, %cst_93 [1] : vector<128x128xbf16> to vector<128xbf16>
    %294 = vector.shape_cast %293 : vector<128xbf16> to vector<128x1xbf16>
    %295 = vector.broadcast %294 : vector<128x1xbf16> to vector<128x128xbf16>
    %296 = arith.subf %292, %295 : vector<128x128xbf16>
    %297 = math.exp %296 : vector<128x128xbf16>
    %298 = arith.extf %297 : vector<128x128xbf16> to vector<128x128xf32>
    %cst_94 = arith.constant dense<0.000000e+00> : vector<128xf32>
    %299 = vector.multi_reduction <add>, %298, %cst_94 [1] : vector<128x128xf32> to vector<128xf32>
    %300 = vector.shape_cast %299 : vector<128xf32> to vector<128x1xf32>
    %301 = tpu.reciprocal %300 {approx = true} : vector<128x1xf32> -> vector<128x1xf32>
    %302 = vector.extract_strided_slice %282 {offsets = [0, 0], sizes = [128, 64], strides = [1, 1]} : vector<128x256xbf16> to vector<128x64xbf16>
    %cst_95 = arith.constant dense<0.000000e+00> : vector<128x64xf32>
    %303 = tpu.matmul %297, %302, %cst_95 {dimension_numbers = #tpu.dot_dimension_numbers<[1], [0], [0], [1], [0, 0, 1, 1], [], []>} : vector<128x128xbf16>, vector<128x64xbf16>, vector<128x64xf32> -> vector<128x64xf32>
    %304 = vector.broadcast %301 : vector<128x1xf32> to vector<128x64xf32>
    %305 = arith.mulf %304, %303 : vector<128x64xf32>
    %306 = arith.addf %283, %305 : vector<128x64xf32>
    %307 = vector.extract_strided_slice %281 {offsets = [0, 1], sizes = [128, 1], strides = [1, 1]} : vector<128x4xbf16> to vector<128x1xbf16>
    %308 = vector.extract_strided_slice %279 {offsets = [1, 0], sizes = [1, 128], strides = [1, 1]} : vector<4x128xbf16> to vector<1x128xbf16>
    %309 = vector.broadcast %307 : vector<128x1xbf16> to vector<128x128xbf16>
    %310 = vector.broadcast %308 : vector<1x128xbf16> to vector<128x128xbf16>
    %311 = arith.addf %309, %310 : vector<128x128xbf16>
    %312 = arith.addf %311, %27 : vector<128x128xbf16>
    %cst_96 = arith.constant 2.001950e-01 : bf16
    %313 = vector.broadcast %cst_96 : bf16 to vector<128x128xbf16>
    %314 = arith.mulf %312, %313 : vector<128x128xbf16>
    %315 = arith.maximumf %312, %314 : vector<128x128xbf16>
    %cst_97 = arith.constant dense<0xFF80> : vector<128xbf16>
    %316 = vector.multi_reduction <maximumf>, %315, %cst_97 [1] : vector<128x128xbf16> to vector<128xbf16>
    %317 = vector.shape_cast %316 : vector<128xbf16> to vector<128x1xbf16>
    %318 = vector.broadcast %317 : vector<128x1xbf16> to vector<128x128xbf16>
    %319 = arith.subf %315, %318 : vector<128x128xbf16>
    %320 = math.exp %319 : vector<128x128xbf16>
    %321 = arith.extf %320 : vector<128x128xbf16> to vector<128x128xf32>
    %cst_98 = arith.constant dense<0.000000e+00> : vector<128xf32>
    %322 = vector.multi_reduction <add>, %321, %cst_98 [1] : vector<128x128xf32> to vector<128xf32>
    %323 = vector.shape_cast %322 : vector<128xf32> to vector<128x1xf32>
    %324 = tpu.reciprocal %323 {approx = true} : vector<128x1xf32> -> vector<128x1xf32>
    %325 = vector.extract_strided_slice %282 {offsets = [0, 64], sizes = [128, 64], strides = [1, 1]} : vector<128x256xbf16> to vector<128x64xbf16>
    %cst_99 = arith.constant dense<0.000000e+00> : vector<128x64xf32>
    %326 = tpu.matmul %320, %325, %cst_99 {dimension_numbers = #tpu.dot_dimension_numbers<[1], [0], [0], [1], [0, 0, 1, 1], [], []>} : vector<128x128xbf16>, vector<128x64xbf16>, vector<128x64xf32> -> vector<128x64xf32>
    %327 = vector.broadcast %324 : vector<128x1xf32> to vector<128x64xf32>
    %328 = arith.mulf %327, %326 : vector<128x64xf32>
    %329 = arith.addf %306, %328 : vector<128x64xf32>
    %330 = vector.extract_strided_slice %281 {offsets = [0, 2], sizes = [128, 1], strides = [1, 1]} : vector<128x4xbf16> to vector<128x1xbf16>
    %331 = vector.extract_strided_slice %279 {offsets = [2, 0], sizes = [1, 128], strides = [1, 1]} : vector<4x128xbf16> to vector<1x128xbf16>
    %332 = vector.broadcast %330 : vector<128x1xbf16> to vector<128x128xbf16>
    %333 = vector.broadcast %331 : vector<1x128xbf16> to vector<128x128xbf16>
    %334 = arith.addf %332, %333 : vector<128x128xbf16>
    %335 = arith.addf %334, %27 : vector<128x128xbf16>
    %cst_100 = arith.constant 2.001950e-01 : bf16
    %336 = vector.broadcast %cst_100 : bf16 to vector<128x128xbf16>
    %337 = arith.mulf %335, %336 : vector<128x128xbf16>
    %338 = arith.maximumf %335, %337 : vector<128x128xbf16>
    %cst_101 = arith.constant dense<0xFF80> : vector<128xbf16>
    %339 = vector.multi_reduction <maximumf>, %338, %cst_101 [1] : vector<128x128xbf16> to vector<128xbf16>
    %340 = vector.shape_cast %339 : vector<128xbf16> to vector<128x1xbf16>
    %341 = vector.broadcast %340 : vector<128x1xbf16> to vector<128x128xbf16>
    %342 = arith.subf %338, %341 : vector<128x128xbf16>
    %343 = math.exp %342 : vector<128x128xbf16>
    %344 = arith.extf %343 : vector<128x128xbf16> to vector<128x128xf32>
    %cst_102 = arith.constant dense<0.000000e+00> : vector<128xf32>
    %345 = vector.multi_reduction <add>, %344, %cst_102 [1] : vector<128x128xf32> to vector<128xf32>
    %346 = vector.shape_cast %345 : vector<128xf32> to vector<128x1xf32>
    %347 = tpu.reciprocal %346 {approx = true} : vector<128x1xf32> -> vector<128x1xf32>
    %348 = vector.extract_strided_slice %282 {offsets = [0, 128], sizes = [128, 64], strides = [1, 1]} : vector<128x256xbf16> to vector<128x64xbf16>
    %cst_103 = arith.constant dense<0.000000e+00> : vector<128x64xf32>
    %349 = tpu.matmul %343, %348, %cst_103 {dimension_numbers = #tpu.dot_dimension_numbers<[1], [0], [0], [1], [0, 0, 1, 1], [], []>} : vector<128x128xbf16>, vector<128x64xbf16>, vector<128x64xf32> -> vector<128x64xf32>
    %350 = vector.broadcast %347 : vector<128x1xf32> to vector<128x64xf32>
    %351 = arith.mulf %350, %349 : vector<128x64xf32>
    %352 = arith.addf %329, %351 : vector<128x64xf32>
    %353 = vector.extract_strided_slice %281 {offsets = [0, 3], sizes = [128, 1], strides = [1, 1]} : vector<128x4xbf16> to vector<128x1xbf16>
    %354 = vector.extract_strided_slice %279 {offsets = [3, 0], sizes = [1, 128], strides = [1, 1]} : vector<4x128xbf16> to vector<1x128xbf16>
    %355 = vector.broadcast %353 : vector<128x1xbf16> to vector<128x128xbf16>
    %356 = vector.broadcast %354 : vector<1x128xbf16> to vector<128x128xbf16>
    %357 = arith.addf %355, %356 : vector<128x128xbf16>
    %358 = arith.addf %357, %27 : vector<128x128xbf16>
    %cst_104 = arith.constant 2.001950e-01 : bf16
    %359 = vector.broadcast %cst_104 : bf16 to vector<128x128xbf16>
    %360 = arith.mulf %358, %359 : vector<128x128xbf16>
    %361 = arith.maximumf %358, %360 : vector<128x128xbf16>
    %cst_105 = arith.constant dense<0xFF80> : vector<128xbf16>
    %362 = vector.multi_reduction <maximumf>, %361, %cst_105 [1] : vector<128x128xbf16> to vector<128xbf16>
    %363 = vector.shape_cast %362 : vector<128xbf16> to vector<128x1xbf16>
    %364 = vector.broadcast %363 : vector<128x1xbf16> to vector<128x128xbf16>
    %365 = arith.subf %361, %364 : vector<128x128xbf16>
    %366 = math.exp %365 : vector<128x128xbf16>
    %367 = arith.extf %366 : vector<128x128xbf16> to vector<128x128xf32>
    %cst_106 = arith.constant dense<0.000000e+00> : vector<128xf32>
    %368 = vector.multi_reduction <add>, %367, %cst_106 [1] : vector<128x128xf32> to vector<128xf32>
    %369 = vector.shape_cast %368 : vector<128xf32> to vector<128x1xf32>
    %370 = tpu.reciprocal %369 {approx = true} : vector<128x1xf32> -> vector<128x1xf32>
    %371 = vector.extract_strided_slice %282 {offsets = [0, 192], sizes = [128, 64], strides = [1, 1]} : vector<128x256xbf16> to vector<128x64xbf16>
    %cst_107 = arith.constant dense<0.000000e+00> : vector<128x64xf32>
    %372 = tpu.matmul %366, %371, %cst_107 {dimension_numbers = #tpu.dot_dimension_numbers<[1], [0], [0], [1], [0, 0, 1, 1], [], []>} : vector<128x128xbf16>, vector<128x64xbf16>, vector<128x64xf32> -> vector<128x64xf32>
    %373 = vector.broadcast %370 : vector<128x1xf32> to vector<128x64xf32>
    %374 = arith.mulf %373, %372 : vector<128x64xf32>
    %375 = arith.addf %352, %374 : vector<128x64xf32>
    %cst_108 = arith.constant 2.500000e-01 : f32
    %376 = vector.broadcast %cst_108 : f32 to vector<128x64xf32>
    %377 = arith.mulf %375, %376 : vector<128x64xf32>
    %378 = vector.broadcast %273 : vector<1x64xf32> to vector<128x64xf32>
    %379 = arith.addf %377, %378 : vector<128x64xf32>
    %cst_109 = arith.constant 0.000000e+00 : f32
    %380 = vector.broadcast %cst_109 : f32 to vector<128x64xf32>
    %381 = arith.cmpf ogt, %379, %380 : vector<128x64xf32>
    %cst_110 = arith.constant 0.000000e+00 : f32
    %382 = vector.broadcast %cst_110 : f32 to vector<128x64xf32>
    %383 = arith.minimumf %379, %382 : vector<128x64xf32>
    %384 = math.exp %383 : vector<128x64xf32>
    %cst_111 = arith.constant 1.000000e+00 : f32
    %385 = vector.broadcast %cst_111 : f32 to vector<128x64xf32>
    %386 = arith.subf %384, %385 : vector<128x64xf32>
    %387 = arith.select %381, %379, %386 : vector<128x64xi1>, vector<128x64xf32>
    %c3 = arith.constant 3 : index
    %c0_112 = arith.constant 0 : index
    %c0_113 = arith.constant 0 : index
    %388 = vector.load %arg6[%c3, %c0_112, %c0_113] : memref<4x64x256xbf16, #tpu.memory_space<vmem>>, vector<1x64x256xbf16>
    %389 = vector.shape_cast %388 : vector<1x64x256xbf16> to vector<64x256xbf16>
    %c3_114 = arith.constant 3 : index
    %c0_115 = arith.constant 0 : index
    %c0_116 = arith.constant 0 : index
    %390 = vector.load %arg7[%c3_114, %c0_115, %c0_116] : memref<4x256x8xf32, #tpu.memory_space<vmem>>, vector<1x256x8xf32>
    %391 = vector.shape_cast %390 : vector<1x256x8xf32> to vector<256x8xf32>
    %c3_117 = arith.constant 3 : index
    %c0_118 = arith.constant 0 : index
    %c0_119 = arith.constant 0 : index
    %392 = vector.load %arg8[%c3_117, %c0_118, %c0_119] : memref<4x1x64xf32, #tpu.memory_space<vmem>>, vector<1x1x64xf32>
    %393 = vector.shape_cast %392 : vector<1x1x64xf32> to vector<1x64xf32>
    %394 = arith.truncf %387 : vector<128x64xf32> to vector<128x64xbf16>
    %cst_120 = arith.constant dense<0.000000e+00> : vector<128x256xf32>
    %395 = tpu.matmul %394, %389, %cst_120 {dimension_numbers = #tpu.dot_dimension_numbers<[1], [0], [0], [1], [0, 0, 1, 1], [], []>} : vector<128x64xbf16>, vector<64x256xbf16>, vector<128x256xf32> -> vector<128x256xf32>
    %cst_121 = arith.constant dense<0.000000e+00> : vector<128x8xf32>
    %396 = tpu.matmul %395, %391, %cst_121 {dimension_numbers = #tpu.dot_dimension_numbers<[1], [0], [0], [1], [0, 0, 1, 1], [], []>} : vector<128x256xf32>, vector<256x8xf32>, vector<128x8xf32> -> vector<128x8xf32>
    %397 = vector.extract_strided_slice %396 {offsets = [0, 0], sizes = [128, 4], strides = [1, 1]} : vector<128x8xf32> to vector<128x4xf32>
    %398 = tpu.transpose %397, [1, 0] : vector<128x4xf32> -> vector<4x128xf32>
    %399 = arith.truncf %398 : vector<4x128xf32> to vector<4x128xbf16>
    %400 = vector.extract_strided_slice %396 {offsets = [0, 4], sizes = [128, 4], strides = [1, 1]} : vector<128x8xf32> to vector<128x4xf32>
    %401 = arith.truncf %400 : vector<128x4xf32> to vector<128x4xbf16>
    %402 = arith.truncf %395 : vector<128x256xf32> to vector<128x256xbf16>
    %cst_122 = arith.constant 0.000000e+00 : f32
    %403 = vector.broadcast %cst_122 : f32 to vector<128x64xf32>
    %404 = vector.extract_strided_slice %401 {offsets = [0, 0], sizes = [128, 1], strides = [1, 1]} : vector<128x4xbf16> to vector<128x1xbf16>
    %405 = vector.extract_strided_slice %399 {offsets = [0, 0], sizes = [1, 128], strides = [1, 1]} : vector<4x128xbf16> to vector<1x128xbf16>
    %406 = vector.broadcast %404 : vector<128x1xbf16> to vector<128x128xbf16>
    %407 = vector.broadcast %405 : vector<1x128xbf16> to vector<128x128xbf16>
    %408 = arith.addf %406, %407 : vector<128x128xbf16>
    %409 = arith.addf %408, %27 : vector<128x128xbf16>
    %cst_123 = arith.constant 2.001950e-01 : bf16
    %410 = vector.broadcast %cst_123 : bf16 to vector<128x128xbf16>
    %411 = arith.mulf %409, %410 : vector<128x128xbf16>
    %412 = arith.maximumf %409, %411 : vector<128x128xbf16>
    %cst_124 = arith.constant dense<0xFF80> : vector<128xbf16>
    %413 = vector.multi_reduction <maximumf>, %412, %cst_124 [1] : vector<128x128xbf16> to vector<128xbf16>
    %414 = vector.shape_cast %413 : vector<128xbf16> to vector<128x1xbf16>
    %415 = vector.broadcast %414 : vector<128x1xbf16> to vector<128x128xbf16>
    %416 = arith.subf %412, %415 : vector<128x128xbf16>
    %417 = math.exp %416 : vector<128x128xbf16>
    %418 = arith.extf %417 : vector<128x128xbf16> to vector<128x128xf32>
    %cst_125 = arith.constant dense<0.000000e+00> : vector<128xf32>
    %419 = vector.multi_reduction <add>, %418, %cst_125 [1] : vector<128x128xf32> to vector<128xf32>
    %420 = vector.shape_cast %419 : vector<128xf32> to vector<128x1xf32>
    %421 = tpu.reciprocal %420 {approx = true} : vector<128x1xf32> -> vector<128x1xf32>
    %422 = vector.extract_strided_slice %402 {offsets = [0, 0], sizes = [128, 64], strides = [1, 1]} : vector<128x256xbf16> to vector<128x64xbf16>
    %cst_126 = arith.constant dense<0.000000e+00> : vector<128x64xf32>
    %423 = tpu.matmul %417, %422, %cst_126 {dimension_numbers = #tpu.dot_dimension_numbers<[1], [0], [0], [1], [0, 0, 1, 1], [], []>} : vector<128x128xbf16>, vector<128x64xbf16>, vector<128x64xf32> -> vector<128x64xf32>
    %424 = vector.broadcast %421 : vector<128x1xf32> to vector<128x64xf32>
    %425 = arith.mulf %424, %423 : vector<128x64xf32>
    %426 = arith.addf %403, %425 : vector<128x64xf32>
    %427 = vector.extract_strided_slice %401 {offsets = [0, 1], sizes = [128, 1], strides = [1, 1]} : vector<128x4xbf16> to vector<128x1xbf16>
    %428 = vector.extract_strided_slice %399 {offsets = [1, 0], sizes = [1, 128], strides = [1, 1]} : vector<4x128xbf16> to vector<1x128xbf16>
    %429 = vector.broadcast %427 : vector<128x1xbf16> to vector<128x128xbf16>
    %430 = vector.broadcast %428 : vector<1x128xbf16> to vector<128x128xbf16>
    %431 = arith.addf %429, %430 : vector<128x128xbf16>
    %432 = arith.addf %431, %27 : vector<128x128xbf16>
    %cst_127 = arith.constant 2.001950e-01 : bf16
    %433 = vector.broadcast %cst_127 : bf16 to vector<128x128xbf16>
    %434 = arith.mulf %432, %433 : vector<128x128xbf16>
    %435 = arith.maximumf %432, %434 : vector<128x128xbf16>
    %cst_128 = arith.constant dense<0xFF80> : vector<128xbf16>
    %436 = vector.multi_reduction <maximumf>, %435, %cst_128 [1] : vector<128x128xbf16> to vector<128xbf16>
    %437 = vector.shape_cast %436 : vector<128xbf16> to vector<128x1xbf16>
    %438 = vector.broadcast %437 : vector<128x1xbf16> to vector<128x128xbf16>
    %439 = arith.subf %435, %438 : vector<128x128xbf16>
    %440 = math.exp %439 : vector<128x128xbf16>
    %441 = arith.extf %440 : vector<128x128xbf16> to vector<128x128xf32>
    %cst_129 = arith.constant dense<0.000000e+00> : vector<128xf32>
    %442 = vector.multi_reduction <add>, %441, %cst_129 [1] : vector<128x128xf32> to vector<128xf32>
    %443 = vector.shape_cast %442 : vector<128xf32> to vector<128x1xf32>
    %444 = tpu.reciprocal %443 {approx = true} : vector<128x1xf32> -> vector<128x1xf32>
    %445 = vector.extract_strided_slice %402 {offsets = [0, 64], sizes = [128, 64], strides = [1, 1]} : vector<128x256xbf16> to vector<128x64xbf16>
    %cst_130 = arith.constant dense<0.000000e+00> : vector<128x64xf32>
    %446 = tpu.matmul %440, %445, %cst_130 {dimension_numbers = #tpu.dot_dimension_numbers<[1], [0], [0], [1], [0, 0, 1, 1], [], []>} : vector<128x128xbf16>, vector<128x64xbf16>, vector<128x64xf32> -> vector<128x64xf32>
    %447 = vector.broadcast %444 : vector<128x1xf32> to vector<128x64xf32>
    %448 = arith.mulf %447, %446 : vector<128x64xf32>
    %449 = arith.addf %426, %448 : vector<128x64xf32>
    %450 = vector.extract_strided_slice %401 {offsets = [0, 2], sizes = [128, 1], strides = [1, 1]} : vector<128x4xbf16> to vector<128x1xbf16>
    %451 = vector.extract_strided_slice %399 {offsets = [2, 0], sizes = [1, 128], strides = [1, 1]} : vector<4x128xbf16> to vector<1x128xbf16>
    %452 = vector.broadcast %450 : vector<128x1xbf16> to vector<128x128xbf16>
    %453 = vector.broadcast %451 : vector<1x128xbf16> to vector<128x128xbf16>
    %454 = arith.addf %452, %453 : vector<128x128xbf16>
    %455 = arith.addf %454, %27 : vector<128x128xbf16>
    %cst_131 = arith.constant 2.001950e-01 : bf16
    %456 = vector.broadcast %cst_131 : bf16 to vector<128x128xbf16>
    %457 = arith.mulf %455, %456 : vector<128x128xbf16>
    %458 = arith.maximumf %455, %457 : vector<128x128xbf16>
    %cst_132 = arith.constant dense<0xFF80> : vector<128xbf16>
    %459 = vector.multi_reduction <maximumf>, %458, %cst_132 [1] : vector<128x128xbf16> to vector<128xbf16>
    %460 = vector.shape_cast %459 : vector<128xbf16> to vector<128x1xbf16>
    %461 = vector.broadcast %460 : vector<128x1xbf16> to vector<128x128xbf16>
    %462 = arith.subf %458, %461 : vector<128x128xbf16>
    %463 = math.exp %462 : vector<128x128xbf16>
    %464 = arith.extf %463 : vector<128x128xbf16> to vector<128x128xf32>
    %cst_133 = arith.constant dense<0.000000e+00> : vector<128xf32>
    %465 = vector.multi_reduction <add>, %464, %cst_133 [1] : vector<128x128xf32> to vector<128xf32>
    %466 = vector.shape_cast %465 : vector<128xf32> to vector<128x1xf32>
    %467 = tpu.reciprocal %466 {approx = true} : vector<128x1xf32> -> vector<128x1xf32>
    %468 = vector.extract_strided_slice %402 {offsets = [0, 128], sizes = [128, 64], strides = [1, 1]} : vector<128x256xbf16> to vector<128x64xbf16>
    %cst_134 = arith.constant dense<0.000000e+00> : vector<128x64xf32>
    %469 = tpu.matmul %463, %468, %cst_134 {dimension_numbers = #tpu.dot_dimension_numbers<[1], [0], [0], [1], [0, 0, 1, 1], [], []>} : vector<128x128xbf16>, vector<128x64xbf16>, vector<128x64xf32> -> vector<128x64xf32>
    %470 = vector.broadcast %467 : vector<128x1xf32> to vector<128x64xf32>
    %471 = arith.mulf %470, %469 : vector<128x64xf32>
    %472 = arith.addf %449, %471 : vector<128x64xf32>
    %473 = vector.extract_strided_slice %401 {offsets = [0, 3], sizes = [128, 1], strides = [1, 1]} : vector<128x4xbf16> to vector<128x1xbf16>
    %474 = vector.extract_strided_slice %399 {offsets = [3, 0], sizes = [1, 128], strides = [1, 1]} : vector<4x128xbf16> to vector<1x128xbf16>
    %475 = vector.broadcast %473 : vector<128x1xbf16> to vector<128x128xbf16>
    %476 = vector.broadcast %474 : vector<1x128xbf16> to vector<128x128xbf16>
    %477 = arith.addf %475, %476 : vector<128x128xbf16>
    %478 = arith.addf %477, %27 : vector<128x128xbf16>
    %cst_135 = arith.constant 2.001950e-01 : bf16
    %479 = vector.broadcast %cst_135 : bf16 to vector<128x128xbf16>
    %480 = arith.mulf %478, %479 : vector<128x128xbf16>
    %481 = arith.maximumf %478, %480 : vector<128x128xbf16>
    %cst_136 = arith.constant dense<0xFF80> : vector<128xbf16>
    %482 = vector.multi_reduction <maximumf>, %481, %cst_136 [1] : vector<128x128xbf16> to vector<128xbf16>
    %483 = vector.shape_cast %482 : vector<128xbf16> to vector<128x1xbf16>
    %484 = vector.broadcast %483 : vector<128x1xbf16> to vector<128x128xbf16>
    %485 = arith.subf %481, %484 : vector<128x128xbf16>
    %486 = math.exp %485 : vector<128x128xbf16>
    %487 = arith.extf %486 : vector<128x128xbf16> to vector<128x128xf32>
    %cst_137 = arith.constant dense<0.000000e+00> : vector<128xf32>
    %488 = vector.multi_reduction <add>, %487, %cst_137 [1] : vector<128x128xf32> to vector<128xf32>
    %489 = vector.shape_cast %488 : vector<128xf32> to vector<128x1xf32>
    %490 = tpu.reciprocal %489 {approx = true} : vector<128x1xf32> -> vector<128x1xf32>
    %491 = vector.extract_strided_slice %402 {offsets = [0, 192], sizes = [128, 64], strides = [1, 1]} : vector<128x256xbf16> to vector<128x64xbf16>
    %cst_138 = arith.constant dense<0.000000e+00> : vector<128x64xf32>
    %492 = tpu.matmul %486, %491, %cst_138 {dimension_numbers = #tpu.dot_dimension_numbers<[1], [0], [0], [1], [0, 0, 1, 1], [], []>} : vector<128x128xbf16>, vector<128x64xbf16>, vector<128x64xf32> -> vector<128x64xf32>
    %493 = vector.broadcast %490 : vector<128x1xf32> to vector<128x64xf32>
    %494 = arith.mulf %493, %492 : vector<128x64xf32>
    %495 = arith.addf %472, %494 : vector<128x64xf32>
    %cst_139 = arith.constant 2.500000e-01 : f32
    %496 = vector.broadcast %cst_139 : f32 to vector<128x64xf32>
    %497 = arith.mulf %495, %496 : vector<128x64xf32>
    %498 = vector.broadcast %393 : vector<1x64xf32> to vector<128x64xf32>
    %499 = arith.addf %497, %498 : vector<128x64xf32>
    %cst_140 = arith.constant 0.000000e+00 : f32
    %500 = vector.broadcast %cst_140 : f32 to vector<128x64xf32>
    %501 = arith.cmpf ogt, %499, %500 : vector<128x64xf32>
    %cst_141 = arith.constant 0.000000e+00 : f32
    %502 = vector.broadcast %cst_141 : f32 to vector<128x64xf32>
    %503 = arith.minimumf %499, %502 : vector<128x64xf32>
    %504 = math.exp %503 : vector<128x64xf32>
    %cst_142 = arith.constant 1.000000e+00 : f32
    %505 = vector.broadcast %cst_142 : f32 to vector<128x64xf32>
    %506 = arith.subf %504, %505 : vector<128x64xf32>
    %507 = arith.select %501, %499, %506 : vector<128x64xi1>, vector<128x64xf32>
    %c0_143 = arith.constant 0 : index
    %c0_144 = arith.constant 0 : index
    %508 = vector.load %arg9[%c0_143, %c0_144] : memref<64x64xf32, #tpu.memory_space<vmem>>, vector<64x64xf32>
    %cst_145 = arith.constant dense<0.000000e+00> : vector<128x64xf32>
    %509 = tpu.matmul %507, %508, %cst_145 {dimension_numbers = #tpu.dot_dimension_numbers<[1], [0], [0], [1], [0, 0, 1, 1], [], []>} : vector<128x64xf32>, vector<64x64xf32>, vector<128x64xf32> -> vector<128x64xf32>
    %c0_146 = arith.constant 0 : index
    %c0_147 = arith.constant 0 : index
    %510 = vector.load %arg10[%c0_146, %c0_147] : memref<1x64xf32, #tpu.memory_space<vmem>>, vector<1x64xf32>
    %511 = vector.broadcast %510 : vector<1x64xf32> to vector<128x64xf32>
    %512 = arith.addf %509, %511 : vector<128x64xf32>
    %cst_148 = arith.constant 0.000000e+00 : f32
    %513 = vector.broadcast %cst_148 : f32 to vector<128x64xf32>
    %514 = arith.cmpf ogt, %512, %513 : vector<128x64xf32>
    %cst_149 = arith.constant 0.000000e+00 : f32
    %515 = vector.broadcast %cst_149 : f32 to vector<128x64xf32>
    %516 = arith.minimumf %512, %515 : vector<128x64xf32>
    %517 = math.exp %516 : vector<128x64xf32>
    %cst_150 = arith.constant 1.000000e+00 : f32
    %518 = vector.broadcast %cst_150 : f32 to vector<128x64xf32>
    %519 = arith.subf %517, %518 : vector<128x64xf32>
    %520 = arith.select %514, %512, %519 : vector<128x64xi1>, vector<128x64xf32>
    %c0_151 = arith.constant 0 : index
    %c0_152 = arith.constant 0 : index
    %521 = vector.load %arg11[%c0_151, %c0_152] : memref<64x32xf32, #tpu.memory_space<vmem>>, vector<64x32xf32>
    %cst_153 = arith.constant dense<0.000000e+00> : vector<128x32xf32>
    %522 = tpu.matmul %520, %521, %cst_153 {dimension_numbers = #tpu.dot_dimension_numbers<[1], [0], [0], [1], [0, 0, 1, 1], [], []>} : vector<128x64xf32>, vector<64x32xf32>, vector<128x32xf32> -> vector<128x32xf32>
    %c0_154 = arith.constant 0 : index
    %c0_155 = arith.constant 0 : index
    %523 = vector.load %arg12[%c0_154, %c0_155] : memref<1x32xf32, #tpu.memory_space<vmem>>, vector<1x32xf32>
    %524 = vector.broadcast %523 : vector<1x32xf32> to vector<128x32xf32>
    %525 = arith.addf %522, %524 : vector<128x32xf32>
    %cst_156 = arith.constant 0.000000e+00 : f32
    %526 = vector.broadcast %cst_156 : f32 to vector<128x32xf32>
    %527 = arith.cmpf ogt, %525, %526 : vector<128x32xf32>
    %cst_157 = arith.constant 0.000000e+00 : f32
    %528 = vector.broadcast %cst_157 : f32 to vector<128x32xf32>
    %529 = arith.minimumf %525, %528 : vector<128x32xf32>
    %530 = math.exp %529 : vector<128x32xf32>
    %cst_158 = arith.constant 1.000000e+00 : f32
    %531 = vector.broadcast %cst_158 : f32 to vector<128x32xf32>
    %532 = arith.subf %530, %531 : vector<128x32xf32>
    %533 = arith.select %527, %525, %532 : vector<128x32xi1>, vector<128x32xf32>
    %c0_159 = arith.constant 0 : index
    %c0_160 = arith.constant 0 : index
    %534 = vector.load %arg13[%c0_159, %c0_160] : memref<32x8xf32, #tpu.memory_space<vmem>>, vector<32x8xf32>
    %cst_161 = arith.constant dense<0.000000e+00> : vector<128x8xf32>
    %535 = tpu.matmul %533, %534, %cst_161 {dimension_numbers = #tpu.dot_dimension_numbers<[1], [0], [0], [1], [0, 0, 1, 1], [], []>} : vector<128x32xf32>, vector<32x8xf32>, vector<128x8xf32> -> vector<128x8xf32>
    %c0_162 = arith.constant 0 : index
    %c0_163 = arith.constant 0 : index
    %536 = vector.load %arg14[%c0_162, %c0_163] : memref<1x8xf32, #tpu.memory_space<vmem>>, vector<1x8xf32>
    %537 = vector.broadcast %536 : vector<1x8xf32> to vector<128x8xf32>
    %538 = arith.addf %535, %537 : vector<128x8xf32>
    %c0_164 = arith.constant 0 : index
    %c0_165 = arith.constant 0 : index
    %539 = vector.load %arg15[%c0_164, %c0_165] : memref<128x8xf32, #tpu.memory_space<vmem>>, vector<128x8xf32>
    tpu.vector_store %arg15[%c0_164, %c0_165], %538 {strides = array<i32>} : memref<128x8xf32, #tpu.memory_space<vmem>>, vector<128x8xf32>,
    return
  }
}

</mosaic_0001>

<llo_original>
// kernel: tpu_custom_call.1
$region0: #{tpu_custom_call.1}
  #allocation0 [shape = 'u32[]', space=smem, size = 0x4, offset = 0x4, fixed_abs, tag = 'smem constant byte address 0x4 - core index']
  #allocation1 [shape = 'u32[144,128]{1,0:T(1,128)}', space=vmem, size = 0x12000, scoped, tag = 'internal scratch']
  #allocation2 [shape = 'bf16[128,128]{1,0:T(8,128)(2,1)}', space=vmem, size = 0x8000, scoped, tag = 'scratch operand']
  #allocation3 [shape = 's32[1]{0}', space=sflag, size = 0x4, scoped, tag = 'scratch operand']
  #allocation4 [shape = 's32[]', space=sflag, size = 0x4, offset = 0, fixed_abs, tag = 'sflag constant byte address 0x0 - dummy sync flag']
  %s0 = inlined_call_operand.vmem [shape: f32[128,8], index: 0, kind: input, shape index: {}]
  %s1 = inlined_call_operand.vmem [shape: bf16[128,128], index: 1, kind: input, shape index: {}]
  %s2 = inlined_call_operand.vmem [shape: f32[8,64], index: 2, kind: input, shape index: {}]
  %s3 = inlined_call_operand.vmem [shape: f32[1,64], index: 3, kind: input, shape index: {}]
  %s4 = inlined_call_operand.vmem [shape: f32[64,64], index: 4, kind: input, shape index: {}]
  %s5 = inlined_call_operand.vmem [shape: f32[1,64], index: 5, kind: input, shape index: {}]
  %s6 = inlined_call_operand.vmem [shape: bf16[4,64,256], index: 6, kind: input, shape index: {}]
  %s7 = inlined_call_operand.vmem [shape: f32[4,256,8], index: 7, kind: input, shape index: {}]
  %s8 = inlined_call_operand.vmem [shape: f32[4,1,64], index: 8, kind: input, shape index: {}]
  %s9 = inlined_call_operand.vmem [shape: f32[64,64], index: 9, kind: input, shape index: {}]
  %s10 = inlined_call_operand.vmem [shape: f32[1,64], index: 10, kind: input, shape index: {}]
  %s11 = inlined_call_operand.vmem [shape: f32[64,32], index: 11, kind: input, shape index: {}]
  %s12 = inlined_call_operand.vmem [shape: f32[1,32], index: 12, kind: input, shape index: {}]
  %s13 = inlined_call_operand.vmem [shape: f32[32,8], index: 13, kind: input, shape index: {}]
  %s14 = inlined_call_operand.vmem [shape: f32[1,8], index: 14, kind: input, shape index: {}]
  %s15 = inlined_call_operand.vmem [shape: f32[128,8], index: 15, kind: output, shape index: {}]
  %s16 = sld [smem:[#allocation0]]
  $region100: #{tpu_custom_call.1} parent=0
    _
  %s18 = ssub.s32 1, %s16
  %s19 = scalar_select 0, %s18, %s16
  // Predicated region
  $region2: #{tpu_custom_call.1} parent=0 // pred_check
    _
  $region3: #{tpu_custom_call.1} parent=0 // pred_check_branch
    %21 = sbr.rel (0) target = $region5
  $region4: #{tpu_custom_call.1} parent=0 // pred_region
    _
  $region5: #{tpu_custom_call.1} parent=0 // pred_fallthru
    _
  // Predicated region
  $region6: #{tpu_custom_call.1} parent=0 // pred_check
    _
  $region7: #{tpu_custom_call.1} parent=0 // pred_check_branch
    %23 = sbr.rel (0) target = $region9
  $region8: #{tpu_custom_call.1} parent=0 // pred_region
    _
  $region9: #{tpu_custom_call.1} parent=0 // pred_fallthru
    _
  // Predicated region
  $region10: #{tpu_custom_call.1} parent=0 // pred_check
    _
  $region11: #{tpu_custom_call.1} parent=0 // pred_check_branch
    %25 = sbr.rel (0) target = $region13
  $region12: #{tpu_custom_call.1} parent=0 // pred_region
    _
  $region13: #{tpu_custom_call.1} parent=0 // pred_fallthru
    _
  // Predicated region
  $region14: #{tpu_custom_call.1} parent=0 // pred_check
    _
  $region15: #{tpu_custom_call.1} parent=0 // pred_check_branch
    %27 = sbr.rel (0) target = $region17
  $region16: #{tpu_custom_call.1} parent=0 // pred_region
    _
  $region17: #{tpu_custom_call.1} parent=0 // pred_fallthru
    _
  // Predicated region
  $region18: #{tpu_custom_call.1} parent=0 // pred_check
    _
  $region19: #{tpu_custom_call.1} parent=0 // pred_check_branch
    %29 = sbr.rel (0) target = $region21
  $region20: #{tpu_custom_call.1} parent=0 // pred_region
    _
  $region21: #{tpu_custom_call.1} parent=0 // pred_fallthru
    _
  // Predicated region
  $region22: #{tpu_custom_call.1} parent=0 // pred_check
    _
  $region23: #{tpu_custom_call.1} parent=0 // pred_check_branch
    %31 = sbr.rel (0) target = $region25
  $region24: #{tpu_custom_call.1} parent=0 // pred_region
    _
  $region25: #{tpu_custom_call.1} parent=0 // pred_fallthru
    _
  // Predicated region
  $region26: #{tpu_custom_call.1} parent=0 // pred_check
    _
  $region27: #{tpu_custom_call.1} parent=0 // pred_check_branch
    %33 = sbr.rel (0) target = $region29
  $region28: #{tpu_custom_call.1} parent=0 // pred_region
    _
  $region29: #{tpu_custom_call.1} parent=0 // pred_fallthru
    _
  // Predicated region
  $region30: #{tpu_custom_call.1} parent=0 // pred_check
    _
  $region31: #{tpu_custom_call.1} parent=0 // pred_check_branch
    %35 = sbr.rel (0) target = $region33
  $region32: #{tpu_custom_call.1} parent=0 // pred_region
    _
  $region33: #{tpu_custom_call.1} parent=0 // pred_fallthru
    _
  // Predicated region
  $region34: #{tpu_custom_call.1} parent=0 // pred_check
    _
  $region35: #{tpu_custom_call.1} parent=0 // pred_check_branch
    %37 = sbr.rel (0) target = $region37
  $region36: #{tpu_custom_call.1} parent=0 // pred_region
    _
  $region37: #{tpu_custom_call.1} parent=0 // pred_fallthru
    _
  // Predicated region
  $region38: #{tpu_custom_call.1} parent=0 // pred_check
    _
  $region39: #{tpu_custom_call.1} parent=0 // pred_check_branch
    %39 = sbr.rel (0) target = $region41
  $region40: #{tpu_custom_call.1} parent=0 // pred_region
    _
  $region41: #{tpu_custom_call.1} parent=0 // pred_fallthru
    _
  // Predicated region
  $region42: #{tpu_custom_call.1} parent=0 // pred_check
    _
  $region43: #{tpu_custom_call.1} parent=0 // pred_check_branch
    %41 = sbr.rel (0) target = $region45
  $region44: #{tpu_custom_call.1} parent=0 // pred_region
    _
  $region45: #{tpu_custom_call.1} parent=0 // pred_fallthru
    _
  // Predicated region
  $region46: #{tpu_custom_call.1} parent=0 // pred_check
    _
  $region47: #{tpu_custom_call.1} parent=0 // pred_check_branch
    %43 = sbr.rel (0) target = $region49
  $region48: #{tpu_custom_call.1} parent=0 // pred_region
    _
  $region49: #{tpu_custom_call.1} parent=0 // pred_fallthru
    _
  // Predicated region
  $region50: #{tpu_custom_call.1} parent=0 // pred_check
    _
  $region51: #{tpu_custom_call.1} parent=0 // pred_check_branch
    %45 = sbr.rel (0) target = $region53
  $region52: #{tpu_custom_call.1} parent=0 // pred_region
    _
  $region53: #{tpu_custom_call.1} parent=0 // pred_fallthru
    _
  // Predicated region
  $region54: #{tpu_custom_call.1} parent=0 // pred_check
    _
  $region55: #{tpu_custom_call.1} parent=0 // pred_check_branch
    %47 = sbr.rel (0) target = $region57
  $region56: #{tpu_custom_call.1} parent=0 // pred_region
    _
  $region57: #{tpu_custom_call.1} parent=0 // pred_fallthru
    _
  %p51 = scmp.lt.u32.totalorder 64, 8
  %p52 = pneg %p51
  // Predicated region
  $region58: #{tpu_custom_call.1} parent=0 // pred_check
    _
  $region59: #{tpu_custom_call.1} parent=0 // pred_check_branch
    %54 = sbr.rel (%p51) target = $region61
  $region60: #{tpu_custom_call.1} parent=0 // pred_region
    %s70 = sand.u32 64, 7
    %p71 = scmp.eq.s32.totalorder %s70, 0
    // Predicated region
    $region73: #{tpu_custom_call.1} parent=60 // pred_check
      %p72 = pneg %p71
    $region74: #{tpu_custom_call.1} parent=60 // pred_check_branch
      %74 = sbr.rel (%p72) target = $region76
    $region75: #{tpu_custom_call.1} parent=60 // pred_region
      loop: start=0, step=1, limit=1
      $region77: #{tpu_custom_call.1} parent=75 // loop_pre_header
        _
      $region78: #{tpu_custom_call.1} parent=75 // loop_header
        %s76 = sphi 0, %s80
        %p77 = scmp.ge.s32.totalorder %s76, 1
        %s81 = sphi %s1, %s1
        %s82 = sphi [#allocation2], [#allocation2]
      $region79: #{tpu_custom_call.1} parent=75 // loop_header_branch
        %79 = sbr.rel (%p77) target = $region83
      $region80: #{tpu_custom_call.1} parent=75 // loop_body
        %v83 = vld [vmem:[%s81] sm:$0xff]
        %84 = vst [vmem:[%s82] sm:$0xff] %v83
        %v85 = vld [vmem:[%s81 + $0x8] sm:$0xff]
        %86 = vst [vmem:[%s82 + $0x8] sm:$0xff] %v85
        %v87 = vld [vmem:[%s81 + $0x10] sm:$0xff]
        %88 = vst [vmem:[%s82 + $0x10] sm:$0xff] %v87
        %v89 = vld [vmem:[%s81 + $0x18] sm:$0xff]
        %90 = vst [vmem:[%s82 + $0x18] sm:$0xff] %v89
        %v91 = vld [vmem:[%s81 + $0x20] sm:$0xff]
        %92 = vst [vmem:[%s82 + $0x20] sm:$0xff] %v91
        %v93 = vld [vmem:[%s81 + $0x28] sm:$0xff]
        %94 = vst [vmem:[%s82 + $0x28] sm:$0xff] %v93
        %v95 = vld [vmem:[%s81 + $0x30] sm:$0xff]
        %96 = vst [vmem:[%s82 + $0x30] sm:$0xff] %v95
        %v97 = vld [vmem:[%s81 + $0x38] sm:$0xff]
        %98 = vst [vmem:[%s82 + $0x38] sm:$0xff] %v97
      $region81: #{tpu_custom_call.1} parent=75 // loop_footer
        %s80 = sadd.s32 1, %s76
      $region82: #{tpu_custom_call.1} parent=75 // loop_footer_branch
        %75 = sbr.rel target = $region78
      $region83: #{tpu_custom_call.1} parent=75 // loop_exit
        _
    $region76: #{tpu_custom_call.1} parent=60 // pred_fallthru
      _
    %p99 = pneg %p71
    // Predicated region
    $region84: #{tpu_custom_call.1} parent=60 // pred_check
      _
    $region85: #{tpu_custom_call.1} parent=60 // pred_check_branch
      %101 = sbr.rel (%p71) target = $region87
    $region86: #{tpu_custom_call.1} parent=60 // pred_region
      %s102 = sand.u32 64, 7
    $region87: #{tpu_custom_call.1} parent=60 // pred_fallthru
      _
  $region61: #{tpu_custom_call.1} parent=0 // pred_fallthru
    _
  // Predicated region
  $region62: #{tpu_custom_call.1} parent=0 // pred_check
    %p55 = pneg %p51
  $region63: #{tpu_custom_call.1} parent=0 // pred_check_branch
    %57 = sbr.rel (%p55) target = $region65
  $region64: #{tpu_custom_call.1} parent=0 // pred_region
    %s58 = sshll.u32 1, 64
    %s59 = ssub.s32 %s58, 1
    loop: start=0, step=1, limit=1
    $region66: #{tpu_custom_call.1} parent=64 // loop_pre_header
      _
    $region67: #{tpu_custom_call.1} parent=64 // loop_header
      %s61 = sphi 0, %s65
      %p62 = scmp.ge.s32.totalorder %s61, 1
      %s66 = sphi %s1, %s1
      %s67 = sphi [#allocation2], [#allocation2]
    $region68: #{tpu_custom_call.1} parent=64 // loop_header_branch
      %64 = sbr.rel (%p62) target = $region72
    $region69: #{tpu_custom_call.1} parent=64 // loop_body
      %v68 = vld [vmem:[%s66] sm:%s59]
      %69 = vst [vmem:[%s67] sm:%s59] %v68
    $region70: #{tpu_custom_call.1} parent=64 // loop_footer
      %s65 = sadd.s32 1, %s61
    $region71: #{tpu_custom_call.1} parent=64 // loop_footer_branch
      %60 = sbr.rel target = $region67
    $region72: #{tpu_custom_call.1} parent=64 // loop_exit
      _
  $region65: #{tpu_custom_call.1} parent=0 // pred_fallthru
    _
  // Predicated region
  $region88: #{tpu_custom_call.1} parent=0 // pred_check
    _
  $region89: #{tpu_custom_call.1} parent=0 // pred_check_branch
    %105 = sbr.rel (0) target = $region91
  $region90: #{tpu_custom_call.1} parent=0 // pred_region
    %106 = vsyncadd [#allocation3], 1024
  $region91: #{tpu_custom_call.1} parent=0 // pred_fallthru
    _
  %v107 = vld [vmem:[%s0] sm:$0xff]
  %v108 = vld [vmem:[%s0 + $0x8] sm:$0xff]
  %v109 = vld [vmem:[%s0 + $0x10] sm:$0xff]
  %v110 = vld [vmem:[%s0 + $0x18] sm:$0xff]
  %v111 = vld [vmem:[%s0 + $0x20] sm:$0xff]
  %v112 = vld [vmem:[%s0 + $0x28] sm:$0xff]
  %v113 = vld [vmem:[%s0 + $0x30] sm:$0xff]
  %v114 = vld [vmem:[%s0 + $0x38] sm:$0xff]
  %v115 = vld [vmem:[%s0 + $0x40] sm:$0xff]
  %v116 = vld [vmem:[%s0 + $0x48] sm:$0xff]
  %v117 = vld [vmem:[%s0 + $0x50] sm:$0xff]
  %v118 = vld [vmem:[%s0 + $0x58] sm:$0xff]
  %v119 = vld [vmem:[%s0 + $0x60] sm:$0xff]
  %v120 = vld [vmem:[%s0 + $0x68] sm:$0xff]
  %v121 = vld [vmem:[%s0 + $0x70] sm:$0xff]
  %v122 = vld [vmem:[%s0 + $0x78] sm:$0xff]
  %v123 = vld [vmem:[%s2] sm:$0xff]
  %v124 = vld [vmem:[%s3] sm:$0x1]
  %v126 = vlaneseq
  %v127 = vshrl.u32 %v126, 7
  %v128 = vsub.s32 0, %v127
  %v129 = vrot.slane %v124, %v128
  %vm131 = vcmask 64512
  %v133 = vsel %vm131, %v107, 0
  %v136 = vsel %vm131, %v108, 0
  %v139 = vsel %vm131, %v109, 0
  %v142 = vsel %vm131, %v110, 0
  %v145 = vsel %vm131, %v111, 0
  %v148 = vsel %vm131, %v112, 0
  %v151 = vsel %vm131, %v113, 0
  %v154 = vsel %vm131, %v114, 0
  %v157 = vsel %vm131, %v115, 0
  %v160 = vsel %vm131, %v116, 0
  %v163 = vsel %vm131, %v117, 0
  %v166 = vsel %vm131, %v118, 0
  %v169 = vsel %vm131, %v119, 0
  %v172 = vsel %vm131, %v120, 0
  %v175 = vsel %vm131, %v121, 0
  %v178 = vsel %vm131, %v122, 0
  %180 = vmatprep.subr.mxu0 0.0
  %181 = vmatpush1.msra.mxu0 0.0
  %182 = vmatprep.subr.mxu0 0.0
  %183 = vmatpush1.msra.mxu0 0.0
  %184 = vmatprep.subr.mxu0 0.0
  %185 = vmatpush1.msra.mxu0 0.0
  %186 = vmatprep.subr.mxu0 0.0
  %187 = vmatpush1.msra.mxu0 0.0
  %188 = vmatprep.subr.mxu0 0.0
  %189 = vmatpush1.msra.mxu0 0.0
  %190 = vmatprep.subr.mxu0 0.0
  %191 = vmatpush1.msra.mxu0 0.0
  %192 = vmatprep.subr.mxu0 0.0
  %193 = vmatpush1.msra.mxu0 0.0
  %194 = vmatprep.subr.mxu0 0.0
  %195 = vmatpush1.msra.mxu0 0.0
  %196 = vmatprep.subr.mxu0 0.0
  %197 = vmatpush1.msra.mxu0 0.0
  %198 = vmatprep.subr.mxu0 0.0
  %199 = vmatpush1.msra.mxu0 0.0
  %200 = vmatprep.subr.mxu0 0.0
  %201 = vmatpush1.msra.mxu0 0.0
  %202 = vmatprep.subr.mxu0 0.0
  %203 = vmatpush1.msra.mxu0 0.0
  %204 = vmatprep.subr.mxu0 0.0
  %205 = vmatpush1.msra.mxu0 0.0
  %206 = vmatprep.subr.mxu0 0.0
  %207 = vmatpush1.msra.mxu0 0.0
  %208 = vmatprep.subr.mxu0 0.0
  %209 = vmatpush1.msra.mxu0 0.0
  %210 = vmatprep.subr.mxu0 0.0
  %211 = vmatpush1.msra.mxu0 %v123
  %212 = vmatprep.subr.mxu0 0.0
  %213 = vmatpush2.msra.mxu0 0.0
  %214 = vmatprep.subr.mxu0 0.0
  %215 = vmatpush2.msra.mxu0 0.0
  %216 = vmatprep.subr.mxu0 0.0
  %217 = vmatpush2.msra.mxu0 0.0
  %218 = vmatprep.subr.mxu0 0.0
  %219 = vmatpush2.msra.mxu0 0.0
  %220 = vmatprep.subr.mxu0 0.0
  %221 = vmatpush2.msra.mxu0 0.0
  %222 = vmatprep.subr.mxu0 0.0
  %223 = vmatpush2.msra.mxu0 0.0
  %224 = vmatprep.subr.mxu0 0.0
  %225 = vmatpush2.msra.mxu0 0.0
  %226 = vmatprep.subr.mxu0 0.0
  %227 = vmatpush2.msra.mxu0 0.0
  %228 = vmatprep.subr.mxu0 0.0
  %229 = vmatpush2.msra.mxu0 0.0
  %230 = vmatprep.subr.mxu0 0.0
  %231 = vmatpush2.msra.mxu0 0.0
  %232 = vmatprep.subr.mxu0 0.0
  %233 = vmatpush2.msra.mxu0 0.0
  %234 = vmatprep.subr.mxu0 0.0
  %235 = vmatpush2.msra.mxu0 0.0
  %236 = vmatprep.subr.mxu0 0.0
  %237 = vmatpush2.msra.mxu0 0.0
  %238 = vmatprep.subr.mxu0 0.0
  %239 = vmatpush2.msra.mxu0 0.0
  %240 = vmatprep.subr.mxu0 0.0
  %241 = vmatpush2.msra.mxu0 0.0
  %242 = vmatprep.subr.mxu0 0.0
  %243 = vmatpush2.msra.mxu0 0.0
  %244 = vmatprep.mubr.f32.mxu0 0.0
  %245 = vmatmul.mubr.f32.gmra.mxu0 %v133
  %v246 = vpop.f32.mrf.mxu0
  %v247 = vadd.f32 %v129, %v246
  %v248 = vpop.f32.mrf.mxu0
  %249 = vmatprep.mubr.f32.mxu0 0.0
  %250 = vmatmul.mubr.f32.gmra.mxu0 %v136
  %v251 = vpop.f32.mrf.mxu0
  %v252 = vadd.f32 %v129, %v251
  %v253 = vpop.f32.mrf.mxu0
  %254 = vmatprep.mubr.f32.mxu0 0.0
  %255 = vmatmul.mubr.f32.gmra.mxu0 %v139
  %v256 = vpop.f32.mrf.mxu0
  %v257 = vadd.f32 %v129, %v256
  %v258 = vpop.f32.mrf.mxu0
  %259 = vmatprep.mubr.f32.mxu0 0.0
  %260 = vmatmul.mubr.f32.gmra.mxu0 %v142
  %v261 = vpop.f32.mrf.mxu0
  %v262 = vadd.f32 %v129, %v261
  %v263 = vpop.f32.mrf.mxu0
  %264 = vmatprep.mubr.f32.mxu0 0.0
  %265 = vmatmul.mubr.f32.gmra.mxu0 %v145
  %v266 = vpop.f32.mrf.mxu0
  %v267 = vadd.f32 %v129, %v266
  %v268 = vpop.f32.mrf.mxu0
  %269 = vmatprep.mubr.f32.mxu0 0.0
  %270 = vmatmul.mubr.f32.gmra.mxu0 %v148
  %v271 = vpop.f32.mrf.mxu0
  %v272 = vadd.f32 %v129, %v271
  %v273 = vpop.f32.mrf.mxu0
  %274 = vmatprep.mubr.f32.mxu0 0.0
  %275 = vmatmul.mubr.f32.gmra.mxu0 %v151
  %v276 = vpop.f32.mrf.mxu0
  %v277 = vadd.f32 %v129, %v276
  %v278 = vpop.f32.mrf.mxu0
  %279 = vmatprep.mubr.f32.mxu0 0.0
  %280 = vmatmul.mubr.f32.gmra.mxu0 %v154
  %v281 = vpop.f32.mrf.mxu0
  %v282 = vadd.f32 %v129, %v281
  %v283 = vpop.f32.mrf.mxu0
  %284 = vmatprep.mubr.f32.mxu0 0.0
  %285 = vmatmul.mubr.f32.gmra.mxu0 %v157
  %v286 = vpop.f32.mrf.mxu0
  %v287 = vadd.f32 %v129, %v286
  %v288 = vpop.f32.mrf.mxu0
  %289 = vmatprep.mubr.f32.mxu0 0.0
  %290 = vmatmul.mubr.f32.gmra.mxu0 %v160
  %v291 = vpop.f32.mrf.mxu0
  %v292 = vadd.f32 %v129, %v291
  %v293 = vpop.f32.mrf.mxu0
  %294 = vmatprep.mubr.f32.mxu0 0.0
  %295 = vmatmul.mubr.f32.gmra.mxu0 %v163
  %v296 = vpop.f32.mrf.mxu0
  %v297 = vadd.f32 %v129, %v296
  %v298 = vpop.f32.mrf.mxu0
  %299 = vmatprep.mubr.f32.mxu0 0.0
  %300 = vmatmul.mubr.f32.gmra.mxu0 %v166
  %v301 = vpop.f32.mrf.mxu0
  %v302 = vadd.f32 %v129, %v301
  %v303 = vpop.f32.mrf.mxu0
  %304 = vmatprep.mubr.f32.mxu0 0.0
  %305 = vmatmul.mubr.f32.gmra.mxu0 %v169
  %v306 = vpop.f32.mrf.mxu0
  %v307 = vadd.f32 %v129, %v306
  %v308 = vpop.f32.mrf.mxu0
  %309 = vmatprep.mubr.f32.mxu0 0.0
  %310 = vmatmul.mubr.f32.gmra.mxu0 %v172
  %v311 = vpop.f32.mrf.mxu0
  %v312 = vadd.f32 %v129, %v311
  %v313 = vpop.f32.mrf.mxu0
  %314 = vmatprep.mubr.f32.mxu0 0.0
  %315 = vmatmul.mubr.f32.gmra.mxu0 %v175
  %v316 = vpop.f32.mrf.mxu0
  %v317 = vadd.f32 %v129, %v316
  %v318 = vpop.f32.mrf.mxu0
  %319 = vmatprep.mubr.f32.mxu0 0.0
  %320 = vmatmul.mubr.f32.gmra.mxu0 %v178
  %v321 = vpop.f32.mrf.mxu0
  %v322 = vadd.f32 %v129, %v321
  %v323 = vpop.f32.mrf.mxu0
  %324 = vdwg.mxu0
  %vm325 = vcmp.gt.f32.partialorder %v247, 0.0
  %vm326 = vcmp.gt.f32.partialorder %v252, 0.0
  %vm327 = vcmp.gt.f32.partialorder %v257, 0.0
  %vm328 = vcmp.gt.f32.partialorder %v262, 0.0
  %vm329 = vcmp.gt.f32.partialorder %v267, 0.0
  %vm330 = vcmp.gt.f32.partialorder %v272, 0.0
  %vm331 = vcmp.gt.f32.partialorder %v277, 0.0
  %vm332 = vcmp.gt.f32.partialorder %v282, 0.0
  %vm333 = vcmp.gt.f32.partialorder %v287, 0.0
  %vm334 = vcmp.gt.f32.partialorder %v292, 0.0
  %vm335 = vcmp.gt.f32.partialorder %v297, 0.0
  %vm336 = vcmp.gt.f32.partialorder %v302, 0.0
  %vm337 = vcmp.gt.f32.partialorder %v307, 0.0
  %vm338 = vcmp.gt.f32.partialorder %v312, 0.0
  %vm339 = vcmp.gt.f32.partialorder %v317, 0.0
  %vm340 = vcmp.gt.f32.partialorder %v322, 0.0
  %v341 = vmin.f32 %v247, 0.0
  %v342 = vmin.f32 %v252, 0.0
  %v343 = vmin.f32 %v257, 0.0
  %v344 = vmin.f32 %v262, 0.0
  %v345 = vmin.f32 %v267, 0.0
  %v346 = vmin.f32 %v272, 0.0
  %v347 = vmin.f32 %v277, 0.0
  %v348 = vmin.f32 %v282, 0.0
  %v349 = vmin.f32 %v287, 0.0
  %v350 = vmin.f32 %v292, 0.0
  %v351 = vmin.f32 %v297, 0.0
  %v352 = vmin.f32 %v302, 0.0
  %v353 = vmin.f32 %v307, 0.0
  %v354 = vmin.f32 %v312, 0.0
  %v355 = vmin.f32 %v317, 0.0
  %v356 = vmin.f32 %v322, 0.0
  %v357 = vmul.f32 %v341, 1.442695
  %v358 = vpow.pop %v357
  %v359 = vmul.f32 %v342, 1.442695
  %v360 = vpow.pop %v359
  %v361 = vmul.f32 %v343, 1.442695
  %v362 = vpow.pop %v361
  %v363 = vmul.f32 %v344, 1.442695
  %v364 = vpow.pop %v363
  %v365 = vmul.f32 %v345, 1.442695
  %v366 = vpow.pop %v365
  %v367 = vmul.f32 %v346, 1.442695
  %v368 = vpow.pop %v367
  %v369 = vmul.f32 %v347, 1.442695
  %v370 = vpow.pop %v369
  %v371 = vmul.f32 %v348, 1.442695
  %v372 = vpow.pop %v371
  %v373 = vmul.f32 %v349, 1.442695
  %v374 = vpow.pop %v373
  %v375 = vmul.f32 %v350, 1.442695
  %v376 = vpow.pop %v375
  %v377 = vmul.f32 %v351, 1.442695
  %v378 = vpow.pop %v377
  %v379 = vmul.f32 %v352, 1.442695
  %v380 = vpow.pop %v379
  %v381 = vmul.f32 %v353, 1.442695
  %v382 = vpow.pop %v381
  %v383 = vmul.f32 %v354, 1.442695
  %v384 = vpow.pop %v383
  %v385 = vmul.f32 %v355, 1.442695
  %v386 = vpow.pop %v385
  %v387 = vmul.f32 %v356, 1.442695
  %v388 = vpow.pop %v387
  %v389 = vsub.f32 %v358, 1.0
  %v390 = vsub.f32 %v360, 1.0
  %v391 = vsub.f32 %v362, 1.0
  %v392 = vsub.f32 %v364, 1.0
  %v393 = vsub.f32 %v366, 1.0
  %v394 = vsub.f32 %v368, 1.0
  %v395 = vsub.f32 %v370, 1.0
  %v396 = vsub.f32 %v372, 1.0
  %v397 = vsub.f32 %v374, 1.0
  %v398 = vsub.f32 %v376, 1.0
  %v399 = vsub.f32 %v378, 1.0
  %v400 = vsub.f32 %v380, 1.0
  %v401 = vsub.f32 %v382, 1.0
  %v402 = vsub.f32 %v384, 1.0
  %v403 = vsub.f32 %v386, 1.0
  %v404 = vsub.f32 %v388, 1.0
  %v405 = vsel %vm325, %v247, %v389
  %v406 = vsel %vm326, %v252, %v390
  %v407 = vsel %vm327, %v257, %v391
  %v408 = vsel %vm328, %v262, %v392
  %v409 = vsel %vm329, %v267, %v393
  %v410 = vsel %vm330, %v272, %v394
  %v411 = vsel %vm331, %v277, %v395
  %v412 = vsel %vm332, %v282, %v396
  %v413 = vsel %vm333, %v287, %v397
  %v414 = vsel %vm334, %v292, %v398
  %v415 = vsel %vm335, %v297, %v399
  %v416 = vsel %vm336, %v302, %v400
  %v417 = vsel %vm337, %v307, %v401
  %v418 = vsel %vm338, %v312, %v402
  %v419 = vsel %vm339, %v317, %v403
  %v420 = vsel %vm340, %v322, %v404
  %v421 = vld [vmem:[%s4] sm:$0xff]
  %v422 = vld [vmem:[%s4 + $0x8] sm:$0xff]
  %v423 = vld [vmem:[%s4 + $0x10] sm:$0xff]
  %v424 = vld [vmem:[%s4 + $0x18] sm:$0xff]
  %v425 = vld [vmem:[%s4 + $0x20] sm:$0xff]
  %v426 = vld [vmem:[%s4 + $0x28] sm:$0xff]
  %v427 = vld [vmem:[%s4 + $0x30] sm:$0xff]
  %v428 = vld [vmem:[%s4 + $0x38] sm:$0xff]
  %v429 = vld [vmem:[%s5] sm:$0x1]
  %v431 = vlaneseq
  %v432 = vshrl.u32 %v431, 7
  %v433 = vsub.s32 0, %v432
  %v434 = vrot.slane %v429, %v433
  %vm436 = vcmask 523264
  %v438 = vsel %vm436, %v405, 0
  %v441 = vsel %vm436, %v406, 0
  %v444 = vsel %vm436, %v407, 0
  %v447 = vsel %vm436, %v408, 0
  %v450 = vsel %vm436, %v409, 0
  %v453 = vsel %vm436, %v410, 0
  %v456 = vsel %vm436, %v411, 0
  %v459 = vsel %vm436, %v412, 0
  %v462 = vsel %vm436, %v413, 0
  %v465 = vsel %vm436, %v414, 0
  %v468 = vsel %vm436, %v415, 0
  %v471 = vsel %vm436, %v416, 0
  %v474 = vsel %vm436, %v417, 0
  %v477 = vsel %vm436, %v418, 0
  %v480 = vsel %vm436, %v419, 0
  %v483 = vsel %vm436, %v420, 0
  %485 = vmatprep.subr.mxu0 0.0
  %486 = vmatpush1.msra.mxu0 0.0
  %487 = vmatprep.subr.mxu0 0.0
  %488 = vmatpush1.msra.mxu0 0.0
  %489 = vmatprep.subr.mxu0 0.0
  %490 = vmatpush1.msra.mxu0 0.0
  %491 = vmatprep.subr.mxu0 0.0
  %492 = vmatpush1.msra.mxu0 0.0
  %493 = vmatprep.subr.mxu0 0.0
  %494 = vmatpush1.msra.mxu0 0.0
  %495 = vmatprep.subr.mxu0 0.0
  %496 = vmatpush1.msra.mxu0 0.0
  %497 = vmatprep.subr.mxu0 0.0
  %498 = vmatpush1.msra.mxu0 0.0
  %499 = vmatprep.subr.mxu0 0.0
  %500 = vmatpush1.msra.mxu0 0.0
  %501 = vmatprep.subr.mxu0 0.0
  %502 = vmatpush1.msra.mxu0 %v428
  %503 = vmatprep.subr.mxu0 0.0
  %504 = vmatpush1.msra.mxu0 %v427
  %505 = vmatprep.subr.mxu0 0.0
  %506 = vmatpush1.msra.mxu0 %v426
  %507 = vmatprep.subr.mxu0 0.0
  %508 = vmatpush1.msra.mxu0 %v425
  %509 = vmatprep.subr.mxu0 0.0
  %510 = vmatpush1.msra.mxu0 %v424
  %511 = vmatprep.subr.mxu0 0.0
  %512 = vmatpush1.msra.mxu0 %v423
  %513 = vmatprep.subr.mxu0 0.0
  %514 = vmatpush1.msra.mxu0 %v422
  %515 = vmatprep.subr.mxu0 0.0
  %516 = vmatpush1.msra.mxu0 %v421
  %517 = vmatprep.subr.mxu0 0.0
  %518 = vmatpush2.msra.mxu0 0.0
  %519 = vmatprep.subr.mxu0 0.0
  %520 = vmatpush2.msra.mxu0 0.0
  %521 = vmatprep.subr.mxu0 0.0
  %522 = vmatpush2.msra.mxu0 0.0
  %523 = vmatprep.subr.mxu0 0.0
  %524 = vmatpush2.msra.mxu0 0.0
  %525 = vmatprep.subr.mxu0 0.0
  %526 = vmatpush2.msra.mxu0 0.0
  %527 = vmatprep.subr.mxu0 0.0
  %528 = vmatpush2.msra.mxu0 0.0
  %529 = vmatprep.subr.mxu0 0.0
  %530 = vmatpush2.msra.mxu0 0.0
  %531 = vmatprep.subr.mxu0 0.0
  %532 = vmatpush2.msra.mxu0 0.0
  %533 = vmatprep.subr.mxu0 0.0
  %534 = vmatpush2.msra.mxu0 0.0
  %535 = vmatprep.subr.mxu0 0.0
  %536 = vmatpush2.msra.mxu0 0.0
  %537 = vmatprep.subr.mxu0 0.0
  %538 = vmatpush2.msra.mxu0 0.0
  %539 = vmatprep.subr.mxu0 0.0
  %540 = vmatpush2.msra.mxu0 0.0
  %541 = vmatprep.subr.mxu0 0.0
  %542 = vmatpush2.msra.mxu0 0.0
  %543 = vmatprep.subr.mxu0 0.0
  %544 = vmatpush2.msra.mxu0 0.0
  %545 = vmatprep.subr.mxu0 0.0
  %546 = vmatpush2.msra.mxu0 0.0
  %547 = vmatprep.subr.mxu0 0.0
  %548 = vmatpush2.msra.mxu0 0.0
  %549 = vmatprep.mubr.f32.mxu0 0.0
  %550 = vmatmul.mubr.f32.gmra.mxu0 %v438
  %v551 = vpop.f32.mrf.mxu0
  %v552 = vadd.f32 %v434, %v551
  %v553 = vpop.f32.mrf.mxu0
  %554 = vmatprep.mubr.f32.mxu0 0.0
  %555 = vmatmul.mubr.f32.gmra.mxu0 %v441
  %v556 = vpop.f32.mrf.mxu0
  %v557 = vadd.f32 %v434, %v556
  %v558 = vpop.f32.mrf.mxu0
  %559 = vmatprep.mubr.f32.mxu0 0.0
  %560 = vmatmul.mubr.f32.gmra.mxu0 %v444
  %v561 = vpop.f32.mrf.mxu0
  %v562 = vadd.f32 %v434, %v561
  %v563 = vpop.f32.mrf.mxu0
  %564 = vmatprep.mubr.f32.mxu0 0.0
  %565 = vmatmul.mubr.f32.gmra.mxu0 %v447
  %v566 = vpop.f32.mrf.mxu0
  %v567 = vadd.f32 %v434, %v566
  %v568 = vpop.f32.mrf.mxu0
  %569 = vmatprep.mubr.f32.mxu0 0.0
  %570 = vmatmul.mubr.f32.gmra.mxu0 %v450
  %v571 = vpop.f32.mrf.mxu0
  %v572 = vadd.f32 %v434, %v571
  %v573 = vpop.f32.mrf.mxu0
  %574 = vmatprep.mubr.f32.mxu0 0.0
  %575 = vmatmul.mubr.f32.gmra.mxu0 %v453
  %v576 = vpop.f32.mrf.mxu0
  %v577 = vadd.f32 %v434, %v576
  %v578 = vpop.f32.mrf.mxu0
  %579 = vmatprep.mubr.f32.mxu0 0.0
  %580 = vmatmul.mubr.f32.gmra.mxu0 %v456
  %v581 = vpop.f32.mrf.mxu0
  %v582 = vadd.f32 %v434, %v581
  %v583 = vpop.f32.mrf.mxu0
  %584 = vmatprep.mubr.f32.mxu0 0.0
  %585 = vmatmul.mubr.f32.gmra.mxu0 %v459
  %v586 = vpop.f32.mrf.mxu0
  %v587 = vadd.f32 %v434, %v586
  %v588 = vpop.f32.mrf.mxu0
  %589 = vmatprep.mubr.f32.mxu0 0.0
  %590 = vmatmul.mubr.f32.gmra.mxu0 %v462
  %v591 = vpop.f32.mrf.mxu0
  %v592 = vadd.f32 %v434, %v591
  %v593 = vpop.f32.mrf.mxu0
  %594 = vmatprep.mubr.f32.mxu0 0.0
  %595 = vmatmul.mubr.f32.gmra.mxu0 %v465
  %v596 = vpop.f32.mrf.mxu0
  %v597 = vadd.f32 %v434, %v596
  %v598 = vpop.f32.mrf.mxu0
  %599 = vmatprep.mubr.f32.mxu0 0.0
  %600 = vmatmul.mubr.f32.gmra.mxu0 %v468
  %v601 = vpop.f32.mrf.mxu0
  %v602 = vadd.f32 %v434, %v601
  %v603 = vpop.f32.mrf.mxu0
  %604 = vmatprep.mubr.f32.mxu0 0.0
  %605 = vmatmul.mubr.f32.gmra.mxu0 %v471
  %v606 = vpop.f32.mrf.mxu0
  %v607 = vadd.f32 %v434, %v606
  %v608 = vpop.f32.mrf.mxu0
  %609 = vmatprep.mubr.f32.mxu0 0.0
  %610 = vmatmul.mubr.f32.gmra.mxu0 %v474
  %v611 = vpop.f32.mrf.mxu0
  %v612 = vadd.f32 %v434, %v611
  %v613 = vpop.f32.mrf.mxu0
  %614 = vmatprep.mubr.f32.mxu0 0.0
  %615 = vmatmul.mubr.f32.gmra.mxu0 %v477
  %v616 = vpop.f32.mrf.mxu0
  %v617 = vadd.f32 %v434, %v616
  %v618 = vpop.f32.mrf.mxu0
  %619 = vmatprep.mubr.f32.mxu0 0.0
  %620 = vmatmul.mubr.f32.gmra.mxu0 %v480
  %v621 = vpop.f32.mrf.mxu0
  %v622 = vadd.f32 %v434, %v621
  %v623 = vpop.f32.mrf.mxu0
  %624 = vmatprep.mubr.f32.mxu0 0.0
  %625 = vmatmul.mubr.f32.gmra.mxu0 %v483
  %v626 = vpop.f32.mrf.mxu0
  %v627 = vadd.f32 %v434, %v626
  %v628 = vpop.f32.mrf.mxu0
  %629 = vdwg.mxu0
  %vm630 = vcmp.gt.f32.partialorder %v552, 0.0
  %vm631 = vcmp.gt.f32.partialorder %v557, 0.0
  %vm632 = vcmp.gt.f32.partialorder %v562, 0.0
  %vm633 = vcmp.gt.f32.partialorder %v567, 0.0
  %vm634 = vcmp.gt.f32.partialorder %v572, 0.0
  %vm635 = vcmp.gt.f32.partialorder %v577, 0.0
  %vm636 = vcmp.gt.f32.partialorder %v582, 0.0
  %vm637 = vcmp.gt.f32.partialorder %v587, 0.0
  %vm638 = vcmp.gt.f32.partialorder %v592, 0.0
  %vm639 = vcmp.gt.f32.partialorder %v597, 0.0
  %vm640 = vcmp.gt.f32.partialorder %v602, 0.0
  %vm641 = vcmp.gt.f32.partialorder %v607, 0.0
  %vm642 = vcmp.gt.f32.partialorder %v612, 0.0
  %vm643 = vcmp.gt.f32.partialorder %v617, 0.0
  %vm644 = vcmp.gt.f32.partialorder %v622, 0.0
  %vm645 = vcmp.gt.f32.partialorder %v627, 0.0
  %v646 = vmin.f32 %v552, 0.0
  %v647 = vmin.f32 %v557, 0.0
  %v648 = vmin.f32 %v562, 0.0
  %v649 = vmin.f32 %v567, 0.0
  %v650 = vmin.f32 %v572, 0.0
  %v651 = vmin.f32 %v577, 0.0
  %v652 = vmin.f32 %v582, 0.0
  %v653 = vmin.f32 %v587, 0.0
  %v654 = vmin.f32 %v592, 0.0
  %v655 = vmin.f32 %v597, 0.0
  %v656 = vmin.f32 %v602, 0.0
  %v657 = vmin.f32 %v607, 0.0
  %v658 = vmin.f32 %v612, 0.0
  %v659 = vmin.f32 %v617, 0.0
  %v660 = vmin.f32 %v622, 0.0
  %v661 = vmin.f32 %v627, 0.0
  %v662 = vmul.f32 %v646, 1.442695
  %v663 = vpow.pop %v662
  %v664 = vmul.f32 %v647, 1.442695
  %v665 = vpow.pop %v664
  %v666 = vmul.f32 %v648, 1.442695
  %v667 = vpow.pop %v666
  %v668 = vmul.f32 %v649, 1.442695
  %v669 = vpow.pop %v668
  %v670 = vmul.f32 %v650, 1.442695
  %v671 = vpow.pop %v670
  %v672 = vmul.f32 %v651, 1.442695
  %v673 = vpow.pop %v672
  %v674 = vmul.f32 %v652, 1.442695
  %v675 = vpow.pop %v674
  %v676 = vmul.f32 %v653, 1.442695
  %v677 = vpow.pop %v676
  %v678 = vmul.f32 %v654, 1.442695
  %v679 = vpow.pop %v678
  %v680 = vmul.f32 %v655, 1.442695
  %v681 = vpow.pop %v680
  %v682 = vmul.f32 %v656, 1.442695
  %v683 = vpow.pop %v682
  %v684 = vmul.f32 %v657, 1.442695
  %v685 = vpow.pop %v684
  %v686 = vmul.f32 %v658, 1.442695
  %v687 = vpow.pop %v686
  %v688 = vmul.f32 %v659, 1.442695
  %v689 = vpow.pop %v688
  %v690 = vmul.f32 %v660, 1.442695
  %v691 = vpow.pop %v690
  %v692 = vmul.f32 %v661, 1.442695
  %v693 = vpow.pop %v692
  %v694 = vsub.f32 %v663, 1.0
  %v695 = vsub.f32 %v665, 1.0
  %v696 = vsub.f32 %v667, 1.0
  %v697 = vsub.f32 %v669, 1.0
  %v698 = vsub.f32 %v671, 1.0
  %v699 = vsub.f32 %v673, 1.0
  %v700 = vsub.f32 %v675, 1.0
  %v701 = vsub.f32 %v677, 1.0
  %v702 = vsub.f32 %v679, 1.0
  %v703 = vsub.f32 %v681, 1.0
  %v704 = vsub.f32 %v683, 1.0
  %v705 = vsub.f32 %v685, 1.0
  %v706 = vsub.f32 %v687, 1.0
  %v707 = vsub.f32 %v689, 1.0
  %v708 = vsub.f32 %v691, 1.0
  %v709 = vsub.f32 %v693, 1.0
  %v710 = vsel %vm630, %v552, %v694
  %v711 = vsel %vm631, %v557, %v695
  %v712 = vsel %vm632, %v562, %v696
  %v713 = vsel %vm633, %v567, %v697
  %v714 = vsel %vm634, %v572, %v698
  %v715 = vsel %vm635, %v577, %v699
  %v716 = vsel %vm636, %v582, %v700
  %v717 = vsel %vm637, %v587, %v701
  %v718 = vsel %vm638, %v592, %v702
  %v719 = vsel %vm639, %v597, %v703
  %v720 = vsel %vm640, %v602, %v704
  %v721 = vsel %vm641, %v607, %v705
  %v722 = vsel %vm642, %v612, %v706
  %v723 = vsel %vm643, %v617, %v707
  %v724 = vsel %vm644, %v622, %v708
  %v725 = vsel %vm645, %v627, %v709
  %s726 = smul.u32 4, 16
  %s727 = smul.u32 %s726, 1
  %s728 = sshll.u32 %s727, 4
  %729 = dma.done [#allocation3], %s728
  %v730 = vld [vmem:[#allocation2] sm:$0xf]
  %v731 = vld [vmem:[#allocation2 + $0x4] sm:$0xf]
  %v732 = vld [vmem:[#allocation2 + $0x8] sm:$0xf]
  %v733 = vld [vmem:[#allocation2 + $0xc] sm:$0xf]
  %v734 = vld [vmem:[#allocation2 + $0x10] sm:$0xf]
  %v735 = vld [vmem:[#allocation2 + $0x14] sm:$0xf]
  %v736 = vld [vmem:[#allocation2 + $0x18] sm:$0xf]
  %v737 = vld [vmem:[#allocation2 + $0x1c] sm:$0xf]
  %v738 = vld [vmem:[#allocation2 + $0x20] sm:$0xf]
  %v739 = vld [vmem:[#allocation2 + $0x24] sm:$0xf]
  %v740 = vld [vmem:[#allocation2 + $0x28] sm:$0xf]
  %v741 = vld [vmem:[#allocation2 + $0x2c] sm:$0xf]
  %v742 = vld [vmem:[#allocation2 + $0x30] sm:$0xf]
  %v743 = vld [vmem:[#allocation2 + $0x34] sm:$0xf]
  %v744 = vld [vmem:[#allocation2 + $0x38] sm:$0xf]
  %v745 = vld [vmem:[#allocation2 + $0x3c] sm:$0xf]
  %v746 = vld [vmem:[%s6] sm:$0xff]
  %v747 = vld [vmem:[%s6 + $0x8] sm:$0xff]
  %v748 = vld [vmem:[%s6 + $0x10] sm:$0xff]
  %v749 = vld [vmem:[%s6 + $0x18] sm:$0xff]
  %v750 = vld [vmem:[%s6 + $0x20] sm:$0xff]
  %v751 = vld [vmem:[%s6 + $0x28] sm:$0xff]
  %v752 = vld [vmem:[%s6 + $0x30] sm:$0xff]
  %v753 = vld [vmem:[%s6 + $0x38] sm:$0xff]
  %v754 = vld [vmem:[%s7] sm:$0xff]
  %v755 = vld [vmem:[%s7 + $0x8] sm:$0xff]
  %v756 = vld [vmem:[%s7 + $0x10] sm:$0xff]
  %v757 = vld [vmem:[%s7 + $0x18] sm:$0xff]
  %v758 = vld [vmem:[%s7 + $0x20] sm:$0xff]
  %v759 = vld [vmem:[%s7 + $0x28] sm:$0xff]
  %v760 = vld [vmem:[%s7 + $0x30] sm:$0xff]
  %v761 = vld [vmem:[%s7 + $0x38] sm:$0xff]
  %v762 = vld [vmem:[%s7 + $0x40] sm:$0xff]
  %v763 = vld [vmem:[%s7 + $0x48] sm:$0xff]
  %v764 = vld [vmem:[%s7 + $0x50] sm:$0xff]
  %v765 = vld [vmem:[%s7 + $0x58] sm:$0xff]
  %v766 = vld [vmem:[%s7 + $0x60] sm:$0xff]
  %v767 = vld [vmem:[%s7 + $0x68] sm:$0xff]
  %v768 = vld [vmem:[%s7 + $0x70] sm:$0xff]
  %v769 = vld [vmem:[%s7 + $0x78] sm:$0xff]
  %v770 = vld [vmem:[%s7 + $0x80] sm:$0xff]
  %v771 = vld [vmem:[%s7 + $0x88] sm:$0xff]
  %v772 = vld [vmem:[%s7 + $0x90] sm:$0xff]
  %v773 = vld [vmem:[%s7 + $0x98] sm:$0xff]
  %v774 = vld [vmem:[%s7 + $0xa0] sm:$0xff]
  %v775 = vld [vmem:[%s7 + $0xa8] sm:$0xff]
  %v776 = vld [vmem:[%s7 + $0xb0] sm:$0xff]
  %v777 = vld [vmem:[%s7 + $0xb8] sm:$0xff]
  %v778 = vld [vmem:[%s7 + $0xc0] sm:$0xff]
  %v779 = vld [vmem:[%s7 + $0xc8] sm:$0xff]
  %v780 = vld [vmem:[%s7 + $0xd0] sm:$0xff]
  %v781 = vld [vmem:[%s7 + $0xd8] sm:$0xff]
  %v782 = vld [vmem:[%s7 + $0xe0] sm:$0xff]
  %v783 = vld [vmem:[%s7 + $0xe8] sm:$0xff]
  %v784 = vld [vmem:[%s7 + $0xf0] sm:$0xff]
  %v785 = vld [vmem:[%s7 + $0xf8] sm:$0xff]
  %v786 = vld [vmem:[%s8] sm:$0x1]
  %v787 = vpack.c.bf16 %v711, %v710
  %v788 = vpack.c.bf16 %v713, %v712
  %v789 = vpack.c.bf16 %v715, %v714
  %v790 = vpack.c.bf16 %v717, %v716
  %v791 = vpack.c.bf16 %v719, %v718
  %v792 = vpack.c.bf16 %v721, %v720
  %v793 = vpack.c.bf16 %v723, %v722
  %v794 = vpack.c.bf16 %v725, %v724
  %v803 = vunpack.c.l.b16 %v746
  %v804 = vunpack.c.h.b16 %v746
  %v805 = vunpack.c.l.b16 %v747
  %v806 = vunpack.c.h.b16 %v747
  %v807 = vunpack.c.l.b16 %v748
  %v808 = vunpack.c.h.b16 %v748
  %v809 = vunpack.c.l.b16 %v749
  %v810 = vunpack.c.h.b16 %v749
  %v811 = vunpack.c.l.b16 %v750
  %v812 = vunpack.c.h.b16 %v750
  %v813 = vunpack.c.l.b16 %v751
  %v814 = vunpack.c.h.b16 %v751
  %v815 = vunpack.c.l.b16 %v752
  %v816 = vunpack.c.h.b16 %v752
  %v817 = vunpack.c.l.b16 %v753
  %v818 = vunpack.c.h.b16 %v753
  %v819 = vpack.c.b16 %v805, %v803
  %v820 = vpack.c.b16 %v806, %v804
  %v821 = vpack.c.b16 %v809, %v807
  %v822 = vpack.c.b16 %v810, %v808
  %v823 = vpack.c.b16 %v813, %v811
  %v824 = vpack.c.b16 %v814, %v812
  %v825 = vpack.c.b16 %v817, %v815
  %v826 = vpack.c.b16 %v818, %v816
  %v836 = vsel %vm436, %v787, 0
  %v839 = vsel %vm436, %v788, 0
  %v842 = vsel %vm436, %v789, 0
  %v845 = vsel %vm436, %v790, 0
  %v848 = vsel %vm436, %v791, 0
  %v851 = vsel %vm436, %v792, 0
  %v854 = vsel %vm436, %v793, 0
  %v857 = vsel %vm436, %v794, 0
  %859 = vmatprep.subr.bf16.mxu0 0
  %860 = vmatpush1.bf16.msra.mxu0 0
  %861 = vmatprep.subr.bf16.mxu0 0
  %862 = vmatpush1.bf16.msra.mxu0 0
  %863 = vmatprep.subr.bf16.mxu0 0
  %864 = vmatpush1.bf16.msra.mxu0 0
  %865 = vmatprep.subr.bf16.mxu0 0
  %866 = vmatpush1.bf16.msra.mxu0 0
  %867 = vmatprep.subr.bf16.mxu0 %v826
  %868 = vmatpush1.bf16.msra.mxu0 %v825
  %869 = vmatprep.subr.bf16.mxu0 %v824
  %870 = vmatpush1.bf16.msra.mxu0 %v823
  %871 = vmatprep.subr.bf16.mxu0 %v822
  %872 = vmatpush1.bf16.msra.mxu0 %v821
  %873 = vmatprep.subr.bf16.mxu0 %v820
  %874 = vmatpush1.bf16.msra.mxu0 %v819
  %875 = vmatprep.subr.bf16.mxu0 0
  %876 = vmatpush2.bf16.msra.mxu0 0
  %877 = vmatprep.subr.bf16.mxu0 0
  %878 = vmatpush2.bf16.msra.mxu0 0
  %879 = vmatprep.subr.bf16.mxu0 0
  %880 = vmatpush2.bf16.msra.mxu0 0
  %881 = vmatprep.subr.bf16.mxu0 0
  %882 = vmatpush2.bf16.msra.mxu0 0
  %883 = vmatprep.subr.bf16.mxu0 0
  %884 = vmatpush2.bf16.msra.mxu0 0
  %885 = vmatprep.subr.bf16.mxu0 0
  %886 = vmatpush2.bf16.msra.mxu0 0
  %887 = vmatprep.subr.bf16.mxu0 0
  %888 = vmatpush2.bf16.msra.mxu0 0
  %889 = vmatprep.subr.bf16.mxu0 0
  %890 = vmatpush2.bf16.msra.mxu0 0
  %891 = vmatprep.mubr.bf16.mxu0 0
  %892 = vmatmul.mubr.bf16.gmra.mxu0 %v836
  %v893 = vpop.f32.mrf.mxu0
  %v894 = vadd.f32 0.0, %v893
  %v895 = vpop.f32.mrf.mxu0
  %v896 = vadd.f32 0.0, %v895
  %v897 = vpop.f32.mrf.mxu0
  %v898 = vadd.f32 0.0, %v897
  %v899 = vpop.f32.mrf.mxu0
  %v900 = vadd.f32 0.0, %v899
  %901 = vmatprep.mubr.bf16.mxu0 0
  %902 = vmatmul.mubr.bf16.gmra.mxu0 %v839
  %v903 = vpop.f32.mrf.mxu0
  %v904 = vadd.f32 0.0, %v903
  %v905 = vpop.f32.mrf.mxu0
  %v906 = vadd.f32 0.0, %v905
  %v907 = vpop.f32.mrf.mxu0
  %v908 = vadd.f32 0.0, %v907
  %v909 = vpop.f32.mrf.mxu0
  %v910 = vadd.f32 0.0, %v909
  %911 = vmatprep.mubr.bf16.mxu0 0
  %912 = vmatmul.mubr.bf16.gmra.mxu0 %v842
  %v913 = vpop.f32.mrf.mxu0
  %v914 = vadd.f32 0.0, %v913
  %v915 = vpop.f32.mrf.mxu0
  %v916 = vadd.f32 0.0, %v915
  %v917 = vpop.f32.mrf.mxu0
  %v918 = vadd.f32 0.0, %v917
  %v919 = vpop.f32.mrf.mxu0
  %v920 = vadd.f32 0.0, %v919
  %921 = vmatprep.mubr.bf16.mxu0 0
  %922 = vmatmul.mubr.bf16.gmra.mxu0 %v845
  %v923 = vpop.f32.mrf.mxu0
  %v924 = vadd.f32 0.0, %v923
  %v925 = vpop.f32.mrf.mxu0
  %v926 = vadd.f32 0.0, %v925
  %v927 = vpop.f32.mrf.mxu0
  %v928 = vadd.f32 0.0, %v927
  %v929 = vpop.f32.mrf.mxu0
  %v930 = vadd.f32 0.0, %v929
  %931 = vmatprep.mubr.bf16.mxu0 0
  %932 = vmatmul.mubr.bf16.gmra.mxu0 %v848
  %v933 = vpop.f32.mrf.mxu0
  %v934 = vadd.f32 0.0, %v933
  %v935 = vpop.f32.mrf.mxu0
  %v936 = vadd.f32 0.0, %v935
  %v937 = vpop.f32.mrf.mxu0
  %v938 = vadd.f32 0.0, %v937
  %v939 = vpop.f32.mrf.mxu0
  %v940 = vadd.f32 0.0, %v939
  %941 = vmatprep.mubr.bf16.mxu0 0
  %942 = vmatmul.mubr.bf16.gmra.mxu0 %v851
  %v943 = vpop.f32.mrf.mxu0
  %v944 = vadd.f32 0.0, %v943
  %v945 = vpop.f32.mrf.mxu0
  %v946 = vadd.f32 0.0, %v945
  %v947 = vpop.f32.mrf.mxu0
  %v948 = vadd.f32 0.0, %v947
  %v949 = vpop.f32.mrf.mxu0
  %v950 = vadd.f32 0.0, %v949
  %951 = vmatprep.mubr.bf16.mxu0 0
  %952 = vmatmul.mubr.bf16.gmra.mxu0 %v854
  %v953 = vpop.f32.mrf.mxu0
  %v954 = vadd.f32 0.0, %v953
  %v955 = vpop.f32.mrf.mxu0
  %v956 = vadd.f32 0.0, %v955
  %v957 = vpop.f32.mrf.mxu0
  %v958 = vadd.f32 0.0, %v957
  %v959 = vpop.f32.mrf.mxu0
  %v960 = vadd.f32 0.0, %v959
  %961 = vmatprep.mubr.bf16.mxu0 0
  %962 = vmatmul.mubr.bf16.gmra.mxu0 %v857
  %v963 = vpop.f32.mrf.mxu0
  %v964 = vadd.f32 0.0, %v963
  %v965 = vpop.f32.mrf.mxu0
  %v966 = vadd.f32 0.0, %v965
  %v967 = vpop.f32.mrf.mxu0
  %v968 = vadd.f32 0.0, %v967
  %v969 = vpop.f32.mrf.mxu0
  %v970 = vadd.f32 0.0, %v969
  %971 = vdwg.mxu0
  %972 = vmatprep.subr.mxu0 0.0
  %973 = vmatpush1.msra.mxu0 %v769
  %974 = vmatprep.subr.mxu0 0.0
  %975 = vmatpush1.msra.mxu0 %v768
  %976 = vmatprep.subr.mxu0 0.0
  %977 = vmatpush1.msra.mxu0 %v767
  %978 = vmatprep.subr.mxu0 0.0
  %979 = vmatpush1.msra.mxu0 %v766
  %980 = vmatprep.subr.mxu0 0.0
  %981 = vmatpush1.msra.mxu0 %v765
  %982 = vmatprep.subr.mxu0 0.0
  %983 = vmatpush1.msra.mxu0 %v764
  %984 = vmatprep.subr.mxu0 0.0
  %985 = vmatpush1.msra.mxu0 %v763
  %986 = vmatprep.subr.mxu0 0.0
  %987 = vmatpush1.msra.mxu0 %v762
  %988 = vmatprep.subr.mxu0 0.0
  %989 = vmatpush1.msra.mxu0 %v761
  %990 = vmatprep.subr.mxu0 0.0
  %991 = vmatpush1.msra.mxu0 %v760
  %992 = vmatprep.subr.mxu0 0.0
  %993 = vmatpush1.msra.mxu0 %v759
  %994 = vmatprep.subr.mxu0 0.0
  %995 = vmatpush1.msra.mxu0 %v758
  %996 = vmatprep.subr.mxu0 0.0
  %997 = vmatpush1.msra.mxu0 %v757
  %998 = vmatprep.subr.mxu0 0.0
  %999 = vmatpush1.msra.mxu0 %v756
  %1000 = vmatprep.subr.mxu0 0.0
  %1001 = vmatpush1.msra.mxu0 %v755
  %1002 = vmatprep.subr.mxu0 0.0
  %1003 = vmatpush1.msra.mxu0 %v754
  %1004 = vmatprep.subr.mxu0 0.0
  %1005 = vmatpush2.msra.mxu0 %v785
  %1006 = vmatprep.subr.mxu0 0.0
  %1007 = vmatpush2.msra.mxu0 %v784
  %1008 = vmatprep.subr.mxu0 0.0
  %1009 = vmatpush2.msra.mxu0 %v783
  %1010 = vmatprep.subr.mxu0 0.0
  %1011 = vmatpush2.msra.mxu0 %v782
  %1012 = vmatprep.subr.mxu0 0.0
  %1013 = vmatpush2.msra.mxu0 %v781
  %1014 = vmatprep.subr.mxu0 0.0
  %1015 = vmatpush2.msra.mxu0 %v780
  %1016 = vmatprep.subr.mxu0 0.0
  %1017 = vmatpush2.msra.mxu0 %v779
  %1018 = vmatprep.subr.mxu0 0.0
  %1019 = vmatpush2.msra.mxu0 %v778
  %1020 = vmatprep.subr.mxu0 0.0
  %1021 = vmatpush2.msra.mxu0 %v777
  %1022 = vmatprep.subr.mxu0 0.0
  %1023 = vmatpush2.msra.mxu0 %v776
  %1024 = vmatprep.subr.mxu0 0.0
  %1025 = vmatpush2.msra.mxu0 %v775
  %1026 = vmatprep.subr.mxu0 0.0
  %1027 = vmatpush2.msra.mxu0 %v774
  %1028 = vmatprep.subr.mxu0 0.0
  %1029 = vmatpush2.msra.mxu0 %v773
  %1030 = vmatprep.subr.mxu0 0.0
  %1031 = vmatpush2.msra.mxu0 %v772
  %1032 = vmatprep.subr.mxu0 0.0
  %1033 = vmatpush2.msra.mxu0 %v771
  %1034 = vmatprep.subr.mxu0 0.0
  %1035 = vmatpush2.msra.mxu0 %v770
  %1036 = vmatprep.mubr.f32.mxu0 %v896
  %1037 = vmatmul.mubr.f32.gmra.mxu0 %v894
  %v1038 = vpop.f32.mrf.mxu0
  %v1039 = vadd.f32 0.0, %v1038
  %v1040 = vpop.f32.mrf.mxu0
  %1041 = vmatprep.mubr.f32.mxu0 %v900
  %1042 = vmatmul.mubr.f32.gmra.mxu0 %v898
  %v1043 = vpop.f32.mrf.mxu0
  %v1044 = vadd.f32 0.0, %v1043
  %v1045 = vpop.f32.mrf.mxu0
  %1046 = vmatprep.mubr.f32.mxu0 %v906
  %1047 = vmatmul.mubr.f32.gmra.mxu0 %v904
  %v1048 = vpop.f32.mrf.mxu0
  %v1049 = vadd.f32 0.0, %v1048
  %v1050 = vpop.f32.mrf.mxu0
  %1051 = vmatprep.mubr.f32.mxu0 %v910
  %1052 = vmatmul.mubr.f32.gmra.mxu0 %v908
  %v1053 = vpop.f32.mrf.mxu0
  %v1054 = vadd.f32 0.0, %v1053
  %v1055 = vpop.f32.mrf.mxu0
  %1056 = vmatprep.mubr.f32.mxu0 %v916
  %1057 = vmatmul.mubr.f32.gmra.mxu0 %v914
  %v1058 = vpop.f32.mrf.mxu0
  %v1059 = vadd.f32 0.0, %v1058
  %v1060 = vpop.f32.mrf.mxu0
  %1061 = vmatprep.mubr.f32.mxu0 %v920
  %1062 = vmatmul.mubr.f32.gmra.mxu0 %v918
  %v1063 = vpop.f32.mrf.mxu0
  %v1064 = vadd.f32 0.0, %v1063
  %v1065 = vpop.f32.mrf.mxu0
  %1066 = vmatprep.mubr.f32.mxu0 %v926
  %1067 = vmatmul.mubr.f32.gmra.mxu0 %v924
  %v1068 = vpop.f32.mrf.mxu0
  %v1069 = vadd.f32 0.0, %v1068
  %v1070 = vpop.f32.mrf.mxu0
  %1071 = vmatprep.mubr.f32.mxu0 %v930
  %1072 = vmatmul.mubr.f32.gmra.mxu0 %v928
  %v1073 = vpop.f32.mrf.mxu0
  %v1074 = vadd.f32 0.0, %v1073
  %v1075 = vpop.f32.mrf.mxu0
  %1076 = vmatprep.mubr.f32.mxu0 %v936
  %1077 = vmatmul.mubr.f32.gmra.mxu0 %v934
  %v1078 = vpop.f32.mrf.mxu0
  %v1079 = vadd.f32 0.0, %v1078
  %v1080 = vpop.f32.mrf.mxu0
  %1081 = vmatprep.mubr.f32.mxu0 %v940
  %1082 = vmatmul.mubr.f32.gmra.mxu0 %v938
  %v1083 = vpop.f32.mrf.mxu0
  %v1084 = vadd.f32 0.0, %v1083
  %v1085 = vpop.f32.mrf.mxu0
  %1086 = vmatprep.mubr.f32.mxu0 %v946
  %1087 = vmatmul.mubr.f32.gmra.mxu0 %v944
  %v1088 = vpop.f32.mrf.mxu0
  %v1089 = vadd.f32 0.0, %v1088
  %v1090 = vpop.f32.mrf.mxu0
  %1091 = vmatprep.mubr.f32.mxu0 %v950
  %1092 = vmatmul.mubr.f32.gmra.mxu0 %v948
  %v1093 = vpop.f32.mrf.mxu0
  %v1094 = vadd.f32 0.0, %v1093
  %v1095 = vpop.f32.mrf.mxu0
  %1096 = vmatprep.mubr.f32.mxu0 %v956
  %1097 = vmatmul.mubr.f32.gmra.mxu0 %v954
  %v1098 = vpop.f32.mrf.mxu0
  %v1099 = vadd.f32 0.0, %v1098
  %v1100 = vpop.f32.mrf.mxu0
  %1101 = vmatprep.mubr.f32.mxu0 %v960
  %1102 = vmatmul.mubr.f32.gmra.mxu0 %v958
  %v1103 = vpop.f32.mrf.mxu0
  %v1104 = vadd.f32 0.0, %v1103
  %v1105 = vpop.f32.mrf.mxu0
  %1106 = vmatprep.mubr.f32.mxu0 %v966
  %1107 = vmatmul.mubr.f32.gmra.mxu0 %v964
  %v1108 = vpop.f32.mrf.mxu0
  %v1109 = vadd.f32 0.0, %v1108
  %v1110 = vpop.f32.mrf.mxu0
  %1111 = vmatprep.mubr.f32.mxu0 %v970
  %1112 = vmatmul.mubr.f32.gmra.mxu0 %v968
  %v1113 = vpop.f32.mrf.mxu0
  %v1114 = vadd.f32 0.0, %v1113
  %v1115 = vpop.f32.mrf.mxu0
  %1116 = vdwg.mxu0
  %1117 = vxpose.xlu0.b32.start [1/16] %v1039, 128
  %1118 = vxpose.xlu0.b32.cont [2/16] %v1044, 128
  %1119 = vxpose.xlu0.b32.cont [3/16] %v1049, 128
  %1120 = vxpose.xlu0.b32.cont [4/16] %v1054, 128
  %1121 = vxpose.xlu0.b32.cont [5/16] %v1059, 128
  %1122 = vxpose.xlu0.b32.cont [6/16] %v1064, 128
  %1123 = vxpose.xlu0.b32.cont [7/16] %v1069, 128
  %1124 = vxpose.xlu0.b32.cont [8/16] %v1074, 128
  %1125 = vxpose.xlu0.b32.cont [9/16] %v1079, 128
  %1126 = vxpose.xlu0.b32.cont [10/16] %v1084, 128
  %1127 = vxpose.xlu0.b32.cont [11/16] %v1089, 128
  %1128 = vxpose.xlu0.b32.cont [12/16] %v1094, 128
  %1129 = vxpose.xlu0.b32.cont [13/16] %v1099, 128
  %1130 = vxpose.xlu0.b32.cont [14/16] %v1104, 128
  %1131 = vxpose.xlu0.b32.cont [15/16] %v1109, 128
  %1132 = vxpose.xlu0.b32.end [16/16] %v1114, 128
  %v1133 = vpop.trf.xlu0
  %v1134 = vpop.trf.xlu0
  %v1135 = vpop.trf.xlu0
  %v1136 = vpop.trf.xlu0
  %v1137 = vpop.trf.xlu0
  %v1138 = vpop.trf.xlu0
  %v1139 = vpop.trf.xlu0
  %v1140 = vpop.trf.xlu0
  %v1141 = vpop.trf.xlu0
  %v1142 = vpop.trf.xlu0
  %v1143 = vpop.trf.xlu0
  %v1144 = vpop.trf.xlu0
  %v1145 = vpop.trf.xlu0
  %v1146 = vpop.trf.xlu0
  %v1147 = vpop.trf.xlu0
  %v1148 = vpop.trf.xlu0
  %v1149 = vpack.c.bf16 %v1133, %v1133
  %v1150 = vpack.c.bf16 %v1044, %v1039
  %v1151 = vpack.c.bf16 %v1054, %v1049
  %v1152 = vpack.c.bf16 %v1064, %v1059
  %v1153 = vpack.c.bf16 %v1074, %v1069
  %v1154 = vpack.c.bf16 %v1084, %v1079
  %v1155 = vpack.c.bf16 %v1094, %v1089
  %v1156 = vpack.c.bf16 %v1104, %v1099
  %v1157 = vpack.c.bf16 %v1114, %v1109
  %v1158 = vpack.c.bf16 %v898, %v894
  %v1159 = vpack.c.bf16 %v900, %v896
  %v1160 = vpack.c.bf16 %v908, %v904
  %v1161 = vpack.c.bf16 %v910, %v906
  %v1162 = vpack.c.bf16 %v918, %v914
  %v1163 = vpack.c.bf16 %v920, %v916
  %v1164 = vpack.c.bf16 %v928, %v924
  %v1165 = vpack.c.bf16 %v930, %v926
  %v1166 = vpack.c.bf16 %v938, %v934
  %v1167 = vpack.c.bf16 %v940, %v936
  %v1168 = vpack.c.bf16 %v948, %v944
  %v1169 = vpack.c.bf16 %v950, %v946
  %v1170 = vpack.c.bf16 %v958, %v954
  %v1171 = vpack.c.bf16 %v960, %v956
  %v1172 = vpack.c.bf16 %v968, %v964
  %v1173 = vpack.c.bf16 %v970, %v966
  %1175 = vset.pattern.permute.xlu0 4
  %1176 = vperm.xlu0 %1175, %v1150
  %v1177 = vpop.permute.xlu0 %1176
  %1180 = vset.pattern.permute.xlu0 4
  %1181 = vperm.xlu0 %1180, %v1151
  %v1182 = vpop.permute.xlu0 %1181
  %1185 = vset.pattern.permute.xlu0 4
  %1186 = vperm.xlu0 %1185, %v1152
  %v1187 = vpop.permute.xlu0 %1186
  %1190 = vset.pattern.permute.xlu0 4
  %1191 = vperm.xlu0 %1190, %v1153
  %v1192 = vpop.permute.xlu0 %1191
  %1195 = vset.pattern.permute.xlu0 4
  %1196 = vperm.xlu0 %1195, %v1154
  %v1197 = vpop.permute.xlu0 %1196
  %1200 = vset.pattern.permute.xlu0 4
  %1201 = vperm.xlu0 %1200, %v1155
  %v1202 = vpop.permute.xlu0 %1201
  %1205 = vset.pattern.permute.xlu0 4
  %1206 = vperm.xlu0 %1205, %v1156
  %v1207 = vpop.permute.xlu0 %1206
  %1210 = vset.pattern.permute.xlu0 4
  %1211 = vperm.xlu0 %1210, %v1157
  %v1212 = vpop.permute.xlu0 %1211
  %v1215 = vpack.i.b16 %v1149, %v1149
  %v1217 = vlaneseq
  %v1218 = vshrl.u32 %v1217, 7
  %v1219 = vsub.s32 0, %v1218
  %v1220 = vrot.slane %v1215, %v1219
  %v1221 = vadd.bf16 %v1177, %v1220
  %v1222 = vadd.bf16 %v1182, %v1220
  %v1223 = vadd.bf16 %v1187, %v1220
  %v1224 = vadd.bf16 %v1192, %v1220
  %v1225 = vadd.bf16 %v1197, %v1220
  %v1226 = vadd.bf16 %v1202, %v1220
  %v1227 = vadd.bf16 %v1207, %v1220
  %v1228 = vadd.bf16 %v1212, %v1220
  %v1245 = vunpack.c.l.b16 %v730
  %v1246 = vunpack.c.l.b16 %v731
  %v1247 = vunpack.c.l.b16 %v732
  %v1248 = vunpack.c.l.b16 %v733
  %v1249 = vunpack.c.l.b16 %v734
  %v1250 = vunpack.c.l.b16 %v735
  %v1251 = vunpack.c.l.b16 %v736
  %v1252 = vunpack.c.l.b16 %v737
  %v1253 = vunpack.c.l.b16 %v738
  %v1254 = vunpack.c.l.b16 %v739
  %v1255 = vunpack.c.l.b16 %v740
  %v1256 = vunpack.c.l.b16 %v741
  %v1257 = vunpack.c.l.b16 %v742
  %v1258 = vunpack.c.l.b16 %v743
  %v1259 = vunpack.c.l.b16 %v744
  %v1260 = vunpack.c.l.b16 %v745
  %v1261 = vpack.c.b16 %v1246, %v1245
  %v1262 = vpack.c.b16 %v1248, %v1247
  %v1263 = vpack.c.b16 %v1250, %v1249
  %v1264 = vpack.c.b16 %v1252, %v1251
  %v1265 = vpack.c.b16 %v1254, %v1253
  %v1266 = vpack.c.b16 %v1256, %v1255
  %v1267 = vpack.c.b16 %v1258, %v1257
  %v1268 = vpack.c.b16 %v1260, %v1259
  %v1277 = vadd.bf16 %v1221, %v1261
  %v1278 = vadd.bf16 %v1222, %v1262
  %v1279 = vadd.bf16 %v1223, %v1263
  %v1280 = vadd.bf16 %v1224, %v1264
  %v1281 = vadd.bf16 %v1225, %v1265
  %v1282 = vadd.bf16 %v1226, %v1266
  %v1283 = vadd.bf16 %v1227, %v1267
  %v1284 = vadd.bf16 %v1228, %v1268
  %v1285 = vmul.bf16 %v1277, 1045249613
  %v1286 = vmul.bf16 %v1278, 1045249613
  %v1287 = vmul.bf16 %v1279, 1045249613
  %v1288 = vmul.bf16 %v1280, 1045249613
  %v1289 = vmul.bf16 %v1281, 1045249613
  %v1290 = vmul.bf16 %v1282, 1045249613
  %v1291 = vmul.bf16 %v1283, 1045249613
  %v1292 = vmul.bf16 %v1284, 1045249613
  %v1293 = vmax.bf16 %v1277, %v1285
  %v1294 = vmax.bf16 %v1278, %v1286
  %v1295 = vmax.bf16 %v1279, %v1287
  %v1296 = vmax.bf16 %v1280, %v1288
  %v1297 = vmax.bf16 %v1281, %v1289
  %v1298 = vmax.bf16 %v1282, %v1290
  %v1299 = vmax.bf16 %v1283, %v1291
  %v1300 = vmax.bf16 %v1284, %v1292
  %1301 = vmax.xlane.bf16.xlu0 %v1293
  %v1302 = vpop.xlane.xlu0 %1301
  %1303 = vmax.xlane.bf16.xlu0 %v1294
  %v1304 = vpop.xlane.xlu0 %1303
  %1305 = vmax.xlane.bf16.xlu0 %v1295
  %v1306 = vpop.xlane.xlu0 %1305
  %1307 = vmax.xlane.bf16.xlu0 %v1296
  %v1308 = vpop.xlane.xlu0 %1307
  %1309 = vmax.xlane.bf16.xlu0 %v1297
  %v1310 = vpop.xlane.xlu0 %1309
  %1311 = vmax.xlane.bf16.xlu0 %v1298
  %v1312 = vpop.xlane.xlu0 %1311
  %1313 = vmax.xlane.bf16.xlu0 %v1299
  %v1314 = vpop.xlane.xlu0 %1313
  %1315 = vmax.xlane.bf16.xlu0 %v1300
  %v1316 = vpop.xlane.xlu0 %1315
  %v1317 = vsub.bf16 %v1293, %v1302
  %v1318 = vsub.bf16 %v1294, %v1304
  %v1319 = vsub.bf16 %v1295, %v1306
  %v1320 = vsub.bf16 %v1296, %v1308
  %v1321 = vsub.bf16 %v1297, %v1310
  %v1322 = vsub.bf16 %v1298, %v1312
  %v1323 = vsub.bf16 %v1299, %v1314
  %v1324 = vsub.bf16 %v1300, %v1316
  %v1326 = vmul.bf16 %v1317, 1069105081
  %v1327 = vpow.bf16.pop %v1326
  %v1329 = vmul.bf16 %v1318, 1069105081
  %v1330 = vpow.bf16.pop %v1329
  %v1332 = vmul.bf16 %v1319, 1069105081
  %v1333 = vpow.bf16.pop %v1332
  %v1335 = vmul.bf16 %v1320, 1069105081
  %v1336 = vpow.bf16.pop %v1335
  %v1338 = vmul.bf16 %v1321, 1069105081
  %v1339 = vpow.bf16.pop %v1338
  %v1341 = vmul.bf16 %v1322, 1069105081
  %v1342 = vpow.bf16.pop %v1341
  %v1344 = vmul.bf16 %v1323, 1069105081
  %v1345 = vpow.bf16.pop %v1344
  %v1347 = vmul.bf16 %v1324, 1069105081
  %v1348 = vpow.bf16.pop %v1347
  %v1349 = vunpack.c.l.bf16 %v1327
  %v1350 = vunpack.c.h.bf16 %v1327
  %v1351 = vunpack.c.l.bf16 %v1330
  %v1352 = vunpack.c.h.bf16 %v1330
  %v1353 = vunpack.c.l.bf16 %v1333
  %v1354 = vunpack.c.h.bf16 %v1333
  %v1355 = vunpack.c.l.bf16 %v1336
  %v1356 = vunpack.c.h.bf16 %v1336
  %v1357 = vunpack.c.l.bf16 %v1339
  %v1358 = vunpack.c.h.bf16 %v1339
  %v1359 = vunpack.c.l.bf16 %v1342
  %v1360 = vunpack.c.h.bf16 %v1342
  %v1361 = vunpack.c.l.bf16 %v1345
  %v1362 = vunpack.c.h.bf16 %v1345
  %v1363 = vunpack.c.l.bf16 %v1348
  %v1364 = vunpack.c.h.bf16 %v1348
  %1365 = vadd.xlane.f32.xlu0 %v1349
  %v1366 = vpop.xlane.xlu0 %1365
  %1367 = vadd.xlane.f32.xlu0 %v1350
  %v1368 = vpop.xlane.xlu0 %1367
  %1369 = vadd.xlane.f32.xlu0 %v1351
  %v1370 = vpop.xlane.xlu0 %1369
  %1371 = vadd.xlane.f32.xlu0 %v1352
  %v1372 = vpop.xlane.xlu0 %1371
  %1373 = vadd.xlane.f32.xlu0 %v1353
  %v1374 = vpop.xlane.xlu0 %1373
  %1375 = vadd.xlane.f32.xlu0 %v1354
  %v1376 = vpop.xlane.xlu0 %1375
  %1377 = vadd.xlane.f32.xlu0 %v1355
  %v1378 = vpop.xlane.xlu0 %1377
  %1379 = vadd.xlane.f32.xlu0 %v1356
  %v1380 = vpop.xlane.xlu0 %1379
  %1381 = vadd.xlane.f32.xlu0 %v1357
  %v1382 = vpop.xlane.xlu0 %1381
  %1383 = vadd.xlane.f32.xlu0 %v1358
  %v1384 = vpop.xlane.xlu0 %1383
  %1385 = vadd.xlane.f32.xlu0 %v1359
  %v1386 = vpop.xlane.xlu0 %1385
  %1387 = vadd.xlane.f32.xlu0 %v1360
  %v1388 = vpop.xlane.xlu0 %1387
  %1389 = vadd.xlane.f32.xlu0 %v1361
  %v1390 = vpop.xlane.xlu0 %1389
  %1391 = vadd.xlane.f32.xlu0 %v1362
  %v1392 = vpop.xlane.xlu0 %1391
  %1393 = vadd.xlane.f32.xlu0 %v1363
  %v1394 = vpop.xlane.xlu0 %1393
  %1395 = vadd.xlane.f32.xlu0 %v1364
  %v1396 = vpop.xlane.xlu0 %1395
  %v1397 = vrcp.pop %v1366
  %v1398 = vrcp.pop %v1368
  %v1399 = vrcp.pop %v1370
  %v1400 = vrcp.pop %v1372
  %v1401 = vrcp.pop %v1374
  %v1402 = vrcp.pop %v1376
  %v1403 = vrcp.pop %v1378
  %v1404 = vrcp.pop %v1380
  %v1405 = vrcp.pop %v1382
  %v1406 = vrcp.pop %v1384
  %v1407 = vrcp.pop %v1386
  %v1408 = vrcp.pop %v1388
  %v1409 = vrcp.pop %v1390
  %v1410 = vrcp.pop %v1392
  %v1411 = vrcp.pop %v1394
  %v1412 = vrcp.pop %v1396
  %1413 = vmatprep.subr.bf16.mxu0 0
  %1414 = vmatpush1.bf16.msra.mxu0 %v1172
  %1415 = vmatprep.subr.bf16.mxu0 0
  %1416 = vmatpush1.bf16.msra.mxu0 %v1170
  %1417 = vmatprep.subr.bf16.mxu0 0
  %1418 = vmatpush1.bf16.msra.mxu0 %v1168
  %1419 = vmatprep.subr.bf16.mxu0 0
  %1420 = vmatpush1.bf16.msra.mxu0 %v1166
  %1421 = vmatprep.subr.bf16.mxu0 0
  %1422 = vmatpush1.bf16.msra.mxu0 %v1164
  %1423 = vmatprep.subr.bf16.mxu0 0
  %1424 = vmatpush1.bf16.msra.mxu0 %v1162
  %1425 = vmatprep.subr.bf16.mxu0 0
  %1426 = vmatpush1.bf16.msra.mxu0 %v1160
  %1427 = vmatprep.subr.bf16.mxu0 0
  %1428 = vmatpush1.bf16.msra.mxu0 %v1158
  %1429 = vmatprep.subr.bf16.mxu0 0
  %1430 = vmatpush2.bf16.msra.mxu0 0
  %1431 = vmatprep.subr.bf16.mxu0 0
  %1432 = vmatpush2.bf16.msra.mxu0 0
  %1433 = vmatprep.subr.bf16.mxu0 0
  %1434 = vmatpush2.bf16.msra.mxu0 0
  %1435 = vmatprep.subr.bf16.mxu0 0
  %1436 = vmatpush2.bf16.msra.mxu0 0
  %1437 = vmatprep.subr.bf16.mxu0 0
  %1438 = vmatpush2.bf16.msra.mxu0 0
  %1439 = vmatprep.subr.bf16.mxu0 0
  %1440 = vmatpush2.bf16.msra.mxu0 0
  %1441 = vmatprep.subr.bf16.mxu0 0
  %1442 = vmatpush2.bf16.msra.mxu0 0
  %1443 = vmatprep.subr.bf16.mxu0 0
  %1444 = vmatpush2.bf16.msra.mxu0 0
  %1445 = vmatprep.mubr.bf16.mxu0 0
  %1446 = vmatmul.mubr.bf16.gmra.mxu0 %v1327
  %v1447 = vpop.f32.mrf.mxu0
  %v1448 = vadd.f32 0.0, %v1447
  %v1449 = vpop.f32.mrf.mxu0
  %v1450 = vpop.f32.mrf.mxu0
  %v1451 = vadd.f32 0.0, %v1450
  %v1452 = vpop.f32.mrf.mxu0
  %1453 = vmatprep.mubr.bf16.mxu0 0
  %1454 = vmatmul.mubr.bf16.gmra.mxu0 %v1330
  %v1455 = vpop.f32.mrf.mxu0
  %v1456 = vadd.f32 0.0, %v1455
  %v1457 = vpop.f32.mrf.mxu0
  %v1458 = vpop.f32.mrf.mxu0
  %v1459 = vadd.f32 0.0, %v1458
  %v1460 = vpop.f32.mrf.mxu0
  %1461 = vmatprep.mubr.bf16.mxu0 0
  %1462 = vmatmul.mubr.bf16.gmra.mxu0 %v1333
  %v1463 = vpop.f32.mrf.mxu0
  %v1464 = vadd.f32 0.0, %v1463
  %v1465 = vpop.f32.mrf.mxu0
  %v1466 = vpop.f32.mrf.mxu0
  %v1467 = vadd.f32 0.0, %v1466
  %v1468 = vpop.f32.mrf.mxu0
  %1469 = vmatprep.mubr.bf16.mxu0 0
  %1470 = vmatmul.mubr.bf16.gmra.mxu0 %v1336
  %v1471 = vpop.f32.mrf.mxu0
  %v1472 = vadd.f32 0.0, %v1471
  %v1473 = vpop.f32.mrf.mxu0
  %v1474 = vpop.f32.mrf.mxu0
  %v1475 = vadd.f32 0.0, %v1474
  %v1476 = vpop.f32.mrf.mxu0
  %1477 = vmatprep.mubr.bf16.mxu0 0
  %1478 = vmatmul.mubr.bf16.gmra.mxu0 %v1339
  %v1479 = vpop.f32.mrf.mxu0
  %v1480 = vadd.f32 0.0, %v1479
  %v1481 = vpop.f32.mrf.mxu0
  %v1482 = vpop.f32.mrf.mxu0
  %v1483 = vadd.f32 0.0, %v1482
  %v1484 = vpop.f32.mrf.mxu0
  %1485 = vmatprep.mubr.bf16.mxu0 0
  %1486 = vmatmul.mubr.bf16.gmra.mxu0 %v1342
  %v1487 = vpop.f32.mrf.mxu0
  %v1488 = vadd.f32 0.0, %v1487
  %v1489 = vpop.f32.mrf.mxu0
  %v1490 = vpop.f32.mrf.mxu0
  %v1491 = vadd.f32 0.0, %v1490
  %v1492 = vpop.f32.mrf.mxu0
  %1493 = vmatprep.mubr.bf16.mxu0 0
  %1494 = vmatmul.mubr.bf16.gmra.mxu0 %v1345
  %v1495 = vpop.f32.mrf.mxu0
  %v1496 = vadd.f32 0.0, %v1495
  %v1497 = vpop.f32.mrf.mxu0
  %v1498 = vpop.f32.mrf.mxu0
  %v1499 = vadd.f32 0.0, %v1498
  %v1500 = vpop.f32.mrf.mxu0
  %1501 = vmatprep.mubr.bf16.mxu0 0
  %1502 = vmatmul.mubr.bf16.gmra.mxu0 %v1348
  %v1503 = vpop.f32.mrf.mxu0
  %v1504 = vadd.f32 0.0, %v1503
  %v1505 = vpop.f32.mrf.mxu0
  %v1506 = vpop.f32.mrf.mxu0
  %v1507 = vadd.f32 0.0, %v1506
  %v1508 = vpop.f32.mrf.mxu0
  %1509 = vdwg.mxu0
  %v1510 = vmul.f32 %v1397, %v1448
  %v1511 = vmul.f32 %v1398, %v1451
  %v1512 = vmul.f32 %v1399, %v1456
  %v1513 = vmul.f32 %v1400, %v1459
  %v1514 = vmul.f32 %v1401, %v1464
  %v1515 = vmul.f32 %v1402, %v1467
  %v1516 = vmul.f32 %v1403, %v1472
  %v1517 = vmul.f32 %v1404, %v1475
  %v1518 = vmul.f32 %v1405, %v1480
  %v1519 = vmul.f32 %v1406, %v1483
  %v1520 = vmul.f32 %v1407, %v1488
  %v1521 = vmul.f32 %v1408, %v1491
  %v1522 = vmul.f32 %v1409, %v1496
  %v1523 = vmul.f32 %v1410, %v1499
  %v1524 = vmul.f32 %v1411, %v1504
  %v1525 = vmul.f32 %v1412, %v1507
  %v1526 = vadd.f32 %v1510, 0.0
  %v1527 = vadd.f32 %v1511, 0.0
  %v1528 = vadd.f32 %v1512, 0.0
  %v1529 = vadd.f32 %v1513, 0.0
  %v1530 = vadd.f32 %v1514, 0.0
  %v1531 = vadd.f32 %v1515, 0.0
  %v1532 = vadd.f32 %v1516, 0.0
  %v1533 = vadd.f32 %v1517, 0.0
  %v1534 = vadd.f32 %v1518, 0.0
  %v1535 = vadd.f32 %v1519, 0.0
  %v1536 = vadd.f32 %v1520, 0.0
  %v1537 = vadd.f32 %v1521, 0.0
  %v1538 = vadd.f32 %v1522, 0.0
  %v1539 = vadd.f32 %v1523, 0.0
  %v1540 = vadd.f32 %v1524, 0.0
  %v1541 = vadd.f32 %v1525, 0.0
  %1542 = vset.pattern.permute.xlu0 5
  %1543 = vperm.xlu0 %1542, %v1150
  %v1544 = vpop.permute.xlu0 %1543
  %1546 = vset.pattern.permute.xlu0 5
  %1547 = vperm.xlu0 %1546, %v1151
  %v1548 = vpop.permute.xlu0 %1547
  %1550 = vset.pattern.permute.xlu0 5
  %1551 = vperm.xlu0 %1550, %v1152
  %v1552 = vpop.permute.xlu0 %1551
  %1554 = vset.pattern.permute.xlu0 5
  %1555 = vperm.xlu0 %1554, %v1153
  %v1556 = vpop.permute.xlu0 %1555
  %1558 = vset.pattern.permute.xlu0 5
  %1559 = vperm.xlu0 %1558, %v1154
  %v1560 = vpop.permute.xlu0 %1559
  %1562 = vset.pattern.permute.xlu0 5
  %1563 = vperm.xlu0 %1562, %v1155
  %v1564 = vpop.permute.xlu0 %1563
  %1566 = vset.pattern.permute.xlu0 5
  %1567 = vperm.xlu0 %1566, %v1156
  %v1568 = vpop.permute.xlu0 %1567
  %1570 = vset.pattern.permute.xlu0 5
  %1571 = vperm.xlu0 %1570, %v1157
  %v1572 = vpop.permute.xlu0 %1571
  %v1574 = vshrl.u32 %v1149, 16
  %v1575 = vpack.i.b16 %v1574, %v1574
  %v1577 = vlaneseq
  %v1578 = vshrl.u32 %v1577, 7
  %v1579 = vsub.s32 0, %v1578
  %v1580 = vrot.slane %v1575, %v1579
  %v1581 = vadd.bf16 %v1544, %v1580
  %v1582 = vadd.bf16 %v1548, %v1580
  %v1583 = vadd.bf16 %v1552, %v1580
  %v1584 = vadd.bf16 %v1556, %v1580
  %v1585 = vadd.bf16 %v1560, %v1580
  %v1586 = vadd.bf16 %v1564, %v1580
  %v1587 = vadd.bf16 %v1568, %v1580
  %v1588 = vadd.bf16 %v1572, %v1580
  %v1589 = vadd.bf16 %v1581, %v1261
  %v1590 = vadd.bf16 %v1582, %v1262
  %v1591 = vadd.bf16 %v1583, %v1263
  %v1592 = vadd.bf16 %v1584, %v1264
  %v1593 = vadd.bf16 %v1585, %v1265
  %v1594 = vadd.bf16 %v1586, %v1266
  %v1595 = vadd.bf16 %v1587, %v1267
  %v1596 = vadd.bf16 %v1588, %v1268
  %v1597 = vmul.bf16 %v1589, 1045249613
  %v1598 = vmul.bf16 %v1590, 1045249613
  %v1599 = vmul.bf16 %v1591, 1045249613
  %v1600 = vmul.bf16 %v1592, 1045249613
  %v1601 = vmul.bf16 %v1593, 1045249613
  %v1602 = vmul.bf16 %v1594, 1045249613
  %v1603 = vmul.bf16 %v1595, 1045249613
  %v1604 = vmul.bf16 %v1596, 1045249613
  %v1605 = vmax.bf16 %v1589, %v1597
  %v1606 = vmax.bf16 %v1590, %v1598
  %v1607 = vmax.bf16 %v1591, %v1599
  %v1608 = vmax.bf16 %v1592, %v1600
  %v1609 = vmax.bf16 %v1593, %v1601
  %v1610 = vmax.bf16 %v1594, %v1602
  %v1611 = vmax.bf16 %v1595, %v1603
  %v1612 = vmax.bf16 %v1596, %v1604
  %1613 = vmax.xlane.bf16.xlu0 %v1605
  %v1614 = vpop.xlane.xlu0 %1613
  %1615 = vmax.xlane.bf16.xlu0 %v1606
  %v1616 = vpop.xlane.xlu0 %1615
  %1617 = vmax.xlane.bf16.xlu0 %v1607
  %v1618 = vpop.xlane.xlu0 %1617
  %1619 = vmax.xlane.bf16.xlu0 %v1608
  %v1620 = vpop.xlane.xlu0 %1619
  %1621 = vmax.xlane.bf16.xlu0 %v1609
  %v1622 = vpop.xlane.xlu0 %1621
  %1623 = vmax.xlane.bf16.xlu0 %v1610
  %v1624 = vpop.xlane.xlu0 %1623
  %1625 = vmax.xlane.bf16.xlu0 %v1611
  %v1626 = vpop.xlane.xlu0 %1625
  %1627 = vmax.xlane.bf16.xlu0 %v1612
  %v1628 = vpop.xlane.xlu0 %1627
  %v1629 = vsub.bf16 %v1605, %v1614
  %v1630 = vsub.bf16 %v1606, %v1616
  %v1631 = vsub.bf16 %v1607, %v1618
  %v1632 = vsub.bf16 %v1608, %v1620
  %v1633 = vsub.bf16 %v1609, %v1622
  %v1634 = vsub.bf16 %v1610, %v1624
  %v1635 = vsub.bf16 %v1611, %v1626
  %v1636 = vsub.bf16 %v1612, %v1628
  %v1638 = vmul.bf16 %v1629, 1069105081
  %v1639 = vpow.bf16.pop %v1638
  %v1641 = vmul.bf16 %v1630, 1069105081
  %v1642 = vpow.bf16.pop %v1641
  %v1644 = vmul.bf16 %v1631, 1069105081
  %v1645 = vpow.bf16.pop %v1644
  %v1647 = vmul.bf16 %v1632, 1069105081
  %v1648 = vpow.bf16.pop %v1647
  %v1650 = vmul.bf16 %v1633, 1069105081
  %v1651 = vpow.bf16.pop %v1650
  %v1653 = vmul.bf16 %v1634, 1069105081
  %v1654 = vpow.bf16.pop %v1653
  %v1656 = vmul.bf16 %v1635, 1069105081
  %v1657 = vpow.bf16.pop %v1656
  %v1659 = vmul.bf16 %v1636, 1069105081
  %v1660 = vpow.bf16.pop %v1659
  %v1661 = vunpack.c.l.bf16 %v1639
  %v1662 = vunpack.c.h.bf16 %v1639
  %v1663 = vunpack.c.l.bf16 %v1642
  %v1664 = vunpack.c.h.bf16 %v1642
  %v1665 = vunpack.c.l.bf16 %v1645
  %v1666 = vunpack.c.h.bf16 %v1645
  %v1667 = vunpack.c.l.bf16 %v1648
  %v1668 = vunpack.c.h.bf16 %v1648
  %v1669 = vunpack.c.l.bf16 %v1651
  %v1670 = vunpack.c.h.bf16 %v1651
  %v1671 = vunpack.c.l.bf16 %v1654
  %v1672 = vunpack.c.h.bf16 %v1654
  %v1673 = vunpack.c.l.bf16 %v1657
  %v1674 = vunpack.c.h.bf16 %v1657
  %v1675 = vunpack.c.l.bf16 %v1660
  %v1676 = vunpack.c.h.bf16 %v1660
  %1677 = vadd.xlane.f32.xlu0 %v1661
  %v1678 = vpop.xlane.xlu0 %1677
  %1679 = vadd.xlane.f32.xlu0 %v1662
  %v1680 = vpop.xlane.xlu0 %1679
  %1681 = vadd.xlane.f32.xlu0 %v1663
  %v1682 = vpop.xlane.xlu0 %1681
  %1683 = vadd.xlane.f32.xlu0 %v1664
  %v1684 = vpop.xlane.xlu0 %1683
  %1685 = vadd.xlane.f32.xlu0 %v1665
  %v1686 = vpop.xlane.xlu0 %1685
  %1687 = vadd.xlane.f32.xlu0 %v1666
  %v1688 = vpop.xlane.xlu0 %1687
  %1689 = vadd.xlane.f32.xlu0 %v1667
  %v1690 = vpop.xlane.xlu0 %1689
  %1691 = vadd.xlane.f32.xlu0 %v1668
  %v1692 = vpop.xlane.xlu0 %1691
  %1693 = vadd.xlane.f32.xlu0 %v1669
  %v1694 = vpop.xlane.xlu0 %1693
  %1695 = vadd.xlane.f32.xlu0 %v1670
  %v1696 = vpop.xlane.xlu0 %1695
  %1697 = vadd.xlane.f32.xlu0 %v1671
  %v1698 = vpop.xlane.xlu0 %1697
  %1699 = vadd.xlane.f32.xlu0 %v1672
  %v1700 = vpop.xlane.xlu0 %1699
  %1701 = vadd.xlane.f32.xlu0 %v1673
  %v1702 = vpop.xlane.xlu0 %1701
  %1703 = vadd.xlane.f32.xlu0 %v1674
  %v1704 = vpop.xlane.xlu0 %1703
  %1705 = vadd.xlane.f32.xlu0 %v1675
  %v1706 = vpop.xlane.xlu0 %1705
  %1707 = vadd.xlane.f32.xlu0 %v1676
  %v1708 = vpop.xlane.xlu0 %1707
  %v1709 = vrcp.pop %v1678
  %v1710 = vrcp.pop %v1680
  %v1711 = vrcp.pop %v1682
  %v1712 = vrcp.pop %v1684
  %v1713 = vrcp.pop %v1686
  %v1714 = vrcp.pop %v1688
  %v1715 = vrcp.pop %v1690
  %v1716 = vrcp.pop %v1692
  %v1717 = vrcp.pop %v1694
  %v1718 = vrcp.pop %v1696
  %v1719 = vrcp.pop %v1698
  %v1720 = vrcp.pop %v1700
  %v1721 = vrcp.pop %v1702
  %v1722 = vrcp.pop %v1704
  %v1723 = vrcp.pop %v1706
  %v1724 = vrcp.pop %v1708
  %1733 = vrot.lane.b32.xlu0 %v1158, 64
  %v1734 = vpop.permute.xlu0 %1733
  %1735 = vrot.lane.b32.xlu0 %v1160, 64
  %v1736 = vpop.permute.xlu0 %1735
  %1737 = vrot.lane.b32.xlu0 %v1162, 64
  %v1738 = vpop.permute.xlu0 %1737
  %1739 = vrot.lane.b32.xlu0 %v1164, 64
  %v1740 = vpop.permute.xlu0 %1739
  %1741 = vrot.lane.b32.xlu0 %v1166, 64
  %v1742 = vpop.permute.xlu0 %1741
  %1743 = vrot.lane.b32.xlu0 %v1168, 64
  %v1744 = vpop.permute.xlu0 %1743
  %1745 = vrot.lane.b32.xlu0 %v1170, 64
  %v1746 = vpop.permute.xlu0 %1745
  %1747 = vrot.lane.b32.xlu0 %v1172, 64
  %v1748 = vpop.permute.xlu0 %1747
  %1757 = vmatprep.subr.bf16.mxu0 0
  %1758 = vmatpush1.bf16.msra.mxu0 %v1748
  %1759 = vmatprep.subr.bf16.mxu0 0
  %1760 = vmatpush1.bf16.msra.mxu0 %v1746
  %1761 = vmatprep.subr.bf16.mxu0 0
  %1762 = vmatpush1.bf16.msra.mxu0 %v1744
  %1763 = vmatprep.subr.bf16.mxu0 0
  %1764 = vmatpush1.bf16.msra.mxu0 %v1742
  %1765 = vmatprep.subr.bf16.mxu0 0
  %1766 = vmatpush1.bf16.msra.mxu0 %v1740
  %1767 = vmatprep.subr.bf16.mxu0 0
  %1768 = vmatpush1.bf16.msra.mxu0 %v1738
  %1769 = vmatprep.subr.bf16.mxu0 0
  %1770 = vmatpush1.bf16.msra.mxu0 %v1736
  %1771 = vmatprep.subr.bf16.mxu0 0
  %1772 = vmatpush1.bf16.msra.mxu0 %v1734
  %1773 = vmatprep.subr.bf16.mxu0 0
  %1774 = vmatpush2.bf16.msra.mxu0 0
  %1775 = vmatprep.subr.bf16.mxu0 0
  %1776 = vmatpush2.bf16.msra.mxu0 0
  %1777 = vmatprep.subr.bf16.mxu0 0
  %1778 = vmatpush2.bf16.msra.mxu0 0
  %1779 = vmatprep.subr.bf16.mxu0 0
  %1780 = vmatpush2.bf16.msra.mxu0 0
  %1781 = vmatprep.subr.bf16.mxu0 0
  %1782 = vmatpush2.bf16.msra.mxu0 0
  %1783 = vmatprep.subr.bf16.mxu0 0
  %1784 = vmatpush2.bf16.msra.mxu0 0
  %1785 = vmatprep.subr.bf16.mxu0 0
  %1786 = vmatpush2.bf16.msra.mxu0 0
  %1787 = vmatprep.subr.bf16.mxu0 0
  %1788 = vmatpush2.bf16.msra.mxu0 0
  %1789 = vmatprep.mubr.bf16.mxu0 0
  %1790 = vmatmul.mubr.bf16.gmra.mxu0 %v1639
  %v1791 = vpop.f32.mrf.mxu0
  %v1792 = vadd.f32 0.0, %v1791
  %v1793 = vpop.f32.mrf.mxu0
  %v1794 = vpop.f32.mrf.mxu0
  %v1795 = vadd.f32 0.0, %v1794
  %v1796 = vpop.f32.mrf.mxu0
  %1797 = vmatprep.mubr.bf16.mxu0 0
  %1798 = vmatmul.mubr.bf16.gmra.mxu0 %v1642
  %v1799 = vpop.f32.mrf.mxu0
  %v1800 = vadd.f32 0.0, %v1799
  %v1801 = vpop.f32.mrf.mxu0
  %v1802 = vpop.f32.mrf.mxu0
  %v1803 = vadd.f32 0.0, %v1802
  %v1804 = vpop.f32.mrf.mxu0
  %1805 = vmatprep.mubr.bf16.mxu0 0
  %1806 = vmatmul.mubr.bf16.gmra.mxu0 %v1645
  %v1807 = vpop.f32.mrf.mxu0
  %v1808 = vadd.f32 0.0, %v1807
  %v1809 = vpop.f32.mrf.mxu0
  %v1810 = vpop.f32.mrf.mxu0
  %v1811 = vadd.f32 0.0, %v1810
  %v1812 = vpop.f32.mrf.mxu0
  %1813 = vmatprep.mubr.bf16.mxu0 0
  %1814 = vmatmul.mubr.bf16.gmra.mxu0 %v1648
  %v1815 = vpop.f32.mrf.mxu0
  %v1816 = vadd.f32 0.0, %v1815
  %v1817 = vpop.f32.mrf.mxu0
  %v1818 = vpop.f32.mrf.mxu0
  %v1819 = vadd.f32 0.0, %v1818
  %v1820 = vpop.f32.mrf.mxu0
  %1821 = vmatprep.mubr.bf16.mxu0 0
  %1822 = vmatmul.mubr.bf16.gmra.mxu0 %v1651
  %v1823 = vpop.f32.mrf.mxu0
  %v1824 = vadd.f32 0.0, %v1823
  %v1825 = vpop.f32.mrf.mxu0
  %v1826 = vpop.f32.mrf.mxu0
  %v1827 = vadd.f32 0.0, %v1826
  %v1828 = vpop.f32.mrf.mxu0
  %1829 = vmatprep.mubr.bf16.mxu0 0
  %1830 = vmatmul.mubr.bf16.gmra.mxu0 %v1654
  %v1831 = vpop.f32.mrf.mxu0
  %v1832 = vadd.f32 0.0, %v1831
  %v1833 = vpop.f32.mrf.mxu0
  %v1834 = vpop.f32.mrf.mxu0
  %v1835 = vadd.f32 0.0, %v1834
  %v1836 = vpop.f32.mrf.mxu0
  %1837 = vmatprep.mubr.bf16.mxu0 0
  %1838 = vmatmul.mubr.bf16.gmra.mxu0 %v1657
  %v1839 = vpop.f32.mrf.mxu0
  %v1840 = vadd.f32 0.0, %v1839
  %v1841 = vpop.f32.mrf.mxu0
  %v1842 = vpop.f32.mrf.mxu0
  %v1843 = vadd.f32 0.0, %v1842
  %v1844 = vpop.f32.mrf.mxu0
  %1845 = vmatprep.mubr.bf16.mxu0 0
  %1846 = vmatmul.mubr.bf16.gmra.mxu0 %v1660
  %v1847 = vpop.f32.mrf.mxu0
  %v1848 = vadd.f32 0.0, %v1847
  %v1849 = vpop.f32.mrf.mxu0
  %v1850 = vpop.f32.mrf.mxu0
  %v1851 = vadd.f32 0.0, %v1850
  %v1852 = vpop.f32.mrf.mxu0
  %1853 = vdwg.mxu0
  %v1854 = vmul.f32 %v1709, %v1792
  %v1855 = vmul.f32 %v1710, %v1795
  %v1856 = vmul.f32 %v1711, %v1800
  %v1857 = vmul.f32 %v1712, %v1803
  %v1858 = vmul.f32 %v1713, %v1808
  %v1859 = vmul.f32 %v1714, %v1811
  %v1860 = vmul.f32 %v1715, %v1816
  %v1861 = vmul.f32 %v1716, %v1819
  %v1862 = vmul.f32 %v1717, %v1824
  %v1863 = vmul.f32 %v1718, %v1827
  %v1864 = vmul.f32 %v1719, %v1832
  %v1865 = vmul.f32 %v1720, %v1835
  %v1866 = vmul.f32 %v1721, %v1840
  %v1867 = vmul.f32 %v1722, %v1843
  %v1868 = vmul.f32 %v1723, %v1848
  %v1869 = vmul.f32 %v1724, %v1851
  %v1870 = vadd.f32 %v1526, %v1854
  %v1871 = vadd.f32 %v1527, %v1855
  %v1872 = vadd.f32 %v1528, %v1856
  %v1873 = vadd.f32 %v1529, %v1857
  %v1874 = vadd.f32 %v1530, %v1858
  %v1875 = vadd.f32 %v1531, %v1859
  %v1876 = vadd.f32 %v1532, %v1860
  %v1877 = vadd.f32 %v1533, %v1861
  %v1878 = vadd.f32 %v1534, %v1862
  %v1879 = vadd.f32 %v1535, %v1863
  %v1880 = vadd.f32 %v1536, %v1864
  %v1881 = vadd.f32 %v1537, %v1865
  %v1882 = vadd.f32 %v1538, %v1866
  %v1883 = vadd.f32 %v1539, %v1867
  %v1884 = vadd.f32 %v1540, %v1868
  %v1885 = vadd.f32 %v1541, %v1869
  %1886 = vset.pattern.permute.xlu0 6
  %1887 = vperm.xlu0 %1886, %v1150
  %v1888 = vpop.permute.xlu0 %1887
  %1890 = vset.pattern.permute.xlu0 6
  %1891 = vperm.xlu0 %1890, %v1151
  %v1892 = vpop.permute.xlu0 %1891
  %1894 = vset.pattern.permute.xlu0 6
  %1895 = vperm.xlu0 %1894, %v1152
  %v1896 = vpop.permute.xlu0 %1895
  %1898 = vset.pattern.permute.xlu0 6
  %1899 = vperm.xlu0 %1898, %v1153
  %v1900 = vpop.permute.xlu0 %1899
  %1902 = vset.pattern.permute.xlu0 6
  %1903 = vperm.xlu0 %1902, %v1154
  %v1904 = vpop.permute.xlu0 %1903
  %1906 = vset.pattern.permute.xlu0 6
  %1907 = vperm.xlu0 %1906, %v1155
  %v1908 = vpop.permute.xlu0 %1907
  %1910 = vset.pattern.permute.xlu0 6
  %1911 = vperm.xlu0 %1910, %v1156
  %v1912 = vpop.permute.xlu0 %1911
  %1914 = vset.pattern.permute.xlu0 6
  %1915 = vperm.xlu0 %1914, %v1157
  %v1916 = vpop.permute.xlu0 %1915
  %v1918 = vlaneseq
  %v1919 = vshrl.u32 %v1918, 7
  %v1920 = vsub.s32 1, %v1919
  %v1921 = vrot.slane %v1215, %v1920
  %v1922 = vadd.bf16 %v1888, %v1921
  %v1923 = vadd.bf16 %v1892, %v1921
  %v1924 = vadd.bf16 %v1896, %v1921
  %v1925 = vadd.bf16 %v1900, %v1921
  %v1926 = vadd.bf16 %v1904, %v1921
  %v1927 = vadd.bf16 %v1908, %v1921
  %v1928 = vadd.bf16 %v1912, %v1921
  %v1929 = vadd.bf16 %v1916, %v1921
  %v1930 = vadd.bf16 %v1922, %v1261
  %v1931 = vadd.bf16 %v1923, %v1262
  %v1932 = vadd.bf16 %v1924, %v1263
  %v1933 = vadd.bf16 %v1925, %v1264
  %v1934 = vadd.bf16 %v1926, %v1265
  %v1935 = vadd.bf16 %v1927, %v1266
  %v1936 = vadd.bf16 %v1928, %v1267
  %v1937 = vadd.bf16 %v1929, %v1268
  %v1938 = vmul.bf16 %v1930, 1045249613
  %v1939 = vmul.bf16 %v1931, 1045249613
  %v1940 = vmul.bf16 %v1932, 1045249613
  %v1941 = vmul.bf16 %v1933, 1045249613
  %v1942 = vmul.bf16 %v1934, 1045249613
  %v1943 = vmul.bf16 %v1935, 1045249613
  %v1944 = vmul.bf16 %v1936, 1045249613
  %v1945 = vmul.bf16 %v1937, 1045249613
  %v1946 = vmax.bf16 %v1930, %v1938
  %v1947 = vmax.bf16 %v1931, %v1939
  %v1948 = vmax.bf16 %v1932, %v1940
  %v1949 = vmax.bf16 %v1933, %v1941
  %v1950 = vmax.bf16 %v1934, %v1942
  %v1951 = vmax.bf16 %v1935, %v1943
  %v1952 = vmax.bf16 %v1936, %v1944
  %v1953 = vmax.bf16 %v1937, %v1945
  %1954 = vmax.xlane.bf16.xlu0 %v1946
  %v1955 = vpop.xlane.xlu0 %1954
  %1956 = vmax.xlane.bf16.xlu0 %v1947
  %v1957 = vpop.xlane.xlu0 %1956
  %1958 = vmax.xlane.bf16.xlu0 %v1948
  %v1959 = vpop.xlane.xlu0 %1958
  %1960 = vmax.xlane.bf16.xlu0 %v1949
  %v1961 = vpop.xlane.xlu0 %1960
  %1962 = vmax.xlane.bf16.xlu0 %v1950
  %v1963 = vpop.xlane.xlu0 %1962
  %1964 = vmax.xlane.bf16.xlu0 %v1951
  %v1965 = vpop.xlane.xlu0 %1964
  %1966 = vmax.xlane.bf16.xlu0 %v1952
  %v1967 = vpop.xlane.xlu0 %1966
  %1968 = vmax.xlane.bf16.xlu0 %v1953
  %v1969 = vpop.xlane.xlu0 %1968
  %v1970 = vsub.bf16 %v1946, %v1955
  %v1971 = vsub.bf16 %v1947, %v1957
  %v1972 = vsub.bf16 %v1948, %v1959
  %v1973 = vsub.bf16 %v1949, %v1961
  %v1974 = vsub.bf16 %v1950, %v1963
  %v1975 = vsub.bf16 %v1951, %v1965
  %v1976 = vsub.bf16 %v1952, %v1967
  %v1977 = vsub.bf16 %v1953, %v1969
  %v1979 = vmul.bf16 %v1970, 1069105081
  %v1980 = vpow.bf16.pop %v1979
  %v1982 = vmul.bf16 %v1971, 1069105081
  %v1983 = vpow.bf16.pop %v1982
  %v1985 = vmul.bf16 %v1972, 1069105081
  %v1986 = vpow.bf16.pop %v1985
  %v1988 = vmul.bf16 %v1973, 1069105081
  %v1989 = vpow.bf16.pop %v1988
  %v1991 = vmul.bf16 %v1974, 1069105081
  %v1992 = vpow.bf16.pop %v1991
  %v1994 = vmul.bf16 %v1975, 1069105081
  %v1995 = vpow.bf16.pop %v1994
  %v1997 = vmul.bf16 %v1976, 1069105081
  %v1998 = vpow.bf16.pop %v1997
  %v2000 = vmul.bf16 %v1977, 1069105081
  %v2001 = vpow.bf16.pop %v2000
  %v2002 = vunpack.c.l.bf16 %v1980
  %v2003 = vunpack.c.h.bf16 %v1980
  %v2004 = vunpack.c.l.bf16 %v1983
  %v2005 = vunpack.c.h.bf16 %v1983
  %v2006 = vunpack.c.l.bf16 %v1986
  %v2007 = vunpack.c.h.bf16 %v1986
  %v2008 = vunpack.c.l.bf16 %v1989
  %v2009 = vunpack.c.h.bf16 %v1989
  %v2010 = vunpack.c.l.bf16 %v1992
  %v2011 = vunpack.c.h.bf16 %v1992
  %v2012 = vunpack.c.l.bf16 %v1995
  %v2013 = vunpack.c.h.bf16 %v1995
  %v2014 = vunpack.c.l.bf16 %v1998
  %v2015 = vunpack.c.h.bf16 %v1998
  %v2016 = vunpack.c.l.bf16 %v2001
  %v2017 = vunpack.c.h.bf16 %v2001
  %2018 = vadd.xlane.f32.xlu0 %v2002
  %v2019 = vpop.xlane.xlu0 %2018
  %2020 = vadd.xlane.f32.xlu0 %v2003
  %v2021 = vpop.xlane.xlu0 %2020
  %2022 = vadd.xlane.f32.xlu0 %v2004
  %v2023 = vpop.xlane.xlu0 %2022
  %2024 = vadd.xlane.f32.xlu0 %v2005
  %v2025 = vpop.xlane.xlu0 %2024
  %2026 = vadd.xlane.f32.xlu0 %v2006
  %v2027 = vpop.xlane.xlu0 %2026
  %2028 = vadd.xlane.f32.xlu0 %v2007
  %v2029 = vpop.xlane.xlu0 %2028
  %2030 = vadd.xlane.f32.xlu0 %v2008
  %v2031 = vpop.xlane.xlu0 %2030
  %2032 = vadd.xlane.f32.xlu0 %v2009
  %v2033 = vpop.xlane.xlu0 %2032
  %2034 = vadd.xlane.f32.xlu0 %v2010
  %v2035 = vpop.xlane.xlu0 %2034
  %2036 = vadd.xlane.f32.xlu0 %v2011
  %v2037 = vpop.xlane.xlu0 %2036
  %2038 = vadd.xlane.f32.xlu0 %v2012
  %v2039 = vpop.xlane.xlu0 %2038
  %2040 = vadd.xlane.f32.xlu0 %v2013
  %v2041 = vpop.xlane.xlu0 %2040
  %2042 = vadd.xlane.f32.xlu0 %v2014
  %v2043 = vpop.xlane.xlu0 %2042
  %2044 = vadd.xlane.f32.xlu0 %v2015
  %v2045 = vpop.xlane.xlu0 %2044
  %2046 = vadd.xlane.f32.xlu0 %v2016
  %v2047 = vpop.xlane.xlu0 %2046
  %2048 = vadd.xlane.f32.xlu0 %v2017
  %v2049 = vpop.xlane.xlu0 %2048
  %v2050 = vrcp.pop %v2019
  %v2051 = vrcp.pop %v2021
  %v2052 = vrcp.pop %v2023
  %v2053 = vrcp.pop %v2025
  %v2054 = vrcp.pop %v2027
  %v2055 = vrcp.pop %v2029
  %v2056 = vrcp.pop %v2031
  %v2057 = vrcp.pop %v2033
  %v2058 = vrcp.pop %v2035
  %v2059 = vrcp.pop %v2037
  %v2060 = vrcp.pop %v2039
  %v2061 = vrcp.pop %v2041
  %v2062 = vrcp.pop %v2043
  %v2063 = vrcp.pop %v2045
  %v2064 = vrcp.pop %v2047
  %v2065 = vrcp.pop %v2049
  %2066 = vmatprep.subr.bf16.mxu0 0
  %2067 = vmatpush1.bf16.msra.mxu0 %v1173
  %2068 = vmatprep.subr.bf16.mxu0 0
  %2069 = vmatpush1.bf16.msra.mxu0 %v1171
  %2070 = vmatprep.subr.bf16.mxu0 0
  %2071 = vmatpush1.bf16.msra.mxu0 %v1169
  %2072 = vmatprep.subr.bf16.mxu0 0
  %2073 = vmatpush1.bf16.msra.mxu0 %v1167
  %2074 = vmatprep.subr.bf16.mxu0 0
  %2075 = vmatpush1.bf16.msra.mxu0 %v1165
  %2076 = vmatprep.subr.bf16.mxu0 0
  %2077 = vmatpush1.bf16.msra.mxu0 %v1163
  %2078 = vmatprep.subr.bf16.mxu0 0
  %2079 = vmatpush1.bf16.msra.mxu0 %v1161
  %2080 = vmatprep.subr.bf16.mxu0 0
  %2081 = vmatpush1.bf16.msra.mxu0 %v1159
  %2082 = vmatprep.subr.bf16.mxu0 0
  %2083 = vmatpush2.bf16.msra.mxu0 0
  %2084 = vmatprep.subr.bf16.mxu0 0
  %2085 = vmatpush2.bf16.msra.mxu0 0
  %2086 = vmatprep.subr.bf16.mxu0 0
  %2087 = vmatpush2.bf16.msra.mxu0 0
  %2088 = vmatprep.subr.bf16.mxu0 0
  %2089 = vmatpush2.bf16.msra.mxu0 0
  %2090 = vmatprep.subr.bf16.mxu0 0
  %2091 = vmatpush2.bf16.msra.mxu0 0
  %2092 = vmatprep.subr.bf16.mxu0 0
  %2093 = vmatpush2.bf16.msra.mxu0 0
  %2094 = vmatprep.subr.bf16.mxu0 0
  %2095 = vmatpush2.bf16.msra.mxu0 0
  %2096 = vmatprep.subr.bf16.mxu0 0
  %2097 = vmatpush2.bf16.msra.mxu0 0
  %2098 = vmatprep.mubr.bf16.mxu0 0
  %2099 = vmatmul.mubr.bf16.gmra.mxu0 %v1980
  %v2100 = vpop.f32.mrf.mxu0
  %v2101 = vadd.f32 0.0, %v2100
  %v2102 = vpop.f32.mrf.mxu0
  %v2103 = vpop.f32.mrf.mxu0
  %v2104 = vadd.f32 0.0, %v2103
  %v2105 = vpop.f32.mrf.mxu0
  %2106 = vmatprep.mubr.bf16.mxu0 0
  %2107 = vmatmul.mubr.bf16.gmra.mxu0 %v1983
  %v2108 = vpop.f32.mrf.mxu0
  %v2109 = vadd.f32 0.0, %v2108
  %v2110 = vpop.f32.mrf.mxu0
  %v2111 = vpop.f32.mrf.mxu0
  %v2112 = vadd.f32 0.0, %v2111
  %v2113 = vpop.f32.mrf.mxu0
  %2114 = vmatprep.mubr.bf16.mxu0 0
  %2115 = vmatmul.mubr.bf16.gmra.mxu0 %v1986
  %v2116 = vpop.f32.mrf.mxu0
  %v2117 = vadd.f32 0.0, %v2116
  %v2118 = vpop.f32.mrf.mxu0
  %v2119 = vpop.f32.mrf.mxu0
  %v2120 = vadd.f32 0.0, %v2119
  %v2121 = vpop.f32.mrf.mxu0
  %2122 = vmatprep.mubr.bf16.mxu0 0
  %2123 = vmatmul.mubr.bf16.gmra.mxu0 %v1989
  %v2124 = vpop.f32.mrf.mxu0
  %v2125 = vadd.f32 0.0, %v2124
  %v2126 = vpop.f32.mrf.mxu0
  %v2127 = vpop.f32.mrf.mxu0
  %v2128 = vadd.f32 0.0, %v2127
  %v2129 = vpop.f32.mrf.mxu0
  %2130 = vmatprep.mubr.bf16.mxu0 0
  %2131 = vmatmul.mubr.bf16.gmra.mxu0 %v1992
  %v2132 = vpop.f32.mrf.mxu0
  %v2133 = vadd.f32 0.0, %v2132
  %v2134 = vpop.f32.mrf.mxu0
  %v2135 = vpop.f32.mrf.mxu0
  %v2136 = vadd.f32 0.0, %v2135
  %v2137 = vpop.f32.mrf.mxu0
  %2138 = vmatprep.mubr.bf16.mxu0 0
  %2139 = vmatmul.mubr.bf16.gmra.mxu0 %v1995
  %v2140 = vpop.f32.mrf.mxu0
  %v2141 = vadd.f32 0.0, %v2140
  %v2142 = vpop.f32.mrf.mxu0
  %v2143 = vpop.f32.mrf.mxu0
  %v2144 = vadd.f32 0.0, %v2143
  %v2145 = vpop.f32.mrf.mxu0
  %2146 = vmatprep.mubr.bf16.mxu0 0
  %2147 = vmatmul.mubr.bf16.gmra.mxu0 %v1998
  %v2148 = vpop.f32.mrf.mxu0
  %v2149 = vadd.f32 0.0, %v2148
  %v2150 = vpop.f32.mrf.mxu0
  %v2151 = vpop.f32.mrf.mxu0
  %v2152 = vadd.f32 0.0, %v2151
  %v2153 = vpop.f32.mrf.mxu0
  %2154 = vmatprep.mubr.bf16.mxu0 0
  %2155 = vmatmul.mubr.bf16.gmra.mxu0 %v2001
  %v2156 = vpop.f32.mrf.mxu0
  %v2157 = vadd.f32 0.0, %v2156
  %v2158 = vpop.f32.mrf.mxu0
  %v2159 = vpop.f32.mrf.mxu0
  %v2160 = vadd.f32 0.0, %v2159
  %v2161 = vpop.f32.mrf.mxu0
  %2162 = vdwg.mxu0
  %v2163 = vmul.f32 %v2050, %v2101
  %v2164 = vmul.f32 %v2051, %v2104
  %v2165 = vmul.f32 %v2052, %v2109
  %v2166 = vmul.f32 %v2053, %v2112
  %v2167 = vmul.f32 %v2054, %v2117
  %v2168 = vmul.f32 %v2055, %v2120
  %v2169 = vmul.f32 %v2056, %v2125
  %v2170 = vmul.f32 %v2057, %v2128
  %v2171 = vmul.f32 %v2058, %v2133
  %v2172 = vmul.f32 %v2059, %v2136
  %v2173 = vmul.f32 %v2060, %v2141
  %v2174 = vmul.f32 %v2061, %v2144
  %v2175 = vmul.f32 %v2062, %v2149
  %v2176 = vmul.f32 %v2063, %v2152
  %v2177 = vmul.f32 %v2064, %v2157
  %v2178 = vmul.f32 %v2065, %v2160
  %v2179 = vadd.f32 %v1870, %v2163
  %v2180 = vadd.f32 %v1871, %v2164
  %v2181 = vadd.f32 %v1872, %v2165
  %v2182 = vadd.f32 %v1873, %v2166
  %v2183 = vadd.f32 %v1874, %v2167
  %v2184 = vadd.f32 %v1875, %v2168
  %v2185 = vadd.f32 %v1876, %v2169
  %v2186 = vadd.f32 %v1877, %v2170
  %v2187 = vadd.f32 %v1878, %v2171
  %v2188 = vadd.f32 %v1879, %v2172
  %v2189 = vadd.f32 %v1880, %v2173
  %v2190 = vadd.f32 %v1881, %v2174
  %v2191 = vadd.f32 %v1882, %v2175
  %v2192 = vadd.f32 %v1883, %v2176
  %v2193 = vadd.f32 %v1884, %v2177
  %v2194 = vadd.f32 %v1885, %v2178
  %2195 = vset.pattern.permute.xlu0 7
  %2196 = vperm.xlu0 %2195, %v1150
  %v2197 = vpop.permute.xlu0 %2196
  %2199 = vset.pattern.permute.xlu0 7
  %2200 = vperm.xlu0 %2199, %v1151
  %v2201 = vpop.permute.xlu0 %2200
  %2203 = vset.pattern.permute.xlu0 7
  %2204 = vperm.xlu0 %2203, %v1152
  %v2205 = vpop.permute.xlu0 %2204
  %2207 = vset.pattern.permute.xlu0 7
  %2208 = vperm.xlu0 %2207, %v1153
  %v2209 = vpop.permute.xlu0 %2208
  %2211 = vset.pattern.permute.xlu0 7
  %2212 = vperm.xlu0 %2211, %v1154
  %v2213 = vpop.permute.xlu0 %2212
  %2215 = vset.pattern.permute.xlu0 7
  %2216 = vperm.xlu0 %2215, %v1155
  %v2217 = vpop.permute.xlu0 %2216
  %2219 = vset.pattern.permute.xlu0 7
  %2220 = vperm.xlu0 %2219, %v1156
  %v2221 = vpop.permute.xlu0 %2220
  %2223 = vset.pattern.permute.xlu0 7
  %2224 = vperm.xlu0 %2223, %v1157
  %v2225 = vpop.permute.xlu0 %2224
  %v2227 = vlaneseq
  %v2228 = vshrl.u32 %v2227, 7
  %v2229 = vsub.s32 1, %v2228
  %v2230 = vrot.slane %v1575, %v2229
  %v2231 = vadd.bf16 %v2197, %v2230
  %v2232 = vadd.bf16 %v2201, %v2230
  %v2233 = vadd.bf16 %v2205, %v2230
  %v2234 = vadd.bf16 %v2209, %v2230
  %v2235 = vadd.bf16 %v2213, %v2230
  %v2236 = vadd.bf16 %v2217, %v2230
  %v2237 = vadd.bf16 %v2221, %v2230
  %v2238 = vadd.bf16 %v2225, %v2230
  %v2239 = vadd.bf16 %v2231, %v1261
  %v2240 = vadd.bf16 %v2232, %v1262
  %v2241 = vadd.bf16 %v2233, %v1263
  %v2242 = vadd.bf16 %v2234, %v1264
  %v2243 = vadd.bf16 %v2235, %v1265
  %v2244 = vadd.bf16 %v2236, %v1266
  %v2245 = vadd.bf16 %v2237, %v1267
  %v2246 = vadd.bf16 %v2238, %v1268
  %v2247 = vmul.bf16 %v2239, 1045249613
  %v2248 = vmul.bf16 %v2240, 1045249613
  %v2249 = vmul.bf16 %v2241, 1045249613
  %v2250 = vmul.bf16 %v2242, 1045249613
  %v2251 = vmul.bf16 %v2243, 1045249613
  %v2252 = vmul.bf16 %v2244, 1045249613
  %v2253 = vmul.bf16 %v2245, 1045249613
  %v2254 = vmul.bf16 %v2246, 1045249613
  %v2255 = vmax.bf16 %v2239, %v2247
  %v2256 = vmax.bf16 %v2240, %v2248
  %v2257 = vmax.bf16 %v2241, %v2249
  %v2258 = vmax.bf16 %v2242, %v2250
  %v2259 = vmax.bf16 %v2243, %v2251
  %v2260 = vmax.bf16 %v2244, %v2252
  %v2261 = vmax.bf16 %v2245, %v2253
  %v2262 = vmax.bf16 %v2246, %v2254
  %2263 = vmax.xlane.bf16.xlu0 %v2255
  %v2264 = vpop.xlane.xlu0 %2263
  %2265 = vmax.xlane.bf16.xlu0 %v2256
  %v2266 = vpop.xlane.xlu0 %2265
  %2267 = vmax.xlane.bf16.xlu0 %v2257
  %v2268 = vpop.xlane.xlu0 %2267
  %2269 = vmax.xlane.bf16.xlu0 %v2258
  %v2270 = vpop.xlane.xlu0 %2269
  %2271 = vmax.xlane.bf16.xlu0 %v2259
  %v2272 = vpop.xlane.xlu0 %2271
  %2273 = vmax.xlane.bf16.xlu0 %v2260
  %v2274 = vpop.xlane.xlu0 %2273
  %2275 = vmax.xlane.bf16.xlu0 %v2261
  %v2276 = vpop.xlane.xlu0 %2275
  %2277 = vmax.xlane.bf16.xlu0 %v2262
  %v2278 = vpop.xlane.xlu0 %2277
  %v2279 = vsub.bf16 %v2255, %v2264
  %v2280 = vsub.bf16 %v2256, %v2266
  %v2281 = vsub.bf16 %v2257, %v2268
  %v2282 = vsub.bf16 %v2258, %v2270
  %v2283 = vsub.bf16 %v2259, %v2272
  %v2284 = vsub.bf16 %v2260, %v2274
  %v2285 = vsub.bf16 %v2261, %v2276
  %v2286 = vsub.bf16 %v2262, %v2278
  %v2288 = vmul.bf16 %v2279, 1069105081
  %v2289 = vpow.bf16.pop %v2288
  %v2291 = vmul.bf16 %v2280, 1069105081
  %v2292 = vpow.bf16.pop %v2291
  %v2294 = vmul.bf16 %v2281, 1069105081
  %v2295 = vpow.bf16.pop %v2294
  %v2297 = vmul.bf16 %v2282, 1069105081
  %v2298 = vpow.bf16.pop %v2297
  %v2300 = vmul.bf16 %v2283, 1069105081
  %v2301 = vpow.bf16.pop %v2300
  %v2303 = vmul.bf16 %v2284, 1069105081
  %v2304 = vpow.bf16.pop %v2303
  %v2306 = vmul.bf16 %v2285, 1069105081
  %v2307 = vpow.bf16.pop %v2306
  %v2309 = vmul.bf16 %v2286, 1069105081
  %v2310 = vpow.bf16.pop %v2309
  %v2311 = vunpack.c.l.bf16 %v2289
  %v2312 = vunpack.c.h.bf16 %v2289
  %v2313 = vunpack.c.l.bf16 %v2292
  %v2314 = vunpack.c.h.bf16 %v2292
  %v2315 = vunpack.c.l.bf16 %v2295
  %v2316 = vunpack.c.h.bf16 %v2295
  %v2317 = vunpack.c.l.bf16 %v2298
  %v2318 = vunpack.c.h.bf16 %v2298
  %v2319 = vunpack.c.l.bf16 %v2301
  %v2320 = vunpack.c.h.bf16 %v2301
  %v2321 = vunpack.c.l.bf16 %v2304
  %v2322 = vunpack.c.h.bf16 %v2304
  %v2323 = vunpack.c.l.bf16 %v2307
  %v2324 = vunpack.c.h.bf16 %v2307
  %v2325 = vunpack.c.l.bf16 %v2310
  %v2326 = vunpack.c.h.bf16 %v2310
  %2327 = vadd.xlane.f32.xlu0 %v2311
  %v2328 = vpop.xlane.xlu0 %2327
  %2329 = vadd.xlane.f32.xlu0 %v2312
  %v2330 = vpop.xlane.xlu0 %2329
  %2331 = vadd.xlane.f32.xlu0 %v2313
  %v2332 = vpop.xlane.xlu0 %2331
  %2333 = vadd.xlane.f32.xlu0 %v2314
  %v2334 = vpop.xlane.xlu0 %2333
  %2335 = vadd.xlane.f32.xlu0 %v2315
  %v2336 = vpop.xlane.xlu0 %2335
  %2337 = vadd.xlane.f32.xlu0 %v2316
  %v2338 = vpop.xlane.xlu0 %2337
  %2339 = vadd.xlane.f32.xlu0 %v2317
  %v2340 = vpop.xlane.xlu0 %2339
  %2341 = vadd.xlane.f32.xlu0 %v2318
  %v2342 = vpop.xlane.xlu0 %2341
  %2343 = vadd.xlane.f32.xlu0 %v2319
  %v2344 = vpop.xlane.xlu0 %2343
  %2345 = vadd.xlane.f32.xlu0 %v2320
  %v2346 = vpop.xlane.xlu0 %2345
  %2347 = vadd.xlane.f32.xlu0 %v2321
  %v2348 = vpop.xlane.xlu0 %2347
  %2349 = vadd.xlane.f32.xlu0 %v2322
  %v2350 = vpop.xlane.xlu0 %2349
  %2351 = vadd.xlane.f32.xlu0 %v2323
  %v2352 = vpop.xlane.xlu0 %2351
  %2353 = vadd.xlane.f32.xlu0 %v2324
  %v2354 = vpop.xlane.xlu0 %2353
  %2355 = vadd.xlane.f32.xlu0 %v2325
  %v2356 = vpop.xlane.xlu0 %2355
  %2357 = vadd.xlane.f32.xlu0 %v2326
  %v2358 = vpop.xlane.xlu0 %2357
  %v2359 = vrcp.pop %v2328
  %v2360 = vrcp.pop %v2330
  %v2361 = vrcp.pop %v2332
  %v2362 = vrcp.pop %v2334
  %v2363 = vrcp.pop %v2336
  %v2364 = vrcp.pop %v2338
  %v2365 = vrcp.pop %v2340
  %v2366 = vrcp.pop %v2342
  %v2367 = vrcp.pop %v2344
  %v2368 = vrcp.pop %v2346
  %v2369 = vrcp.pop %v2348
  %v2370 = vrcp.pop %v2350
  %v2371 = vrcp.pop %v2352
  %v2372 = vrcp.pop %v2354
  %v2373 = vrcp.pop %v2356
  %v2374 = vrcp.pop %v2358
  %2383 = vrot.lane.b32.xlu0 %v1159, 64
  %v2384 = vpop.permute.xlu0 %2383
  %2385 = vrot.lane.b32.xlu0 %v1161, 64
  %v2386 = vpop.permute.xlu0 %2385
  %2387 = vrot.lane.b32.xlu0 %v1163, 64
  %v2388 = vpop.permute.xlu0 %2387
  %2389 = vrot.lane.b32.xlu0 %v1165, 64
  %v2390 = vpop.permute.xlu0 %2389
  %2391 = vrot.lane.b32.xlu0 %v1167, 64
  %v2392 = vpop.permute.xlu0 %2391
  %2393 = vrot.lane.b32.xlu0 %v1169, 64
  %v2394 = vpop.permute.xlu0 %2393
  %2395 = vrot.lane.b32.xlu0 %v1171, 64
  %v2396 = vpop.permute.xlu0 %2395
  %2397 = vrot.lane.b32.xlu0 %v1173, 64
  %v2398 = vpop.permute.xlu0 %2397
  %2407 = vmatprep.subr.bf16.mxu0 0
  %2408 = vmatpush1.bf16.msra.mxu0 %v2398
  %2409 = vmatprep.subr.bf16.mxu0 0
  %2410 = vmatpush1.bf16.msra.mxu0 %v2396
  %2411 = vmatprep.subr.bf16.mxu0 0
  %2412 = vmatpush1.bf16.msra.mxu0 %v2394
  %2413 = vmatprep.subr.bf16.mxu0 0
  %2414 = vmatpush1.bf16.msra.mxu0 %v2392
  %2415 = vmatprep.subr.bf16.mxu0 0
  %2416 = vmatpush1.bf16.msra.mxu0 %v2390
  %2417 = vmatprep.subr.bf16.mxu0 0
  %2418 = vmatpush1.bf16.msra.mxu0 %v2388
  %2419 = vmatprep.subr.bf16.mxu0 0
  %2420 = vmatpush1.bf16.msra.mxu0 %v2386
  %2421 = vmatprep.subr.bf16.mxu0 0
  %2422 = vmatpush1.bf16.msra.mxu0 %v2384
  %2423 = vmatprep.subr.bf16.mxu0 0
  %2424 = vmatpush2.bf16.msra.mxu0 0
  %2425 = vmatprep.subr.bf16.mxu0 0
  %2426 = vmatpush2.bf16.msra.mxu0 0
  %2427 = vmatprep.subr.bf16.mxu0 0
  %2428 = vmatpush2.bf16.msra.mxu0 0
  %2429 = vmatprep.subr.bf16.mxu0 0
  %2430 = vmatpush2.bf16.msra.mxu0 0
  %2431 = vmatprep.subr.bf16.mxu0 0
  %2432 = vmatpush2.bf16.msra.mxu0 0
  %2433 = vmatprep.subr.bf16.mxu0 0
  %2434 = vmatpush2.bf16.msra.mxu0 0
  %2435 = vmatprep.subr.bf16.mxu0 0
  %2436 = vmatpush2.bf16.msra.mxu0 0
  %2437 = vmatprep.subr.bf16.mxu0 0
  %2438 = vmatpush2.bf16.msra.mxu0 0
  %2439 = vmatprep.mubr.bf16.mxu0 0
  %2440 = vmatmul.mubr.bf16.gmra.mxu0 %v2289
  %v2441 = vpop.f32.mrf.mxu0
  %v2442 = vadd.f32 0.0, %v2441
  %v2443 = vpop.f32.mrf.mxu0
  %v2444 = vpop.f32.mrf.mxu0
  %v2445 = vadd.f32 0.0, %v2444
  %v2446 = vpop.f32.mrf.mxu0
  %2447 = vmatprep.mubr.bf16.mxu0 0
  %2448 = vmatmul.mubr.bf16.gmra.mxu0 %v2292
  %v2449 = vpop.f32.mrf.mxu0
  %v2450 = vadd.f32 0.0, %v2449
  %v2451 = vpop.f32.mrf.mxu0
  %v2452 = vpop.f32.mrf.mxu0
  %v2453 = vadd.f32 0.0, %v2452
  %v2454 = vpop.f32.mrf.mxu0
  %2455 = vmatprep.mubr.bf16.mxu0 0
  %2456 = vmatmul.mubr.bf16.gmra.mxu0 %v2295
  %v2457 = vpop.f32.mrf.mxu0
  %v2458 = vadd.f32 0.0, %v2457
  %v2459 = vpop.f32.mrf.mxu0
  %v2460 = vpop.f32.mrf.mxu0
  %v2461 = vadd.f32 0.0, %v2460
  %v2462 = vpop.f32.mrf.mxu0
  %2463 = vmatprep.mubr.bf16.mxu0 0
  %2464 = vmatmul.mubr.bf16.gmra.mxu0 %v2298
  %v2465 = vpop.f32.mrf.mxu0
  %v2466 = vadd.f32 0.0, %v2465
  %v2467 = vpop.f32.mrf.mxu0
  %v2468 = vpop.f32.mrf.mxu0
  %v2469 = vadd.f32 0.0, %v2468
  %v2470 = vpop.f32.mrf.mxu0
  %2471 = vmatprep.mubr.bf16.mxu0 0
  %2472 = vmatmul.mubr.bf16.gmra.mxu0 %v2301
  %v2473 = vpop.f32.mrf.mxu0
  %v2474 = vadd.f32 0.0, %v2473
  %v2475 = vpop.f32.mrf.mxu0
  %v2476 = vpop.f32.mrf.mxu0
  %v2477 = vadd.f32 0.0, %v2476
  %v2478 = vpop.f32.mrf.mxu0
  %2479 = vmatprep.mubr.bf16.mxu0 0
  %2480 = vmatmul.mubr.bf16.gmra.mxu0 %v2304
  %v2481 = vpop.f32.mrf.mxu0
  %v2482 = vadd.f32 0.0, %v2481
  %v2483 = vpop.f32.mrf.mxu0
  %v2484 = vpop.f32.mrf.mxu0
  %v2485 = vadd.f32 0.0, %v2484
  %v2486 = vpop.f32.mrf.mxu0
  %2487 = vmatprep.mubr.bf16.mxu0 0
  %2488 = vmatmul.mubr.bf16.gmra.mxu0 %v2307
  %v2489 = vpop.f32.mrf.mxu0
  %v2490 = vadd.f32 0.0, %v2489
  %v2491 = vpop.f32.mrf.mxu0
  %v2492 = vpop.f32.mrf.mxu0
  %v2493 = vadd.f32 0.0, %v2492
  %v2494 = vpop.f32.mrf.mxu0
  %2495 = vmatprep.mubr.bf16.mxu0 0
  %2496 = vmatmul.mubr.bf16.gmra.mxu0 %v2310
  %v2497 = vpop.f32.mrf.mxu0
  %v2498 = vadd.f32 0.0, %v2497
  %v2499 = vpop.f32.mrf.mxu0
  %v2500 = vpop.f32.mrf.mxu0
  %v2501 = vadd.f32 0.0, %v2500
  %v2502 = vpop.f32.mrf.mxu0
  %2503 = vdwg.mxu0
  %v2504 = vmul.f32 %v2359, %v2442
  %v2505 = vmul.f32 %v2360, %v2445
  %v2506 = vmul.f32 %v2361, %v2450
  %v2507 = vmul.f32 %v2362, %v2453
  %v2508 = vmul.f32 %v2363, %v2458
  %v2509 = vmul.f32 %v2364, %v2461
  %v2510 = vmul.f32 %v2365, %v2466
  %v2511 = vmul.f32 %v2366, %v2469
  %v2512 = vmul.f32 %v2367, %v2474
  %v2513 = vmul.f32 %v2368, %v2477
  %v2514 = vmul.f32 %v2369, %v2482
  %v2515 = vmul.f32 %v2370, %v2485
  %v2516 = vmul.f32 %v2371, %v2490
  %v2517 = vmul.f32 %v2372, %v2493
  %v2518 = vmul.f32 %v2373, %v2498
  %v2519 = vmul.f32 %v2374, %v2501
  %v2520 = vadd.f32 %v2179, %v2504
  %v2521 = vadd.f32 %v2180, %v2505
  %v2522 = vadd.f32 %v2181, %v2506
  %v2523 = vadd.f32 %v2182, %v2507
  %v2524 = vadd.f32 %v2183, %v2508
  %v2525 = vadd.f32 %v2184, %v2509
  %v2526 = vadd.f32 %v2185, %v2510
  %v2527 = vadd.f32 %v2186, %v2511
  %v2528 = vadd.f32 %v2187, %v2512
  %v2529 = vadd.f32 %v2188, %v2513
  %v2530 = vadd.f32 %v2189, %v2514
  %v2531 = vadd.f32 %v2190, %v2515
  %v2532 = vadd.f32 %v2191, %v2516
  %v2533 = vadd.f32 %v2192, %v2517
  %v2534 = vadd.f32 %v2193, %v2518
  %v2535 = vadd.f32 %v2194, %v2519
  %v2536 = vmul.f32 %v2520, 0.25
  %v2537 = vmul.f32 %v2521, 0.25
  %v2538 = vmul.f32 %v2522, 0.25
  %v2539 = vmul.f32 %v2523, 0.25
  %v2540 = vmul.f32 %v2524, 0.25
  %v2541 = vmul.f32 %v2525, 0.25
  %v2542 = vmul.f32 %v2526, 0.25
  %v2543 = vmul.f32 %v2527, 0.25
  %v2544 = vmul.f32 %v2528, 0.25
  %v2545 = vmul.f32 %v2529, 0.25
  %v2546 = vmul.f32 %v2530, 0.25
  %v2547 = vmul.f32 %v2531, 0.25
  %v2548 = vmul.f32 %v2532, 0.25
  %v2549 = vmul.f32 %v2533, 0.25
  %v2550 = vmul.f32 %v2534, 0.25
  %v2551 = vmul.f32 %v2535, 0.25
  %v2553 = vlaneseq
  %v2554 = vshrl.u32 %v2553, 7
  %v2555 = vsub.s32 0, %v2554
  %v2556 = vrot.slane %v786, %v2555
  %v2558 = vadd.f32 %v2536, %v2556
  %v2559 = vadd.f32 %v2537, %v2556
  %v2560 = vadd.f32 %v2538, %v2556
  %v2561 = vadd.f32 %v2539, %v2556
  %v2562 = vadd.f32 %v2540, %v2556
  %v2563 = vadd.f32 %v2541, %v2556
  %v2564 = vadd.f32 %v2542, %v2556
  %v2565 = vadd.f32 %v2543, %v2556
  %v2566 = vadd.f32 %v2544, %v2556
  %v2567 = vadd.f32 %v2545, %v2556
  %v2568 = vadd.f32 %v2546, %v2556
  %v2569 = vadd.f32 %v2547, %v2556
  %v2570 = vadd.f32 %v2548, %v2556
  %v2571 = vadd.f32 %v2549, %v2556
  %v2572 = vadd.f32 %v2550, %v2556
  %v2573 = vadd.f32 %v2551, %v2556
  %vm2574 = vcmp.gt.f32.partialorder %v2558, 0.0
  %vm2575 = vcmp.gt.f32.partialorder %v2559, 0.0
  %vm2576 = vcmp.gt.f32.partialorder %v2560, 0.0
  %vm2577 = vcmp.gt.f32.partialorder %v2561, 0.0
  %vm2578 = vcmp.gt.f32.partialorder %v2562, 0.0
  %vm2579 = vcmp.gt.f32.partialorder %v2563, 0.0
  %vm2580 = vcmp.gt.f32.partialorder %v2564, 0.0
  %vm2581 = vcmp.gt.f32.partialorder %v2565, 0.0
  %vm2582 = vcmp.gt.f32.partialorder %v2566, 0.0
  %vm2583 = vcmp.gt.f32.partialorder %v2567, 0.0
  %vm2584 = vcmp.gt.f32.partialorder %v2568, 0.0
  %vm2585 = vcmp.gt.f32.partialorder %v2569, 0.0
  %vm2586 = vcmp.gt.f32.partialorder %v2570, 0.0
  %vm2587 = vcmp.gt.f32.partialorder %v2571, 0.0
  %vm2588 = vcmp.gt.f32.partialorder %v2572, 0.0
  %vm2589 = vcmp.gt.f32.partialorder %v2573, 0.0
  %v2590 = vmin.f32 %v2558, 0.0
  %v2591 = vmin.f32 %v2559, 0.0
  %v2592 = vmin.f32 %v2560, 0.0
  %v2593 = vmin.f32 %v2561, 0.0
  %v2594 = vmin.f32 %v2562, 0.0
  %v2595 = vmin.f32 %v2563, 0.0
  %v2596 = vmin.f32 %v2564, 0.0
  %v2597 = vmin.f32 %v2565, 0.0
  %v2598 = vmin.f32 %v2566, 0.0
  %v2599 = vmin.f32 %v2567, 0.0
  %v2600 = vmin.f32 %v2568, 0.0
  %v2601 = vmin.f32 %v2569, 0.0
  %v2602 = vmin.f32 %v2570, 0.0
  %v2603 = vmin.f32 %v2571, 0.0
  %v2604 = vmin.f32 %v2572, 0.0
  %v2605 = vmin.f32 %v2573, 0.0
  %v2606 = vmul.f32 %v2590, 1.442695
  %v2607 = vpow.pop %v2606
  %v2608 = vmul.f32 %v2591, 1.442695
  %v2609 = vpow.pop %v2608
  %v2610 = vmul.f32 %v2592, 1.442695
  %v2611 = vpow.pop %v2610
  %v2612 = vmul.f32 %v2593, 1.442695
  %v2613 = vpow.pop %v2612
  %v2614 = vmul.f32 %v2594, 1.442695
  %v2615 = vpow.pop %v2614
  %v2616 = vmul.f32 %v2595, 1.442695
  %v2617 = vpow.pop %v2616
  %v2618 = vmul.f32 %v2596, 1.442695
  %v2619 = vpow.pop %v2618
  %v2620 = vmul.f32 %v2597, 1.442695
  %v2621 = vpow.pop %v2620
  %v2622 = vmul.f32 %v2598, 1.442695
  %v2623 = vpow.pop %v2622
  %v2624 = vmul.f32 %v2599, 1.442695
  %v2625 = vpow.pop %v2624
  %v2626 = vmul.f32 %v2600, 1.442695
  %v2627 = vpow.pop %v2626
  %v2628 = vmul.f32 %v2601, 1.442695
  %v2629 = vpow.pop %v2628
  %v2630 = vmul.f32 %v2602, 1.442695
  %v2631 = vpow.pop %v2630
  %v2632 = vmul.f32 %v2603, 1.442695
  %v2633 = vpow.pop %v2632
  %v2634 = vmul.f32 %v2604, 1.442695
  %v2635 = vpow.pop %v2634
  %v2636 = vmul.f32 %v2605, 1.442695
  %v2637 = vpow.pop %v2636
  %v2638 = vsub.f32 %v2607, 1.0
  %v2639 = vsub.f32 %v2609, 1.0
  %v2640 = vsub.f32 %v2611, 1.0
  %v2641 = vsub.f32 %v2613, 1.0
  %v2642 = vsub.f32 %v2615, 1.0
  %v2643 = vsub.f32 %v2617, 1.0
  %v2644 = vsub.f32 %v2619, 1.0
  %v2645 = vsub.f32 %v2621, 1.0
  %v2646 = vsub.f32 %v2623, 1.0
  %v2647 = vsub.f32 %v2625, 1.0
  %v2648 = vsub.f32 %v2627, 1.0
  %v2649 = vsub.f32 %v2629, 1.0
  %v2650 = vsub.f32 %v2631, 1.0
  %v2651 = vsub.f32 %v2633, 1.0
  %v2652 = vsub.f32 %v2635, 1.0
  %v2653 = vsub.f32 %v2637, 1.0
  %v2654 = vsel %vm2574, %v2558, %v2638
  %v2655 = vsel %vm2575, %v2559, %v2639
  %v2656 = vsel %vm2576, %v2560, %v2640
  %v2657 = vsel %vm2577, %v2561, %v2641
  %v2658 = vsel %vm2578, %v2562, %v2642
  %v2659 = vsel %vm2579, %v2563, %v2643
  %v2660 = vsel %vm2580, %v2564, %v2644
  %v2661 = vsel %vm2581, %v2565, %v2645
  %v2662 = vsel %vm2582, %v2566, %v2646
  %v2663 = vsel %vm2583, %v2567, %v2647
  %v2664 = vsel %vm2584, %v2568, %v2648
  %v2665 = vsel %vm2585, %v2569, %v2649
  %v2666 = vsel %vm2586, %v2570, %v2650
  %v2667 = vsel %vm2587, %v2571, %v2651
  %v2668 = vsel %vm2588, %v2572, %v2652
  %v2669 = vsel %vm2589, %v2573, %v2653
  %s2670 = scalar_lea.vmem %s6, 64
  %v2671 = vld [vmem:[%s2670] sm:$0xff]
  %v2672 = vld [vmem:[%s2670 + $0x8] sm:$0xff]
  %v2673 = vld [vmem:[%s2670 + $0x10] sm:$0xff]
  %v2674 = vld [vmem:[%s2670 + $0x18] sm:$0xff]
  %v2675 = vld [vmem:[%s2670 + $0x20] sm:$0xff]
  %v2676 = vld [vmem:[%s2670 + $0x28] sm:$0xff]
  %v2677 = vld [vmem:[%s2670 + $0x30] sm:$0xff]
  %v2678 = vld [vmem:[%s2670 + $0x38] sm:$0xff]
  %s2679 = scalar_lea.vmem %s7, 256
  %v2680 = vld [vmem:[%s2679] sm:$0xff]
  %v2681 = vld [vmem:[%s2679 + $0x8] sm:$0xff]
  %v2682 = vld [vmem:[%s2679 + $0x10] sm:$0xff]
  %v2683 = vld [vmem:[%s2679 + $0x18] sm:$0xff]
  %v2684 = vld [vmem:[%s2679 + $0x20] sm:$0xff]
  %v2685 = vld [vmem:[%s2679 + $0x28] sm:$0xff]
  %v2686 = vld [vmem:[%s2679 + $0x30] sm:$0xff]
  %v2687 = vld [vmem:[%s2679 + $0x38] sm:$0xff]
  %v2688 = vld [vmem:[%s2679 + $0x40] sm:$0xff]
  %v2689 = vld [vmem:[%s2679 + $0x48] sm:$0xff]
  %v2690 = vld [vmem:[%s2679 + $0x50] sm:$0xff]
  %v2691 = vld [vmem:[%s2679 + $0x58] sm:$0xff]
  %v2692 = vld [vmem:[%s2679 + $0x60] sm:$0xff]
  %v2693 = vld [vmem:[%s2679 + $0x68] sm:$0xff]
  %v2694 = vld [vmem:[%s2679 + $0x70] sm:$0xff]
  %v2695 = vld [vmem:[%s2679 + $0x78] sm:$0xff]
  %v2696 = vld [vmem:[%s2679 + $0x80] sm:$0xff]
  %v2697 = vld [vmem:[%s2679 + $0x88] sm:$0xff]
  %v2698 = vld [vmem:[%s2679 + $0x90] sm:$0xff]
  %v2699 = vld [vmem:[%s2679 + $0x98] sm:$0xff]
  %v2700 = vld [vmem:[%s2679 + $0xa0] sm:$0xff]
  %v2701 = vld [vmem:[%s2679 + $0xa8] sm:$0xff]
  %v2702 = vld [vmem:[%s2679 + $0xb0] sm:$0xff]
  %v2703 = vld [vmem:[%s2679 + $0xb8] sm:$0xff]
  %v2704 = vld [vmem:[%s2679 + $0xc0] sm:$0xff]
  %v2705 = vld [vmem:[%s2679 + $0xc8] sm:$0xff]
  %v2706 = vld [vmem:[%s2679 + $0xd0] sm:$0xff]
  %v2707 = vld [vmem:[%s2679 + $0xd8] sm:$0xff]
  %v2708 = vld [vmem:[%s2679 + $0xe0] sm:$0xff]
  %v2709 = vld [vmem:[%s2679 + $0xe8] sm:$0xff]
  %v2710 = vld [vmem:[%s2679 + $0xf0] sm:$0xff]
  %v2711 = vld [vmem:[%s2679 + $0xf8] sm:$0xff]
  %s2712 = scalar_lea.vmem %s8, 1
  %v2713 = vld [vmem:[%s2712] sm:$0x1]
  %v2714 = vpack.c.bf16 %v2655, %v2654
  %v2715 = vpack.c.bf16 %v2657, %v2656
  %v2716 = vpack.c.bf16 %v2659, %v2658
  %v2717 = vpack.c.bf16 %v2661, %v2660
  %v2718 = vpack.c.bf16 %v2663, %v2662
  %v2719 = vpack.c.bf16 %v2665, %v2664
  %v2720 = vpack.c.bf16 %v2667, %v2666
  %v2721 = vpack.c.bf16 %v2669, %v2668
  %v2730 = vunpack.c.l.b16 %v2671
  %v2731 = vunpack.c.h.b16 %v2671
  %v2732 = vunpack.c.l.b16 %v2672
  %v2733 = vunpack.c.h.b16 %v2672
  %v2734 = vunpack.c.l.b16 %v2673
  %v2735 = vunpack.c.h.b16 %v2673
  %v2736 = vunpack.c.l.b16 %v2674
  %v2737 = vunpack.c.h.b16 %v2674
  %v2738 = vunpack.c.l.b16 %v2675
  %v2739 = vunpack.c.h.b16 %v2675
  %v2740 = vunpack.c.l.b16 %v2676
  %v2741 = vunpack.c.h.b16 %v2676
  %v2742 = vunpack.c.l.b16 %v2677
  %v2743 = vunpack.c.h.b16 %v2677
  %v2744 = vunpack.c.l.b16 %v2678
  %v2745 = vunpack.c.h.b16 %v2678
  %v2746 = vpack.c.b16 %v2732, %v2730
  %v2747 = vpack.c.b16 %v2733, %v2731
  %v2748 = vpack.c.b16 %v2736, %v2734
  %v2749 = vpack.c.b16 %v2737, %v2735
  %v2750 = vpack.c.b16 %v2740, %v2738
  %v2751 = vpack.c.b16 %v2741, %v2739
  %v2752 = vpack.c.b16 %v2744, %v2742
  %v2753 = vpack.c.b16 %v2745, %v2743
  %v2763 = vsel %vm436, %v2714, 0
  %v2766 = vsel %vm436, %v2715, 0
  %v2769 = vsel %vm436, %v2716, 0
  %v2772 = vsel %vm436, %v2717, 0
  %v2775 = vsel %vm436, %v2718, 0
  %v2778 = vsel %vm436, %v2719, 0
  %v2781 = vsel %vm436, %v2720, 0
  %v2784 = vsel %vm436, %v2721, 0
  %2786 = vmatprep.subr.bf16.mxu0 0
  %2787 = vmatpush1.bf16.msra.mxu0 0
  %2788 = vmatprep.subr.bf16.mxu0 0
  %2789 = vmatpush1.bf16.msra.mxu0 0
  %2790 = vmatprep.subr.bf16.mxu0 0
  %2791 = vmatpush1.bf16.msra.mxu0 0
  %2792 = vmatprep.subr.bf16.mxu0 0
  %2793 = vmatpush1.bf16.msra.mxu0 0
  %2794 = vmatprep.subr.bf16.mxu0 %v2753
  %2795 = vmatpush1.bf16.msra.mxu0 %v2752
  %2796 = vmatprep.subr.bf16.mxu0 %v2751
  %2797 = vmatpush1.bf16.msra.mxu0 %v2750
  %2798 = vmatprep.subr.bf16.mxu0 %v2749
  %2799 = vmatpush1.bf16.msra.mxu0 %v2748
  %2800 = vmatprep.subr.bf16.mxu0 %v2747
  %2801 = vmatpush1.bf16.msra.mxu0 %v2746
  %2802 = vmatprep.subr.bf16.mxu0 0
  %2803 = vmatpush2.bf16.msra.mxu0 0
  %2804 = vmatprep.subr.bf16.mxu0 0
  %2805 = vmatpush2.bf16.msra.mxu0 0
  %2806 = vmatprep.subr.bf16.mxu0 0
  %2807 = vmatpush2.bf16.msra.mxu0 0
  %2808 = vmatprep.subr.bf16.mxu0 0
  %2809 = vmatpush2.bf16.msra.mxu0 0
  %2810 = vmatprep.subr.bf16.mxu0 0
  %2811 = vmatpush2.bf16.msra.mxu0 0
  %2812 = vmatprep.subr.bf16.mxu0 0
  %2813 = vmatpush2.bf16.msra.mxu0 0
  %2814 = vmatprep.subr.bf16.mxu0 0
  %2815 = vmatpush2.bf16.msra.mxu0 0
  %2816 = vmatprep.subr.bf16.mxu0 0
  %2817 = vmatpush2.bf16.msra.mxu0 0
  %2818 = vmatprep.mubr.bf16.mxu0 0
  %2819 = vmatmul.mubr.bf16.gmra.mxu0 %v2763
  %v2820 = vpop.f32.mrf.mxu0
  %v2821 = vadd.f32 0.0, %v2820
  %v2822 = vpop.f32.mrf.mxu0
  %v2823 = vadd.f32 0.0, %v2822
  %v2824 = vpop.f32.mrf.mxu0
  %v2825 = vadd.f32 0.0, %v2824
  %v2826 = vpop.f32.mrf.mxu0
  %v2827 = vadd.f32 0.0, %v2826
  %2828 = vmatprep.mubr.bf16.mxu0 0
  %2829 = vmatmul.mubr.bf16.gmra.mxu0 %v2766
  %v2830 = vpop.f32.mrf.mxu0
  %v2831 = vadd.f32 0.0, %v2830
  %v2832 = vpop.f32.mrf.mxu0
  %v2833 = vadd.f32 0.0, %v2832
  %v2834 = vpop.f32.mrf.mxu0
  %v2835 = vadd.f32 0.0, %v2834
  %v2836 = vpop.f32.mrf.mxu0
  %v2837 = vadd.f32 0.0, %v2836
  %2838 = vmatprep.mubr.bf16.mxu0 0
  %2839 = vmatmul.mubr.bf16.gmra.mxu0 %v2769
  %v2840 = vpop.f32.mrf.mxu0
  %v2841 = vadd.f32 0.0, %v2840
  %v2842 = vpop.f32.mrf.mxu0
  %v2843 = vadd.f32 0.0, %v2842
  %v2844 = vpop.f32.mrf.mxu0
  %v2845 = vadd.f32 0.0, %v2844
  %v2846 = vpop.f32.mrf.mxu0
  %v2847 = vadd.f32 0.0, %v2846
  %2848 = vmatprep.mubr.bf16.mxu0 0
  %2849 = vmatmul.mubr.bf16.gmra.mxu0 %v2772
  %v2850 = vpop.f32.mrf.mxu0
  %v2851 = vadd.f32 0.0, %v2850
  %v2852 = vpop.f32.mrf.mxu0
  %v2853 = vadd.f32 0.0, %v2852
  %v2854 = vpop.f32.mrf.mxu0
  %v2855 = vadd.f32 0.0, %v2854
  %v2856 = vpop.f32.mrf.mxu0
  %v2857 = vadd.f32 0.0, %v2856
  %2858 = vmatprep.mubr.bf16.mxu0 0
  %2859 = vmatmul.mubr.bf16.gmra.mxu0 %v2775
  %v2860 = vpop.f32.mrf.mxu0
  %v2861 = vadd.f32 0.0, %v2860
  %v2862 = vpop.f32.mrf.mxu0
  %v2863 = vadd.f32 0.0, %v2862
  %v2864 = vpop.f32.mrf.mxu0
  %v2865 = vadd.f32 0.0, %v2864
  %v2866 = vpop.f32.mrf.mxu0
  %v2867 = vadd.f32 0.0, %v2866
  %2868 = vmatprep.mubr.bf16.mxu0 0
  %2869 = vmatmul.mubr.bf16.gmra.mxu0 %v2778
  %v2870 = vpop.f32.mrf.mxu0
  %v2871 = vadd.f32 0.0, %v2870
  %v2872 = vpop.f32.mrf.mxu0
  %v2873 = vadd.f32 0.0, %v2872
  %v2874 = vpop.f32.mrf.mxu0
  %v2875 = vadd.f32 0.0, %v2874
  %v2876 = vpop.f32.mrf.mxu0
  %v2877 = vadd.f32 0.0, %v2876
  %2878 = vmatprep.mubr.bf16.mxu0 0
  %2879 = vmatmul.mubr.bf16.gmra.mxu0 %v2781
  %v2880 = vpop.f32.mrf.mxu0
  %v2881 = vadd.f32 0.0, %v2880
  %v2882 = vpop.f32.mrf.mxu0
  %v2883 = vadd.f32 0.0, %v2882
  %v2884 = vpop.f32.mrf.mxu0
  %v2885 = vadd.f32 0.0, %v2884
  %v2886 = vpop.f32.mrf.mxu0
  %v2887 = vadd.f32 0.0, %v2886
  %2888 = vmatprep.mubr.bf16.mxu0 0
  %2889 = vmatmul.mubr.bf16.gmra.mxu0 %v2784
  %v2890 = vpop.f32.mrf.mxu0
  %v2891 = vadd.f32 0.0, %v2890
  %v2892 = vpop.f32.mrf.mxu0
  %v2893 = vadd.f32 0.0, %v2892
  %v2894 = vpop.f32.mrf.mxu0
  %v2895 = vadd.f32 0.0, %v2894
  %v2896 = vpop.f32.mrf.mxu0
  %v2897 = vadd.f32 0.0, %v2896
  %2898 = vdwg.mxu0
  %2899 = vmatprep.subr.mxu0 0.0
  %2900 = vmatpush1.msra.mxu0 %v2695
  %2901 = vmatprep.subr.mxu0 0.0
  %2902 = vmatpush1.msra.mxu0 %v2694
  %2903 = vmatprep.subr.mxu0 0.0
  %2904 = vmatpush1.msra.mxu0 %v2693
  %2905 = vmatprep.subr.mxu0 0.0
  %2906 = vmatpush1.msra.mxu0 %v2692
  %2907 = vmatprep.subr.mxu0 0.0
  %2908 = vmatpush1.msra.mxu0 %v2691
  %2909 = vmatprep.subr.mxu0 0.0
  %2910 = vmatpush1.msra.mxu0 %v2690
  %2911 = vmatprep.subr.mxu0 0.0
  %2912 = vmatpush1.msra.mxu0 %v2689
  %2913 = vmatprep.subr.mxu0 0.0
  %2914 = vmatpush1.msra.mxu0 %v2688
  %2915 = vmatprep.subr.mxu0 0.0
  %2916 = vmatpush1.msra.mxu0 %v2687
  %2917 = vmatprep.subr.mxu0 0.0
  %2918 = vmatpush1.msra.mxu0 %v2686
  %2919 = vmatprep.subr.mxu0 0.0
  %2920 = vmatpush1.msra.mxu0 %v2685
  %2921 = vmatprep.subr.mxu0 0.0
  %2922 = vmatpush1.msra.mxu0 %v2684
  %2923 = vmatprep.subr.mxu0 0.0
  %2924 = vmatpush1.msra.mxu0 %v2683
  %2925 = vmatprep.subr.mxu0 0.0
  %2926 = vmatpush1.msra.mxu0 %v2682
  %2927 = vmatprep.subr.mxu0 0.0
  %2928 = vmatpush1.msra.mxu0 %v2681
  %2929 = vmatprep.subr.mxu0 0.0
  %2930 = vmatpush1.msra.mxu0 %v2680
  %2931 = vmatprep.subr.mxu0 0.0
  %2932 = vmatpush2.msra.mxu0 %v2711
  %2933 = vmatprep.subr.mxu0 0.0
  %2934 = vmatpush2.msra.mxu0 %v2710
  %2935 = vmatprep.subr.mxu0 0.0
  %2936 = vmatpush2.msra.mxu0 %v2709
  %2937 = vmatprep.subr.mxu0 0.0
  %2938 = vmatpush2.msra.mxu0 %v2708
  %2939 = vmatprep.subr.mxu0 0.0
  %2940 = vmatpush2.msra.mxu0 %v2707
  %2941 = vmatprep.subr.mxu0 0.0
  %2942 = vmatpush2.msra.mxu0 %v2706
  %2943 = vmatprep.subr.mxu0 0.0
  %2944 = vmatpush2.msra.mxu0 %v2705
  %2945 = vmatprep.subr.mxu0 0.0
  %2946 = vmatpush2.msra.mxu0 %v2704
  %2947 = vmatprep.subr.mxu0 0.0
  %2948 = vmatpush2.msra.mxu0 %v2703
  %2949 = vmatprep.subr.mxu0 0.0
  %2950 = vmatpush2.msra.mxu0 %v2702
  %2951 = vmatprep.subr.mxu0 0.0
  %2952 = vmatpush2.msra.mxu0 %v2701
  %2953 = vmatprep.subr.mxu0 0.0
  %2954 = vmatpush2.msra.mxu0 %v2700
  %2955 = vmatprep.subr.mxu0 0.0
  %2956 = vmatpush2.msra.mxu0 %v2699
  %2957 = vmatprep.subr.mxu0 0.0
  %2958 = vmatpush2.msra.mxu0 %v2698
  %2959 = vmatprep.subr.mxu0 0.0
  %2960 = vmatpush2.msra.mxu0 %v2697
  %2961 = vmatprep.subr.mxu0 0.0
  %2962 = vmatpush2.msra.mxu0 %v2696
  %2963 = vmatprep.mubr.f32.mxu0 %v2823
  %2964 = vmatmul.mubr.f32.gmra.mxu0 %v2821
  %v2965 = vpop.f32.mrf.mxu0
  %v2966 = vadd.f32 0.0, %v2965
  %v2967 = vpop.f32.mrf.mxu0
  %2968 = vmatprep.mubr.f32.mxu0 %v2827
  %2969 = vmatmul.mubr.f32.gmra.mxu0 %v2825
  %v2970 = vpop.f32.mrf.mxu0
  %v2971 = vadd.f32 0.0, %v2970
  %v2972 = vpop.f32.mrf.mxu0
  %2973 = vmatprep.mubr.f32.mxu0 %v2833
  %2974 = vmatmul.mubr.f32.gmra.mxu0 %v2831
  %v2975 = vpop.f32.mrf.mxu0
  %v2976 = vadd.f32 0.0, %v2975
  %v2977 = vpop.f32.mrf.mxu0
  %2978 = vmatprep.mubr.f32.mxu0 %v2837
  %2979 = vmatmul.mubr.f32.gmra.mxu0 %v2835
  %v2980 = vpop.f32.mrf.mxu0
  %v2981 = vadd.f32 0.0, %v2980
  %v2982 = vpop.f32.mrf.mxu0
  %2983 = vmatprep.mubr.f32.mxu0 %v2843
  %2984 = vmatmul.mubr.f32.gmra.mxu0 %v2841
  %v2985 = vpop.f32.mrf.mxu0
  %v2986 = vadd.f32 0.0, %v2985
  %v2987 = vpop.f32.mrf.mxu0
  %2988 = vmatprep.mubr.f32.mxu0 %v2847
  %2989 = vmatmul.mubr.f32.gmra.mxu0 %v2845
  %v2990 = vpop.f32.mrf.mxu0
  %v2991 = vadd.f32 0.0, %v2990
  %v2992 = vpop.f32.mrf.mxu0
  %2993 = vmatprep.mubr.f32.mxu0 %v2853
  %2994 = vmatmul.mubr.f32.gmra.mxu0 %v2851
  %v2995 = vpop.f32.mrf.mxu0
  %v2996 = vadd.f32 0.0, %v2995
  %v2997 = vpop.f32.mrf.mxu0
  %2998 = vmatprep.mubr.f32.mxu0 %v2857
  %2999 = vmatmul.mubr.f32.gmra.mxu0 %v2855
  %v3000 = vpop.f32.mrf.mxu0
  %v3001 = vadd.f32 0.0, %v3000
  %v3002 = vpop.f32.mrf.mxu0
  %3003 = vmatprep.mubr.f32.mxu0 %v2863
  %3004 = vmatmul.mubr.f32.gmra.mxu0 %v2861
  %v3005 = vpop.f32.mrf.mxu0
  %v3006 = vadd.f32 0.0, %v3005
  %v3007 = vpop.f32.mrf.mxu0
  %3008 = vmatprep.mubr.f32.mxu0 %v2867
  %3009 = vmatmul.mubr.f32.gmra.mxu0 %v2865
  %v3010 = vpop.f32.mrf.mxu0
  %v3011 = vadd.f32 0.0, %v3010
  %v3012 = vpop.f32.mrf.mxu0
  %3013 = vmatprep.mubr.f32.mxu0 %v2873
  %3014 = vmatmul.mubr.f32.gmra.mxu0 %v2871
  %v3015 = vpop.f32.mrf.mxu0
  %v3016 = vadd.f32 0.0, %v3015
  %v3017 = vpop.f32.mrf.mxu0
  %3018 = vmatprep.mubr.f32.mxu0 %v2877
  %3019 = vmatmul.mubr.f32.gmra.mxu0 %v2875
  %v3020 = vpop.f32.mrf.mxu0
  %v3021 = vadd.f32 0.0, %v3020
  %v3022 = vpop.f32.mrf.mxu0
  %3023 = vmatprep.mubr.f32.mxu0 %v2883
  %3024 = vmatmul.mubr.f32.gmra.mxu0 %v2881
  %v3025 = vpop.f32.mrf.mxu0
  %v3026 = vadd.f32 0.0, %v3025
  %v3027 = vpop.f32.mrf.mxu0
  %3028 = vmatprep.mubr.f32.mxu0 %v2887
  %3029 = vmatmul.mubr.f32.gmra.mxu0 %v2885
  %v3030 = vpop.f32.mrf.mxu0
  %v3031 = vadd.f32 0.0, %v3030
  %v3032 = vpop.f32.mrf.mxu0
  %3033 = vmatprep.mubr.f32.mxu0 %v2893
  %3034 = vmatmul.mubr.f32.gmra.mxu0 %v2891
  %v3035 = vpop.f32.mrf.mxu0
  %v3036 = vadd.f32 0.0, %v3035
  %v3037 = vpop.f32.mrf.mxu0
  %3038 = vmatprep.mubr.f32.mxu0 %v2897
  %3039 = vmatmul.mubr.f32.gmra.mxu0 %v2895
  %v3040 = vpop.f32.mrf.mxu0
  %v3041 = vadd.f32 0.0, %v3040
  %v3042 = vpop.f32.mrf.mxu0
  %3043 = vdwg.mxu0
  %3044 = vxpose.xlu0.b32.start [1/16] %v2966, 128
  %3045 = vxpose.xlu0.b32.cont [2/16] %v2971, 128
  %3046 = vxpose.xlu0.b32.cont [3/16] %v2976, 128
  %3047 = vxpose.xlu0.b32.cont [4/16] %v2981, 128
  %3048 = vxpose.xlu0.b32.cont [5/16] %v2986, 128
  %3049 = vxpose.xlu0.b32.cont [6/16] %v2991, 128
  %3050 = vxpose.xlu0.b32.cont [7/16] %v2996, 128
  %3051 = vxpose.xlu0.b32.cont [8/16] %v3001, 128
  %3052 = vxpose.xlu0.b32.cont [9/16] %v3006, 128
  %3053 = vxpose.xlu0.b32.cont [10/16] %v3011, 128
  %3054 = vxpose.xlu0.b32.cont [11/16] %v3016, 128
  %3055 = vxpose.xlu0.b32.cont [12/16] %v3021, 128
  %3056 = vxpose.xlu0.b32.cont [13/16] %v3026, 128
  %3057 = vxpose.xlu0.b32.cont [14/16] %v3031, 128
  %3058 = vxpose.xlu0.b32.cont [15/16] %v3036, 128
  %3059 = vxpose.xlu0.b32.end [16/16] %v3041, 128
  %v3060 = vpop.trf.xlu0
  %v3061 = vpop.trf.xlu0
  %v3062 = vpop.trf.xlu0
  %v3063 = vpop.trf.xlu0
  %v3064 = vpop.trf.xlu0
  %v3065 = vpop.trf.xlu0
  %v3066 = vpop.trf.xlu0
  %v3067 = vpop.trf.xlu0
  %v3068 = vpop.trf.xlu0
  %v3069 = vpop.trf.xlu0
  %v3070 = vpop.trf.xlu0
  %v3071 = vpop.trf.xlu0
  %v3072 = vpop.trf.xlu0
  %v3073 = vpop.trf.xlu0
  %v3074 = vpop.trf.xlu0
  %v3075 = vpop.trf.xlu0
  %v3076 = vpack.c.bf16 %v3060, %v3060
  %v3077 = vpack.c.bf16 %v2971, %v2966
  %v3078 = vpack.c.bf16 %v2981, %v2976
  %v3079 = vpack.c.bf16 %v2991, %v2986
  %v3080 = vpack.c.bf16 %v3001, %v2996
  %v3081 = vpack.c.bf16 %v3011, %v3006
  %v3082 = vpack.c.bf16 %v3021, %v3016
  %v3083 = vpack.c.bf16 %v3031, %v3026
  %v3084 = vpack.c.bf16 %v3041, %v3036
  %v3085 = vpack.c.bf16 %v2825, %v2821
  %v3086 = vpack.c.bf16 %v2827, %v2823
  %v3087 = vpack.c.bf16 %v2835, %v2831
  %v3088 = vpack.c.bf16 %v2837, %v2833
  %v3089 = vpack.c.bf16 %v2845, %v2841
  %v3090 = vpack.c.bf16 %v2847, %v2843
  %v3091 = vpack.c.bf16 %v2855, %v2851
  %v3092 = vpack.c.bf16 %v2857, %v2853
  %v3093 = vpack.c.bf16 %v2865, %v2861
  %v3094 = vpack.c.bf16 %v2867, %v2863
  %v3095 = vpack.c.bf16 %v2875, %v2871
  %v3096 = vpack.c.bf16 %v2877, %v2873
  %v3097 = vpack.c.bf16 %v2885, %v2881
  %v3098 = vpack.c.bf16 %v2887, %v2883
  %v3099 = vpack.c.bf16 %v2895, %v2891
  %v3100 = vpack.c.bf16 %v2897, %v2893
  %3102 = vset.pattern.permute.xlu0 4
  %3103 = vperm.xlu0 %3102, %v3077
  %v3104 = vpop.permute.xlu0 %3103
  %3107 = vset.pattern.permute.xlu0 4
  %3108 = vperm.xlu0 %3107, %v3078
  %v3109 = vpop.permute.xlu0 %3108
  %3112 = vset.pattern.permute.xlu0 4
  %3113 = vperm.xlu0 %3112, %v3079
  %v3114 = vpop.permute.xlu0 %3113
  %3117 = vset.pattern.permute.xlu0 4
  %3118 = vperm.xlu0 %3117, %v3080
  %v3119 = vpop.permute.xlu0 %3118
  %3122 = vset.pattern.permute.xlu0 4
  %3123 = vperm.xlu0 %3122, %v3081
  %v3124 = vpop.permute.xlu0 %3123
  %3127 = vset.pattern.permute.xlu0 4
  %3128 = vperm.xlu0 %3127, %v3082
  %v3129 = vpop.permute.xlu0 %3128
  %3132 = vset.pattern.permute.xlu0 4
  %3133 = vperm.xlu0 %3132, %v3083
  %v3134 = vpop.permute.xlu0 %3133
  %3137 = vset.pattern.permute.xlu0 4
  %3138 = vperm.xlu0 %3137, %v3084
  %v3139 = vpop.permute.xlu0 %3138
  %v3142 = vpack.i.b16 %v3076, %v3076
  %v3144 = vlaneseq
  %v3145 = vshrl.u32 %v3144, 7
  %v3146 = vsub.s32 0, %v3145
  %v3147 = vrot.slane %v3142, %v3146
  %v3148 = vadd.bf16 %v3104, %v3147
  %v3149 = vadd.bf16 %v3109, %v3147
  %v3150 = vadd.bf16 %v3114, %v3147
  %v3151 = vadd.bf16 %v3119, %v3147
  %v3152 = vadd.bf16 %v3124, %v3147
  %v3153 = vadd.bf16 %v3129, %v3147
  %v3154 = vadd.bf16 %v3134, %v3147
  %v3155 = vadd.bf16 %v3139, %v3147
  %v3156 = vadd.bf16 %v3148, %v1261
  %v3157 = vadd.bf16 %v3149, %v1262
  %v3158 = vadd.bf16 %v3150, %v1263
  %v3159 = vadd.bf16 %v3151, %v1264
  %v3160 = vadd.bf16 %v3152, %v1265
  %v3161 = vadd.bf16 %v3153, %v1266
  %v3162 = vadd.bf16 %v3154, %v1267
  %v3163 = vadd.bf16 %v3155, %v1268
  %v3164 = vmul.bf16 %v3156, 1045249613
  %v3165 = vmul.bf16 %v3157, 1045249613
  %v3166 = vmul.bf16 %v3158, 1045249613
  %v3167 = vmul.bf16 %v3159, 1045249613
  %v3168 = vmul.bf16 %v3160, 1045249613
  %v3169 = vmul.bf16 %v3161, 1045249613
  %v3170 = vmul.bf16 %v3162, 1045249613
  %v3171 = vmul.bf16 %v3163, 1045249613
  %v3172 = vmax.bf16 %v3156, %v3164
  %v3173 = vmax.bf16 %v3157, %v3165
  %v3174 = vmax.bf16 %v3158, %v3166
  %v3175 = vmax.bf16 %v3159, %v3167
  %v3176 = vmax.bf16 %v3160, %v3168
  %v3177 = vmax.bf16 %v3161, %v3169
  %v3178 = vmax.bf16 %v3162, %v3170
  %v3179 = vmax.bf16 %v3163, %v3171
  %3180 = vmax.xlane.bf16.xlu0 %v3172
  %v3181 = vpop.xlane.xlu0 %3180
  %3182 = vmax.xlane.bf16.xlu0 %v3173
  %v3183 = vpop.xlane.xlu0 %3182
  %3184 = vmax.xlane.bf16.xlu0 %v3174
  %v3185 = vpop.xlane.xlu0 %3184
  %3186 = vmax.xlane.bf16.xlu0 %v3175
  %v3187 = vpop.xlane.xlu0 %3186
  %3188 = vmax.xlane.bf16.xlu0 %v3176
  %v3189 = vpop.xlane.xlu0 %3188
  %3190 = vmax.xlane.bf16.xlu0 %v3177
  %v3191 = vpop.xlane.xlu0 %3190
  %3192 = vmax.xlane.bf16.xlu0 %v3178
  %v3193 = vpop.xlane.xlu0 %3192
  %3194 = vmax.xlane.bf16.xlu0 %v3179
  %v3195 = vpop.xlane.xlu0 %3194
  %v3196 = vsub.bf16 %v3172, %v3181
  %v3197 = vsub.bf16 %v3173, %v3183
  %v3198 = vsub.bf16 %v3174, %v3185
  %v3199 = vsub.bf16 %v3175, %v3187
  %v3200 = vsub.bf16 %v3176, %v3189
  %v3201 = vsub.bf16 %v3177, %v3191
  %v3202 = vsub.bf16 %v3178, %v3193
  %v3203 = vsub.bf16 %v3179, %v3195
  %v3205 = vmul.bf16 %v3196, 1069105081
  %v3206 = vpow.bf16.pop %v3205
  %v3208 = vmul.bf16 %v3197, 1069105081
  %v3209 = vpow.bf16.pop %v3208
  %v3211 = vmul.bf16 %v3198, 1069105081
  %v3212 = vpow.bf16.pop %v3211
  %v3214 = vmul.bf16 %v3199, 1069105081
  %v3215 = vpow.bf16.pop %v3214
  %v3217 = vmul.bf16 %v3200, 1069105081
  %v3218 = vpow.bf16.pop %v3217
  %v3220 = vmul.bf16 %v3201, 1069105081
  %v3221 = vpow.bf16.pop %v3220
  %v3223 = vmul.bf16 %v3202, 1069105081
  %v3224 = vpow.bf16.pop %v3223
  %v3226 = vmul.bf16 %v3203, 1069105081
  %v3227 = vpow.bf16.pop %v3226
  %v3228 = vunpack.c.l.bf16 %v3206
  %v3229 = vunpack.c.h.bf16 %v3206
  %v3230 = vunpack.c.l.bf16 %v3209
  %v3231 = vunpack.c.h.bf16 %v3209
  %v3232 = vunpack.c.l.bf16 %v3212
  %v3233 = vunpack.c.h.bf16 %v3212
  %v3234 = vunpack.c.l.bf16 %v3215
  %v3235 = vunpack.c.h.bf16 %v3215
  %v3236 = vunpack.c.l.bf16 %v3218
  %v3237 = vunpack.c.h.bf16 %v3218
  %v3238 = vunpack.c.l.bf16 %v3221
  %v3239 = vunpack.c.h.bf16 %v3221
  %v3240 = vunpack.c.l.bf16 %v3224
  %v3241 = vunpack.c.h.bf16 %v3224
  %v3242 = vunpack.c.l.bf16 %v3227
  %v3243 = vunpack.c.h.bf16 %v3227
  %3244 = vadd.xlane.f32.xlu0 %v3228
  %v3245 = vpop.xlane.xlu0 %3244
  %3246 = vadd.xlane.f32.xlu0 %v3229
  %v3247 = vpop.xlane.xlu0 %3246
  %3248 = vadd.xlane.f32.xlu0 %v3230
  %v3249 = vpop.xlane.xlu0 %3248
  %3250 = vadd.xlane.f32.xlu0 %v3231
  %v3251 = vpop.xlane.xlu0 %3250
  %3252 = vadd.xlane.f32.xlu0 %v3232
  %v3253 = vpop.xlane.xlu0 %3252
  %3254 = vadd.xlane.f32.xlu0 %v3233
  %v3255 = vpop.xlane.xlu0 %3254
  %3256 = vadd.xlane.f32.xlu0 %v3234
  %v3257 = vpop.xlane.xlu0 %3256
  %3258 = vadd.xlane.f32.xlu0 %v3235
  %v3259 = vpop.xlane.xlu0 %3258
  %3260 = vadd.xlane.f32.xlu0 %v3236
  %v3261 = vpop.xlane.xlu0 %3260
  %3262 = vadd.xlane.f32.xlu0 %v3237
  %v3263 = vpop.xlane.xlu0 %3262
  %3264 = vadd.xlane.f32.xlu0 %v3238
  %v3265 = vpop.xlane.xlu0 %3264
  %3266 = vadd.xlane.f32.xlu0 %v3239
  %v3267 = vpop.xlane.xlu0 %3266
  %3268 = vadd.xlane.f32.xlu0 %v3240
  %v3269 = vpop.xlane.xlu0 %3268
  %3270 = vadd.xlane.f32.xlu0 %v3241
  %v3271 = vpop.xlane.xlu0 %3270
  %3272 = vadd.xlane.f32.xlu0 %v3242
  %v3273 = vpop.xlane.xlu0 %3272
  %3274 = vadd.xlane.f32.xlu0 %v3243
  %v3275 = vpop.xlane.xlu0 %3274
  %v3276 = vrcp.pop %v3245
  %v3277 = vrcp.pop %v3247
  %v3278 = vrcp.pop %v3249
  %v3279 = vrcp.pop %v3251
  %v3280 = vrcp.pop %v3253
  %v3281 = vrcp.pop %v3255
  %v3282 = vrcp.pop %v3257
  %v3283 = vrcp.pop %v3259
  %v3284 = vrcp.pop %v3261
  %v3285 = vrcp.pop %v3263
  %v3286 = vrcp.pop %v3265
  %v3287 = vrcp.pop %v3267
  %v3288 = vrcp.pop %v3269
  %v3289 = vrcp.pop %v3271
  %v3290 = vrcp.pop %v3273
  %v3291 = vrcp.pop %v3275
  %3292 = vmatprep.subr.bf16.mxu0 0
  %3293 = vmatpush1.bf16.msra.mxu0 %v3099
  %3294 = vmatprep.subr.bf16.mxu0 0
  %3295 = vmatpush1.bf16.msra.mxu0 %v3097
  %3296 = vmatprep.subr.bf16.mxu0 0
  %3297 = vmatpush1.bf16.msra.mxu0 %v3095
  %3298 = vmatprep.subr.bf16.mxu0 0
  %3299 = vmatpush1.bf16.msra.mxu0 %v3093
  %3300 = vmatprep.subr.bf16.mxu0 0
  %3301 = vmatpush1.bf16.msra.mxu0 %v3091
  %3302 = vmatprep.subr.bf16.mxu0 0
  %3303 = vmatpush1.bf16.msra.mxu0 %v3089
  %3304 = vmatprep.subr.bf16.mxu0 0
  %3305 = vmatpush1.bf16.msra.mxu0 %v3087
  %3306 = vmatprep.subr.bf16.mxu0 0
  %3307 = vmatpush1.bf16.msra.mxu0 %v3085
  %3308 = vmatprep.subr.bf16.mxu0 0
  %3309 = vmatpush2.bf16.msra.mxu0 0
  %3310 = vmatprep.subr.bf16.mxu0 0
  %3311 = vmatpush2.bf16.msra.mxu0 0
  %3312 = vmatprep.subr.bf16.mxu0 0
  %3313 = vmatpush2.bf16.msra.mxu0 0
  %3314 = vmatprep.subr.bf16.mxu0 0
  %3315 = vmatpush2.bf16.msra.mxu0 0
  %3316 = vmatprep.subr.bf16.mxu0 0
  %3317 = vmatpush2.bf16.msra.mxu0 0
  %3318 = vmatprep.subr.bf16.mxu0 0
  %3319 = vmatpush2.bf16.msra.mxu0 0
  %3320 = vmatprep.subr.bf16.mxu0 0
  %3321 = vmatpush2.bf16.msra.mxu0 0
  %3322 = vmatprep.subr.bf16.mxu0 0
  %3323 = vmatpush2.bf16.msra.mxu0 0
  %3324 = vmatprep.mubr.bf16.mxu0 0
  %3325 = vmatmul.mubr.bf16.gmra.mxu0 %v3206
  %v3326 = vpop.f32.mrf.mxu0
  %v3327 = vadd.f32 0.0, %v3326
  %v3328 = vpop.f32.mrf.mxu0
  %v3329 = vpop.f32.mrf.mxu0
  %v3330 = vadd.f32 0.0, %v3329
  %v3331 = vpop.f32.mrf.mxu0
  %3332 = vmatprep.mubr.bf16.mxu0 0
  %3333 = vmatmul.mubr.bf16.gmra.mxu0 %v3209
  %v3334 = vpop.f32.mrf.mxu0
  %v3335 = vadd.f32 0.0, %v3334
  %v3336 = vpop.f32.mrf.mxu0
  %v3337 = vpop.f32.mrf.mxu0
  %v3338 = vadd.f32 0.0, %v3337
  %v3339 = vpop.f32.mrf.mxu0
  %3340 = vmatprep.mubr.bf16.mxu0 0
  %3341 = vmatmul.mubr.bf16.gmra.mxu0 %v3212
  %v3342 = vpop.f32.mrf.mxu0
  %v3343 = vadd.f32 0.0, %v3342
  %v3344 = vpop.f32.mrf.mxu0
  %v3345 = vpop.f32.mrf.mxu0
  %v3346 = vadd.f32 0.0, %v3345
  %v3347 = vpop.f32.mrf.mxu0
  %3348 = vmatprep.mubr.bf16.mxu0 0
  %3349 = vmatmul.mubr.bf16.gmra.mxu0 %v3215
  %v3350 = vpop.f32.mrf.mxu0
  %v3351 = vadd.f32 0.0, %v3350
  %v3352 = vpop.f32.mrf.mxu0
  %v3353 = vpop.f32.mrf.mxu0
  %v3354 = vadd.f32 0.0, %v3353
  %v3355 = vpop.f32.mrf.mxu0
  %3356 = vmatprep.mubr.bf16.mxu0 0
  %3357 = vmatmul.mubr.bf16.gmra.mxu0 %v3218
  %v3358 = vpop.f32.mrf.mxu0
  %v3359 = vadd.f32 0.0, %v3358
  %v3360 = vpop.f32.mrf.mxu0
  %v3361 = vpop.f32.mrf.mxu0
  %v3362 = vadd.f32 0.0, %v3361
  %v3363 = vpop.f32.mrf.mxu0
  %3364 = vmatprep.mubr.bf16.mxu0 0
  %3365 = vmatmul.mubr.bf16.gmra.mxu0 %v3221
  %v3366 = vpop.f32.mrf.mxu0
  %v3367 = vadd.f32 0.0, %v3366
  %v3368 = vpop.f32.mrf.mxu0
  %v3369 = vpop.f32.mrf.mxu0
  %v3370 = vadd.f32 0.0, %v3369
  %v3371 = vpop.f32.mrf.mxu0
  %3372 = vmatprep.mubr.bf16.mxu0 0
  %3373 = vmatmul.mubr.bf16.gmra.mxu0 %v3224
  %v3374 = vpop.f32.mrf.mxu0
  %v3375 = vadd.f32 0.0, %v3374
  %v3376 = vpop.f32.mrf.mxu0
  %v3377 = vpop.f32.mrf.mxu0
  %v3378 = vadd.f32 0.0, %v3377
  %v3379 = vpop.f32.mrf.mxu0
  %3380 = vmatprep.mubr.bf16.mxu0 0
  %3381 = vmatmul.mubr.bf16.gmra.mxu0 %v3227
  %v3382 = vpop.f32.mrf.mxu0
  %v3383 = vadd.f32 0.0, %v3382
  %v3384 = vpop.f32.mrf.mxu0
  %v3385 = vpop.f32.mrf.mxu0
  %v3386 = vadd.f32 0.0, %v3385
  %v3387 = vpop.f32.mrf.mxu0
  %3388 = vdwg.mxu0
  %v3389 = vmul.f32 %v3276, %v3327
  %v3390 = vmul.f32 %v3277, %v3330
  %v3391 = vmul.f32 %v3278, %v3335
  %v3392 = vmul.f32 %v3279, %v3338
  %v3393 = vmul.f32 %v3280, %v3343
  %v3394 = vmul.f32 %v3281, %v3346
  %v3395 = vmul.f32 %v3282, %v3351
  %v3396 = vmul.f32 %v3283, %v3354
  %v3397 = vmul.f32 %v3284, %v3359
  %v3398 = vmul.f32 %v3285, %v3362
  %v3399 = vmul.f32 %v3286, %v3367
  %v3400 = vmul.f32 %v3287, %v3370
  %v3401 = vmul.f32 %v3288, %v3375
  %v3402 = vmul.f32 %v3289, %v3378
  %v3403 = vmul.f32 %v3290, %v3383
  %v3404 = vmul.f32 %v3291, %v3386
  %v3405 = vadd.f32 %v3389, 0.0
  %v3406 = vadd.f32 %v3390, 0.0
  %v3407 = vadd.f32 %v3391, 0.0
  %v3408 = vadd.f32 %v3392, 0.0
  %v3409 = vadd.f32 %v3393, 0.0
  %v3410 = vadd.f32 %v3394, 0.0
  %v3411 = vadd.f32 %v3395, 0.0
  %v3412 = vadd.f32 %v3396, 0.0
  %v3413 = vadd.f32 %v3397, 0.0
  %v3414 = vadd.f32 %v3398, 0.0
  %v3415 = vadd.f32 %v3399, 0.0
  %v3416 = vadd.f32 %v3400, 0.0
  %v3417 = vadd.f32 %v3401, 0.0
  %v3418 = vadd.f32 %v3402, 0.0
  %v3419 = vadd.f32 %v3403, 0.0
  %v3420 = vadd.f32 %v3404, 0.0
  %3421 = vset.pattern.permute.xlu0 5
  %3422 = vperm.xlu0 %3421, %v3077
  %v3423 = vpop.permute.xlu0 %3422
  %3425 = vset.pattern.permute.xlu0 5
  %3426 = vperm.xlu0 %3425, %v3078
  %v3427 = vpop.permute.xlu0 %3426
  %3429 = vset.pattern.permute.xlu0 5
  %3430 = vperm.xlu0 %3429, %v3079
  %v3431 = vpop.permute.xlu0 %3430
  %3433 = vset.pattern.permute.xlu0 5
  %3434 = vperm.xlu0 %3433, %v3080
  %v3435 = vpop.permute.xlu0 %3434
  %3437 = vset.pattern.permute.xlu0 5
  %3438 = vperm.xlu0 %3437, %v3081
  %v3439 = vpop.permute.xlu0 %3438
  %3441 = vset.pattern.permute.xlu0 5
  %3442 = vperm.xlu0 %3441, %v3082
  %v3443 = vpop.permute.xlu0 %3442
  %3445 = vset.pattern.permute.xlu0 5
  %3446 = vperm.xlu0 %3445, %v3083
  %v3447 = vpop.permute.xlu0 %3446
  %3449 = vset.pattern.permute.xlu0 5
  %3450 = vperm.xlu0 %3449, %v3084
  %v3451 = vpop.permute.xlu0 %3450
  %v3453 = vshrl.u32 %v3076, 16
  %v3454 = vpack.i.b16 %v3453, %v3453
  %v3456 = vlaneseq
  %v3457 = vshrl.u32 %v3456, 7
  %v3458 = vsub.s32 0, %v3457
  %v3459 = vrot.slane %v3454, %v3458
  %v3460 = vadd.bf16 %v3423, %v3459
  %v3461 = vadd.bf16 %v3427, %v3459
  %v3462 = vadd.bf16 %v3431, %v3459
  %v3463 = vadd.bf16 %v3435, %v3459
  %v3464 = vadd.bf16 %v3439, %v3459
  %v3465 = vadd.bf16 %v3443, %v3459
  %v3466 = vadd.bf16 %v3447, %v3459
  %v3467 = vadd.bf16 %v3451, %v3459
  %v3468 = vadd.bf16 %v3460, %v1261
  %v3469 = vadd.bf16 %v3461, %v1262
  %v3470 = vadd.bf16 %v3462, %v1263
  %v3471 = vadd.bf16 %v3463, %v1264
  %v3472 = vadd.bf16 %v3464, %v1265
  %v3473 = vadd.bf16 %v3465, %v1266
  %v3474 = vadd.bf16 %v3466, %v1267
  %v3475 = vadd.bf16 %v3467, %v1268
  %v3476 = vmul.bf16 %v3468, 1045249613
  %v3477 = vmul.bf16 %v3469, 1045249613
  %v3478 = vmul.bf16 %v3470, 1045249613
  %v3479 = vmul.bf16 %v3471, 1045249613
  %v3480 = vmul.bf16 %v3472, 1045249613
  %v3481 = vmul.bf16 %v3473, 1045249613
  %v3482 = vmul.bf16 %v3474, 1045249613
  %v3483 = vmul.bf16 %v3475, 1045249613
  %v3484 = vmax.bf16 %v3468, %v3476
  %v3485 = vmax.bf16 %v3469, %v3477
  %v3486 = vmax.bf16 %v3470, %v3478
  %v3487 = vmax.bf16 %v3471, %v3479
  %v3488 = vmax.bf16 %v3472, %v3480
  %v3489 = vmax.bf16 %v3473, %v3481
  %v3490 = vmax.bf16 %v3474, %v3482
  %v3491 = vmax.bf16 %v3475, %v3483
  %3492 = vmax.xlane.bf16.xlu0 %v3484
  %v3493 = vpop.xlane.xlu0 %3492
  %3494 = vmax.xlane.bf16.xlu0 %v3485
  %v3495 = vpop.xlane.xlu0 %3494
  %3496 = vmax.xlane.bf16.xlu0 %v3486
  %v3497 = vpop.xlane.xlu0 %3496
  %3498 = vmax.xlane.bf16.xlu0 %v3487
  %v3499 = vpop.xlane.xlu0 %3498
  %3500 = vmax.xlane.bf16.xlu0 %v3488
  %v3501 = vpop.xlane.xlu0 %3500
  %3502 = vmax.xlane.bf16.xlu0 %v3489
  %v3503 = vpop.xlane.xlu0 %3502
  %3504 = vmax.xlane.bf16.xlu0 %v3490
  %v3505 = vpop.xlane.xlu0 %3504
  %3506 = vmax.xlane.bf16.xlu0 %v3491
  %v3507 = vpop.xlane.xlu0 %3506
  %v3508 = vsub.bf16 %v3484, %v3493
  %v3509 = vsub.bf16 %v3485, %v3495
  %v3510 = vsub.bf16 %v3486, %v3497
  %v3511 = vsub.bf16 %v3487, %v3499
  %v3512 = vsub.bf16 %v3488, %v3501
  %v3513 = vsub.bf16 %v3489, %v3503
  %v3514 = vsub.bf16 %v3490, %v3505
  %v3515 = vsub.bf16 %v3491, %v3507
  %v3517 = vmul.bf16 %v3508, 1069105081
  %v3518 = vpow.bf16.pop %v3517
  %v3520 = vmul.bf16 %v3509, 1069105081
  %v3521 = vpow.bf16.pop %v3520
  %v3523 = vmul.bf16 %v3510, 1069105081
  %v3524 = vpow.bf16.pop %v3523
  %v3526 = vmul.bf16 %v3511, 1069105081
  %v3527 = vpow.bf16.pop %v3526
  %v3529 = vmul.bf16 %v3512, 1069105081
  %v3530 = vpow.bf16.pop %v3529
  %v3532 = vmul.bf16 %v3513, 1069105081
  %v3533 = vpow.bf16.pop %v3532
  %v3535 = vmul.bf16 %v3514, 1069105081
  %v3536 = vpow.bf16.pop %v3535
  %v3538 = vmul.bf16 %v3515, 1069105081
  %v3539 = vpow.bf16.pop %v3538
  %v3540 = vunpack.c.l.bf16 %v3518
  %v3541 = vunpack.c.h.bf16 %v3518
  %v3542 = vunpack.c.l.bf16 %v3521
  %v3543 = vunpack.c.h.bf16 %v3521
  %v3544 = vunpack.c.l.bf16 %v3524
  %v3545 = vunpack.c.h.bf16 %v3524
  %v3546 = vunpack.c.l.bf16 %v3527
  %v3547 = vunpack.c.h.bf16 %v3527
  %v3548 = vunpack.c.l.bf16 %v3530
  %v3549 = vunpack.c.h.bf16 %v3530
  %v3550 = vunpack.c.l.bf16 %v3533
  %v3551 = vunpack.c.h.bf16 %v3533
  %v3552 = vunpack.c.l.bf16 %v3536
  %v3553 = vunpack.c.h.bf16 %v3536
  %v3554 = vunpack.c.l.bf16 %v3539
  %v3555 = vunpack.c.h.bf16 %v3539
  %3556 = vadd.xlane.f32.xlu0 %v3540
  %v3557 = vpop.xlane.xlu0 %3556
  %3558 = vadd.xlane.f32.xlu0 %v3541
  %v3559 = vpop.xlane.xlu0 %3558
  %3560 = vadd.xlane.f32.xlu0 %v3542
  %v3561 = vpop.xlane.xlu0 %3560
  %3562 = vadd.xlane.f32.xlu0 %v3543
  %v3563 = vpop.xlane.xlu0 %3562
  %3564 = vadd.xlane.f32.xlu0 %v3544
  %v3565 = vpop.xlane.xlu0 %3564
  %3566 = vadd.xlane.f32.xlu0 %v3545
  %v3567 = vpop.xlane.xlu0 %3566
  %3568 = vadd.xlane.f32.xlu0 %v3546
  %v3569 = vpop.xlane.xlu0 %3568
  %3570 = vadd.xlane.f32.xlu0 %v3547
  %v3571 = vpop.xlane.xlu0 %3570
  %3572 = vadd.xlane.f32.xlu0 %v3548
  %v3573 = vpop.xlane.xlu0 %3572
  %3574 = vadd.xlane.f32.xlu0 %v3549
  %v3575 = vpop.xlane.xlu0 %3574
  %3576 = vadd.xlane.f32.xlu0 %v3550
  %v3577 = vpop.xlane.xlu0 %3576
  %3578 = vadd.xlane.f32.xlu0 %v3551
  %v3579 = vpop.xlane.xlu0 %3578
  %3580 = vadd.xlane.f32.xlu0 %v3552
  %v3581 = vpop.xlane.xlu0 %3580
  %3582 = vadd.xlane.f32.xlu0 %v3553
  %v3583 = vpop.xlane.xlu0 %3582
  %3584 = vadd.xlane.f32.xlu0 %v3554
  %v3585 = vpop.xlane.xlu0 %3584
  %3586 = vadd.xlane.f32.xlu0 %v3555
  %v3587 = vpop.xlane.xlu0 %3586
  %v3588 = vrcp.pop %v3557
  %v3589 = vrcp.pop %v3559
  %v3590 = vrcp.pop %v3561
  %v3591 = vrcp.pop %v3563
  %v3592 = vrcp.pop %v3565
  %v3593 = vrcp.pop %v3567
  %v3594 = vrcp.pop %v3569
  %v3595 = vrcp.pop %v3571
  %v3596 = vrcp.pop %v3573
  %v3597 = vrcp.pop %v3575
  %v3598 = vrcp.pop %v3577
  %v3599 = vrcp.pop %v3579
  %v3600 = vrcp.pop %v3581
  %v3601 = vrcp.pop %v3583
  %v3602 = vrcp.pop %v3585
  %v3603 = vrcp.pop %v3587
  %3612 = vrot.lane.b32.xlu0 %v3085, 64
  %v3613 = vpop.permute.xlu0 %3612
  %3614 = vrot.lane.b32.xlu0 %v3087, 64
  %v3615 = vpop.permute.xlu0 %3614
  %3616 = vrot.lane.b32.xlu0 %v3089, 64
  %v3617 = vpop.permute.xlu0 %3616
  %3618 = vrot.lane.b32.xlu0 %v3091, 64
  %v3619 = vpop.permute.xlu0 %3618
  %3620 = vrot.lane.b32.xlu0 %v3093, 64
  %v3621 = vpop.permute.xlu0 %3620
  %3622 = vrot.lane.b32.xlu0 %v3095, 64
  %v3623 = vpop.permute.xlu0 %3622
  %3624 = vrot.lane.b32.xlu0 %v3097, 64
  %v3625 = vpop.permute.xlu0 %3624
  %3626 = vrot.lane.b32.xlu0 %v3099, 64
  %v3627 = vpop.permute.xlu0 %3626
  %3636 = vmatprep.subr.bf16.mxu0 0
  %3637 = vmatpush1.bf16.msra.mxu0 %v3627
  %3638 = vmatprep.subr.bf16.mxu0 0
  %3639 = vmatpush1.bf16.msra.mxu0 %v3625
  %3640 = vmatprep.subr.bf16.mxu0 0
  %3641 = vmatpush1.bf16.msra.mxu0 %v3623
  %3642 = vmatprep.subr.bf16.mxu0 0
  %3643 = vmatpush1.bf16.msra.mxu0 %v3621
  %3644 = vmatprep.subr.bf16.mxu0 0
  %3645 = vmatpush1.bf16.msra.mxu0 %v3619
  %3646 = vmatprep.subr.bf16.mxu0 0
  %3647 = vmatpush1.bf16.msra.mxu0 %v3617
  %3648 = vmatprep.subr.bf16.mxu0 0
  %3649 = vmatpush1.bf16.msra.mxu0 %v3615
  %3650 = vmatprep.subr.bf16.mxu0 0
  %3651 = vmatpush1.bf16.msra.mxu0 %v3613
  %3652 = vmatprep.subr.bf16.mxu0 0
  %3653 = vmatpush2.bf16.msra.mxu0 0
  %3654 = vmatprep.subr.bf16.mxu0 0
  %3655 = vmatpush2.bf16.msra.mxu0 0
  %3656 = vmatprep.subr.bf16.mxu0 0
  %3657 = vmatpush2.bf16.msra.mxu0 0
  %3658 = vmatprep.subr.bf16.mxu0 0
  %3659 = vmatpush2.bf16.msra.mxu0 0
  %3660 = vmatprep.subr.bf16.mxu0 0
  %3661 = vmatpush2.bf16.msra.mxu0 0
  %3662 = vmatprep.subr.bf16.mxu0 0
  %3663 = vmatpush2.bf16.msra.mxu0 0
  %3664 = vmatprep.subr.bf16.mxu0 0
  %3665 = vmatpush2.bf16.msra.mxu0 0
  %3666 = vmatprep.subr.bf16.mxu0 0
  %3667 = vmatpush2.bf16.msra.mxu0 0
  %3668 = vmatprep.mubr.bf16.mxu0 0
  %3669 = vmatmul.mubr.bf16.gmra.mxu0 %v3518
  %v3670 = vpop.f32.mrf.mxu0
  %v3671 = vadd.f32 0.0, %v3670
  %v3672 = vpop.f32.mrf.mxu0
  %v3673 = vpop.f32.mrf.mxu0
  %v3674 = vadd.f32 0.0, %v3673
  %v3675 = vpop.f32.mrf.mxu0
  %3676 = vmatprep.mubr.bf16.mxu0 0
  %3677 = vmatmul.mubr.bf16.gmra.mxu0 %v3521
  %v3678 = vpop.f32.mrf.mxu0
  %v3679 = vadd.f32 0.0, %v3678
  %v3680 = vpop.f32.mrf.mxu0
  %v3681 = vpop.f32.mrf.mxu0
  %v3682 = vadd.f32 0.0, %v3681
  %v3683 = vpop.f32.mrf.mxu0
  %3684 = vmatprep.mubr.bf16.mxu0 0
  %3685 = vmatmul.mubr.bf16.gmra.mxu0 %v3524
  %v3686 = vpop.f32.mrf.mxu0
  %v3687 = vadd.f32 0.0, %v3686
  %v3688 = vpop.f32.mrf.mxu0
  %v3689 = vpop.f32.mrf.mxu0
  %v3690 = vadd.f32 0.0, %v3689
  %v3691 = vpop.f32.mrf.mxu0
  %3692 = vmatprep.mubr.bf16.mxu0 0
  %3693 = vmatmul.mubr.bf16.gmra.mxu0 %v3527
  %v3694 = vpop.f32.mrf.mxu0
  %v3695 = vadd.f32 0.0, %v3694
  %v3696 = vpop.f32.mrf.mxu0
  %v3697 = vpop.f32.mrf.mxu0
  %v3698 = vadd.f32 0.0, %v3697
  %v3699 = vpop.f32.mrf.mxu0
  %3700 = vmatprep.mubr.bf16.mxu0 0
  %3701 = vmatmul.mubr.bf16.gmra.mxu0 %v3530
  %v3702 = vpop.f32.mrf.mxu0
  %v3703 = vadd.f32 0.0, %v3702
  %v3704 = vpop.f32.mrf.mxu0
  %v3705 = vpop.f32.mrf.mxu0
  %v3706 = vadd.f32 0.0, %v3705
  %v3707 = vpop.f32.mrf.mxu0
  %3708 = vmatprep.mubr.bf16.mxu0 0
  %3709 = vmatmul.mubr.bf16.gmra.mxu0 %v3533
  %v3710 = vpop.f32.mrf.mxu0
  %v3711 = vadd.f32 0.0, %v3710
  %v3712 = vpop.f32.mrf.mxu0
  %v3713 = vpop.f32.mrf.mxu0
  %v3714 = vadd.f32 0.0, %v3713
  %v3715 = vpop.f32.mrf.mxu0
  %3716 = vmatprep.mubr.bf16.mxu0 0
  %3717 = vmatmul.mubr.bf16.gmra.mxu0 %v3536
  %v3718 = vpop.f32.mrf.mxu0
  %v3719 = vadd.f32 0.0, %v3718
  %v3720 = vpop.f32.mrf.mxu0
  %v3721 = vpop.f32.mrf.mxu0
  %v3722 = vadd.f32 0.0, %v3721
  %v3723 = vpop.f32.mrf.mxu0
  %3724 = vmatprep.mubr.bf16.mxu0 0
  %3725 = vmatmul.mubr.bf16.gmra.mxu0 %v3539
  %v3726 = vpop.f32.mrf.mxu0
  %v3727 = vadd.f32 0.0, %v3726
  %v3728 = vpop.f32.mrf.mxu0
  %v3729 = vpop.f32.mrf.mxu0
  %v3730 = vadd.f32 0.0, %v3729
  %v3731 = vpop.f32.mrf.mxu0
  %3732 = vdwg.mxu0
  %v3733 = vmul.f32 %v3588, %v3671
  %v3734 = vmul.f32 %v3589, %v3674
  %v3735 = vmul.f32 %v3590, %v3679
  %v3736 = vmul.f32 %v3591, %v3682
  %v3737 = vmul.f32 %v3592, %v3687
  %v3738 = vmul.f32 %v3593, %v3690
  %v3739 = vmul.f32 %v3594, %v3695
  %v3740 = vmul.f32 %v3595, %v3698
  %v3741 = vmul.f32 %v3596, %v3703
  %v3742 = vmul.f32 %v3597, %v3706
  %v3743 = vmul.f32 %v3598, %v3711
  %v3744 = vmul.f32 %v3599, %v3714
  %v3745 = vmul.f32 %v3600, %v3719
  %v3746 = vmul.f32 %v3601, %v3722
  %v3747 = vmul.f32 %v3602, %v3727
  %v3748 = vmul.f32 %v3603, %v3730
  %v3749 = vadd.f32 %v3405, %v3733
  %v3750 = vadd.f32 %v3406, %v3734
  %v3751 = vadd.f32 %v3407, %v3735
  %v3752 = vadd.f32 %v3408, %v3736
  %v3753 = vadd.f32 %v3409, %v3737
  %v3754 = vadd.f32 %v3410, %v3738
  %v3755 = vadd.f32 %v3411, %v3739
  %v3756 = vadd.f32 %v3412, %v3740
  %v3757 = vadd.f32 %v3413, %v3741
  %v3758 = vadd.f32 %v3414, %v3742
  %v3759 = vadd.f32 %v3415, %v3743
  %v3760 = vadd.f32 %v3416, %v3744
  %v3761 = vadd.f32 %v3417, %v3745
  %v3762 = vadd.f32 %v3418, %v3746
  %v3763 = vadd.f32 %v3419, %v3747
  %v3764 = vadd.f32 %v3420, %v3748
  %3765 = vset.pattern.permute.xlu0 6
  %3766 = vperm.xlu0 %3765, %v3077
  %v3767 = vpop.permute.xlu0 %3766
  %3769 = vset.pattern.permute.xlu0 6
  %3770 = vperm.xlu0 %3769, %v3078
  %v3771 = vpop.permute.xlu0 %3770
  %3773 = vset.pattern.permute.xlu0 6
  %3774 = vperm.xlu0 %3773, %v3079
  %v3775 = vpop.permute.xlu0 %3774
  %3777 = vset.pattern.permute.xlu0 6
  %3778 = vperm.xlu0 %3777, %v3080
  %v3779 = vpop.permute.xlu0 %3778
  %3781 = vset.pattern.permute.xlu0 6
  %3782 = vperm.xlu0 %3781, %v3081
  %v3783 = vpop.permute.xlu0 %3782
  %3785 = vset.pattern.permute.xlu0 6
  %3786 = vperm.xlu0 %3785, %v3082
  %v3787 = vpop.permute.xlu0 %3786
  %3789 = vset.pattern.permute.xlu0 6
  %3790 = vperm.xlu0 %3789, %v3083
  %v3791 = vpop.permute.xlu0 %3790
  %3793 = vset.pattern.permute.xlu0 6
  %3794 = vperm.xlu0 %3793, %v3084
  %v3795 = vpop.permute.xlu0 %3794
  %v3797 = vlaneseq
  %v3798 = vshrl.u32 %v3797, 7
  %v3799 = vsub.s32 1, %v3798
  %v3800 = vrot.slane %v3142, %v3799
  %v3801 = vadd.bf16 %v3767, %v3800
  %v3802 = vadd.bf16 %v3771, %v3800
  %v3803 = vadd.bf16 %v3775, %v3800
  %v3804 = vadd.bf16 %v3779, %v3800
  %v3805 = vadd.bf16 %v3783, %v3800
  %v3806 = vadd.bf16 %v3787, %v3800
  %v3807 = vadd.bf16 %v3791, %v3800
  %v3808 = vadd.bf16 %v3795, %v3800
  %v3809 = vadd.bf16 %v3801, %v1261
  %v3810 = vadd.bf16 %v3802, %v1262
  %v3811 = vadd.bf16 %v3803, %v1263
  %v3812 = vadd.bf16 %v3804, %v1264
  %v3813 = vadd.bf16 %v3805, %v1265
  %v3814 = vadd.bf16 %v3806, %v1266
  %v3815 = vadd.bf16 %v3807, %v1267
  %v3816 = vadd.bf16 %v3808, %v1268
  %v3817 = vmul.bf16 %v3809, 1045249613
  %v3818 = vmul.bf16 %v3810, 1045249613
  %v3819 = vmul.bf16 %v3811, 1045249613
  %v3820 = vmul.bf16 %v3812, 1045249613
  %v3821 = vmul.bf16 %v3813, 1045249613
  %v3822 = vmul.bf16 %v3814, 1045249613
  %v3823 = vmul.bf16 %v3815, 1045249613
  %v3824 = vmul.bf16 %v3816, 1045249613
  %v3825 = vmax.bf16 %v3809, %v3817
  %v3826 = vmax.bf16 %v3810, %v3818
  %v3827 = vmax.bf16 %v3811, %v3819
  %v3828 = vmax.bf16 %v3812, %v3820
  %v3829 = vmax.bf16 %v3813, %v3821
  %v3830 = vmax.bf16 %v3814, %v3822
  %v3831 = vmax.bf16 %v3815, %v3823
  %v3832 = vmax.bf16 %v3816, %v3824
  %3833 = vmax.xlane.bf16.xlu0 %v3825
  %v3834 = vpop.xlane.xlu0 %3833
  %3835 = vmax.xlane.bf16.xlu0 %v3826
  %v3836 = vpop.xlane.xlu0 %3835
  %3837 = vmax.xlane.bf16.xlu0 %v3827
  %v3838 = vpop.xlane.xlu0 %3837
  %3839 = vmax.xlane.bf16.xlu0 %v3828
  %v3840 = vpop.xlane.xlu0 %3839
  %3841 = vmax.xlane.bf16.xlu0 %v3829
  %v3842 = vpop.xlane.xlu0 %3841
  %3843 = vmax.xlane.bf16.xlu0 %v3830
  %v3844 = vpop.xlane.xlu0 %3843
  %3845 = vmax.xlane.bf16.xlu0 %v3831
  %v3846 = vpop.xlane.xlu0 %3845
  %3847 = vmax.xlane.bf16.xlu0 %v3832
  %v3848 = vpop.xlane.xlu0 %3847
  %v3849 = vsub.bf16 %v3825, %v3834
  %v3850 = vsub.bf16 %v3826, %v3836
  %v3851 = vsub.bf16 %v3827, %v3838
  %v3852 = vsub.bf16 %v3828, %v3840
  %v3853 = vsub.bf16 %v3829, %v3842
  %v3854 = vsub.bf16 %v3830, %v3844
  %v3855 = vsub.bf16 %v3831, %v3846
  %v3856 = vsub.bf16 %v3832, %v3848
  %v3858 = vmul.bf16 %v3849, 1069105081
  %v3859 = vpow.bf16.pop %v3858
  %v3861 = vmul.bf16 %v3850, 1069105081
  %v3862 = vpow.bf16.pop %v3861
  %v3864 = vmul.bf16 %v3851, 1069105081
  %v3865 = vpow.bf16.pop %v3864
  %v3867 = vmul.bf16 %v3852, 1069105081
  %v3868 = vpow.bf16.pop %v3867
  %v3870 = vmul.bf16 %v3853, 1069105081
  %v3871 = vpow.bf16.pop %v3870
  %v3873 = vmul.bf16 %v3854, 1069105081
  %v3874 = vpow.bf16.pop %v3873
  %v3876 = vmul.bf16 %v3855, 1069105081
  %v3877 = vpow.bf16.pop %v3876
  %v3879 = vmul.bf16 %v3856, 1069105081
  %v3880 = vpow.bf16.pop %v3879
  %v3881 = vunpack.c.l.bf16 %v3859
  %v3882 = vunpack.c.h.bf16 %v3859
  %v3883 = vunpack.c.l.bf16 %v3862
  %v3884 = vunpack.c.h.bf16 %v3862
  %v3885 = vunpack.c.l.bf16 %v3865
  %v3886 = vunpack.c.h.bf16 %v3865
  %v3887 = vunpack.c.l.bf16 %v3868
  %v3888 = vunpack.c.h.bf16 %v3868
  %v3889 = vunpack.c.l.bf16 %v3871
  %v3890 = vunpack.c.h.bf16 %v3871
  %v3891 = vunpack.c.l.bf16 %v3874
  %v3892 = vunpack.c.h.bf16 %v3874
  %v3893 = vunpack.c.l.bf16 %v3877
  %v3894 = vunpack.c.h.bf16 %v3877
  %v3895 = vunpack.c.l.bf16 %v3880
  %v3896 = vunpack.c.h.bf16 %v3880
  %3897 = vadd.xlane.f32.xlu0 %v3881
  %v3898 = vpop.xlane.xlu0 %3897
  %3899 = vadd.xlane.f32.xlu0 %v3882
  %v3900 = vpop.xlane.xlu0 %3899
  %3901 = vadd.xlane.f32.xlu0 %v3883
  %v3902 = vpop.xlane.xlu0 %3901
  %3903 = vadd.xlane.f32.xlu0 %v3884
  %v3904 = vpop.xlane.xlu0 %3903
  %3905 = vadd.xlane.f32.xlu0 %v3885
  %v3906 = vpop.xlane.xlu0 %3905
  %3907 = vadd.xlane.f32.xlu0 %v3886
  %v3908 = vpop.xlane.xlu0 %3907
  %3909 = vadd.xlane.f32.xlu0 %v3887
  %v3910 = vpop.xlane.xlu0 %3909
  %3911 = vadd.xlane.f32.xlu0 %v3888
  %v3912 = vpop.xlane.xlu0 %3911
  %3913 = vadd.xlane.f32.xlu0 %v3889
  %v3914 = vpop.xlane.xlu0 %3913
  %3915 = vadd.xlane.f32.xlu0 %v3890
  %v3916 = vpop.xlane.xlu0 %3915
  %3917 = vadd.xlane.f32.xlu0 %v3891
  %v3918 = vpop.xlane.xlu0 %3917
  %3919 = vadd.xlane.f32.xlu0 %v3892
  %v3920 = vpop.xlane.xlu0 %3919
  %3921 = vadd.xlane.f32.xlu0 %v3893
  %v3922 = vpop.xlane.xlu0 %3921
  %3923 = vadd.xlane.f32.xlu0 %v3894
  %v3924 = vpop.xlane.xlu0 %3923
  %3925 = vadd.xlane.f32.xlu0 %v3895
  %v3926 = vpop.xlane.xlu0 %3925
  %3927 = vadd.xlane.f32.xlu0 %v3896
  %v3928 = vpop.xlane.xlu0 %3927
  %v3929 = vrcp.pop %v3898
  %v3930 = vrcp.pop %v3900
  %v3931 = vrcp.pop %v3902
  %v3932 = vrcp.pop %v3904
  %v3933 = vrcp.pop %v3906
  %v3934 = vrcp.pop %v3908
  %v3935 = vrcp.pop %v3910
  %v3936 = vrcp.pop %v3912
  %v3937 = vrcp.pop %v3914
  %v3938 = vrcp.pop %v3916
  %v3939 = vrcp.pop %v3918
  %v3940 = vrcp.pop %v3920
  %v3941 = vrcp.pop %v3922
  %v3942 = vrcp.pop %v3924
  %v3943 = vrcp.pop %v3926
  %v3944 = vrcp.pop %v3928
  %3945 = vmatprep.subr.bf16.mxu0 0
  %3946 = vmatpush1.bf16.msra.mxu0 %v3100
  %3947 = vmatprep.subr.bf16.mxu0 0
  %3948 = vmatpush1.bf16.msra.mxu0 %v3098
  %3949 = vmatprep.subr.bf16.mxu0 0
  %3950 = vmatpush1.bf16.msra.mxu0 %v3096
  %3951 = vmatprep.subr.bf16.mxu0 0
  %3952 = vmatpush1.bf16.msra.mxu0 %v3094
  %3953 = vmatprep.subr.bf16.mxu0 0
  %3954 = vmatpush1.bf16.msra.mxu0 %v3092
  %3955 = vmatprep.subr.bf16.mxu0 0
  %3956 = vmatpush1.bf16.msra.mxu0 %v3090
  %3957 = vmatprep.subr.bf16.mxu0 0
  %3958 = vmatpush1.bf16.msra.mxu0 %v3088
  %3959 = vmatprep.subr.bf16.mxu0 0
  %3960 = vmatpush1.bf16.msra.mxu0 %v3086
  %3961 = vmatprep.subr.bf16.mxu0 0
  %3962 = vmatpush2.bf16.msra.mxu0 0
  %3963 = vmatprep.subr.bf16.mxu0 0
  %3964 = vmatpush2.bf16.msra.mxu0 0
  %3965 = vmatprep.subr.bf16.mxu0 0
  %3966 = vmatpush2.bf16.msra.mxu0 0
  %3967 = vmatprep.subr.bf16.mxu0 0
  %3968 = vmatpush2.bf16.msra.mxu0 0
  %3969 = vmatprep.subr.bf16.mxu0 0
  %3970 = vmatpush2.bf16.msra.mxu0 0
  %3971 = vmatprep.subr.bf16.mxu0 0
  %3972 = vmatpush2.bf16.msra.mxu0 0
  %3973 = vmatprep.subr.bf16.mxu0 0
  %3974 = vmatpush2.bf16.msra.mxu0 0
  %3975 = vmatprep.subr.bf16.mxu0 0
  %3976 = vmatpush2.bf16.msra.mxu0 0
  %3977 = vmatprep.mubr.bf16.mxu0 0
  %3978 = vmatmul.mubr.bf16.gmra.mxu0 %v3859
  %v3979 = vpop.f32.mrf.mxu0
  %v3980 = vadd.f32 0.0, %v3979
  %v3981 = vpop.f32.mrf.mxu0
  %v3982 = vpop.f32.mrf.mxu0
  %v3983 = vadd.f32 0.0, %v3982
  %v3984 = vpop.f32.mrf.mxu0
  %3985 = vmatprep.mubr.bf16.mxu0 0
  %3986 = vmatmul.mubr.bf16.gmra.mxu0 %v3862
  %v3987 = vpop.f32.mrf.mxu0
  %v3988 = vadd.f32 0.0, %v3987
  %v3989 = vpop.f32.mrf.mxu0
  %v3990 = vpop.f32.mrf.mxu0
  %v3991 = vadd.f32 0.0, %v3990
  %v3992 = vpop.f32.mrf.mxu0
  %3993 = vmatprep.mubr.bf16.mxu0 0
  %3994 = vmatmul.mubr.bf16.gmra.mxu0 %v3865
  %v3995 = vpop.f32.mrf.mxu0
  %v3996 = vadd.f32 0.0, %v3995
  %v3997 = vpop.f32.mrf.mxu0
  %v3998 = vpop.f32.mrf.mxu0
  %v3999 = vadd.f32 0.0, %v3998
  %v4000 = vpop.f32.mrf.mxu0
  %4001 = vmatprep.mubr.bf16.mxu0 0
  %4002 = vmatmul.mubr.bf16.gmra.mxu0 %v3868
  %v4003 = vpop.f32.mrf.mxu0
  %v4004 = vadd.f32 0.0, %v4003
  %v4005 = vpop.f32.mrf.mxu0
  %v4006 = vpop.f32.mrf.mxu0
  %v4007 = vadd.f32 0.0, %v4006
  %v4008 = vpop.f32.mrf.mxu0
  %4009 = vmatprep.mubr.bf16.mxu0 0
  %4010 = vmatmul.mubr.bf16.gmra.mxu0 %v3871
  %v4011 = vpop.f32.mrf.mxu0
  %v4012 = vadd.f32 0.0, %v4011
  %v4013 = vpop.f32.mrf.mxu0
  %v4014 = vpop.f32.mrf.mxu0
  %v4015 = vadd.f32 0.0, %v4014
  %v4016 = vpop.f32.mrf.mxu0
  %4017 = vmatprep.mubr.bf16.mxu0 0
  %4018 = vmatmul.mubr.bf16.gmra.mxu0 %v3874
  %v4019 = vpop.f32.mrf.mxu0
  %v4020 = vadd.f32 0.0, %v4019
  %v4021 = vpop.f32.mrf.mxu0
  %v4022 = vpop.f32.mrf.mxu0
  %v4023 = vadd.f32 0.0, %v4022
  %v4024 = vpop.f32.mrf.mxu0
  %4025 = vmatprep.mubr.bf16.mxu0 0
  %4026 = vmatmul.mubr.bf16.gmra.mxu0 %v3877
  %v4027 = vpop.f32.mrf.mxu0
  %v4028 = vadd.f32 0.0, %v4027
  %v4029 = vpop.f32.mrf.mxu0
  %v4030 = vpop.f32.mrf.mxu0
  %v4031 = vadd.f32 0.0, %v4030
  %v4032 = vpop.f32.mrf.mxu0
  %4033 = vmatprep.mubr.bf16.mxu0 0
  %4034 = vmatmul.mubr.bf16.gmra.mxu0 %v3880
  %v4035 = vpop.f32.mrf.mxu0
  %v4036 = vadd.f32 0.0, %v4035
  %v4037 = vpop.f32.mrf.mxu0
  %v4038 = vpop.f32.mrf.mxu0
  %v4039 = vadd.f32 0.0, %v4038
  %v4040 = vpop.f32.mrf.mxu0
  %4041 = vdwg.mxu0
  %v4042 = vmul.f32 %v3929, %v3980
  %v4043 = vmul.f32 %v3930, %v3983
  %v4044 = vmul.f32 %v3931, %v3988
  %v4045 = vmul.f32 %v3932, %v3991
  %v4046 = vmul.f32 %v3933, %v3996
  %v4047 = vmul.f32 %v3934, %v3999
  %v4048 = vmul.f32 %v3935, %v4004
  %v4049 = vmul.f32 %v3936, %v4007
  %v4050 = vmul.f32 %v3937, %v4012
  %v4051 = vmul.f32 %v3938, %v4015
  %v4052 = vmul.f32 %v3939, %v4020
  %v4053 = vmul.f32 %v3940, %v4023
  %v4054 = vmul.f32 %v3941, %v4028
  %v4055 = vmul.f32 %v3942, %v4031
  %v4056 = vmul.f32 %v3943, %v4036
  %v4057 = vmul.f32 %v3944, %v4039
  %v4058 = vadd.f32 %v3749, %v4042
  %v4059 = vadd.f32 %v3750, %v4043
  %v4060 = vadd.f32 %v3751, %v4044
  %v4061 = vadd.f32 %v3752, %v4045
  %v4062 = vadd.f32 %v3753, %v4046
  %v4063 = vadd.f32 %v3754, %v4047
  %v4064 = vadd.f32 %v3755, %v4048
  %v4065 = vadd.f32 %v3756, %v4049
  %v4066 = vadd.f32 %v3757, %v4050
  %v4067 = vadd.f32 %v3758, %v4051
  %v4068 = vadd.f32 %v3759, %v4052
  %v4069 = vadd.f32 %v3760, %v4053
  %v4070 = vadd.f32 %v3761, %v4054
  %v4071 = vadd.f32 %v3762, %v4055
  %v4072 = vadd.f32 %v3763, %v4056
  %v4073 = vadd.f32 %v3764, %v4057
  %4074 = vset.pattern.permute.xlu0 7
  %4075 = vperm.xlu0 %4074, %v3077
  %v4076 = vpop.permute.xlu0 %4075
  %4078 = vset.pattern.permute.xlu0 7
  %4079 = vperm.xlu0 %4078, %v3078
  %v4080 = vpop.permute.xlu0 %4079
  %4082 = vset.pattern.permute.xlu0 7
  %4083 = vperm.xlu0 %4082, %v3079
  %v4084 = vpop.permute.xlu0 %4083
  %4086 = vset.pattern.permute.xlu0 7
  %4087 = vperm.xlu0 %4086, %v3080
  %v4088 = vpop.permute.xlu0 %4087
  %4090 = vset.pattern.permute.xlu0 7
  %4091 = vperm.xlu0 %4090, %v3081
  %v4092 = vpop.permute.xlu0 %4091
  %4094 = vset.pattern.permute.xlu0 7
  %4095 = vperm.xlu0 %4094, %v3082
  %v4096 = vpop.permute.xlu0 %4095
  %4098 = vset.pattern.permute.xlu0 7
  %4099 = vperm.xlu0 %4098, %v3083
  %v4100 = vpop.permute.xlu0 %4099
  %4102 = vset.pattern.permute.xlu0 7
  %4103 = vperm.xlu0 %4102, %v3084
  %v4104 = vpop.permute.xlu0 %4103
  %v4106 = vlaneseq
  %v4107 = vshrl.u32 %v4106, 7
  %v4108 = vsub.s32 1, %v4107
  %v4109 = vrot.slane %v3454, %v4108
  %v4110 = vadd.bf16 %v4076, %v4109
  %v4111 = vadd.bf16 %v4080, %v4109
  %v4112 = vadd.bf16 %v4084, %v4109
  %v4113 = vadd.bf16 %v4088, %v4109
  %v4114 = vadd.bf16 %v4092, %v4109
  %v4115 = vadd.bf16 %v4096, %v4109
  %v4116 = vadd.bf16 %v4100, %v4109
  %v4117 = vadd.bf16 %v4104, %v4109
  %v4118 = vadd.bf16 %v4110, %v1261
  %v4119 = vadd.bf16 %v4111, %v1262
  %v4120 = vadd.bf16 %v4112, %v1263
  %v4121 = vadd.bf16 %v4113, %v1264
  %v4122 = vadd.bf16 %v4114, %v1265
  %v4123 = vadd.bf16 %v4115, %v1266
  %v4124 = vadd.bf16 %v4116, %v1267
  %v4125 = vadd.bf16 %v4117, %v1268
  %v4126 = vmul.bf16 %v4118, 1045249613
  %v4127 = vmul.bf16 %v4119, 1045249613
  %v4128 = vmul.bf16 %v4120, 1045249613
  %v4129 = vmul.bf16 %v4121, 1045249613
  %v4130 = vmul.bf16 %v4122, 1045249613
  %v4131 = vmul.bf16 %v4123, 1045249613
  %v4132 = vmul.bf16 %v4124, 1045249613
  %v4133 = vmul.bf16 %v4125, 1045249613
  %v4134 = vmax.bf16 %v4118, %v4126
  %v4135 = vmax.bf16 %v4119, %v4127
  %v4136 = vmax.bf16 %v4120, %v4128
  %v4137 = vmax.bf16 %v4121, %v4129
  %v4138 = vmax.bf16 %v4122, %v4130
  %v4139 = vmax.bf16 %v4123, %v4131
  %v4140 = vmax.bf16 %v4124, %v4132
  %v4141 = vmax.bf16 %v4125, %v4133
  %4142 = vmax.xlane.bf16.xlu0 %v4134
  %v4143 = vpop.xlane.xlu0 %4142
  %4144 = vmax.xlane.bf16.xlu0 %v4135
  %v4145 = vpop.xlane.xlu0 %4144
  %4146 = vmax.xlane.bf16.xlu0 %v4136
  %v4147 = vpop.xlane.xlu0 %4146
  %4148 = vmax.xlane.bf16.xlu0 %v4137
  %v4149 = vpop.xlane.xlu0 %4148
  %4150 = vmax.xlane.bf16.xlu0 %v4138
  %v4151 = vpop.xlane.xlu0 %4150
  %4152 = vmax.xlane.bf16.xlu0 %v4139
  %v4153 = vpop.xlane.xlu0 %4152
  %4154 = vmax.xlane.bf16.xlu0 %v4140
  %v4155 = vpop.xlane.xlu0 %4154
  %4156 = vmax.xlane.bf16.xlu0 %v4141
  %v4157 = vpop.xlane.xlu0 %4156
  %v4158 = vsub.bf16 %v4134, %v4143
  %v4159 = vsub.bf16 %v4135, %v4145
  %v4160 = vsub.bf16 %v4136, %v4147
  %v4161 = vsub.bf16 %v4137, %v4149
  %v4162 = vsub.bf16 %v4138, %v4151
  %v4163 = vsub.bf16 %v4139, %v4153
  %v4164 = vsub.bf16 %v4140, %v4155
  %v4165 = vsub.bf16 %v4141, %v4157
  %v4167 = vmul.bf16 %v4158, 1069105081
  %v4168 = vpow.bf16.pop %v4167
  %v4170 = vmul.bf16 %v4159, 1069105081
  %v4171 = vpow.bf16.pop %v4170
  %v4173 = vmul.bf16 %v4160, 1069105081
  %v4174 = vpow.bf16.pop %v4173
  %v4176 = vmul.bf16 %v4161, 1069105081
  %v4177 = vpow.bf16.pop %v4176
  %v4179 = vmul.bf16 %v4162, 1069105081
  %v4180 = vpow.bf16.pop %v4179
  %v4182 = vmul.bf16 %v4163, 1069105081
  %v4183 = vpow.bf16.pop %v4182
  %v4185 = vmul.bf16 %v4164, 1069105081
  %v4186 = vpow.bf16.pop %v4185
  %v4188 = vmul.bf16 %v4165, 1069105081
  %v4189 = vpow.bf16.pop %v4188
  %v4190 = vunpack.c.l.bf16 %v4168
  %v4191 = vunpack.c.h.bf16 %v4168
  %v4192 = vunpack.c.l.bf16 %v4171
  %v4193 = vunpack.c.h.bf16 %v4171
  %v4194 = vunpack.c.l.bf16 %v4174
  %v4195 = vunpack.c.h.bf16 %v4174
  %v4196 = vunpack.c.l.bf16 %v4177
  %v4197 = vunpack.c.h.bf16 %v4177
  %v4198 = vunpack.c.l.bf16 %v4180
  %v4199 = vunpack.c.h.bf16 %v4180
  %v4200 = vunpack.c.l.bf16 %v4183
  %v4201 = vunpack.c.h.bf16 %v4183
  %v4202 = vunpack.c.l.bf16 %v4186
  %v4203 = vunpack.c.h.bf16 %v4186
  %v4204 = vunpack.c.l.bf16 %v4189
  %v4205 = vunpack.c.h.bf16 %v4189
  %4206 = vadd.xlane.f32.xlu0 %v4190
  %v4207 = vpop.xlane.xlu0 %4206
  %4208 = vadd.xlane.f32.xlu0 %v4191
  %v4209 = vpop.xlane.xlu0 %4208
  %4210 = vadd.xlane.f32.xlu0 %v4192
  %v4211 = vpop.xlane.xlu0 %4210
  %4212 = vadd.xlane.f32.xlu0 %v4193
  %v4213 = vpop.xlane.xlu0 %4212
  %4214 = vadd.xlane.f32.xlu0 %v4194
  %v4215 = vpop.xlane.xlu0 %4214
  %4216 = vadd.xlane.f32.xlu0 %v4195
  %v4217 = vpop.xlane.xlu0 %4216
  %4218 = vadd.xlane.f32.xlu0 %v4196
  %v4219 = vpop.xlane.xlu0 %4218
  %4220 = vadd.xlane.f32.xlu0 %v4197
  %v4221 = vpop.xlane.xlu0 %4220
  %4222 = vadd.xlane.f32.xlu0 %v4198
  %v4223 = vpop.xlane.xlu0 %4222
  %4224 = vadd.xlane.f32.xlu0 %v4199
  %v4225 = vpop.xlane.xlu0 %4224
  %4226 = vadd.xlane.f32.xlu0 %v4200
  %v4227 = vpop.xlane.xlu0 %4226
  %4228 = vadd.xlane.f32.xlu0 %v4201
  %v4229 = vpop.xlane.xlu0 %4228
  %4230 = vadd.xlane.f32.xlu0 %v4202
  %v4231 = vpop.xlane.xlu0 %4230
  %4232 = vadd.xlane.f32.xlu0 %v4203
  %v4233 = vpop.xlane.xlu0 %4232
  %4234 = vadd.xlane.f32.xlu0 %v4204
  %v4235 = vpop.xlane.xlu0 %4234
  %4236 = vadd.xlane.f32.xlu0 %v4205
  %v4237 = vpop.xlane.xlu0 %4236
  %v4238 = vrcp.pop %v4207
  %v4239 = vrcp.pop %v4209
  %v4240 = vrcp.pop %v4211
  %v4241 = vrcp.pop %v4213
  %v4242 = vrcp.pop %v4215
  %v4243 = vrcp.pop %v4217
  %v4244 = vrcp.pop %v4219
  %v4245 = vrcp.pop %v4221
  %v4246 = vrcp.pop %v4223
  %v4247 = vrcp.pop %v4225
  %v4248 = vrcp.pop %v4227
  %v4249 = vrcp.pop %v4229
  %v4250 = vrcp.pop %v4231
  %v4251 = vrcp.pop %v4233
  %v4252 = vrcp.pop %v4235
  %v4253 = vrcp.pop %v4237
  %4262 = vrot.lane.b32.xlu0 %v3086, 64
  %v4263 = vpop.permute.xlu0 %4262
  %4264 = vrot.lane.b32.xlu0 %v3088, 64
  %v4265 = vpop.permute.xlu0 %4264
  %4266 = vrot.lane.b32.xlu0 %v3090, 64
  %v4267 = vpop.permute.xlu0 %4266
  %4268 = vrot.lane.b32.xlu0 %v3092, 64
  %v4269 = vpop.permute.xlu0 %4268
  %4270 = vrot.lane.b32.xlu0 %v3094, 64
  %v4271 = vpop.permute.xlu0 %4270
  %4272 = vrot.lane.b32.xlu0 %v3096, 64
  %v4273 = vpop.permute.xlu0 %4272
  %4274 = vrot.lane.b32.xlu0 %v3098, 64
  %v4275 = vpop.permute.xlu0 %4274
  %4276 = vrot.lane.b32.xlu0 %v3100, 64
  %v4277 = vpop.permute.xlu0 %4276
  %4286 = vmatprep.subr.bf16.mxu0 0
  %4287 = vmatpush1.bf16.msra.mxu0 %v4277
  %4288 = vmatprep.subr.bf16.mxu0 0
  %4289 = vmatpush1.bf16.msra.mxu0 %v4275
  %4290 = vmatprep.subr.bf16.mxu0 0
  %4291 = vmatpush1.bf16.msra.mxu0 %v4273
  %4292 = vmatprep.subr.bf16.mxu0 0
  %4293 = vmatpush1.bf16.msra.mxu0 %v4271
  %4294 = vmatprep.subr.bf16.mxu0 0
  %4295 = vmatpush1.bf16.msra.mxu0 %v4269
  %4296 = vmatprep.subr.bf16.mxu0 0
  %4297 = vmatpush1.bf16.msra.mxu0 %v4267
  %4298 = vmatprep.subr.bf16.mxu0 0
  %4299 = vmatpush1.bf16.msra.mxu0 %v4265
  %4300 = vmatprep.subr.bf16.mxu0 0
  %4301 = vmatpush1.bf16.msra.mxu0 %v4263
  %4302 = vmatprep.subr.bf16.mxu0 0
  %4303 = vmatpush2.bf16.msra.mxu0 0
  %4304 = vmatprep.subr.bf16.mxu0 0
  %4305 = vmatpush2.bf16.msra.mxu0 0
  %4306 = vmatprep.subr.bf16.mxu0 0
  %4307 = vmatpush2.bf16.msra.mxu0 0
  %4308 = vmatprep.subr.bf16.mxu0 0
  %4309 = vmatpush2.bf16.msra.mxu0 0
  %4310 = vmatprep.subr.bf16.mxu0 0
  %4311 = vmatpush2.bf16.msra.mxu0 0
  %4312 = vmatprep.subr.bf16.mxu0 0
  %4313 = vmatpush2.bf16.msra.mxu0 0
  %4314 = vmatprep.subr.bf16.mxu0 0
  %4315 = vmatpush2.bf16.msra.mxu0 0
  %4316 = vmatprep.subr.bf16.mxu0 0
  %4317 = vmatpush2.bf16.msra.mxu0 0
  %4318 = vmatprep.mubr.bf16.mxu0 0
  %4319 = vmatmul.mubr.bf16.gmra.mxu0 %v4168
  %v4320 = vpop.f32.mrf.mxu0
  %v4321 = vadd.f32 0.0, %v4320
  %v4322 = vpop.f32.mrf.mxu0
  %v4323 = vpop.f32.mrf.mxu0
  %v4324 = vadd.f32 0.0, %v4323
  %v4325 = vpop.f32.mrf.mxu0
  %4326 = vmatprep.mubr.bf16.mxu0 0
  %4327 = vmatmul.mubr.bf16.gmra.mxu0 %v4171
  %v4328 = vpop.f32.mrf.mxu0
  %v4329 = vadd.f32 0.0, %v4328
  %v4330 = vpop.f32.mrf.mxu0
  %v4331 = vpop.f32.mrf.mxu0
  %v4332 = vadd.f32 0.0, %v4331
  %v4333 = vpop.f32.mrf.mxu0
  %4334 = vmatprep.mubr.bf16.mxu0 0
  %4335 = vmatmul.mubr.bf16.gmra.mxu0 %v4174
  %v4336 = vpop.f32.mrf.mxu0
  %v4337 = vadd.f32 0.0, %v4336
  %v4338 = vpop.f32.mrf.mxu0
  %v4339 = vpop.f32.mrf.mxu0
  %v4340 = vadd.f32 0.0, %v4339
  %v4341 = vpop.f32.mrf.mxu0
  %4342 = vmatprep.mubr.bf16.mxu0 0
  %4343 = vmatmul.mubr.bf16.gmra.mxu0 %v4177
  %v4344 = vpop.f32.mrf.mxu0
  %v4345 = vadd.f32 0.0, %v4344
  %v4346 = vpop.f32.mrf.mxu0
  %v4347 = vpop.f32.mrf.mxu0
  %v4348 = vadd.f32 0.0, %v4347
  %v4349 = vpop.f32.mrf.mxu0
  %4350 = vmatprep.mubr.bf16.mxu0 0
  %4351 = vmatmul.mubr.bf16.gmra.mxu0 %v4180
  %v4352 = vpop.f32.mrf.mxu0
  %v4353 = vadd.f32 0.0, %v4352
  %v4354 = vpop.f32.mrf.mxu0
  %v4355 = vpop.f32.mrf.mxu0
  %v4356 = vadd.f32 0.0, %v4355
  %v4357 = vpop.f32.mrf.mxu0
  %4358 = vmatprep.mubr.bf16.mxu0 0
  %4359 = vmatmul.mubr.bf16.gmra.mxu0 %v4183
  %v4360 = vpop.f32.mrf.mxu0
  %v4361 = vadd.f32 0.0, %v4360
  %v4362 = vpop.f32.mrf.mxu0
  %v4363 = vpop.f32.mrf.mxu0
  %v4364 = vadd.f32 0.0, %v4363
  %v4365 = vpop.f32.mrf.mxu0
  %4366 = vmatprep.mubr.bf16.mxu0 0
  %4367 = vmatmul.mubr.bf16.gmra.mxu0 %v4186
  %v4368 = vpop.f32.mrf.mxu0
  %v4369 = vadd.f32 0.0, %v4368
  %v4370 = vpop.f32.mrf.mxu0
  %v4371 = vpop.f32.mrf.mxu0
  %v4372 = vadd.f32 0.0, %v4371
  %v4373 = vpop.f32.mrf.mxu0
  %4374 = vmatprep.mubr.bf16.mxu0 0
  %4375 = vmatmul.mubr.bf16.gmra.mxu0 %v4189
  %v4376 = vpop.f32.mrf.mxu0
  %v4377 = vadd.f32 0.0, %v4376
  %v4378 = vpop.f32.mrf.mxu0
  %v4379 = vpop.f32.mrf.mxu0
  %v4380 = vadd.f32 0.0, %v4379
  %v4381 = vpop.f32.mrf.mxu0
  %4382 = vdwg.mxu0
  %v4383 = vmul.f32 %v4238, %v4321
  %v4384 = vmul.f32 %v4239, %v4324
  %v4385 = vmul.f32 %v4240, %v4329
  %v4386 = vmul.f32 %v4241, %v4332
  %v4387 = vmul.f32 %v4242, %v4337
  %v4388 = vmul.f32 %v4243, %v4340
  %v4389 = vmul.f32 %v4244, %v4345
  %v4390 = vmul.f32 %v4245, %v4348
  %v4391 = vmul.f32 %v4246, %v4353
  %v4392 = vmul.f32 %v4247, %v4356
  %v4393 = vmul.f32 %v4248, %v4361
  %v4394 = vmul.f32 %v4249, %v4364
  %v4395 = vmul.f32 %v4250, %v4369
  %v4396 = vmul.f32 %v4251, %v4372
  %v4397 = vmul.f32 %v4252, %v4377
  %v4398 = vmul.f32 %v4253, %v4380
  %v4399 = vadd.f32 %v4058, %v4383
  %v4400 = vadd.f32 %v4059, %v4384
  %v4401 = vadd.f32 %v4060, %v4385
  %v4402 = vadd.f32 %v4061, %v4386
  %v4403 = vadd.f32 %v4062, %v4387
  %v4404 = vadd.f32 %v4063, %v4388
  %v4405 = vadd.f32 %v4064, %v4389
  %v4406 = vadd.f32 %v4065, %v4390
  %v4407 = vadd.f32 %v4066, %v4391
  %v4408 = vadd.f32 %v4067, %v4392
  %v4409 = vadd.f32 %v4068, %v4393
  %v4410 = vadd.f32 %v4069, %v4394
  %v4411 = vadd.f32 %v4070, %v4395
  %v4412 = vadd.f32 %v4071, %v4396
  %v4413 = vadd.f32 %v4072, %v4397
  %v4414 = vadd.f32 %v4073, %v4398
  %v4415 = vmul.f32 %v4399, 0.25
  %v4416 = vmul.f32 %v4400, 0.25
  %v4417 = vmul.f32 %v4401, 0.25
  %v4418 = vmul.f32 %v4402, 0.25
  %v4419 = vmul.f32 %v4403, 0.25
  %v4420 = vmul.f32 %v4404, 0.25
  %v4421 = vmul.f32 %v4405, 0.25
  %v4422 = vmul.f32 %v4406, 0.25
  %v4423 = vmul.f32 %v4407, 0.25
  %v4424 = vmul.f32 %v4408, 0.25
  %v4425 = vmul.f32 %v4409, 0.25
  %v4426 = vmul.f32 %v4410, 0.25
  %v4427 = vmul.f32 %v4411, 0.25
  %v4428 = vmul.f32 %v4412, 0.25
  %v4429 = vmul.f32 %v4413, 0.25
  %v4430 = vmul.f32 %v4414, 0.25
  %v4432 = vlaneseq
  %v4433 = vshrl.u32 %v4432, 7
  %v4434 = vsub.s32 0, %v4433
  %v4435 = vrot.slane %v2713, %v4434
  %v4437 = vadd.f32 %v4415, %v4435
  %v4438 = vadd.f32 %v4416, %v4435
  %v4439 = vadd.f32 %v4417, %v4435
  %v4440 = vadd.f32 %v4418, %v4435
  %v4441 = vadd.f32 %v4419, %v4435
  %v4442 = vadd.f32 %v4420, %v4435
  %v4443 = vadd.f32 %v4421, %v4435
  %v4444 = vadd.f32 %v4422, %v4435
  %v4445 = vadd.f32 %v4423, %v4435
  %v4446 = vadd.f32 %v4424, %v4435
  %v4447 = vadd.f32 %v4425, %v4435
  %v4448 = vadd.f32 %v4426, %v4435
  %v4449 = vadd.f32 %v4427, %v4435
  %v4450 = vadd.f32 %v4428, %v4435
  %v4451 = vadd.f32 %v4429, %v4435
  %v4452 = vadd.f32 %v4430, %v4435
  %vm4453 = vcmp.gt.f32.partialorder %v4437, 0.0
  %vm4454 = vcmp.gt.f32.partialorder %v4438, 0.0
  %vm4455 = vcmp.gt.f32.partialorder %v4439, 0.0
  %vm4456 = vcmp.gt.f32.partialorder %v4440, 0.0
  %vm4457 = vcmp.gt.f32.partialorder %v4441, 0.0
  %vm4458 = vcmp.gt.f32.partialorder %v4442, 0.0
  %vm4459 = vcmp.gt.f32.partialorder %v4443, 0.0
  %vm4460 = vcmp.gt.f32.partialorder %v4444, 0.0
  %vm4461 = vcmp.gt.f32.partialorder %v4445, 0.0
  %vm4462 = vcmp.gt.f32.partialorder %v4446, 0.0
  %vm4463 = vcmp.gt.f32.partialorder %v4447, 0.0
  %vm4464 = vcmp.gt.f32.partialorder %v4448, 0.0
  %vm4465 = vcmp.gt.f32.partialorder %v4449, 0.0
  %vm4466 = vcmp.gt.f32.partialorder %v4450, 0.0
  %vm4467 = vcmp.gt.f32.partialorder %v4451, 0.0
  %vm4468 = vcmp.gt.f32.partialorder %v4452, 0.0
  %v4469 = vmin.f32 %v4437, 0.0
  %v4470 = vmin.f32 %v4438, 0.0
  %v4471 = vmin.f32 %v4439, 0.0
  %v4472 = vmin.f32 %v4440, 0.0
  %v4473 = vmin.f32 %v4441, 0.0
  %v4474 = vmin.f32 %v4442, 0.0
  %v4475 = vmin.f32 %v4443, 0.0
  %v4476 = vmin.f32 %v4444, 0.0
  %v4477 = vmin.f32 %v4445, 0.0
  %v4478 = vmin.f32 %v4446, 0.0
  %v4479 = vmin.f32 %v4447, 0.0
  %v4480 = vmin.f32 %v4448, 0.0
  %v4481 = vmin.f32 %v4449, 0.0
  %v4482 = vmin.f32 %v4450, 0.0
  %v4483 = vmin.f32 %v4451, 0.0
  %v4484 = vmin.f32 %v4452, 0.0
  %v4485 = vmul.f32 %v4469, 1.442695
  %v4486 = vpow.pop %v4485
  %v4487 = vmul.f32 %v4470, 1.442695
  %v4488 = vpow.pop %v4487
  %v4489 = vmul.f32 %v4471, 1.442695
  %v4490 = vpow.pop %v4489
  %v4491 = vmul.f32 %v4472, 1.442695
  %v4492 = vpow.pop %v4491
  %v4493 = vmul.f32 %v4473, 1.442695
  %v4494 = vpow.pop %v4493
  %v4495 = vmul.f32 %v4474, 1.442695
  %v4496 = vpow.pop %v4495
  %v4497 = vmul.f32 %v4475, 1.442695
  %v4498 = vpow.pop %v4497
  %v4499 = vmul.f32 %v4476, 1.442695
  %v4500 = vpow.pop %v4499
  %v4501 = vmul.f32 %v4477, 1.442695
  %v4502 = vpow.pop %v4501
  %v4503 = vmul.f32 %v4478, 1.442695
  %v4504 = vpow.pop %v4503
  %v4505 = vmul.f32 %v4479, 1.442695
  %v4506 = vpow.pop %v4505
  %v4507 = vmul.f32 %v4480, 1.442695
  %v4508 = vpow.pop %v4507
  %v4509 = vmul.f32 %v4481, 1.442695
  %v4510 = vpow.pop %v4509
  %v4511 = vmul.f32 %v4482, 1.442695
  %v4512 = vpow.pop %v4511
  %v4513 = vmul.f32 %v4483, 1.442695
  %v4514 = vpow.pop %v4513
  %v4515 = vmul.f32 %v4484, 1.442695
  %v4516 = vpow.pop %v4515
  %v4517 = vsub.f32 %v4486, 1.0
  %v4518 = vsub.f32 %v4488, 1.0
  %v4519 = vsub.f32 %v4490, 1.0
  %v4520 = vsub.f32 %v4492, 1.0
  %v4521 = vsub.f32 %v4494, 1.0
  %v4522 = vsub.f32 %v4496, 1.0
  %v4523 = vsub.f32 %v4498, 1.0
  %v4524 = vsub.f32 %v4500, 1.0
  %v4525 = vsub.f32 %v4502, 1.0
  %v4526 = vsub.f32 %v4504, 1.0
  %v4527 = vsub.f32 %v4506, 1.0
  %v4528 = vsub.f32 %v4508, 1.0
  %v4529 = vsub.f32 %v4510, 1.0
  %v4530 = vsub.f32 %v4512, 1.0
  %v4531 = vsub.f32 %v4514, 1.0
  %v4532 = vsub.f32 %v4516, 1.0
  %v4533 = vsel %vm4453, %v4437, %v4517
  %v4534 = vsel %vm4454, %v4438, %v4518
  %v4535 = vsel %vm4455, %v4439, %v4519
  %v4536 = vsel %vm4456, %v4440, %v4520
  %v4537 = vsel %vm4457, %v4441, %v4521
  %v4538 = vsel %vm4458, %v4442, %v4522
  %v4539 = vsel %vm4459, %v4443, %v4523
  %v4540 = vsel %vm4460, %v4444, %v4524
  %v4541 = vsel %vm4461, %v4445, %v4525
  %v4542 = vsel %vm4462, %v4446, %v4526
  %v4543 = vsel %vm4463, %v4447, %v4527
  %v4544 = vsel %vm4464, %v4448, %v4528
  %v4545 = vsel %vm4465, %v4449, %v4529
  %v4546 = vsel %vm4466, %v4450, %v4530
  %v4547 = vsel %vm4467, %v4451, %v4531
  %v4548 = vsel %vm4468, %v4452, %v4532
  %s4549 = scalar_lea.vmem %s6, 128
  %v4550 = vld [vmem:[%s4549] sm:$0xff]
  %v4551 = vld [vmem:[%s4549 + $0x8] sm:$0xff]
  %v4552 = vld [vmem:[%s4549 + $0x10] sm:$0xff]
  %v4553 = vld [vmem:[%s4549 + $0x18] sm:$0xff]
  %v4554 = vld [vmem:[%s4549 + $0x20] sm:$0xff]
  %v4555 = vld [vmem:[%s4549 + $0x28] sm:$0xff]
  %v4556 = vld [vmem:[%s4549 + $0x30] sm:$0xff]
  %v4557 = vld [vmem:[%s4549 + $0x38] sm:$0xff]
  %s4558 = scalar_lea.vmem %s7, 512
  %v4559 = vld [vmem:[%s4558] sm:$0xff]
  %v4560 = vld [vmem:[%s4558 + $0x8] sm:$0xff]
  %v4561 = vld [vmem:[%s4558 + $0x10] sm:$0xff]
  %v4562 = vld [vmem:[%s4558 + $0x18] sm:$0xff]
  %v4563 = vld [vmem:[%s4558 + $0x20] sm:$0xff]
  %v4564 = vld [vmem:[%s4558 + $0x28] sm:$0xff]
  %v4565 = vld [vmem:[%s4558 + $0x30] sm:$0xff]
  %v4566 = vld [vmem:[%s4558 + $0x38] sm:$0xff]
  %v4567 = vld [vmem:[%s4558 + $0x40] sm:$0xff]
  %v4568 = vld [vmem:[%s4558 + $0x48] sm:$0xff]
  %v4569 = vld [vmem:[%s4558 + $0x50] sm:$0xff]
  %v4570 = vld [vmem:[%s4558 + $0x58] sm:$0xff]
  %v4571 = vld [vmem:[%s4558 + $0x60] sm:$0xff]
  %v4572 = vld [vmem:[%s4558 + $0x68] sm:$0xff]
  %v4573 = vld [vmem:[%s4558 + $0x70] sm:$0xff]
  %v4574 = vld [vmem:[%s4558 + $0x78] sm:$0xff]
  %v4575 = vld [vmem:[%s4558 + $0x80] sm:$0xff]
  %v4576 = vld [vmem:[%s4558 + $0x88] sm:$0xff]
  %v4577 = vld [vmem:[%s4558 + $0x90] sm:$0xff]
  %v4578 = vld [vmem:[%s4558 + $0x98] sm:$0xff]
  %v4579 = vld [vmem:[%s4558 + $0xa0] sm:$0xff]
  %v4580 = vld [vmem:[%s4558 + $0xa8] sm:$0xff]
  %v4581 = vld [vmem:[%s4558 + $0xb0] sm:$0xff]
  %v4582 = vld [vmem:[%s4558 + $0xb8] sm:$0xff]
  %v4583 = vld [vmem:[%s4558 + $0xc0] sm:$0xff]
  %v4584 = vld [vmem:[%s4558 + $0xc8] sm:$0xff]
  %v4585 = vld [vmem:[%s4558 + $0xd0] sm:$0xff]
  %v4586 = vld [vmem:[%s4558 + $0xd8] sm:$0xff]
  %v4587 = vld [vmem:[%s4558 + $0xe0] sm:$0xff]
  %v4588 = vld [vmem:[%s4558 + $0xe8] sm:$0xff]
  %v4589 = vld [vmem:[%s4558 + $0xf0] sm:$0xff]
  %v4590 = vld [vmem:[%s4558 + $0xf8] sm:$0xff]
  %s4591 = scalar_lea.vmem %s8, 2
  %v4592 = vld [vmem:[%s4591] sm:$0x1]
  %v4593 = vpack.c.bf16 %v4534, %v4533
  %v4594 = vpack.c.bf16 %v4536, %v4535
  %v4595 = vpack.c.bf16 %v4538, %v4537
  %v4596 = vpack.c.bf16 %v4540, %v4539
  %v4597 = vpack.c.bf16 %v4542, %v4541
  %v4598 = vpack.c.bf16 %v4544, %v4543
  %v4599 = vpack.c.bf16 %v4546, %v4545
  %v4600 = vpack.c.bf16 %v4548, %v4547
  %v4609 = vunpack.c.l.b16 %v4550
  %v4610 = vunpack.c.h.b16 %v4550
  %v4611 = vunpack.c.l.b16 %v4551
  %v4612 = vunpack.c.h.b16 %v4551
  %v4613 = vunpack.c.l.b16 %v4552
  %v4614 = vunpack.c.h.b16 %v4552
  %v4615 = vunpack.c.l.b16 %v4553
  %v4616 = vunpack.c.h.b16 %v4553
  %v4617 = vunpack.c.l.b16 %v4554
  %v4618 = vunpack.c.h.b16 %v4554
  %v4619 = vunpack.c.l.b16 %v4555
  %v4620 = vunpack.c.h.b16 %v4555
  %v4621 = vunpack.c.l.b16 %v4556
  %v4622 = vunpack.c.h.b16 %v4556
  %v4623 = vunpack.c.l.b16 %v4557
  %v4624 = vunpack.c.h.b16 %v4557
  %v4625 = vpack.c.b16 %v4611, %v4609
  %v4626 = vpack.c.b16 %v4612, %v4610
  %v4627 = vpack.c.b16 %v4615, %v4613
  %v4628 = vpack.c.b16 %v4616, %v4614
  %v4629 = vpack.c.b16 %v4619, %v4617
  %v4630 = vpack.c.b16 %v4620, %v4618
  %v4631 = vpack.c.b16 %v4623, %v4621
  %v4632 = vpack.c.b16 %v4624, %v4622
  %v4642 = vsel %vm436, %v4593, 0
  %v4645 = vsel %vm436, %v4594, 0
  %v4648 = vsel %vm436, %v4595, 0
  %v4651 = vsel %vm436, %v4596, 0
  %v4654 = vsel %vm436, %v4597, 0
  %v4657 = vsel %vm436, %v4598, 0
  %v4660 = vsel %vm436, %v4599, 0
  %v4663 = vsel %vm436, %v4600, 0
  %4665 = vmatprep.subr.bf16.mxu0 0
  %4666 = vmatpush1.bf16.msra.mxu0 0
  %4667 = vmatprep.subr.bf16.mxu0 0
  %4668 = vmatpush1.bf16.msra.mxu0 0
  %4669 = vmatprep.subr.bf16.mxu0 0
  %4670 = vmatpush1.bf16.msra.mxu0 0
  %4671 = vmatprep.subr.bf16.mxu0 0
  %4672 = vmatpush1.bf16.msra.mxu0 0
  %4673 = vmatprep.subr.bf16.mxu0 %v4632
  %4674 = vmatpush1.bf16.msra.mxu0 %v4631
  %4675 = vmatprep.subr.bf16.mxu0 %v4630
  %4676 = vmatpush1.bf16.msra.mxu0 %v4629
  %4677 = vmatprep.subr.bf16.mxu0 %v4628
  %4678 = vmatpush1.bf16.msra.mxu0 %v4627
  %4679 = vmatprep.subr.bf16.mxu0 %v4626
  %4680 = vmatpush1.bf16.msra.mxu0 %v4625
  %4681 = vmatprep.subr.bf16.mxu0 0
  %4682 = vmatpush2.bf16.msra.mxu0 0
  %4683 = vmatprep.subr.bf16.mxu0 0
  %4684 = vmatpush2.bf16.msra.mxu0 0
  %4685 = vmatprep.subr.bf16.mxu0 0
  %4686 = vmatpush2.bf16.msra.mxu0 0
  %4687 = vmatprep.subr.bf16.mxu0 0
  %4688 = vmatpush2.bf16.msra.mxu0 0
  %4689 = vmatprep.subr.bf16.mxu0 0
  %4690 = vmatpush2.bf16.msra.mxu0 0
  %4691 = vmatprep.subr.bf16.mxu0 0
  %4692 = vmatpush2.bf16.msra.mxu0 0
  %4693 = vmatprep.subr.bf16.mxu0 0
  %4694 = vmatpush2.bf16.msra.mxu0 0
  %4695 = vmatprep.subr.bf16.mxu0 0
  %4696 = vmatpush2.bf16.msra.mxu0 0
  %4697 = vmatprep.mubr.bf16.mxu0 0
  %4698 = vmatmul.mubr.bf16.gmra.mxu0 %v4642
  %v4699 = vpop.f32.mrf.mxu0
  %v4700 = vadd.f32 0.0, %v4699
  %v4701 = vpop.f32.mrf.mxu0
  %v4702 = vadd.f32 0.0, %v4701
  %v4703 = vpop.f32.mrf.mxu0
  %v4704 = vadd.f32 0.0, %v4703
  %v4705 = vpop.f32.mrf.mxu0
  %v4706 = vadd.f32 0.0, %v4705
  %4707 = vmatprep.mubr.bf16.mxu0 0
  %4708 = vmatmul.mubr.bf16.gmra.mxu0 %v4645
  %v4709 = vpop.f32.mrf.mxu0
  %v4710 = vadd.f32 0.0, %v4709
  %v4711 = vpop.f32.mrf.mxu0
  %v4712 = vadd.f32 0.0, %v4711
  %v4713 = vpop.f32.mrf.mxu0
  %v4714 = vadd.f32 0.0, %v4713
  %v4715 = vpop.f32.mrf.mxu0
  %v4716 = vadd.f32 0.0, %v4715
  %4717 = vmatprep.mubr.bf16.mxu0 0
  %4718 = vmatmul.mubr.bf16.gmra.mxu0 %v4648
  %v4719 = vpop.f32.mrf.mxu0
  %v4720 = vadd.f32 0.0, %v4719
  %v4721 = vpop.f32.mrf.mxu0
  %v4722 = vadd.f32 0.0, %v4721
  %v4723 = vpop.f32.mrf.mxu0
  %v4724 = vadd.f32 0.0, %v4723
  %v4725 = vpop.f32.mrf.mxu0
  %v4726 = vadd.f32 0.0, %v4725
  %4727 = vmatprep.mubr.bf16.mxu0 0
  %4728 = vmatmul.mubr.bf16.gmra.mxu0 %v4651
  %v4729 = vpop.f32.mrf.mxu0
  %v4730 = vadd.f32 0.0, %v4729
  %v4731 = vpop.f32.mrf.mxu0
  %v4732 = vadd.f32 0.0, %v4731
  %v4733 = vpop.f32.mrf.mxu0
  %v4734 = vadd.f32 0.0, %v4733
  %v4735 = vpop.f32.mrf.mxu0
  %v4736 = vadd.f32 0.0, %v4735
  %4737 = vmatprep.mubr.bf16.mxu0 0
  %4738 = vmatmul.mubr.bf16.gmra.mxu0 %v4654
  %v4739 = vpop.f32.mrf.mxu0
  %v4740 = vadd.f32 0.0, %v4739
  %v4741 = vpop.f32.mrf.mxu0
  %v4742 = vadd.f32 0.0, %v4741
  %v4743 = vpop.f32.mrf.mxu0
  %v4744 = vadd.f32 0.0, %v4743
  %v4745 = vpop.f32.mrf.mxu0
  %v4746 = vadd.f32 0.0, %v4745
  %4747 = vmatprep.mubr.bf16.mxu0 0
  %4748 = vmatmul.mubr.bf16.gmra.mxu0 %v4657
  %v4749 = vpop.f32.mrf.mxu0
  %v4750 = vadd.f32 0.0, %v4749
  %v4751 = vpop.f32.mrf.mxu0
  %v4752 = vadd.f32 0.0, %v4751
  %v4753 = vpop.f32.mrf.mxu0
  %v4754 = vadd.f32 0.0, %v4753
  %v4755 = vpop.f32.mrf.mxu0
  %v4756 = vadd.f32 0.0, %v4755
  %4757 = vmatprep.mubr.bf16.mxu0 0
  %4758 = vmatmul.mubr.bf16.gmra.mxu0 %v4660
  %v4759 = vpop.f32.mrf.mxu0
  %v4760 = vadd.f32 0.0, %v4759
  %v4761 = vpop.f32.mrf.mxu0
  %v4762 = vadd.f32 0.0, %v4761
  %v4763 = vpop.f32.mrf.mxu0
  %v4764 = vadd.f32 0.0, %v4763
  %v4765 = vpop.f32.mrf.mxu0
  %v4766 = vadd.f32 0.0, %v4765
  %4767 = vmatprep.mubr.bf16.mxu0 0
  %4768 = vmatmul.mubr.bf16.gmra.mxu0 %v4663
  %v4769 = vpop.f32.mrf.mxu0
  %v4770 = vadd.f32 0.0, %v4769
  %v4771 = vpop.f32.mrf.mxu0
  %v4772 = vadd.f32 0.0, %v4771
  %v4773 = vpop.f32.mrf.mxu0
  %v4774 = vadd.f32 0.0, %v4773
  %v4775 = vpop.f32.mrf.mxu0
  %v4776 = vadd.f32 0.0, %v4775
  %4777 = vdwg.mxu0
  %4778 = vmatprep.subr.mxu0 0.0
  %4779 = vmatpush1.msra.mxu0 %v4574
  %4780 = vmatprep.subr.mxu0 0.0
  %4781 = vmatpush1.msra.mxu0 %v4573
  %4782 = vmatprep.subr.mxu0 0.0
  %4783 = vmatpush1.msra.mxu0 %v4572
  %4784 = vmatprep.subr.mxu0 0.0
  %4785 = vmatpush1.msra.mxu0 %v4571
  %4786 = vmatprep.subr.mxu0 0.0
  %4787 = vmatpush1.msra.mxu0 %v4570
  %4788 = vmatprep.subr.mxu0 0.0
  %4789 = vmatpush1.msra.mxu0 %v4569
  %4790 = vmatprep.subr.mxu0 0.0
  %4791 = vmatpush1.msra.mxu0 %v4568
  %4792 = vmatprep.subr.mxu0 0.0
  %4793 = vmatpush1.msra.mxu0 %v4567
  %4794 = vmatprep.subr.mxu0 0.0
  %4795 = vmatpush1.msra.mxu0 %v4566
  %4796 = vmatprep.subr.mxu0 0.0
  %4797 = vmatpush1.msra.mxu0 %v4565
  %4798 = vmatprep.subr.mxu0 0.0
  %4799 = vmatpush1.msra.mxu0 %v4564
  %4800 = vmatprep.subr.mxu0 0.0
  %4801 = vmatpush1.msra.mxu0 %v4563
  %4802 = vmatprep.subr.mxu0 0.0
  %4803 = vmatpush1.msra.mxu0 %v4562
  %4804 = vmatprep.subr.mxu0 0.0
  %4805 = vmatpush1.msra.mxu0 %v4561
  %4806 = vmatprep.subr.mxu0 0.0
  %4807 = vmatpush1.msra.mxu0 %v4560
  %4808 = vmatprep.subr.mxu0 0.0
  %4809 = vmatpush1.msra.mxu0 %v4559
  %4810 = vmatprep.subr.mxu0 0.0
  %4811 = vmatpush2.msra.mxu0 %v4590
  %4812 = vmatprep.subr.mxu0 0.0
  %4813 = vmatpush2.msra.mxu0 %v4589
  %4814 = vmatprep.subr.mxu0 0.0
  %4815 = vmatpush2.msra.mxu0 %v4588
  %4816 = vmatprep.subr.mxu0 0.0
  %4817 = vmatpush2.msra.mxu0 %v4587
  %4818 = vmatprep.subr.mxu0 0.0
  %4819 = vmatpush2.msra.mxu0 %v4586
  %4820 = vmatprep.subr.mxu0 0.0
  %4821 = vmatpush2.msra.mxu0 %v4585
  %4822 = vmatprep.subr.mxu0 0.0
  %4823 = vmatpush2.msra.mxu0 %v4584
  %4824 = vmatprep.subr.mxu0 0.0
  %4825 = vmatpush2.msra.mxu0 %v4583
  %4826 = vmatprep.subr.mxu0 0.0
  %4827 = vmatpush2.msra.mxu0 %v4582
  %4828 = vmatprep.subr.mxu0 0.0
  %4829 = vmatpush2.msra.mxu0 %v4581
  %4830 = vmatprep.subr.mxu0 0.0
  %4831 = vmatpush2.msra.mxu0 %v4580
  %4832 = vmatprep.subr.mxu0 0.0
  %4833 = vmatpush2.msra.mxu0 %v4579
  %4834 = vmatprep.subr.mxu0 0.0
  %4835 = vmatpush2.msra.mxu0 %v4578
  %4836 = vmatprep.subr.mxu0 0.0
  %4837 = vmatpush2.msra.mxu0 %v4577
  %4838 = vmatprep.subr.mxu0 0.0
  %4839 = vmatpush2.msra.mxu0 %v4576
  %4840 = vmatprep.subr.mxu0 0.0
  %4841 = vmatpush2.msra.mxu0 %v4575
  %4842 = vmatprep.mubr.f32.mxu0 %v4702
  %4843 = vmatmul.mubr.f32.gmra.mxu0 %v4700
  %v4844 = vpop.f32.mrf.mxu0
  %v4845 = vadd.f32 0.0, %v4844
  %v4846 = vpop.f32.mrf.mxu0
  %4847 = vmatprep.mubr.f32.mxu0 %v4706
  %4848 = vmatmul.mubr.f32.gmra.mxu0 %v4704
  %v4849 = vpop.f32.mrf.mxu0
  %v4850 = vadd.f32 0.0, %v4849
  %v4851 = vpop.f32.mrf.mxu0
  %4852 = vmatprep.mubr.f32.mxu0 %v4712
  %4853 = vmatmul.mubr.f32.gmra.mxu0 %v4710
  %v4854 = vpop.f32.mrf.mxu0
  %v4855 = vadd.f32 0.0, %v4854
  %v4856 = vpop.f32.mrf.mxu0
  %4857 = vmatprep.mubr.f32.mxu0 %v4716
  %4858 = vmatmul.mubr.f32.gmra.mxu0 %v4714
  %v4859 = vpop.f32.mrf.mxu0
  %v4860 = vadd.f32 0.0, %v4859
  %v4861 = vpop.f32.mrf.mxu0
  %4862 = vmatprep.mubr.f32.mxu0 %v4722
  %4863 = vmatmul.mubr.f32.gmra.mxu0 %v4720
  %v4864 = vpop.f32.mrf.mxu0
  %v4865 = vadd.f32 0.0, %v4864
  %v4866 = vpop.f32.mrf.mxu0
  %4867 = vmatprep.mubr.f32.mxu0 %v4726
  %4868 = vmatmul.mubr.f32.gmra.mxu0 %v4724
  %v4869 = vpop.f32.mrf.mxu0
  %v4870 = vadd.f32 0.0, %v4869
  %v4871 = vpop.f32.mrf.mxu0
  %4872 = vmatprep.mubr.f32.mxu0 %v4732
  %4873 = vmatmul.mubr.f32.gmra.mxu0 %v4730
  %v4874 = vpop.f32.mrf.mxu0
  %v4875 = vadd.f32 0.0, %v4874
  %v4876 = vpop.f32.mrf.mxu0
  %4877 = vmatprep.mubr.f32.mxu0 %v4736
  %4878 = vmatmul.mubr.f32.gmra.mxu0 %v4734
  %v4879 = vpop.f32.mrf.mxu0
  %v4880 = vadd.f32 0.0, %v4879
  %v4881 = vpop.f32.mrf.mxu0
  %4882 = vmatprep.mubr.f32.mxu0 %v4742
  %4883 = vmatmul.mubr.f32.gmra.mxu0 %v4740
  %v4884 = vpop.f32.mrf.mxu0
  %v4885 = vadd.f32 0.0, %v4884
  %v4886 = vpop.f32.mrf.mxu0
  %4887 = vmatprep.mubr.f32.mxu0 %v4746
  %4888 = vmatmul.mubr.f32.gmra.mxu0 %v4744
  %v4889 = vpop.f32.mrf.mxu0
  %v4890 = vadd.f32 0.0, %v4889
  %v4891 = vpop.f32.mrf.mxu0
  %4892 = vmatprep.mubr.f32.mxu0 %v4752
  %4893 = vmatmul.mubr.f32.gmra.mxu0 %v4750
  %v4894 = vpop.f32.mrf.mxu0
  %v4895 = vadd.f32 0.0, %v4894
  %v4896 = vpop.f32.mrf.mxu0
  %4897 = vmatprep.mubr.f32.mxu0 %v4756
  %4898 = vmatmul.mubr.f32.gmra.mxu0 %v4754
  %v4899 = vpop.f32.mrf.mxu0
  %v4900 = vadd.f32 0.0, %v4899
  %v4901 = vpop.f32.mrf.mxu0
  %4902 = vmatprep.mubr.f32.mxu0 %v4762
  %4903 = vmatmul.mubr.f32.gmra.mxu0 %v4760
  %v4904 = vpop.f32.mrf.mxu0
  %v4905 = vadd.f32 0.0, %v4904
  %v4906 = vpop.f32.mrf.mxu0
  %4907 = vmatprep.mubr.f32.mxu0 %v4766
  %4908 = vmatmul.mubr.f32.gmra.mxu0 %v4764
  %v4909 = vpop.f32.mrf.mxu0
  %v4910 = vadd.f32 0.0, %v4909
  %v4911 = vpop.f32.mrf.mxu0
  %4912 = vmatprep.mubr.f32.mxu0 %v4772
  %4913 = vmatmul.mubr.f32.gmra.mxu0 %v4770
  %v4914 = vpop.f32.mrf.mxu0
  %v4915 = vadd.f32 0.0, %v4914
  %v4916 = vpop.f32.mrf.mxu0
  %4917 = vmatprep.mubr.f32.mxu0 %v4776
  %4918 = vmatmul.mubr.f32.gmra.mxu0 %v4774
  %v4919 = vpop.f32.mrf.mxu0
  %v4920 = vadd.f32 0.0, %v4919
  %v4921 = vpop.f32.mrf.mxu0
  %4922 = vdwg.mxu0
  %4923 = vxpose.xlu0.b32.start [1/16] %v4845, 128
  %4924 = vxpose.xlu0.b32.cont [2/16] %v4850, 128
  %4925 = vxpose.xlu0.b32.cont [3/16] %v4855, 128
  %4926 = vxpose.xlu0.b32.cont [4/16] %v4860, 128
  %4927 = vxpose.xlu0.b32.cont [5/16] %v4865, 128
  %4928 = vxpose.xlu0.b32.cont [6/16] %v4870, 128
  %4929 = vxpose.xlu0.b32.cont [7/16] %v4875, 128
  %4930 = vxpose.xlu0.b32.cont [8/16] %v4880, 128
  %4931 = vxpose.xlu0.b32.cont [9/16] %v4885, 128
  %4932 = vxpose.xlu0.b32.cont [10/16] %v4890, 128
  %4933 = vxpose.xlu0.b32.cont [11/16] %v4895, 128
  %4934 = vxpose.xlu0.b32.cont [12/16] %v4900, 128
  %4935 = vxpose.xlu0.b32.cont [13/16] %v4905, 128
  %4936 = vxpose.xlu0.b32.cont [14/16] %v4910, 128
  %4937 = vxpose.xlu0.b32.cont [15/16] %v4915, 128
  %4938 = vxpose.xlu0.b32.end [16/16] %v4920, 128
  %v4939 = vpop.trf.xlu0
  %v4940 = vpop.trf.xlu0
  %v4941 = vpop.trf.xlu0
  %v4942 = vpop.trf.xlu0
  %v4943 = vpop.trf.xlu0
  %v4944 = vpop.trf.xlu0
  %v4945 = vpop.trf.xlu0
  %v4946 = vpop.trf.xlu0
  %v4947 = vpop.trf.xlu0
  %v4948 = vpop.trf.xlu0
  %v4949 = vpop.trf.xlu0
  %v4950 = vpop.trf.xlu0
  %v4951 = vpop.trf.xlu0
  %v4952 = vpop.trf.xlu0
  %v4953 = vpop.trf.xlu0
  %v4954 = vpop.trf.xlu0
  %v4955 = vpack.c.bf16 %v4939, %v4939
  %v4956 = vpack.c.bf16 %v4850, %v4845
  %v4957 = vpack.c.bf16 %v4860, %v4855
  %v4958 = vpack.c.bf16 %v4870, %v4865
  %v4959 = vpack.c.bf16 %v4880, %v4875
  %v4960 = vpack.c.bf16 %v4890, %v4885
  %v4961 = vpack.c.bf16 %v4900, %v4895
  %v4962 = vpack.c.bf16 %v4910, %v4905
  %v4963 = vpack.c.bf16 %v4920, %v4915
  %v4964 = vpack.c.bf16 %v4704, %v4700
  %v4965 = vpack.c.bf16 %v4706, %v4702
  %v4966 = vpack.c.bf16 %v4714, %v4710
  %v4967 = vpack.c.bf16 %v4716, %v4712
  %v4968 = vpack.c.bf16 %v4724, %v4720
  %v4969 = vpack.c.bf16 %v4726, %v4722
  %v4970 = vpack.c.bf16 %v4734, %v4730
  %v4971 = vpack.c.bf16 %v4736, %v4732
  %v4972 = vpack.c.bf16 %v4744, %v4740
  %v4973 = vpack.c.bf16 %v4746, %v4742
  %v4974 = vpack.c.bf16 %v4754, %v4750
  %v4975 = vpack.c.bf16 %v4756, %v4752
  %v4976 = vpack.c.bf16 %v4764, %v4760
  %v4977 = vpack.c.bf16 %v4766, %v4762
  %v4978 = vpack.c.bf16 %v4774, %v4770
  %v4979 = vpack.c.bf16 %v4776, %v4772
  %4981 = vset.pattern.permute.xlu0 4
  %4982 = vperm.xlu0 %4981, %v4956
  %v4983 = vpop.permute.xlu0 %4982
  %4986 = vset.pattern.permute.xlu0 4
  %4987 = vperm.xlu0 %4986, %v4957
  %v4988 = vpop.permute.xlu0 %4987
  %4991 = vset.pattern.permute.xlu0 4
  %4992 = vperm.xlu0 %4991, %v4958
  %v4993 = vpop.permute.xlu0 %4992
  %4996 = vset.pattern.permute.xlu0 4
  %4997 = vperm.xlu0 %4996, %v4959
  %v4998 = vpop.permute.xlu0 %4997
  %5001 = vset.pattern.permute.xlu0 4
  %5002 = vperm.xlu0 %5001, %v4960
  %v5003 = vpop.permute.xlu0 %5002
  %5006 = vset.pattern.permute.xlu0 4
  %5007 = vperm.xlu0 %5006, %v4961
  %v5008 = vpop.permute.xlu0 %5007
  %5011 = vset.pattern.permute.xlu0 4
  %5012 = vperm.xlu0 %5011, %v4962
  %v5013 = vpop.permute.xlu0 %5012
  %5016 = vset.pattern.permute.xlu0 4
  %5017 = vperm.xlu0 %5016, %v4963
  %v5018 = vpop.permute.xlu0 %5017
  %v5021 = vpack.i.b16 %v4955, %v4955
  %v5023 = vlaneseq
  %v5024 = vshrl.u32 %v5023, 7
  %v5025 = vsub.s32 0, %v5024
  %v5026 = vrot.slane %v5021, %v5025
  %v5027 = vadd.bf16 %v4983, %v5026
  %v5028 = vadd.bf16 %v4988, %v5026
  %v5029 = vadd.bf16 %v4993, %v5026
  %v5030 = vadd.bf16 %v4998, %v5026
  %v5031 = vadd.bf16 %v5003, %v5026
  %v5032 = vadd.bf16 %v5008, %v5026
  %v5033 = vadd.bf16 %v5013, %v5026
  %v5034 = vadd.bf16 %v5018, %v5026
  %v5035 = vadd.bf16 %v5027, %v1261
  %v5036 = vadd.bf16 %v5028, %v1262
  %v5037 = vadd.bf16 %v5029, %v1263
  %v5038 = vadd.bf16 %v5030, %v1264
  %v5039 = vadd.bf16 %v5031, %v1265
  %v5040 = vadd.bf16 %v5032, %v1266
  %v5041 = vadd.bf16 %v5033, %v1267
  %v5042 = vadd.bf16 %v5034, %v1268
  %v5043 = vmul.bf16 %v5035, 1045249613
  %v5044 = vmul.bf16 %v5036, 1045249613
  %v5045 = vmul.bf16 %v5037, 1045249613
  %v5046 = vmul.bf16 %v5038, 1045249613
  %v5047 = vmul.bf16 %v5039, 1045249613
  %v5048 = vmul.bf16 %v5040, 1045249613
  %v5049 = vmul.bf16 %v5041, 1045249613
  %v5050 = vmul.bf16 %v5042, 1045249613
  %v5051 = vmax.bf16 %v5035, %v5043
  %v5052 = vmax.bf16 %v5036, %v5044
  %v5053 = vmax.bf16 %v5037, %v5045
  %v5054 = vmax.bf16 %v5038, %v5046
  %v5055 = vmax.bf16 %v5039, %v5047
  %v5056 = vmax.bf16 %v5040, %v5048
  %v5057 = vmax.bf16 %v5041, %v5049
  %v5058 = vmax.bf16 %v5042, %v5050
  %5059 = vmax.xlane.bf16.xlu0 %v5051
  %v5060 = vpop.xlane.xlu0 %5059
  %5061 = vmax.xlane.bf16.xlu0 %v5052
  %v5062 = vpop.xlane.xlu0 %5061
  %5063 = vmax.xlane.bf16.xlu0 %v5053
  %v5064 = vpop.xlane.xlu0 %5063
  %5065 = vmax.xlane.bf16.xlu0 %v5054
  %v5066 = vpop.xlane.xlu0 %5065
  %5067 = vmax.xlane.bf16.xlu0 %v5055
  %v5068 = vpop.xlane.xlu0 %5067
  %5069 = vmax.xlane.bf16.xlu0 %v5056
  %v5070 = vpop.xlane.xlu0 %5069
  %5071 = vmax.xlane.bf16.xlu0 %v5057
  %v5072 = vpop.xlane.xlu0 %5071
  %5073 = vmax.xlane.bf16.xlu0 %v5058
  %v5074 = vpop.xlane.xlu0 %5073
  %v5075 = vsub.bf16 %v5051, %v5060
  %v5076 = vsub.bf16 %v5052, %v5062
  %v5077 = vsub.bf16 %v5053, %v5064
  %v5078 = vsub.bf16 %v5054, %v5066
  %v5079 = vsub.bf16 %v5055, %v5068
  %v5080 = vsub.bf16 %v5056, %v5070
  %v5081 = vsub.bf16 %v5057, %v5072
  %v5082 = vsub.bf16 %v5058, %v5074
  %v5084 = vmul.bf16 %v5075, 1069105081
  %v5085 = vpow.bf16.pop %v5084
  %v5087 = vmul.bf16 %v5076, 1069105081
  %v5088 = vpow.bf16.pop %v5087
  %v5090 = vmul.bf16 %v5077, 1069105081
  %v5091 = vpow.bf16.pop %v5090
  %v5093 = vmul.bf16 %v5078, 1069105081
  %v5094 = vpow.bf16.pop %v5093
  %v5096 = vmul.bf16 %v5079, 1069105081
  %v5097 = vpow.bf16.pop %v5096
  %v5099 = vmul.bf16 %v5080, 1069105081
  %v5100 = vpow.bf16.pop %v5099
  %v5102 = vmul.bf16 %v5081, 1069105081
  %v5103 = vpow.bf16.pop %v5102
  %v5105 = vmul.bf16 %v5082, 1069105081
  %v5106 = vpow.bf16.pop %v5105
  %v5107 = vunpack.c.l.bf16 %v5085
  %v5108 = vunpack.c.h.bf16 %v5085
  %v5109 = vunpack.c.l.bf16 %v5088
  %v5110 = vunpack.c.h.bf16 %v5088
  %v5111 = vunpack.c.l.bf16 %v5091
  %v5112 = vunpack.c.h.bf16 %v5091
  %v5113 = vunpack.c.l.bf16 %v5094
  %v5114 = vunpack.c.h.bf16 %v5094
  %v5115 = vunpack.c.l.bf16 %v5097
  %v5116 = vunpack.c.h.bf16 %v5097
  %v5117 = vunpack.c.l.bf16 %v5100
  %v5118 = vunpack.c.h.bf16 %v5100
  %v5119 = vunpack.c.l.bf16 %v5103
  %v5120 = vunpack.c.h.bf16 %v5103
  %v5121 = vunpack.c.l.bf16 %v5106
  %v5122 = vunpack.c.h.bf16 %v5106
  %5123 = vadd.xlane.f32.xlu0 %v5107
  %v5124 = vpop.xlane.xlu0 %5123
  %5125 = vadd.xlane.f32.xlu0 %v5108
  %v5126 = vpop.xlane.xlu0 %5125
  %5127 = vadd.xlane.f32.xlu0 %v5109
  %v5128 = vpop.xlane.xlu0 %5127
  %5129 = vadd.xlane.f32.xlu0 %v5110
  %v5130 = vpop.xlane.xlu0 %5129
  %5131 = vadd.xlane.f32.xlu0 %v5111
  %v5132 = vpop.xlane.xlu0 %5131
  %5133 = vadd.xlane.f32.xlu0 %v5112
  %v5134 = vpop.xlane.xlu0 %5133
  %5135 = vadd.xlane.f32.xlu0 %v5113
  %v5136 = vpop.xlane.xlu0 %5135
  %5137 = vadd.xlane.f32.xlu0 %v5114
  %v5138 = vpop.xlane.xlu0 %5137
  %5139 = vadd.xlane.f32.xlu0 %v5115
  %v5140 = vpop.xlane.xlu0 %5139
  %5141 = vadd.xlane.f32.xlu0 %v5116
  %v5142 = vpop.xlane.xlu0 %5141
  %5143 = vadd.xlane.f32.xlu0 %v5117
  %v5144 = vpop.xlane.xlu0 %5143
  %5145 = vadd.xlane.f32.xlu0 %v5118
  %v5146 = vpop.xlane.xlu0 %5145
  %5147 = vadd.xlane.f32.xlu0 %v5119
  %v5148 = vpop.xlane.xlu0 %5147
  %5149 = vadd.xlane.f32.xlu0 %v5120
  %v5150 = vpop.xlane.xlu0 %5149
  %5151 = vadd.xlane.f32.xlu0 %v5121
  %v5152 = vpop.xlane.xlu0 %5151
  %5153 = vadd.xlane.f32.xlu0 %v5122
  %v5154 = vpop.xlane.xlu0 %5153
  %v5155 = vrcp.pop %v5124
  %v5156 = vrcp.pop %v5126
  %v5157 = vrcp.pop %v5128
  %v5158 = vrcp.pop %v5130
  %v5159 = vrcp.pop %v5132
  %v5160 = vrcp.pop %v5134
  %v5161 = vrcp.pop %v5136
  %v5162 = vrcp.pop %v5138
  %v5163 = vrcp.pop %v5140
  %v5164 = vrcp.pop %v5142
  %v5165 = vrcp.pop %v5144
  %v5166 = vrcp.pop %v5146
  %v5167 = vrcp.pop %v5148
  %v5168 = vrcp.pop %v5150
  %v5169 = vrcp.pop %v5152
  %v5170 = vrcp.pop %v5154
  %5171 = vmatprep.subr.bf16.mxu0 0
  %5172 = vmatpush1.bf16.msra.mxu0 %v4978
  %5173 = vmatprep.subr.bf16.mxu0 0
  %5174 = vmatpush1.bf16.msra.mxu0 %v4976
  %5175 = vmatprep.subr.bf16.mxu0 0
  %5176 = vmatpush1.bf16.msra.mxu0 %v4974
  %5177 = vmatprep.subr.bf16.mxu0 0
  %5178 = vmatpush1.bf16.msra.mxu0 %v4972
  %5179 = vmatprep.subr.bf16.mxu0 0
  %5180 = vmatpush1.bf16.msra.mxu0 %v4970
  %5181 = vmatprep.subr.bf16.mxu0 0
  %5182 = vmatpush1.bf16.msra.mxu0 %v4968
  %5183 = vmatprep.subr.bf16.mxu0 0
  %5184 = vmatpush1.bf16.msra.mxu0 %v4966
  %5185 = vmatprep.subr.bf16.mxu0 0
  %5186 = vmatpush1.bf16.msra.mxu0 %v4964
  %5187 = vmatprep.subr.bf16.mxu0 0
  %5188 = vmatpush2.bf16.msra.mxu0 0
  %5189 = vmatprep.subr.bf16.mxu0 0
  %5190 = vmatpush2.bf16.msra.mxu0 0
  %5191 = vmatprep.subr.bf16.mxu0 0
  %5192 = vmatpush2.bf16.msra.mxu0 0
  %5193 = vmatprep.subr.bf16.mxu0 0
  %5194 = vmatpush2.bf16.msra.mxu0 0
  %5195 = vmatprep.subr.bf16.mxu0 0
  %5196 = vmatpush2.bf16.msra.mxu0 0
  %5197 = vmatprep.subr.bf16.mxu0 0
  %5198 = vmatpush2.bf16.msra.mxu0 0
  %5199 = vmatprep.subr.bf16.mxu0 0
  %5200 = vmatpush2.bf16.msra.mxu0 0
  %5201 = vmatprep.subr.bf16.mxu0 0
  %5202 = vmatpush2.bf16.msra.mxu0 0
  %5203 = vmatprep.mubr.bf16.mxu0 0
  %5204 = vmatmul.mubr.bf16.gmra.mxu0 %v5085
  %v5205 = vpop.f32.mrf.mxu0
  %v5206 = vadd.f32 0.0, %v5205
  %v5207 = vpop.f32.mrf.mxu0
  %v5208 = vpop.f32.mrf.mxu0
  %v5209 = vadd.f32 0.0, %v5208
  %v5210 = vpop.f32.mrf.mxu0
  %5211 = vmatprep.mubr.bf16.mxu0 0
  %5212 = vmatmul.mubr.bf16.gmra.mxu0 %v5088
  %v5213 = vpop.f32.mrf.mxu0
  %v5214 = vadd.f32 0.0, %v5213
  %v5215 = vpop.f32.mrf.mxu0
  %v5216 = vpop.f32.mrf.mxu0
  %v5217 = vadd.f32 0.0, %v5216
  %v5218 = vpop.f32.mrf.mxu0
  %5219 = vmatprep.mubr.bf16.mxu0 0
  %5220 = vmatmul.mubr.bf16.gmra.mxu0 %v5091
  %v5221 = vpop.f32.mrf.mxu0
  %v5222 = vadd.f32 0.0, %v5221
  %v5223 = vpop.f32.mrf.mxu0
  %v5224 = vpop.f32.mrf.mxu0
  %v5225 = vadd.f32 0.0, %v5224
  %v5226 = vpop.f32.mrf.mxu0
  %5227 = vmatprep.mubr.bf16.mxu0 0
  %5228 = vmatmul.mubr.bf16.gmra.mxu0 %v5094
  %v5229 = vpop.f32.mrf.mxu0
  %v5230 = vadd.f32 0.0, %v5229
  %v5231 = vpop.f32.mrf.mxu0
  %v5232 = vpop.f32.mrf.mxu0
  %v5233 = vadd.f32 0.0, %v5232
  %v5234 = vpop.f32.mrf.mxu0
  %5235 = vmatprep.mubr.bf16.mxu0 0
  %5236 = vmatmul.mubr.bf16.gmra.mxu0 %v5097
  %v5237 = vpop.f32.mrf.mxu0
  %v5238 = vadd.f32 0.0, %v5237
  %v5239 = vpop.f32.mrf.mxu0
  %v5240 = vpop.f32.mrf.mxu0
  %v5241 = vadd.f32 0.0, %v5240
  %v5242 = vpop.f32.mrf.mxu0
  %5243 = vmatprep.mubr.bf16.mxu0 0
  %5244 = vmatmul.mubr.bf16.gmra.mxu0 %v5100
  %v5245 = vpop.f32.mrf.mxu0
  %v5246 = vadd.f32 0.0, %v5245
  %v5247 = vpop.f32.mrf.mxu0
  %v5248 = vpop.f32.mrf.mxu0
  %v5249 = vadd.f32 0.0, %v5248
  %v5250 = vpop.f32.mrf.mxu0
  %5251 = vmatprep.mubr.bf16.mxu0 0
  %5252 = vmatmul.mubr.bf16.gmra.mxu0 %v5103
  %v5253 = vpop.f32.mrf.mxu0
  %v5254 = vadd.f32 0.0, %v5253
  %v5255 = vpop.f32.mrf.mxu0
  %v5256 = vpop.f32.mrf.mxu0
  %v5257 = vadd.f32 0.0, %v5256
  %v5258 = vpop.f32.mrf.mxu0
  %5259 = vmatprep.mubr.bf16.mxu0 0
  %5260 = vmatmul.mubr.bf16.gmra.mxu0 %v5106
  %v5261 = vpop.f32.mrf.mxu0
  %v5262 = vadd.f32 0.0, %v5261
  %v5263 = vpop.f32.mrf.mxu0
  %v5264 = vpop.f32.mrf.mxu0
  %v5265 = vadd.f32 0.0, %v5264
  %v5266 = vpop.f32.mrf.mxu0
  %5267 = vdwg.mxu0
  %v5268 = vmul.f32 %v5155, %v5206
  %v5269 = vmul.f32 %v5156, %v5209
  %v5270 = vmul.f32 %v5157, %v5214
  %v5271 = vmul.f32 %v5158, %v5217
  %v5272 = vmul.f32 %v5159, %v5222
  %v5273 = vmul.f32 %v5160, %v5225
  %v5274 = vmul.f32 %v5161, %v5230
  %v5275 = vmul.f32 %v5162, %v5233
  %v5276 = vmul.f32 %v5163, %v5238
  %v5277 = vmul.f32 %v5164, %v5241
  %v5278 = vmul.f32 %v5165, %v5246
  %v5279 = vmul.f32 %v5166, %v5249
  %v5280 = vmul.f32 %v5167, %v5254
  %v5281 = vmul.f32 %v5168, %v5257
  %v5282 = vmul.f32 %v5169, %v5262
  %v5283 = vmul.f32 %v5170, %v5265
  %v5284 = vadd.f32 %v5268, 0.0
  %v5285 = vadd.f32 %v5269, 0.0
  %v5286 = vadd.f32 %v5270, 0.0
  %v5287 = vadd.f32 %v5271, 0.0
  %v5288 = vadd.f32 %v5272, 0.0
  %v5289 = vadd.f32 %v5273, 0.0
  %v5290 = vadd.f32 %v5274, 0.0
  %v5291 = vadd.f32 %v5275, 0.0
  %v5292 = vadd.f32 %v5276, 0.0
  %v5293 = vadd.f32 %v5277, 0.0
  %v5294 = vadd.f32 %v5278, 0.0
  %v5295 = vadd.f32 %v5279, 0.0
  %v5296 = vadd.f32 %v5280, 0.0
  %v5297 = vadd.f32 %v5281, 0.0
  %v5298 = vadd.f32 %v5282, 0.0
  %v5299 = vadd.f32 %v5283, 0.0
  %5300 = vset.pattern.permute.xlu0 5
  %5301 = vperm.xlu0 %5300, %v4956
  %v5302 = vpop.permute.xlu0 %5301
  %5304 = vset.pattern.permute.xlu0 5
  %5305 = vperm.xlu0 %5304, %v4957
  %v5306 = vpop.permute.xlu0 %5305
  %5308 = vset.pattern.permute.xlu0 5
  %5309 = vperm.xlu0 %5308, %v4958
  %v5310 = vpop.permute.xlu0 %5309
  %5312 = vset.pattern.permute.xlu0 5
  %5313 = vperm.xlu0 %5312, %v4959
  %v5314 = vpop.permute.xlu0 %5313
  %5316 = vset.pattern.permute.xlu0 5
  %5317 = vperm.xlu0 %5316, %v4960
  %v5318 = vpop.permute.xlu0 %5317
  %5320 = vset.pattern.permute.xlu0 5
  %5321 = vperm.xlu0 %5320, %v4961
  %v5322 = vpop.permute.xlu0 %5321
  %5324 = vset.pattern.permute.xlu0 5
  %5325 = vperm.xlu0 %5324, %v4962
  %v5326 = vpop.permute.xlu0 %5325
  %5328 = vset.pattern.permute.xlu0 5
  %5329 = vperm.xlu0 %5328, %v4963
  %v5330 = vpop.permute.xlu0 %5329
  %v5332 = vshrl.u32 %v4955, 16
  %v5333 = vpack.i.b16 %v5332, %v5332
  %v5335 = vlaneseq
  %v5336 = vshrl.u32 %v5335, 7
  %v5337 = vsub.s32 0, %v5336
  %v5338 = vrot.slane %v5333, %v5337
  %v5339 = vadd.bf16 %v5302, %v5338
  %v5340 = vadd.bf16 %v5306, %v5338
  %v5341 = vadd.bf16 %v5310, %v5338
  %v5342 = vadd.bf16 %v5314, %v5338
  %v5343 = vadd.bf16 %v5318, %v5338
  %v5344 = vadd.bf16 %v5322, %v5338
  %v5345 = vadd.bf16 %v5326, %v5338
  %v5346 = vadd.bf16 %v5330, %v5338
  %v5347 = vadd.bf16 %v5339, %v1261
  %v5348 = vadd.bf16 %v5340, %v1262
  %v5349 = vadd.bf16 %v5341, %v1263
  %v5350 = vadd.bf16 %v5342, %v1264
  %v5351 = vadd.bf16 %v5343, %v1265
  %v5352 = vadd.bf16 %v5344, %v1266
  %v5353 = vadd.bf16 %v5345, %v1267
  %v5354 = vadd.bf16 %v5346, %v1268
  %v5355 = vmul.bf16 %v5347, 1045249613
  %v5356 = vmul.bf16 %v5348, 1045249613
  %v5357 = vmul.bf16 %v5349, 1045249613
  %v5358 = vmul.bf16 %v5350, 1045249613
  %v5359 = vmul.bf16 %v5351, 1045249613
  %v5360 = vmul.bf16 %v5352, 1045249613
  %v5361 = vmul.bf16 %v5353, 1045249613
  %v5362 = vmul.bf16 %v5354, 1045249613
  %v5363 = vmax.bf16 %v5347, %v5355
  %v5364 = vmax.bf16 %v5348, %v5356
  %v5365 = vmax.bf16 %v5349, %v5357
  %v5366 = vmax.bf16 %v5350, %v5358
  %v5367 = vmax.bf16 %v5351, %v5359
  %v5368 = vmax.bf16 %v5352, %v5360
  %v5369 = vmax.bf16 %v5353, %v5361
  %v5370 = vmax.bf16 %v5354, %v5362
  %5371 = vmax.xlane.bf16.xlu0 %v5363
  %v5372 = vpop.xlane.xlu0 %5371
  %5373 = vmax.xlane.bf16.xlu0 %v5364
  %v5374 = vpop.xlane.xlu0 %5373
  %5375 = vmax.xlane.bf16.xlu0 %v5365
  %v5376 = vpop.xlane.xlu0 %5375
  %5377 = vmax.xlane.bf16.xlu0 %v5366
  %v5378 = vpop.xlane.xlu0 %5377
  %5379 = vmax.xlane.bf16.xlu0 %v5367
  %v5380 = vpop.xlane.xlu0 %5379
  %5381 = vmax.xlane.bf16.xlu0 %v5368
  %v5382 = vpop.xlane.xlu0 %5381
  %5383 = vmax.xlane.bf16.xlu0 %v5369
  %v5384 = vpop.xlane.xlu0 %5383
  %5385 = vmax.xlane.bf16.xlu0 %v5370
  %v5386 = vpop.xlane.xlu0 %5385
  %v5387 = vsub.bf16 %v5363, %v5372
  %v5388 = vsub.bf16 %v5364, %v5374
  %v5389 = vsub.bf16 %v5365, %v5376
  %v5390 = vsub.bf16 %v5366, %v5378
  %v5391 = vsub.bf16 %v5367, %v5380
  %v5392 = vsub.bf16 %v5368, %v5382
  %v5393 = vsub.bf16 %v5369, %v5384
  %v5394 = vsub.bf16 %v5370, %v5386
  %v5396 = vmul.bf16 %v5387, 1069105081
  %v5397 = vpow.bf16.pop %v5396
  %v5399 = vmul.bf16 %v5388, 1069105081
  %v5400 = vpow.bf16.pop %v5399
  %v5402 = vmul.bf16 %v5389, 1069105081
  %v5403 = vpow.bf16.pop %v5402
  %v5405 = vmul.bf16 %v5390, 1069105081
  %v5406 = vpow.bf16.pop %v5405
  %v5408 = vmul.bf16 %v5391, 1069105081
  %v5409 = vpow.bf16.pop %v5408
  %v5411 = vmul.bf16 %v5392, 1069105081
  %v5412 = vpow.bf16.pop %v5411
  %v5414 = vmul.bf16 %v5393, 1069105081
  %v5415 = vpow.bf16.pop %v5414
  %v5417 = vmul.bf16 %v5394, 1069105081
  %v5418 = vpow.bf16.pop %v5417
  %v5419 = vunpack.c.l.bf16 %v5397
  %v5420 = vunpack.c.h.bf16 %v5397
  %v5421 = vunpack.c.l.bf16 %v5400
  %v5422 = vunpack.c.h.bf16 %v5400
  %v5423 = vunpack.c.l.bf16 %v5403
  %v5424 = vunpack.c.h.bf16 %v5403
  %v5425 = vunpack.c.l.bf16 %v5406
  %v5426 = vunpack.c.h.bf16 %v5406
  %v5427 = vunpack.c.l.bf16 %v5409
  %v5428 = vunpack.c.h.bf16 %v5409
  %v5429 = vunpack.c.l.bf16 %v5412
  %v5430 = vunpack.c.h.bf16 %v5412
  %v5431 = vunpack.c.l.bf16 %v5415
  %v5432 = vunpack.c.h.bf16 %v5415
  %v5433 = vunpack.c.l.bf16 %v5418
  %v5434 = vunpack.c.h.bf16 %v5418
  %5435 = vadd.xlane.f32.xlu0 %v5419
  %v5436 = vpop.xlane.xlu0 %5435
  %5437 = vadd.xlane.f32.xlu0 %v5420
  %v5438 = vpop.xlane.xlu0 %5437
  %5439 = vadd.xlane.f32.xlu0 %v5421
  %v5440 = vpop.xlane.xlu0 %5439
  %5441 = vadd.xlane.f32.xlu0 %v5422
  %v5442 = vpop.xlane.xlu0 %5441
  %5443 = vadd.xlane.f32.xlu0 %v5423
  %v5444 = vpop.xlane.xlu0 %5443
  %5445 = vadd.xlane.f32.xlu0 %v5424
  %v5446 = vpop.xlane.xlu0 %5445
  %5447 = vadd.xlane.f32.xlu0 %v5425
  %v5448 = vpop.xlane.xlu0 %5447
  %5449 = vadd.xlane.f32.xlu0 %v5426
  %v5450 = vpop.xlane.xlu0 %5449
  %5451 = vadd.xlane.f32.xlu0 %v5427
  %v5452 = vpop.xlane.xlu0 %5451
  %5453 = vadd.xlane.f32.xlu0 %v5428
  %v5454 = vpop.xlane.xlu0 %5453
  %5455 = vadd.xlane.f32.xlu0 %v5429
  %v5456 = vpop.xlane.xlu0 %5455
  %5457 = vadd.xlane.f32.xlu0 %v5430
  %v5458 = vpop.xlane.xlu0 %5457
  %5459 = vadd.xlane.f32.xlu0 %v5431
  %v5460 = vpop.xlane.xlu0 %5459
  %5461 = vadd.xlane.f32.xlu0 %v5432
  %v5462 = vpop.xlane.xlu0 %5461
  %5463 = vadd.xlane.f32.xlu0 %v5433
  %v5464 = vpop.xlane.xlu0 %5463
  %5465 = vadd.xlane.f32.xlu0 %v5434
  %v5466 = vpop.xlane.xlu0 %5465
  %v5467 = vrcp.pop %v5436
  %v5468 = vrcp.pop %v5438
  %v5469 = vrcp.pop %v5440
  %v5470 = vrcp.pop %v5442
  %v5471 = vrcp.pop %v5444
  %v5472 = vrcp.pop %v5446
  %v5473 = vrcp.pop %v5448
  %v5474 = vrcp.pop %v5450
  %v5475 = vrcp.pop %v5452
  %v5476 = vrcp.pop %v5454
  %v5477 = vrcp.pop %v5456
  %v5478 = vrcp.pop %v5458
  %v5479 = vrcp.pop %v5460
  %v5480 = vrcp.pop %v5462
  %v5481 = vrcp.pop %v5464
  %v5482 = vrcp.pop %v5466
  %5491 = vrot.lane.b32.xlu0 %v4964, 64
  %v5492 = vpop.permute.xlu0 %5491
  %5493 = vrot.lane.b32.xlu0 %v4966, 64
  %v5494 = vpop.permute.xlu0 %5493
  %5495 = vrot.lane.b32.xlu0 %v4968, 64
  %v5496 = vpop.permute.xlu0 %5495
  %5497 = vrot.lane.b32.xlu0 %v4970, 64
  %v5498 = vpop.permute.xlu0 %5497
  %5499 = vrot.lane.b32.xlu0 %v4972, 64
  %v5500 = vpop.permute.xlu0 %5499
  %5501 = vrot.lane.b32.xlu0 %v4974, 64
  %v5502 = vpop.permute.xlu0 %5501
  %5503 = vrot.lane.b32.xlu0 %v4976, 64
  %v5504 = vpop.permute.xlu0 %5503
  %5505 = vrot.lane.b32.xlu0 %v4978, 64
  %v5506 = vpop.permute.xlu0 %5505
  %5515 = vmatprep.subr.bf16.mxu0 0
  %5516 = vmatpush1.bf16.msra.mxu0 %v5506
  %5517 = vmatprep.subr.bf16.mxu0 0
  %5518 = vmatpush1.bf16.msra.mxu0 %v5504
  %5519 = vmatprep.subr.bf16.mxu0 0
  %5520 = vmatpush1.bf16.msra.mxu0 %v5502
  %5521 = vmatprep.subr.bf16.mxu0 0
  %5522 = vmatpush1.bf16.msra.mxu0 %v5500
  %5523 = vmatprep.subr.bf16.mxu0 0
  %5524 = vmatpush1.bf16.msra.mxu0 %v5498
  %5525 = vmatprep.subr.bf16.mxu0 0
  %5526 = vmatpush1.bf16.msra.mxu0 %v5496
  %5527 = vmatprep.subr.bf16.mxu0 0
  %5528 = vmatpush1.bf16.msra.mxu0 %v5494
  %5529 = vmatprep.subr.bf16.mxu0 0
  %5530 = vmatpush1.bf16.msra.mxu0 %v5492
  %5531 = vmatprep.subr.bf16.mxu0 0
  %5532 = vmatpush2.bf16.msra.mxu0 0
  %5533 = vmatprep.subr.bf16.mxu0 0
  %5534 = vmatpush2.bf16.msra.mxu0 0
  %5535 = vmatprep.subr.bf16.mxu0 0
  %5536 = vmatpush2.bf16.msra.mxu0 0
  %5537 = vmatprep.subr.bf16.mxu0 0
  %5538 = vmatpush2.bf16.msra.mxu0 0
  %5539 = vmatprep.subr.bf16.mxu0 0
  %5540 = vmatpush2.bf16.msra.mxu0 0
  %5541 = vmatprep.subr.bf16.mxu0 0
  %5542 = vmatpush2.bf16.msra.mxu0 0
  %5543 = vmatprep.subr.bf16.mxu0 0
  %5544 = vmatpush2.bf16.msra.mxu0 0
  %5545 = vmatprep.subr.bf16.mxu0 0
  %5546 = vmatpush2.bf16.msra.mxu0 0
  %5547 = vmatprep.mubr.bf16.mxu0 0
  %5548 = vmatmul.mubr.bf16.gmra.mxu0 %v5397
  %v5549 = vpop.f32.mrf.mxu0
  %v5550 = vadd.f32 0.0, %v5549
  %v5551 = vpop.f32.mrf.mxu0
  %v5552 = vpop.f32.mrf.mxu0
  %v5553 = vadd.f32 0.0, %v5552
  %v5554 = vpop.f32.mrf.mxu0
  %5555 = vmatprep.mubr.bf16.mxu0 0
  %5556 = vmatmul.mubr.bf16.gmra.mxu0 %v5400
  %v5557 = vpop.f32.mrf.mxu0
  %v5558 = vadd.f32 0.0, %v5557
  %v5559 = vpop.f32.mrf.mxu0
  %v5560 = vpop.f32.mrf.mxu0
  %v5561 = vadd.f32 0.0, %v5560
  %v5562 = vpop.f32.mrf.mxu0
  %5563 = vmatprep.mubr.bf16.mxu0 0
  %5564 = vmatmul.mubr.bf16.gmra.mxu0 %v5403
  %v5565 = vpop.f32.mrf.mxu0
  %v5566 = vadd.f32 0.0, %v5565
  %v5567 = vpop.f32.mrf.mxu0
  %v5568 = vpop.f32.mrf.mxu0
  %v5569 = vadd.f32 0.0, %v5568
  %v5570 = vpop.f32.mrf.mxu0
  %5571 = vmatprep.mubr.bf16.mxu0 0
  %5572 = vmatmul.mubr.bf16.gmra.mxu0 %v5406
  %v5573 = vpop.f32.mrf.mxu0
  %v5574 = vadd.f32 0.0, %v5573
  %v5575 = vpop.f32.mrf.mxu0
  %v5576 = vpop.f32.mrf.mxu0
  %v5577 = vadd.f32 0.0, %v5576
  %v5578 = vpop.f32.mrf.mxu0
  %5579 = vmatprep.mubr.bf16.mxu0 0
  %5580 = vmatmul.mubr.bf16.gmra.mxu0 %v5409
  %v5581 = vpop.f32.mrf.mxu0
  %v5582 = vadd.f32 0.0, %v5581
  %v5583 = vpop.f32.mrf.mxu0
  %v5584 = vpop.f32.mrf.mxu0
  %v5585 = vadd.f32 0.0, %v5584
  %v5586 = vpop.f32.mrf.mxu0
  %5587 = vmatprep.mubr.bf16.mxu0 0
  %5588 = vmatmul.mubr.bf16.gmra.mxu0 %v5412
  %v5589 = vpop.f32.mrf.mxu0
  %v5590 = vadd.f32 0.0, %v5589
  %v5591 = vpop.f32.mrf.mxu0
  %v5592 = vpop.f32.mrf.mxu0
  %v5593 = vadd.f32 0.0, %v5592
  %v5594 = vpop.f32.mrf.mxu0
  %5595 = vmatprep.mubr.bf16.mxu0 0
  %5596 = vmatmul.mubr.bf16.gmra.mxu0 %v5415
  %v5597 = vpop.f32.mrf.mxu0
  %v5598 = vadd.f32 0.0, %v5597
  %v5599 = vpop.f32.mrf.mxu0
  %v5600 = vpop.f32.mrf.mxu0
  %v5601 = vadd.f32 0.0, %v5600
  %v5602 = vpop.f32.mrf.mxu0
  %5603 = vmatprep.mubr.bf16.mxu0 0
  %5604 = vmatmul.mubr.bf16.gmra.mxu0 %v5418
  %v5605 = vpop.f32.mrf.mxu0
  %v5606 = vadd.f32 0.0, %v5605
  %v5607 = vpop.f32.mrf.mxu0
  %v5608 = vpop.f32.mrf.mxu0
  %v5609 = vadd.f32 0.0, %v5608
  %v5610 = vpop.f32.mrf.mxu0
  %5611 = vdwg.mxu0
  %v5612 = vmul.f32 %v5467, %v5550
  %v5613 = vmul.f32 %v5468, %v5553
  %v5614 = vmul.f32 %v5469, %v5558
  %v5615 = vmul.f32 %v5470, %v5561
  %v5616 = vmul.f32 %v5471, %v5566
  %v5617 = vmul.f32 %v5472, %v5569
  %v5618 = vmul.f32 %v5473, %v5574
  %v5619 = vmul.f32 %v5474, %v5577
  %v5620 = vmul.f32 %v5475, %v5582
  %v5621 = vmul.f32 %v5476, %v5585
  %v5622 = vmul.f32 %v5477, %v5590
  %v5623 = vmul.f32 %v5478, %v5593
  %v5624 = vmul.f32 %v5479, %v5598
  %v5625 = vmul.f32 %v5480, %v5601
  %v5626 = vmul.f32 %v5481, %v5606
  %v5627 = vmul.f32 %v5482, %v5609
  %v5628 = vadd.f32 %v5284, %v5612
  %v5629 = vadd.f32 %v5285, %v5613
  %v5630 = vadd.f32 %v5286, %v5614
  %v5631 = vadd.f32 %v5287, %v5615
  %v5632 = vadd.f32 %v5288, %v5616
  %v5633 = vadd.f32 %v5289, %v5617
  %v5634 = vadd.f32 %v5290, %v5618
  %v5635 = vadd.f32 %v5291, %v5619
  %v5636 = vadd.f32 %v5292, %v5620
  %v5637 = vadd.f32 %v5293, %v5621
  %v5638 = vadd.f32 %v5294, %v5622
  %v5639 = vadd.f32 %v5295, %v5623
  %v5640 = vadd.f32 %v5296, %v5624
  %v5641 = vadd.f32 %v5297, %v5625
  %v5642 = vadd.f32 %v5298, %v5626
  %v5643 = vadd.f32 %v5299, %v5627
  %5644 = vset.pattern.permute.xlu0 6
  %5645 = vperm.xlu0 %5644, %v4956
  %v5646 = vpop.permute.xlu0 %5645
  %5648 = vset.pattern.permute.xlu0 6
  %5649 = vperm.xlu0 %5648, %v4957
  %v5650 = vpop.permute.xlu0 %5649
  %5652 = vset.pattern.permute.xlu0 6
  %5653 = vperm.xlu0 %5652, %v4958
  %v5654 = vpop.permute.xlu0 %5653
  %5656 = vset.pattern.permute.xlu0 6
  %5657 = vperm.xlu0 %5656, %v4959
  %v5658 = vpop.permute.xlu0 %5657
  %5660 = vset.pattern.permute.xlu0 6
  %5661 = vperm.xlu0 %5660, %v4960
  %v5662 = vpop.permute.xlu0 %5661
  %5664 = vset.pattern.permute.xlu0 6
  %5665 = vperm.xlu0 %5664, %v4961
  %v5666 = vpop.permute.xlu0 %5665
  %5668 = vset.pattern.permute.xlu0 6
  %5669 = vperm.xlu0 %5668, %v4962
  %v5670 = vpop.permute.xlu0 %5669
  %5672 = vset.pattern.permute.xlu0 6
  %5673 = vperm.xlu0 %5672, %v4963
  %v5674 = vpop.permute.xlu0 %5673
  %v5676 = vlaneseq
  %v5677 = vshrl.u32 %v5676, 7
  %v5678 = vsub.s32 1, %v5677
  %v5679 = vrot.slane %v5021, %v5678
  %v5680 = vadd.bf16 %v5646, %v5679
  %v5681 = vadd.bf16 %v5650, %v5679
  %v5682 = vadd.bf16 %v5654, %v5679
  %v5683 = vadd.bf16 %v5658, %v5679
  %v5684 = vadd.bf16 %v5662, %v5679
  %v5685 = vadd.bf16 %v5666, %v5679
  %v5686 = vadd.bf16 %v5670, %v5679
  %v5687 = vadd.bf16 %v5674, %v5679
  %v5688 = vadd.bf16 %v5680, %v1261
  %v5689 = vadd.bf16 %v5681, %v1262
  %v5690 = vadd.bf16 %v5682, %v1263
  %v5691 = vadd.bf16 %v5683, %v1264
  %v5692 = vadd.bf16 %v5684, %v1265
  %v5693 = vadd.bf16 %v5685, %v1266
  %v5694 = vadd.bf16 %v5686, %v1267
  %v5695 = vadd.bf16 %v5687, %v1268
  %v5696 = vmul.bf16 %v5688, 1045249613
  %v5697 = vmul.bf16 %v5689, 1045249613
  %v5698 = vmul.bf16 %v5690, 1045249613
  %v5699 = vmul.bf16 %v5691, 1045249613
  %v5700 = vmul.bf16 %v5692, 1045249613
  %v5701 = vmul.bf16 %v5693, 1045249613
  %v5702 = vmul.bf16 %v5694, 1045249613
  %v5703 = vmul.bf16 %v5695, 1045249613
  %v5704 = vmax.bf16 %v5688, %v5696
  %v5705 = vmax.bf16 %v5689, %v5697
  %v5706 = vmax.bf16 %v5690, %v5698
  %v5707 = vmax.bf16 %v5691, %v5699
  %v5708 = vmax.bf16 %v5692, %v5700
  %v5709 = vmax.bf16 %v5693, %v5701
  %v5710 = vmax.bf16 %v5694, %v5702
  %v5711 = vmax.bf16 %v5695, %v5703
  %5712 = vmax.xlane.bf16.xlu0 %v5704
  %v5713 = vpop.xlane.xlu0 %5712
  %5714 = vmax.xlane.bf16.xlu0 %v5705
  %v5715 = vpop.xlane.xlu0 %5714
  %5716 = vmax.xlane.bf16.xlu0 %v5706
  %v5717 = vpop.xlane.xlu0 %5716
  %5718 = vmax.xlane.bf16.xlu0 %v5707
  %v5719 = vpop.xlane.xlu0 %5718
  %5720 = vmax.xlane.bf16.xlu0 %v5708
  %v5721 = vpop.xlane.xlu0 %5720
  %5722 = vmax.xlane.bf16.xlu0 %v5709
  %v5723 = vpop.xlane.xlu0 %5722
  %5724 = vmax.xlane.bf16.xlu0 %v5710
  %v5725 = vpop.xlane.xlu0 %5724
  %5726 = vmax.xlane.bf16.xlu0 %v5711
  %v5727 = vpop.xlane.xlu0 %5726
  %v5728 = vsub.bf16 %v5704, %v5713
  %v5729 = vsub.bf16 %v5705, %v5715
  %v5730 = vsub.bf16 %v5706, %v5717
  %v5731 = vsub.bf16 %v5707, %v5719
  %v5732 = vsub.bf16 %v5708, %v5721
  %v5733 = vsub.bf16 %v5709, %v5723
  %v5734 = vsub.bf16 %v5710, %v5725
  %v5735 = vsub.bf16 %v5711, %v5727
  %v5737 = vmul.bf16 %v5728, 1069105081
  %v5738 = vpow.bf16.pop %v5737
  %v5740 = vmul.bf16 %v5729, 1069105081
  %v5741 = vpow.bf16.pop %v5740
  %v5743 = vmul.bf16 %v5730, 1069105081
  %v5744 = vpow.bf16.pop %v5743
  %v5746 = vmul.bf16 %v5731, 1069105081
  %v5747 = vpow.bf16.pop %v5746
  %v5749 = vmul.bf16 %v5732, 1069105081
  %v5750 = vpow.bf16.pop %v5749
  %v5752 = vmul.bf16 %v5733, 1069105081
  %v5753 = vpow.bf16.pop %v5752
  %v5755 = vmul.bf16 %v5734, 1069105081
  %v5756 = vpow.bf16.pop %v5755
  %v5758 = vmul.bf16 %v5735, 1069105081
  %v5759 = vpow.bf16.pop %v5758
  %v5760 = vunpack.c.l.bf16 %v5738
  %v5761 = vunpack.c.h.bf16 %v5738
  %v5762 = vunpack.c.l.bf16 %v5741
  %v5763 = vunpack.c.h.bf16 %v5741
  %v5764 = vunpack.c.l.bf16 %v5744
  %v5765 = vunpack.c.h.bf16 %v5744
  %v5766 = vunpack.c.l.bf16 %v5747
  %v5767 = vunpack.c.h.bf16 %v5747
  %v5768 = vunpack.c.l.bf16 %v5750
  %v5769 = vunpack.c.h.bf16 %v5750
  %v5770 = vunpack.c.l.bf16 %v5753
  %v5771 = vunpack.c.h.bf16 %v5753
  %v5772 = vunpack.c.l.bf16 %v5756
  %v5773 = vunpack.c.h.bf16 %v5756
  %v5774 = vunpack.c.l.bf16 %v5759
  %v5775 = vunpack.c.h.bf16 %v5759
  %5776 = vadd.xlane.f32.xlu0 %v5760
  %v5777 = vpop.xlane.xlu0 %5776
  %5778 = vadd.xlane.f32.xlu0 %v5761
  %v5779 = vpop.xlane.xlu0 %5778
  %5780 = vadd.xlane.f32.xlu0 %v5762
  %v5781 = vpop.xlane.xlu0 %5780
  %5782 = vadd.xlane.f32.xlu0 %v5763
  %v5783 = vpop.xlane.xlu0 %5782
  %5784 = vadd.xlane.f32.xlu0 %v5764
  %v5785 = vpop.xlane.xlu0 %5784
  %5786 = vadd.xlane.f32.xlu0 %v5765
  %v5787 = vpop.xlane.xlu0 %5786
  %5788 = vadd.xlane.f32.xlu0 %v5766
  %v5789 = vpop.xlane.xlu0 %5788
  %5790 = vadd.xlane.f32.xlu0 %v5767
  %v5791 = vpop.xlane.xlu0 %5790
  %5792 = vadd.xlane.f32.xlu0 %v5768
  %v5793 = vpop.xlane.xlu0 %5792
  %5794 = vadd.xlane.f32.xlu0 %v5769
  %v5795 = vpop.xlane.xlu0 %5794
  %5796 = vadd.xlane.f32.xlu0 %v5770
  %v5797 = vpop.xlane.xlu0 %5796
  %5798 = vadd.xlane.f32.xlu0 %v5771
  %v5799 = vpop.xlane.xlu0 %5798
  %5800 = vadd.xlane.f32.xlu0 %v5772
  %v5801 = vpop.xlane.xlu0 %5800
  %5802 = vadd.xlane.f32.xlu0 %v5773
  %v5803 = vpop.xlane.xlu0 %5802
  %5804 = vadd.xlane.f32.xlu0 %v5774
  %v5805 = vpop.xlane.xlu0 %5804
  %5806 = vadd.xlane.f32.xlu0 %v5775
  %v5807 = vpop.xlane.xlu0 %5806
  %v5808 = vrcp.pop %v5777
  %v5809 = vrcp.pop %v5779
  %v5810 = vrcp.pop %v5781
  %v5811 = vrcp.pop %v5783
  %v5812 = vrcp.pop %v5785
  %v5813 = vrcp.pop %v5787
  %v5814 = vrcp.pop %v5789
  %v5815 = vrcp.pop %v5791
  %v5816 = vrcp.pop %v5793
  %v5817 = vrcp.pop %v5795
  %v5818 = vrcp.pop %v5797
  %v5819 = vrcp.pop %v5799
  %v5820 = vrcp.pop %v5801
  %v5821 = vrcp.pop %v5803
  %v5822 = vrcp.pop %v5805
  %v5823 = vrcp.pop %v5807
  %5824 = vmatprep.subr.bf16.mxu0 0
  %5825 = vmatpush1.bf16.msra.mxu0 %v4979
  %5826 = vmatprep.subr.bf16.mxu0 0
  %5827 = vmatpush1.bf16.msra.mxu0 %v4977
  %5828 = vmatprep.subr.bf16.mxu0 0
  %5829 = vmatpush1.bf16.msra.mxu0 %v4975
  %5830 = vmatprep.subr.bf16.mxu0 0
  %5831 = vmatpush1.bf16.msra.mxu0 %v4973
  %5832 = vmatprep.subr.bf16.mxu0 0
  %5833 = vmatpush1.bf16.msra.mxu0 %v4971
  %5834 = vmatprep.subr.bf16.mxu0 0
  %5835 = vmatpush1.bf16.msra.mxu0 %v4969
  %5836 = vmatprep.subr.bf16.mxu0 0
  %5837 = vmatpush1.bf16.msra.mxu0 %v4967
  %5838 = vmatprep.subr.bf16.mxu0 0
  %5839 = vmatpush1.bf16.msra.mxu0 %v4965
  %5840 = vmatprep.subr.bf16.mxu0 0
  %5841 = vmatpush2.bf16.msra.mxu0 0
  %5842 = vmatprep.subr.bf16.mxu0 0
  %5843 = vmatpush2.bf16.msra.mxu0 0
  %5844 = vmatprep.subr.bf16.mxu0 0
  %5845 = vmatpush2.bf16.msra.mxu0 0
  %5846 = vmatprep.subr.bf16.mxu0 0
  %5847 = vmatpush2.bf16.msra.mxu0 0
  %5848 = vmatprep.subr.bf16.mxu0 0
  %5849 = vmatpush2.bf16.msra.mxu0 0
  %5850 = vmatprep.subr.bf16.mxu0 0
  %5851 = vmatpush2.bf16.msra.mxu0 0
  %5852 = vmatprep.subr.bf16.mxu0 0
  %5853 = vmatpush2.bf16.msra.mxu0 0
  %5854 = vmatprep.subr.bf16.mxu0 0
  %5855 = vmatpush2.bf16.msra.mxu0 0
  %5856 = vmatprep.mubr.bf16.mxu0 0
  %5857 = vmatmul.mubr.bf16.gmra.mxu0 %v5738
  %v5858 = vpop.f32.mrf.mxu0
  %v5859 = vadd.f32 0.0, %v5858
  %v5860 = vpop.f32.mrf.mxu0
  %v5861 = vpop.f32.mrf.mxu0
  %v5862 = vadd.f32 0.0, %v5861
  %v5863 = vpop.f32.mrf.mxu0
  %5864 = vmatprep.mubr.bf16.mxu0 0
  %5865 = vmatmul.mubr.bf16.gmra.mxu0 %v5741
  %v5866 = vpop.f32.mrf.mxu0
  %v5867 = vadd.f32 0.0, %v5866
  %v5868 = vpop.f32.mrf.mxu0
  %v5869 = vpop.f32.mrf.mxu0
  %v5870 = vadd.f32 0.0, %v5869
  %v5871 = vpop.f32.mrf.mxu0
  %5872 = vmatprep.mubr.bf16.mxu0 0
  %5873 = vmatmul.mubr.bf16.gmra.mxu0 %v5744
  %v5874 = vpop.f32.mrf.mxu0
  %v5875 = vadd.f32 0.0, %v5874
  %v5876 = vpop.f32.mrf.mxu0
  %v5877 = vpop.f32.mrf.mxu0
  %v5878 = vadd.f32 0.0, %v5877
  %v5879 = vpop.f32.mrf.mxu0
  %5880 = vmatprep.mubr.bf16.mxu0 0
  %5881 = vmatmul.mubr.bf16.gmra.mxu0 %v5747
  %v5882 = vpop.f32.mrf.mxu0
  %v5883 = vadd.f32 0.0, %v5882
  %v5884 = vpop.f32.mrf.mxu0
  %v5885 = vpop.f32.mrf.mxu0
  %v5886 = vadd.f32 0.0, %v5885
  %v5887 = vpop.f32.mrf.mxu0
  %5888 = vmatprep.mubr.bf16.mxu0 0
  %5889 = vmatmul.mubr.bf16.gmra.mxu0 %v5750
  %v5890 = vpop.f32.mrf.mxu0
  %v5891 = vadd.f32 0.0, %v5890
  %v5892 = vpop.f32.mrf.mxu0
  %v5893 = vpop.f32.mrf.mxu0
  %v5894 = vadd.f32 0.0, %v5893
  %v5895 = vpop.f32.mrf.mxu0
  %5896 = vmatprep.mubr.bf16.mxu0 0
  %5897 = vmatmul.mubr.bf16.gmra.mxu0 %v5753
  %v5898 = vpop.f32.mrf.mxu0
  %v5899 = vadd.f32 0.0, %v5898
  %v5900 = vpop.f32.mrf.mxu0
  %v5901 = vpop.f32.mrf.mxu0
  %v5902 = vadd.f32 0.0, %v5901
  %v5903 = vpop.f32.mrf.mxu0
  %5904 = vmatprep.mubr.bf16.mxu0 0
  %5905 = vmatmul.mubr.bf16.gmra.mxu0 %v5756
  %v5906 = vpop.f32.mrf.mxu0
  %v5907 = vadd.f32 0.0, %v5906
  %v5908 = vpop.f32.mrf.mxu0
  %v5909 = vpop.f32.mrf.mxu0
  %v5910 = vadd.f32 0.0, %v5909
  %v5911 = vpop.f32.mrf.mxu0
  %5912 = vmatprep.mubr.bf16.mxu0 0
  %5913 = vmatmul.mubr.bf16.gmra.mxu0 %v5759
  %v5914 = vpop.f32.mrf.mxu0
  %v5915 = vadd.f32 0.0, %v5914
  %v5916 = vpop.f32.mrf.mxu0
  %v5917 = vpop.f32.mrf.mxu0
  %v5918 = vadd.f32 0.0, %v5917
  %v5919 = vpop.f32.mrf.mxu0
  %5920 = vdwg.mxu0
  %v5921 = vmul.f32 %v5808, %v5859
  %v5922 = vmul.f32 %v5809, %v5862
  %v5923 = vmul.f32 %v5810, %v5867
  %v5924 = vmul.f32 %v5811, %v5870
  %v5925 = vmul.f32 %v5812, %v5875
  %v5926 = vmul.f32 %v5813, %v5878
  %v5927 = vmul.f32 %v5814, %v5883
  %v5928 = vmul.f32 %v5815, %v5886
  %v5929 = vmul.f32 %v5816, %v5891
  %v5930 = vmul.f32 %v5817, %v5894
  %v5931 = vmul.f32 %v5818, %v5899
  %v5932 = vmul.f32 %v5819, %v5902
  %v5933 = vmul.f32 %v5820, %v5907
  %v5934 = vmul.f32 %v5821, %v5910
  %v5935 = vmul.f32 %v5822, %v5915
  %v5936 = vmul.f32 %v5823, %v5918
  %v5937 = vadd.f32 %v5628, %v5921
  %v5938 = vadd.f32 %v5629, %v5922
  %v5939 = vadd.f32 %v5630, %v5923
  %v5940 = vadd.f32 %v5631, %v5924
  %v5941 = vadd.f32 %v5632, %v5925
  %v5942 = vadd.f32 %v5633, %v5926
  %v5943 = vadd.f32 %v5634, %v5927
  %v5944 = vadd.f32 %v5635, %v5928
  %v5945 = vadd.f32 %v5636, %v5929
  %v5946 = vadd.f32 %v5637, %v5930
  %v5947 = vadd.f32 %v5638, %v5931
  %v5948 = vadd.f32 %v5639, %v5932
  %v5949 = vadd.f32 %v5640, %v5933
  %v5950 = vadd.f32 %v5641, %v5934
  %v5951 = vadd.f32 %v5642, %v5935
  %v5952 = vadd.f32 %v5643, %v5936
  %5953 = vset.pattern.permute.xlu0 7
  %5954 = vperm.xlu0 %5953, %v4956
  %v5955 = vpop.permute.xlu0 %5954
  %5957 = vset.pattern.permute.xlu0 7
  %5958 = vperm.xlu0 %5957, %v4957
  %v5959 = vpop.permute.xlu0 %5958
  %5961 = vset.pattern.permute.xlu0 7
  %5962 = vperm.xlu0 %5961, %v4958
  %v5963 = vpop.permute.xlu0 %5962
  %5965 = vset.pattern.permute.xlu0 7
  %5966 = vperm.xlu0 %5965, %v4959
  %v5967 = vpop.permute.xlu0 %5966
  %5969 = vset.pattern.permute.xlu0 7
  %5970 = vperm.xlu0 %5969, %v4960
  %v5971 = vpop.permute.xlu0 %5970
  %5973 = vset.pattern.permute.xlu0 7
  %5974 = vperm.xlu0 %5973, %v4961
  %v5975 = vpop.permute.xlu0 %5974
  %5977 = vset.pattern.permute.xlu0 7
  %5978 = vperm.xlu0 %5977, %v4962
  %v5979 = vpop.permute.xlu0 %5978
  %5981 = vset.pattern.permute.xlu0 7
  %5982 = vperm.xlu0 %5981, %v4963
  %v5983 = vpop.permute.xlu0 %5982
  %v5985 = vlaneseq
  %v5986 = vshrl.u32 %v5985, 7
  %v5987 = vsub.s32 1, %v5986
  %v5988 = vrot.slane %v5333, %v5987
  %v5989 = vadd.bf16 %v5955, %v5988
  %v5990 = vadd.bf16 %v5959, %v5988
  %v5991 = vadd.bf16 %v5963, %v5988
  %v5992 = vadd.bf16 %v5967, %v5988
  %v5993 = vadd.bf16 %v5971, %v5988
  %v5994 = vadd.bf16 %v5975, %v5988
  %v5995 = vadd.bf16 %v5979, %v5988
  %v5996 = vadd.bf16 %v5983, %v5988
  %v5997 = vadd.bf16 %v5989, %v1261
  %v5998 = vadd.bf16 %v5990, %v1262
  %v5999 = vadd.bf16 %v5991, %v1263
  %v6000 = vadd.bf16 %v5992, %v1264
  %v6001 = vadd.bf16 %v5993, %v1265
  %v6002 = vadd.bf16 %v5994, %v1266
  %v6003 = vadd.bf16 %v5995, %v1267
  %v6004 = vadd.bf16 %v5996, %v1268
  %v6005 = vmul.bf16 %v5997, 1045249613
  %v6006 = vmul.bf16 %v5998, 1045249613
  %v6007 = vmul.bf16 %v5999, 1045249613
  %v6008 = vmul.bf16 %v6000, 1045249613
  %v6009 = vmul.bf16 %v6001, 1045249613
  %v6010 = vmul.bf16 %v6002, 1045249613
  %v6011 = vmul.bf16 %v6003, 1045249613
  %v6012 = vmul.bf16 %v6004, 1045249613
  %v6013 = vmax.bf16 %v5997, %v6005
  %v6014 = vmax.bf16 %v5998, %v6006
  %v6015 = vmax.bf16 %v5999, %v6007
  %v6016 = vmax.bf16 %v6000, %v6008
  %v6017 = vmax.bf16 %v6001, %v6009
  %v6018 = vmax.bf16 %v6002, %v6010
  %v6019 = vmax.bf16 %v6003, %v6011
  %v6020 = vmax.bf16 %v6004, %v6012
  %6021 = vmax.xlane.bf16.xlu0 %v6013
  %v6022 = vpop.xlane.xlu0 %6021
  %6023 = vmax.xlane.bf16.xlu0 %v6014
  %v6024 = vpop.xlane.xlu0 %6023
  %6025 = vmax.xlane.bf16.xlu0 %v6015
  %v6026 = vpop.xlane.xlu0 %6025
  %6027 = vmax.xlane.bf16.xlu0 %v6016
  %v6028 = vpop.xlane.xlu0 %6027
  %6029 = vmax.xlane.bf16.xlu0 %v6017
  %v6030 = vpop.xlane.xlu0 %6029
  %6031 = vmax.xlane.bf16.xlu0 %v6018
  %v6032 = vpop.xlane.xlu0 %6031
  %6033 = vmax.xlane.bf16.xlu0 %v6019
  %v6034 = vpop.xlane.xlu0 %6033
  %6035 = vmax.xlane.bf16.xlu0 %v6020
  %v6036 = vpop.xlane.xlu0 %6035
  %v6037 = vsub.bf16 %v6013, %v6022
  %v6038 = vsub.bf16 %v6014, %v6024
  %v6039 = vsub.bf16 %v6015, %v6026
  %v6040 = vsub.bf16 %v6016, %v6028
  %v6041 = vsub.bf16 %v6017, %v6030
  %v6042 = vsub.bf16 %v6018, %v6032
  %v6043 = vsub.bf16 %v6019, %v6034
  %v6044 = vsub.bf16 %v6020, %v6036
  %v6046 = vmul.bf16 %v6037, 1069105081
  %v6047 = vpow.bf16.pop %v6046
  %v6049 = vmul.bf16 %v6038, 1069105081
  %v6050 = vpow.bf16.pop %v6049
  %v6052 = vmul.bf16 %v6039, 1069105081
  %v6053 = vpow.bf16.pop %v6052
  %v6055 = vmul.bf16 %v6040, 1069105081
  %v6056 = vpow.bf16.pop %v6055
  %v6058 = vmul.bf16 %v6041, 1069105081
  %v6059 = vpow.bf16.pop %v6058
  %v6061 = vmul.bf16 %v6042, 1069105081
  %v6062 = vpow.bf16.pop %v6061
  %v6064 = vmul.bf16 %v6043, 1069105081
  %v6065 = vpow.bf16.pop %v6064
  %v6067 = vmul.bf16 %v6044, 1069105081
  %v6068 = vpow.bf16.pop %v6067
  %v6069 = vunpack.c.l.bf16 %v6047
  %v6070 = vunpack.c.h.bf16 %v6047
  %v6071 = vunpack.c.l.bf16 %v6050
  %v6072 = vunpack.c.h.bf16 %v6050
  %v6073 = vunpack.c.l.bf16 %v6053
  %v6074 = vunpack.c.h.bf16 %v6053
  %v6075 = vunpack.c.l.bf16 %v6056
  %v6076 = vunpack.c.h.bf16 %v6056
  %v6077 = vunpack.c.l.bf16 %v6059
  %v6078 = vunpack.c.h.bf16 %v6059
  %v6079 = vunpack.c.l.bf16 %v6062
  %v6080 = vunpack.c.h.bf16 %v6062
  %v6081 = vunpack.c.l.bf16 %v6065
  %v6082 = vunpack.c.h.bf16 %v6065
  %v6083 = vunpack.c.l.bf16 %v6068
  %v6084 = vunpack.c.h.bf16 %v6068
  %6085 = vadd.xlane.f32.xlu0 %v6069
  %v6086 = vpop.xlane.xlu0 %6085
  %6087 = vadd.xlane.f32.xlu0 %v6070
  %v6088 = vpop.xlane.xlu0 %6087
  %6089 = vadd.xlane.f32.xlu0 %v6071
  %v6090 = vpop.xlane.xlu0 %6089
  %6091 = vadd.xlane.f32.xlu0 %v6072
  %v6092 = vpop.xlane.xlu0 %6091
  %6093 = vadd.xlane.f32.xlu0 %v6073
  %v6094 = vpop.xlane.xlu0 %6093
  %6095 = vadd.xlane.f32.xlu0 %v6074
  %v6096 = vpop.xlane.xlu0 %6095
  %6097 = vadd.xlane.f32.xlu0 %v6075
  %v6098 = vpop.xlane.xlu0 %6097
  %6099 = vadd.xlane.f32.xlu0 %v6076
  %v6100 = vpop.xlane.xlu0 %6099
  %6101 = vadd.xlane.f32.xlu0 %v6077
  %v6102 = vpop.xlane.xlu0 %6101
  %6103 = vadd.xlane.f32.xlu0 %v6078
  %v6104 = vpop.xlane.xlu0 %6103
  %6105 = vadd.xlane.f32.xlu0 %v6079
  %v6106 = vpop.xlane.xlu0 %6105
  %6107 = vadd.xlane.f32.xlu0 %v6080
  %v6108 = vpop.xlane.xlu0 %6107
  %6109 = vadd.xlane.f32.xlu0 %v6081
  %v6110 = vpop.xlane.xlu0 %6109
  %6111 = vadd.xlane.f32.xlu0 %v6082
  %v6112 = vpop.xlane.xlu0 %6111
  %6113 = vadd.xlane.f32.xlu0 %v6083
  %v6114 = vpop.xlane.xlu0 %6113
  %6115 = vadd.xlane.f32.xlu0 %v6084
  %v6116 = vpop.xlane.xlu0 %6115
  %v6117 = vrcp.pop %v6086
  %v6118 = vrcp.pop %v6088
  %v6119 = vrcp.pop %v6090
  %v6120 = vrcp.pop %v6092
  %v6121 = vrcp.pop %v6094
  %v6122 = vrcp.pop %v6096
  %v6123 = vrcp.pop %v6098
  %v6124 = vrcp.pop %v6100
  %v6125 = vrcp.pop %v6102
  %v6126 = vrcp.pop %v6104
  %v6127 = vrcp.pop %v6106
  %v6128 = vrcp.pop %v6108
  %v6129 = vrcp.pop %v6110
  %v6130 = vrcp.pop %v6112
  %v6131 = vrcp.pop %v6114
  %v6132 = vrcp.pop %v6116
  %6141 = vrot.lane.b32.xlu0 %v4965, 64
  %v6142 = vpop.permute.xlu0 %6141
  %6143 = vrot.lane.b32.xlu0 %v4967, 64
  %v6144 = vpop.permute.xlu0 %6143
  %6145 = vrot.lane.b32.xlu0 %v4969, 64
  %v6146 = vpop.permute.xlu0 %6145
  %6147 = vrot.lane.b32.xlu0 %v4971, 64
  %v6148 = vpop.permute.xlu0 %6147
  %6149 = vrot.lane.b32.xlu0 %v4973, 64
  %v6150 = vpop.permute.xlu0 %6149
  %6151 = vrot.lane.b32.xlu0 %v4975, 64
  %v6152 = vpop.permute.xlu0 %6151
  %6153 = vrot.lane.b32.xlu0 %v4977, 64
  %v6154 = vpop.permute.xlu0 %6153
  %6155 = vrot.lane.b32.xlu0 %v4979, 64
  %v6156 = vpop.permute.xlu0 %6155
  %6165 = vmatprep.subr.bf16.mxu0 0
  %6166 = vmatpush1.bf16.msra.mxu0 %v6156
  %6167 = vmatprep.subr.bf16.mxu0 0
  %6168 = vmatpush1.bf16.msra.mxu0 %v6154
  %6169 = vmatprep.subr.bf16.mxu0 0
  %6170 = vmatpush1.bf16.msra.mxu0 %v6152
  %6171 = vmatprep.subr.bf16.mxu0 0
  %6172 = vmatpush1.bf16.msra.mxu0 %v6150
  %6173 = vmatprep.subr.bf16.mxu0 0
  %6174 = vmatpush1.bf16.msra.mxu0 %v6148
  %6175 = vmatprep.subr.bf16.mxu0 0
  %6176 = vmatpush1.bf16.msra.mxu0 %v6146
  %6177 = vmatprep.subr.bf16.mxu0 0
  %6178 = vmatpush1.bf16.msra.mxu0 %v6144
  %6179 = vmatprep.subr.bf16.mxu0 0
  %6180 = vmatpush1.bf16.msra.mxu0 %v6142
  %6181 = vmatprep.subr.bf16.mxu0 0
  %6182 = vmatpush2.bf16.msra.mxu0 0
  %6183 = vmatprep.subr.bf16.mxu0 0
  %6184 = vmatpush2.bf16.msra.mxu0 0
  %6185 = vmatprep.subr.bf16.mxu0 0
  %6186 = vmatpush2.bf16.msra.mxu0 0
  %6187 = vmatprep.subr.bf16.mxu0 0
  %6188 = vmatpush2.bf16.msra.mxu0 0
  %6189 = vmatprep.subr.bf16.mxu0 0
  %6190 = vmatpush2.bf16.msra.mxu0 0
  %6191 = vmatprep.subr.bf16.mxu0 0
  %6192 = vmatpush2.bf16.msra.mxu0 0
  %6193 = vmatprep.subr.bf16.mxu0 0
  %6194 = vmatpush2.bf16.msra.mxu0 0
  %6195 = vmatprep.subr.bf16.mxu0 0
  %6196 = vmatpush2.bf16.msra.mxu0 0
  %6197 = vmatprep.mubr.bf16.mxu0 0
  %6198 = vmatmul.mubr.bf16.gmra.mxu0 %v6047
  %v6199 = vpop.f32.mrf.mxu0
  %v6200 = vadd.f32 0.0, %v6199
  %v6201 = vpop.f32.mrf.mxu0
  %v6202 = vpop.f32.mrf.mxu0
  %v6203 = vadd.f32 0.0, %v6202
  %v6204 = vpop.f32.mrf.mxu0
  %6205 = vmatprep.mubr.bf16.mxu0 0
  %6206 = vmatmul.mubr.bf16.gmra.mxu0 %v6050
  %v6207 = vpop.f32.mrf.mxu0
  %v6208 = vadd.f32 0.0, %v6207
  %v6209 = vpop.f32.mrf.mxu0
  %v6210 = vpop.f32.mrf.mxu0
  %v6211 = vadd.f32 0.0, %v6210
  %v6212 = vpop.f32.mrf.mxu0
  %6213 = vmatprep.mubr.bf16.mxu0 0
  %6214 = vmatmul.mubr.bf16.gmra.mxu0 %v6053
  %v6215 = vpop.f32.mrf.mxu0
  %v6216 = vadd.f32 0.0, %v6215
  %v6217 = vpop.f32.mrf.mxu0
  %v6218 = vpop.f32.mrf.mxu0
  %v6219 = vadd.f32 0.0, %v6218
  %v6220 = vpop.f32.mrf.mxu0
  %6221 = vmatprep.mubr.bf16.mxu0 0
  %6222 = vmatmul.mubr.bf16.gmra.mxu0 %v6056
  %v6223 = vpop.f32.mrf.mxu0
  %v6224 = vadd.f32 0.0, %v6223
  %v6225 = vpop.f32.mrf.mxu0
  %v6226 = vpop.f32.mrf.mxu0
  %v6227 = vadd.f32 0.0, %v6226
  %v6228 = vpop.f32.mrf.mxu0
  %6229 = vmatprep.mubr.bf16.mxu0 0
  %6230 = vmatmul.mubr.bf16.gmra.mxu0 %v6059
  %v6231 = vpop.f32.mrf.mxu0
  %v6232 = vadd.f32 0.0, %v6231
  %v6233 = vpop.f32.mrf.mxu0
  %v6234 = vpop.f32.mrf.mxu0
  %v6235 = vadd.f32 0.0, %v6234
  %v6236 = vpop.f32.mrf.mxu0
  %6237 = vmatprep.mubr.bf16.mxu0 0
  %6238 = vmatmul.mubr.bf16.gmra.mxu0 %v6062
  %v6239 = vpop.f32.mrf.mxu0
  %v6240 = vadd.f32 0.0, %v6239
  %v6241 = vpop.f32.mrf.mxu0
  %v6242 = vpop.f32.mrf.mxu0
  %v6243 = vadd.f32 0.0, %v6242
  %v6244 = vpop.f32.mrf.mxu0
  %6245 = vmatprep.mubr.bf16.mxu0 0
  %6246 = vmatmul.mubr.bf16.gmra.mxu0 %v6065
  %v6247 = vpop.f32.mrf.mxu0
  %v6248 = vadd.f32 0.0, %v6247
  %v6249 = vpop.f32.mrf.mxu0
  %v6250 = vpop.f32.mrf.mxu0
  %v6251 = vadd.f32 0.0, %v6250
  %v6252 = vpop.f32.mrf.mxu0
  %6253 = vmatprep.mubr.bf16.mxu0 0
  %6254 = vmatmul.mubr.bf16.gmra.mxu0 %v6068
  %v6255 = vpop.f32.mrf.mxu0
  %v6256 = vadd.f32 0.0, %v6255
  %v6257 = vpop.f32.mrf.mxu0
  %v6258 = vpop.f32.mrf.mxu0
  %v6259 = vadd.f32 0.0, %v6258
  %v6260 = vpop.f32.mrf.mxu0
  %6261 = vdwg.mxu0
  %v6262 = vmul.f32 %v6117, %v6200
  %v6263 = vmul.f32 %v6118, %v6203
  %v6264 = vmul.f32 %v6119, %v6208
  %v6265 = vmul.f32 %v6120, %v6211
  %v6266 = vmul.f32 %v6121, %v6216
  %v6267 = vmul.f32 %v6122, %v6219
  %v6268 = vmul.f32 %v6123, %v6224
  %v6269 = vmul.f32 %v6124, %v6227
  %v6270 = vmul.f32 %v6125, %v6232
  %v6271 = vmul.f32 %v6126, %v6235
  %v6272 = vmul.f32 %v6127, %v6240
  %v6273 = vmul.f32 %v6128, %v6243
  %v6274 = vmul.f32 %v6129, %v6248
  %v6275 = vmul.f32 %v6130, %v6251
  %v6276 = vmul.f32 %v6131, %v6256
  %v6277 = vmul.f32 %v6132, %v6259
  %v6278 = vadd.f32 %v5937, %v6262
  %v6279 = vadd.f32 %v5938, %v6263
  %v6280 = vadd.f32 %v5939, %v6264
  %v6281 = vadd.f32 %v5940, %v6265
  %v6282 = vadd.f32 %v5941, %v6266
  %v6283 = vadd.f32 %v5942, %v6267
  %v6284 = vadd.f32 %v5943, %v6268
  %v6285 = vadd.f32 %v5944, %v6269
  %v6286 = vadd.f32 %v5945, %v6270
  %v6287 = vadd.f32 %v5946, %v6271
  %v6288 = vadd.f32 %v5947, %v6272
  %v6289 = vadd.f32 %v5948, %v6273
  %v6290 = vadd.f32 %v5949, %v6274
  %v6291 = vadd.f32 %v5950, %v6275
  %v6292 = vadd.f32 %v5951, %v6276
  %v6293 = vadd.f32 %v5952, %v6277
  %v6294 = vmul.f32 %v6278, 0.25
  %v6295 = vmul.f32 %v6279, 0.25
  %v6296 = vmul.f32 %v6280, 0.25
  %v6297 = vmul.f32 %v6281, 0.25
  %v6298 = vmul.f32 %v6282, 0.25
  %v6299 = vmul.f32 %v6283, 0.25
  %v6300 = vmul.f32 %v6284, 0.25
  %v6301 = vmul.f32 %v6285, 0.25
  %v6302 = vmul.f32 %v6286, 0.25
  %v6303 = vmul.f32 %v6287, 0.25
  %v6304 = vmul.f32 %v6288, 0.25
  %v6305 = vmul.f32 %v6289, 0.25
  %v6306 = vmul.f32 %v6290, 0.25
  %v6307 = vmul.f32 %v6291, 0.25
  %v6308 = vmul.f32 %v6292, 0.25
  %v6309 = vmul.f32 %v6293, 0.25
  %v6311 = vlaneseq
  %v6312 = vshrl.u32 %v6311, 7
  %v6313 = vsub.s32 0, %v6312
  %v6314 = vrot.slane %v4592, %v6313
  %v6316 = vadd.f32 %v6294, %v6314
  %v6317 = vadd.f32 %v6295, %v6314
  %v6318 = vadd.f32 %v6296, %v6314
  %v6319 = vadd.f32 %v6297, %v6314
  %v6320 = vadd.f32 %v6298, %v6314
  %v6321 = vadd.f32 %v6299, %v6314
  %v6322 = vadd.f32 %v6300, %v6314
  %v6323 = vadd.f32 %v6301, %v6314
  %v6324 = vadd.f32 %v6302, %v6314
  %v6325 = vadd.f32 %v6303, %v6314
  %v6326 = vadd.f32 %v6304, %v6314
  %v6327 = vadd.f32 %v6305, %v6314
  %v6328 = vadd.f32 %v6306, %v6314
  %v6329 = vadd.f32 %v6307, %v6314
  %v6330 = vadd.f32 %v6308, %v6314
  %v6331 = vadd.f32 %v6309, %v6314
  %vm6332 = vcmp.gt.f32.partialorder %v6316, 0.0
  %vm6333 = vcmp.gt.f32.partialorder %v6317, 0.0
  %vm6334 = vcmp.gt.f32.partialorder %v6318, 0.0
  %vm6335 = vcmp.gt.f32.partialorder %v6319, 0.0
  %vm6336 = vcmp.gt.f32.partialorder %v6320, 0.0
  %vm6337 = vcmp.gt.f32.partialorder %v6321, 0.0
  %vm6338 = vcmp.gt.f32.partialorder %v6322, 0.0
  %vm6339 = vcmp.gt.f32.partialorder %v6323, 0.0
  %vm6340 = vcmp.gt.f32.partialorder %v6324, 0.0
  %vm6341 = vcmp.gt.f32.partialorder %v6325, 0.0
  %vm6342 = vcmp.gt.f32.partialorder %v6326, 0.0
  %vm6343 = vcmp.gt.f32.partialorder %v6327, 0.0
  %vm6344 = vcmp.gt.f32.partialorder %v6328, 0.0
  %vm6345 = vcmp.gt.f32.partialorder %v6329, 0.0
  %vm6346 = vcmp.gt.f32.partialorder %v6330, 0.0
  %vm6347 = vcmp.gt.f32.partialorder %v6331, 0.0
  %v6348 = vmin.f32 %v6316, 0.0
  %v6349 = vmin.f32 %v6317, 0.0
  %v6350 = vmin.f32 %v6318, 0.0
  %v6351 = vmin.f32 %v6319, 0.0
  %v6352 = vmin.f32 %v6320, 0.0
  %v6353 = vmin.f32 %v6321, 0.0
  %v6354 = vmin.f32 %v6322, 0.0
  %v6355 = vmin.f32 %v6323, 0.0
  %v6356 = vmin.f32 %v6324, 0.0
  %v6357 = vmin.f32 %v6325, 0.0
  %v6358 = vmin.f32 %v6326, 0.0
  %v6359 = vmin.f32 %v6327, 0.0
  %v6360 = vmin.f32 %v6328, 0.0
  %v6361 = vmin.f32 %v6329, 0.0
  %v6362 = vmin.f32 %v6330, 0.0
  %v6363 = vmin.f32 %v6331, 0.0
  %v6364 = vmul.f32 %v6348, 1.442695
  %v6365 = vpow.pop %v6364
  %v6366 = vmul.f32 %v6349, 1.442695
  %v6367 = vpow.pop %v6366
  %v6368 = vmul.f32 %v6350, 1.442695
  %v6369 = vpow.pop %v6368
  %v6370 = vmul.f32 %v6351, 1.442695
  %v6371 = vpow.pop %v6370
  %v6372 = vmul.f32 %v6352, 1.442695
  %v6373 = vpow.pop %v6372
  %v6374 = vmul.f32 %v6353, 1.442695
  %v6375 = vpow.pop %v6374
  %v6376 = vmul.f32 %v6354, 1.442695
  %v6377 = vpow.pop %v6376
  %v6378 = vmul.f32 %v6355, 1.442695
  %v6379 = vpow.pop %v6378
  %v6380 = vmul.f32 %v6356, 1.442695
  %v6381 = vpow.pop %v6380
  %v6382 = vmul.f32 %v6357, 1.442695
  %v6383 = vpow.pop %v6382
  %v6384 = vmul.f32 %v6358, 1.442695
  %v6385 = vpow.pop %v6384
  %v6386 = vmul.f32 %v6359, 1.442695
  %v6387 = vpow.pop %v6386
  %v6388 = vmul.f32 %v6360, 1.442695
  %v6389 = vpow.pop %v6388
  %v6390 = vmul.f32 %v6361, 1.442695
  %v6391 = vpow.pop %v6390
  %v6392 = vmul.f32 %v6362, 1.442695
  %v6393 = vpow.pop %v6392
  %v6394 = vmul.f32 %v6363, 1.442695
  %v6395 = vpow.pop %v6394
  %v6396 = vsub.f32 %v6365, 1.0
  %v6397 = vsub.f32 %v6367, 1.0
  %v6398 = vsub.f32 %v6369, 1.0
  %v6399 = vsub.f32 %v6371, 1.0
  %v6400 = vsub.f32 %v6373, 1.0
  %v6401 = vsub.f32 %v6375, 1.0
  %v6402 = vsub.f32 %v6377, 1.0
  %v6403 = vsub.f32 %v6379, 1.0
  %v6404 = vsub.f32 %v6381, 1.0
  %v6405 = vsub.f32 %v6383, 1.0
  %v6406 = vsub.f32 %v6385, 1.0
  %v6407 = vsub.f32 %v6387, 1.0
  %v6408 = vsub.f32 %v6389, 1.0
  %v6409 = vsub.f32 %v6391, 1.0
  %v6410 = vsub.f32 %v6393, 1.0
  %v6411 = vsub.f32 %v6395, 1.0
  %v6412 = vsel %vm6332, %v6316, %v6396
  %v6413 = vsel %vm6333, %v6317, %v6397
  %v6414 = vsel %vm6334, %v6318, %v6398
  %v6415 = vsel %vm6335, %v6319, %v6399
  %v6416 = vsel %vm6336, %v6320, %v6400
  %v6417 = vsel %vm6337, %v6321, %v6401
  %v6418 = vsel %vm6338, %v6322, %v6402
  %v6419 = vsel %vm6339, %v6323, %v6403
  %v6420 = vsel %vm6340, %v6324, %v6404
  %v6421 = vsel %vm6341, %v6325, %v6405
  %v6422 = vsel %vm6342, %v6326, %v6406
  %v6423 = vsel %vm6343, %v6327, %v6407
  %v6424 = vsel %vm6344, %v6328, %v6408
  %v6425 = vsel %vm6345, %v6329, %v6409
  %v6426 = vsel %vm6346, %v6330, %v6410
  %v6427 = vsel %vm6347, %v6331, %v6411
  %s6428 = scalar_lea.vmem %s6, 192
  %v6429 = vld [vmem:[%s6428] sm:$0xff]
  %v6430 = vld [vmem:[%s6428 + $0x8] sm:$0xff]
  %v6431 = vld [vmem:[%s6428 + $0x10] sm:$0xff]
  %v6432 = vld [vmem:[%s6428 + $0x18] sm:$0xff]
  %v6433 = vld [vmem:[%s6428 + $0x20] sm:$0xff]
  %v6434 = vld [vmem:[%s6428 + $0x28] sm:$0xff]
  %v6435 = vld [vmem:[%s6428 + $0x30] sm:$0xff]
  %v6436 = vld [vmem:[%s6428 + $0x38] sm:$0xff]
  %s6437 = scalar_lea.vmem %s7, 768
  %v6438 = vld [vmem:[%s6437] sm:$0xff]
  %v6439 = vld [vmem:[%s6437 + $0x8] sm:$0xff]
  %v6440 = vld [vmem:[%s6437 + $0x10] sm:$0xff]
  %v6441 = vld [vmem:[%s6437 + $0x18] sm:$0xff]
  %v6442 = vld [vmem:[%s6437 + $0x20] sm:$0xff]
  %v6443 = vld [vmem:[%s6437 + $0x28] sm:$0xff]
  %v6444 = vld [vmem:[%s6437 + $0x30] sm:$0xff]
  %v6445 = vld [vmem:[%s6437 + $0x38] sm:$0xff]
  %v6446 = vld [vmem:[%s6437 + $0x40] sm:$0xff]
  %v6447 = vld [vmem:[%s6437 + $0x48] sm:$0xff]
  %v6448 = vld [vmem:[%s6437 + $0x50] sm:$0xff]
  %v6449 = vld [vmem:[%s6437 + $0x58] sm:$0xff]
  %v6450 = vld [vmem:[%s6437 + $0x60] sm:$0xff]
  %v6451 = vld [vmem:[%s6437 + $0x68] sm:$0xff]
  %v6452 = vld [vmem:[%s6437 + $0x70] sm:$0xff]
  %v6453 = vld [vmem:[%s6437 + $0x78] sm:$0xff]
  %v6454 = vld [vmem:[%s6437 + $0x80] sm:$0xff]
  %v6455 = vld [vmem:[%s6437 + $0x88] sm:$0xff]
  %v6456 = vld [vmem:[%s6437 + $0x90] sm:$0xff]
  %v6457 = vld [vmem:[%s6437 + $0x98] sm:$0xff]
  %v6458 = vld [vmem:[%s6437 + $0xa0] sm:$0xff]
  %v6459 = vld [vmem:[%s6437 + $0xa8] sm:$0xff]
  %v6460 = vld [vmem:[%s6437 + $0xb0] sm:$0xff]
  %v6461 = vld [vmem:[%s6437 + $0xb8] sm:$0xff]
  %v6462 = vld [vmem:[%s6437 + $0xc0] sm:$0xff]
  %v6463 = vld [vmem:[%s6437 + $0xc8] sm:$0xff]
  %v6464 = vld [vmem:[%s6437 + $0xd0] sm:$0xff]
  %v6465 = vld [vmem:[%s6437 + $0xd8] sm:$0xff]
  %v6466 = vld [vmem:[%s6437 + $0xe0] sm:$0xff]
  %v6467 = vld [vmem:[%s6437 + $0xe8] sm:$0xff]
  %v6468 = vld [vmem:[%s6437 + $0xf0] sm:$0xff]
  %v6469 = vld [vmem:[%s6437 + $0xf8] sm:$0xff]
  %s6470 = scalar_lea.vmem %s8, 3
  %v6471 = vld [vmem:[%s6470] sm:$0x1]
  %v6472 = vpack.c.bf16 %v6413, %v6412
  %v6473 = vpack.c.bf16 %v6415, %v6414
  %v6474 = vpack.c.bf16 %v6417, %v6416
  %v6475 = vpack.c.bf16 %v6419, %v6418
  %v6476 = vpack.c.bf16 %v6421, %v6420
  %v6477 = vpack.c.bf16 %v6423, %v6422
  %v6478 = vpack.c.bf16 %v6425, %v6424
  %v6479 = vpack.c.bf16 %v6427, %v6426
  %v6488 = vunpack.c.l.b16 %v6429
  %v6489 = vunpack.c.h.b16 %v6429
  %v6490 = vunpack.c.l.b16 %v6430
  %v6491 = vunpack.c.h.b16 %v6430
  %v6492 = vunpack.c.l.b16 %v6431
  %v6493 = vunpack.c.h.b16 %v6431
  %v6494 = vunpack.c.l.b16 %v6432
  %v6495 = vunpack.c.h.b16 %v6432
  %v6496 = vunpack.c.l.b16 %v6433
  %v6497 = vunpack.c.h.b16 %v6433
  %v6498 = vunpack.c.l.b16 %v6434
  %v6499 = vunpack.c.h.b16 %v6434
  %v6500 = vunpack.c.l.b16 %v6435
  %v6501 = vunpack.c.h.b16 %v6435
  %v6502 = vunpack.c.l.b16 %v6436
  %v6503 = vunpack.c.h.b16 %v6436
  %v6504 = vpack.c.b16 %v6490, %v6488
  %v6505 = vpack.c.b16 %v6491, %v6489
  %v6506 = vpack.c.b16 %v6494, %v6492
  %v6507 = vpack.c.b16 %v6495, %v6493
  %v6508 = vpack.c.b16 %v6498, %v6496
  %v6509 = vpack.c.b16 %v6499, %v6497
  %v6510 = vpack.c.b16 %v6502, %v6500
  %v6511 = vpack.c.b16 %v6503, %v6501
  %v6521 = vsel %vm436, %v6472, 0
  %v6524 = vsel %vm436, %v6473, 0
  %v6527 = vsel %vm436, %v6474, 0
  %v6530 = vsel %vm436, %v6475, 0
  %v6533 = vsel %vm436, %v6476, 0
  %v6536 = vsel %vm436, %v6477, 0
  %v6539 = vsel %vm436, %v6478, 0
  %v6542 = vsel %vm436, %v6479, 0
  %6544 = vmatprep.subr.bf16.mxu0 0
  %6545 = vmatpush1.bf16.msra.mxu0 0
  %6546 = vmatprep.subr.bf16.mxu0 0
  %6547 = vmatpush1.bf16.msra.mxu0 0
  %6548 = vmatprep.subr.bf16.mxu0 0
  %6549 = vmatpush1.bf16.msra.mxu0 0
  %6550 = vmatprep.subr.bf16.mxu0 0
  %6551 = vmatpush1.bf16.msra.mxu0 0
  %6552 = vmatprep.subr.bf16.mxu0 %v6511
  %6553 = vmatpush1.bf16.msra.mxu0 %v6510
  %6554 = vmatprep.subr.bf16.mxu0 %v6509
  %6555 = vmatpush1.bf16.msra.mxu0 %v6508
  %6556 = vmatprep.subr.bf16.mxu0 %v6507
  %6557 = vmatpush1.bf16.msra.mxu0 %v6506
  %6558 = vmatprep.subr.bf16.mxu0 %v6505
  %6559 = vmatpush1.bf16.msra.mxu0 %v6504
  %6560 = vmatprep.subr.bf16.mxu0 0
  %6561 = vmatpush2.bf16.msra.mxu0 0
  %6562 = vmatprep.subr.bf16.mxu0 0
  %6563 = vmatpush2.bf16.msra.mxu0 0
  %6564 = vmatprep.subr.bf16.mxu0 0
  %6565 = vmatpush2.bf16.msra.mxu0 0
  %6566 = vmatprep.subr.bf16.mxu0 0
  %6567 = vmatpush2.bf16.msra.mxu0 0
  %6568 = vmatprep.subr.bf16.mxu0 0
  %6569 = vmatpush2.bf16.msra.mxu0 0
  %6570 = vmatprep.subr.bf16.mxu0 0
  %6571 = vmatpush2.bf16.msra.mxu0 0
  %6572 = vmatprep.subr.bf16.mxu0 0
  %6573 = vmatpush2.bf16.msra.mxu0 0
  %6574 = vmatprep.subr.bf16.mxu0 0
  %6575 = vmatpush2.bf16.msra.mxu0 0
  %6576 = vmatprep.mubr.bf16.mxu0 0
  %6577 = vmatmul.mubr.bf16.gmra.mxu0 %v6521
  %v6578 = vpop.f32.mrf.mxu0
  %v6579 = vadd.f32 0.0, %v6578
  %v6580 = vpop.f32.mrf.mxu0
  %v6581 = vadd.f32 0.0, %v6580
  %v6582 = vpop.f32.mrf.mxu0
  %v6583 = vadd.f32 0.0, %v6582
  %v6584 = vpop.f32.mrf.mxu0
  %v6585 = vadd.f32 0.0, %v6584
  %6586 = vmatprep.mubr.bf16.mxu0 0
  %6587 = vmatmul.mubr.bf16.gmra.mxu0 %v6524
  %v6588 = vpop.f32.mrf.mxu0
  %v6589 = vadd.f32 0.0, %v6588
  %v6590 = vpop.f32.mrf.mxu0
  %v6591 = vadd.f32 0.0, %v6590
  %v6592 = vpop.f32.mrf.mxu0
  %v6593 = vadd.f32 0.0, %v6592
  %v6594 = vpop.f32.mrf.mxu0
  %v6595 = vadd.f32 0.0, %v6594
  %6596 = vmatprep.mubr.bf16.mxu0 0
  %6597 = vmatmul.mubr.bf16.gmra.mxu0 %v6527
  %v6598 = vpop.f32.mrf.mxu0
  %v6599 = vadd.f32 0.0, %v6598
  %v6600 = vpop.f32.mrf.mxu0
  %v6601 = vadd.f32 0.0, %v6600
  %v6602 = vpop.f32.mrf.mxu0
  %v6603 = vadd.f32 0.0, %v6602
  %v6604 = vpop.f32.mrf.mxu0
  %v6605 = vadd.f32 0.0, %v6604
  %6606 = vmatprep.mubr.bf16.mxu0 0
  %6607 = vmatmul.mubr.bf16.gmra.mxu0 %v6530
  %v6608 = vpop.f32.mrf.mxu0
  %v6609 = vadd.f32 0.0, %v6608
  %v6610 = vpop.f32.mrf.mxu0
  %v6611 = vadd.f32 0.0, %v6610
  %v6612 = vpop.f32.mrf.mxu0
  %v6613 = vadd.f32 0.0, %v6612
  %v6614 = vpop.f32.mrf.mxu0
  %v6615 = vadd.f32 0.0, %v6614
  %6616 = vmatprep.mubr.bf16.mxu0 0
  %6617 = vmatmul.mubr.bf16.gmra.mxu0 %v6533
  %v6618 = vpop.f32.mrf.mxu0
  %v6619 = vadd.f32 0.0, %v6618
  %v6620 = vpop.f32.mrf.mxu0
  %v6621 = vadd.f32 0.0, %v6620
  %v6622 = vpop.f32.mrf.mxu0
  %v6623 = vadd.f32 0.0, %v6622
  %v6624 = vpop.f32.mrf.mxu0
  %v6625 = vadd.f32 0.0, %v6624
  %6626 = vmatprep.mubr.bf16.mxu0 0
  %6627 = vmatmul.mubr.bf16.gmra.mxu0 %v6536
  %v6628 = vpop.f32.mrf.mxu0
  %v6629 = vadd.f32 0.0, %v6628
  %v6630 = vpop.f32.mrf.mxu0
  %v6631 = vadd.f32 0.0, %v6630
  %v6632 = vpop.f32.mrf.mxu0
  %v6633 = vadd.f32 0.0, %v6632
  %v6634 = vpop.f32.mrf.mxu0
  %v6635 = vadd.f32 0.0, %v6634
  %6636 = vmatprep.mubr.bf16.mxu0 0
  %6637 = vmatmul.mubr.bf16.gmra.mxu0 %v6539
  %v6638 = vpop.f32.mrf.mxu0
  %v6639 = vadd.f32 0.0, %v6638
  %v6640 = vpop.f32.mrf.mxu0
  %v6641 = vadd.f32 0.0, %v6640
  %v6642 = vpop.f32.mrf.mxu0
  %v6643 = vadd.f32 0.0, %v6642
  %v6644 = vpop.f32.mrf.mxu0
  %v6645 = vadd.f32 0.0, %v6644
  %6646 = vmatprep.mubr.bf16.mxu0 0
  %6647 = vmatmul.mubr.bf16.gmra.mxu0 %v6542
  %v6648 = vpop.f32.mrf.mxu0
  %v6649 = vadd.f32 0.0, %v6648
  %v6650 = vpop.f32.mrf.mxu0
  %v6651 = vadd.f32 0.0, %v6650
  %v6652 = vpop.f32.mrf.mxu0
  %v6653 = vadd.f32 0.0, %v6652
  %v6654 = vpop.f32.mrf.mxu0
  %v6655 = vadd.f32 0.0, %v6654
  %6656 = vdwg.mxu0
  %6657 = vmatprep.subr.mxu0 0.0
  %6658 = vmatpush1.msra.mxu0 %v6453
  %6659 = vmatprep.subr.mxu0 0.0
  %6660 = vmatpush1.msra.mxu0 %v6452
  %6661 = vmatprep.subr.mxu0 0.0
  %6662 = vmatpush1.msra.mxu0 %v6451
  %6663 = vmatprep.subr.mxu0 0.0
  %6664 = vmatpush1.msra.mxu0 %v6450
  %6665 = vmatprep.subr.mxu0 0.0
  %6666 = vmatpush1.msra.mxu0 %v6449
  %6667 = vmatprep.subr.mxu0 0.0
  %6668 = vmatpush1.msra.mxu0 %v6448
  %6669 = vmatprep.subr.mxu0 0.0
  %6670 = vmatpush1.msra.mxu0 %v6447
  %6671 = vmatprep.subr.mxu0 0.0
  %6672 = vmatpush1.msra.mxu0 %v6446
  %6673 = vmatprep.subr.mxu0 0.0
  %6674 = vmatpush1.msra.mxu0 %v6445
  %6675 = vmatprep.subr.mxu0 0.0
  %6676 = vmatpush1.msra.mxu0 %v6444
  %6677 = vmatprep.subr.mxu0 0.0
  %6678 = vmatpush1.msra.mxu0 %v6443
  %6679 = vmatprep.subr.mxu0 0.0
  %6680 = vmatpush1.msra.mxu0 %v6442
  %6681 = vmatprep.subr.mxu0 0.0
  %6682 = vmatpush1.msra.mxu0 %v6441
  %6683 = vmatprep.subr.mxu0 0.0
  %6684 = vmatpush1.msra.mxu0 %v6440
  %6685 = vmatprep.subr.mxu0 0.0
  %6686 = vmatpush1.msra.mxu0 %v6439
  %6687 = vmatprep.subr.mxu0 0.0
  %6688 = vmatpush1.msra.mxu0 %v6438
  %6689 = vmatprep.subr.mxu0 0.0
  %6690 = vmatpush2.msra.mxu0 %v6469
  %6691 = vmatprep.subr.mxu0 0.0
  %6692 = vmatpush2.msra.mxu0 %v6468
  %6693 = vmatprep.subr.mxu0 0.0
  %6694 = vmatpush2.msra.mxu0 %v6467
  %6695 = vmatprep.subr.mxu0 0.0
  %6696 = vmatpush2.msra.mxu0 %v6466
  %6697 = vmatprep.subr.mxu0 0.0
  %6698 = vmatpush2.msra.mxu0 %v6465
  %6699 = vmatprep.subr.mxu0 0.0
  %6700 = vmatpush2.msra.mxu0 %v6464
  %6701 = vmatprep.subr.mxu0 0.0
  %6702 = vmatpush2.msra.mxu0 %v6463
  %6703 = vmatprep.subr.mxu0 0.0
  %6704 = vmatpush2.msra.mxu0 %v6462
  %6705 = vmatprep.subr.mxu0 0.0
  %6706 = vmatpush2.msra.mxu0 %v6461
  %6707 = vmatprep.subr.mxu0 0.0
  %6708 = vmatpush2.msra.mxu0 %v6460
  %6709 = vmatprep.subr.mxu0 0.0
  %6710 = vmatpush2.msra.mxu0 %v6459
  %6711 = vmatprep.subr.mxu0 0.0
  %6712 = vmatpush2.msra.mxu0 %v6458
  %6713 = vmatprep.subr.mxu0 0.0
  %6714 = vmatpush2.msra.mxu0 %v6457
  %6715 = vmatprep.subr.mxu0 0.0
  %6716 = vmatpush2.msra.mxu0 %v6456
  %6717 = vmatprep.subr.mxu0 0.0
  %6718 = vmatpush2.msra.mxu0 %v6455
  %6719 = vmatprep.subr.mxu0 0.0
  %6720 = vmatpush2.msra.mxu0 %v6454
  %6721 = vmatprep.mubr.f32.mxu0 %v6581
  %6722 = vmatmul.mubr.f32.gmra.mxu0 %v6579
  %v6723 = vpop.f32.mrf.mxu0
  %v6724 = vadd.f32 0.0, %v6723
  %v6725 = vpop.f32.mrf.mxu0
  %6726 = vmatprep.mubr.f32.mxu0 %v6585
  %6727 = vmatmul.mubr.f32.gmra.mxu0 %v6583
  %v6728 = vpop.f32.mrf.mxu0
  %v6729 = vadd.f32 0.0, %v6728
  %v6730 = vpop.f32.mrf.mxu0
  %6731 = vmatprep.mubr.f32.mxu0 %v6591
  %6732 = vmatmul.mubr.f32.gmra.mxu0 %v6589
  %v6733 = vpop.f32.mrf.mxu0
  %v6734 = vadd.f32 0.0, %v6733
  %v6735 = vpop.f32.mrf.mxu0
  %6736 = vmatprep.mubr.f32.mxu0 %v6595
  %6737 = vmatmul.mubr.f32.gmra.mxu0 %v6593
  %v6738 = vpop.f32.mrf.mxu0
  %v6739 = vadd.f32 0.0, %v6738
  %v6740 = vpop.f32.mrf.mxu0
  %6741 = vmatprep.mubr.f32.mxu0 %v6601
  %6742 = vmatmul.mubr.f32.gmra.mxu0 %v6599
  %v6743 = vpop.f32.mrf.mxu0
  %v6744 = vadd.f32 0.0, %v6743
  %v6745 = vpop.f32.mrf.mxu0
  %6746 = vmatprep.mubr.f32.mxu0 %v6605
  %6747 = vmatmul.mubr.f32.gmra.mxu0 %v6603
  %v6748 = vpop.f32.mrf.mxu0
  %v6749 = vadd.f32 0.0, %v6748
  %v6750 = vpop.f32.mrf.mxu0
  %6751 = vmatprep.mubr.f32.mxu0 %v6611
  %6752 = vmatmul.mubr.f32.gmra.mxu0 %v6609
  %v6753 = vpop.f32.mrf.mxu0
  %v6754 = vadd.f32 0.0, %v6753
  %v6755 = vpop.f32.mrf.mxu0
  %6756 = vmatprep.mubr.f32.mxu0 %v6615
  %6757 = vmatmul.mubr.f32.gmra.mxu0 %v6613
  %v6758 = vpop.f32.mrf.mxu0
  %v6759 = vadd.f32 0.0, %v6758
  %v6760 = vpop.f32.mrf.mxu0
  %6761 = vmatprep.mubr.f32.mxu0 %v6621
  %6762 = vmatmul.mubr.f32.gmra.mxu0 %v6619
  %v6763 = vpop.f32.mrf.mxu0
  %v6764 = vadd.f32 0.0, %v6763
  %v6765 = vpop.f32.mrf.mxu0
  %6766 = vmatprep.mubr.f32.mxu0 %v6625
  %6767 = vmatmul.mubr.f32.gmra.mxu0 %v6623
  %v6768 = vpop.f32.mrf.mxu0
  %v6769 = vadd.f32 0.0, %v6768
  %v6770 = vpop.f32.mrf.mxu0
  %6771 = vmatprep.mubr.f32.mxu0 %v6631
  %6772 = vmatmul.mubr.f32.gmra.mxu0 %v6629
  %v6773 = vpop.f32.mrf.mxu0
  %v6774 = vadd.f32 0.0, %v6773
  %v6775 = vpop.f32.mrf.mxu0
  %6776 = vmatprep.mubr.f32.mxu0 %v6635
  %6777 = vmatmul.mubr.f32.gmra.mxu0 %v6633
  %v6778 = vpop.f32.mrf.mxu0
  %v6779 = vadd.f32 0.0, %v6778
  %v6780 = vpop.f32.mrf.mxu0
  %6781 = vmatprep.mubr.f32.mxu0 %v6641
  %6782 = vmatmul.mubr.f32.gmra.mxu0 %v6639
  %v6783 = vpop.f32.mrf.mxu0
  %v6784 = vadd.f32 0.0, %v6783
  %v6785 = vpop.f32.mrf.mxu0
  %6786 = vmatprep.mubr.f32.mxu0 %v6645
  %6787 = vmatmul.mubr.f32.gmra.mxu0 %v6643
  %v6788 = vpop.f32.mrf.mxu0
  %v6789 = vadd.f32 0.0, %v6788
  %v6790 = vpop.f32.mrf.mxu0
  %6791 = vmatprep.mubr.f32.mxu0 %v6651
  %6792 = vmatmul.mubr.f32.gmra.mxu0 %v6649
  %v6793 = vpop.f32.mrf.mxu0
  %v6794 = vadd.f32 0.0, %v6793
  %v6795 = vpop.f32.mrf.mxu0
  %6796 = vmatprep.mubr.f32.mxu0 %v6655
  %6797 = vmatmul.mubr.f32.gmra.mxu0 %v6653
  %v6798 = vpop.f32.mrf.mxu0
  %v6799 = vadd.f32 0.0, %v6798
  %v6800 = vpop.f32.mrf.mxu0
  %6801 = vdwg.mxu0
  %6802 = vxpose.xlu0.b32.start [1/16] %v6724, 128
  %6803 = vxpose.xlu0.b32.cont [2/16] %v6729, 128
  %6804 = vxpose.xlu0.b32.cont [3/16] %v6734, 128
  %6805 = vxpose.xlu0.b32.cont [4/16] %v6739, 128
  %6806 = vxpose.xlu0.b32.cont [5/16] %v6744, 128
  %6807 = vxpose.xlu0.b32.cont [6/16] %v6749, 128
  %6808 = vxpose.xlu0.b32.cont [7/16] %v6754, 128
  %6809 = vxpose.xlu0.b32.cont [8/16] %v6759, 128
  %6810 = vxpose.xlu0.b32.cont [9/16] %v6764, 128
  %6811 = vxpose.xlu0.b32.cont [10/16] %v6769, 128
  %6812 = vxpose.xlu0.b32.cont [11/16] %v6774, 128
  %6813 = vxpose.xlu0.b32.cont [12/16] %v6779, 128
  %6814 = vxpose.xlu0.b32.cont [13/16] %v6784, 128
  %6815 = vxpose.xlu0.b32.cont [14/16] %v6789, 128
  %6816 = vxpose.xlu0.b32.cont [15/16] %v6794, 128
  %6817 = vxpose.xlu0.b32.end [16/16] %v6799, 128
  %v6818 = vpop.trf.xlu0
  %v6819 = vpop.trf.xlu0
  %v6820 = vpop.trf.xlu0
  %v6821 = vpop.trf.xlu0
  %v6822 = vpop.trf.xlu0
  %v6823 = vpop.trf.xlu0
  %v6824 = vpop.trf.xlu0
  %v6825 = vpop.trf.xlu0
  %v6826 = vpop.trf.xlu0
  %v6827 = vpop.trf.xlu0
  %v6828 = vpop.trf.xlu0
  %v6829 = vpop.trf.xlu0
  %v6830 = vpop.trf.xlu0
  %v6831 = vpop.trf.xlu0
  %v6832 = vpop.trf.xlu0
  %v6833 = vpop.trf.xlu0
  %v6834 = vpack.c.bf16 %v6818, %v6818
  %v6835 = vpack.c.bf16 %v6729, %v6724
  %v6836 = vpack.c.bf16 %v6739, %v6734
  %v6837 = vpack.c.bf16 %v6749, %v6744
  %v6838 = vpack.c.bf16 %v6759, %v6754
  %v6839 = vpack.c.bf16 %v6769, %v6764
  %v6840 = vpack.c.bf16 %v6779, %v6774
  %v6841 = vpack.c.bf16 %v6789, %v6784
  %v6842 = vpack.c.bf16 %v6799, %v6794
  %v6843 = vpack.c.bf16 %v6583, %v6579
  %v6844 = vpack.c.bf16 %v6585, %v6581
  %v6845 = vpack.c.bf16 %v6593, %v6589
  %v6846 = vpack.c.bf16 %v6595, %v6591
  %v6847 = vpack.c.bf16 %v6603, %v6599
  %v6848 = vpack.c.bf16 %v6605, %v6601
  %v6849 = vpack.c.bf16 %v6613, %v6609
  %v6850 = vpack.c.bf16 %v6615, %v6611
  %v6851 = vpack.c.bf16 %v6623, %v6619
  %v6852 = vpack.c.bf16 %v6625, %v6621
  %v6853 = vpack.c.bf16 %v6633, %v6629
  %v6854 = vpack.c.bf16 %v6635, %v6631
  %v6855 = vpack.c.bf16 %v6643, %v6639
  %v6856 = vpack.c.bf16 %v6645, %v6641
  %v6857 = vpack.c.bf16 %v6653, %v6649
  %v6858 = vpack.c.bf16 %v6655, %v6651
  %6860 = vset.pattern.permute.xlu0 4
  %6861 = vperm.xlu0 %6860, %v6835
  %v6862 = vpop.permute.xlu0 %6861
  %6865 = vset.pattern.permute.xlu0 4
  %6866 = vperm.xlu0 %6865, %v6836
  %v6867 = vpop.permute.xlu0 %6866
  %6870 = vset.pattern.permute.xlu0 4
  %6871 = vperm.xlu0 %6870, %v6837
  %v6872 = vpop.permute.xlu0 %6871
  %6875 = vset.pattern.permute.xlu0 4
  %6876 = vperm.xlu0 %6875, %v6838
  %v6877 = vpop.permute.xlu0 %6876
  %6880 = vset.pattern.permute.xlu0 4
  %6881 = vperm.xlu0 %6880, %v6839
  %v6882 = vpop.permute.xlu0 %6881
  %6885 = vset.pattern.permute.xlu0 4
  %6886 = vperm.xlu0 %6885, %v6840
  %v6887 = vpop.permute.xlu0 %6886
  %6890 = vset.pattern.permute.xlu0 4
  %6891 = vperm.xlu0 %6890, %v6841
  %v6892 = vpop.permute.xlu0 %6891
  %6895 = vset.pattern.permute.xlu0 4
  %6896 = vperm.xlu0 %6895, %v6842
  %v6897 = vpop.permute.xlu0 %6896
  %v6900 = vpack.i.b16 %v6834, %v6834
  %v6902 = vlaneseq
  %v6903 = vshrl.u32 %v6902, 7
  %v6904 = vsub.s32 0, %v6903
  %v6905 = vrot.slane %v6900, %v6904
  %v6906 = vadd.bf16 %v6862, %v6905
  %v6907 = vadd.bf16 %v6867, %v6905
  %v6908 = vadd.bf16 %v6872, %v6905
  %v6909 = vadd.bf16 %v6877, %v6905
  %v6910 = vadd.bf16 %v6882, %v6905
  %v6911 = vadd.bf16 %v6887, %v6905
  %v6912 = vadd.bf16 %v6892, %v6905
  %v6913 = vadd.bf16 %v6897, %v6905
  %v6914 = vadd.bf16 %v6906, %v1261
  %v6915 = vadd.bf16 %v6907, %v1262
  %v6916 = vadd.bf16 %v6908, %v1263
  %v6917 = vadd.bf16 %v6909, %v1264
  %v6918 = vadd.bf16 %v6910, %v1265
  %v6919 = vadd.bf16 %v6911, %v1266
  %v6920 = vadd.bf16 %v6912, %v1267
  %v6921 = vadd.bf16 %v6913, %v1268
  %v6922 = vmul.bf16 %v6914, 1045249613
  %v6923 = vmul.bf16 %v6915, 1045249613
  %v6924 = vmul.bf16 %v6916, 1045249613
  %v6925 = vmul.bf16 %v6917, 1045249613
  %v6926 = vmul.bf16 %v6918, 1045249613
  %v6927 = vmul.bf16 %v6919, 1045249613
  %v6928 = vmul.bf16 %v6920, 1045249613
  %v6929 = vmul.bf16 %v6921, 1045249613
  %v6930 = vmax.bf16 %v6914, %v6922
  %v6931 = vmax.bf16 %v6915, %v6923
  %v6932 = vmax.bf16 %v6916, %v6924
  %v6933 = vmax.bf16 %v6917, %v6925
  %v6934 = vmax.bf16 %v6918, %v6926
  %v6935 = vmax.bf16 %v6919, %v6927
  %v6936 = vmax.bf16 %v6920, %v6928
  %v6937 = vmax.bf16 %v6921, %v6929
  %6938 = vmax.xlane.bf16.xlu0 %v6930
  %v6939 = vpop.xlane.xlu0 %6938
  %6940 = vmax.xlane.bf16.xlu0 %v6931
  %v6941 = vpop.xlane.xlu0 %6940
  %6942 = vmax.xlane.bf16.xlu0 %v6932
  %v6943 = vpop.xlane.xlu0 %6942
  %6944 = vmax.xlane.bf16.xlu0 %v6933
  %v6945 = vpop.xlane.xlu0 %6944
  %6946 = vmax.xlane.bf16.xlu0 %v6934
  %v6947 = vpop.xlane.xlu0 %6946
  %6948 = vmax.xlane.bf16.xlu0 %v6935
  %v6949 = vpop.xlane.xlu0 %6948
  %6950 = vmax.xlane.bf16.xlu0 %v6936
  %v6951 = vpop.xlane.xlu0 %6950
  %6952 = vmax.xlane.bf16.xlu0 %v6937
  %v6953 = vpop.xlane.xlu0 %6952
  %v6954 = vsub.bf16 %v6930, %v6939
  %v6955 = vsub.bf16 %v6931, %v6941
  %v6956 = vsub.bf16 %v6932, %v6943
  %v6957 = vsub.bf16 %v6933, %v6945
  %v6958 = vsub.bf16 %v6934, %v6947
  %v6959 = vsub.bf16 %v6935, %v6949
  %v6960 = vsub.bf16 %v6936, %v6951
  %v6961 = vsub.bf16 %v6937, %v6953
  %v6963 = vmul.bf16 %v6954, 1069105081
  %v6964 = vpow.bf16.pop %v6963
  %v6966 = vmul.bf16 %v6955, 1069105081
  %v6967 = vpow.bf16.pop %v6966
  %v6969 = vmul.bf16 %v6956, 1069105081
  %v6970 = vpow.bf16.pop %v6969
  %v6972 = vmul.bf16 %v6957, 1069105081
  %v6973 = vpow.bf16.pop %v6972
  %v6975 = vmul.bf16 %v6958, 1069105081
  %v6976 = vpow.bf16.pop %v6975
  %v6978 = vmul.bf16 %v6959, 1069105081
  %v6979 = vpow.bf16.pop %v6978
  %v6981 = vmul.bf16 %v6960, 1069105081
  %v6982 = vpow.bf16.pop %v6981
  %v6984 = vmul.bf16 %v6961, 1069105081
  %v6985 = vpow.bf16.pop %v6984
  %v6986 = vunpack.c.l.bf16 %v6964
  %v6987 = vunpack.c.h.bf16 %v6964
  %v6988 = vunpack.c.l.bf16 %v6967
  %v6989 = vunpack.c.h.bf16 %v6967
  %v6990 = vunpack.c.l.bf16 %v6970
  %v6991 = vunpack.c.h.bf16 %v6970
  %v6992 = vunpack.c.l.bf16 %v6973
  %v6993 = vunpack.c.h.bf16 %v6973
  %v6994 = vunpack.c.l.bf16 %v6976
  %v6995 = vunpack.c.h.bf16 %v6976
  %v6996 = vunpack.c.l.bf16 %v6979
  %v6997 = vunpack.c.h.bf16 %v6979
  %v6998 = vunpack.c.l.bf16 %v6982
  %v6999 = vunpack.c.h.bf16 %v6982
  %v7000 = vunpack.c.l.bf16 %v6985
  %v7001 = vunpack.c.h.bf16 %v6985
  %7002 = vadd.xlane.f32.xlu0 %v6986
  %v7003 = vpop.xlane.xlu0 %7002
  %7004 = vadd.xlane.f32.xlu0 %v6987
  %v7005 = vpop.xlane.xlu0 %7004
  %7006 = vadd.xlane.f32.xlu0 %v6988
  %v7007 = vpop.xlane.xlu0 %7006
  %7008 = vadd.xlane.f32.xlu0 %v6989
  %v7009 = vpop.xlane.xlu0 %7008
  %7010 = vadd.xlane.f32.xlu0 %v6990
  %v7011 = vpop.xlane.xlu0 %7010
  %7012 = vadd.xlane.f32.xlu0 %v6991
  %v7013 = vpop.xlane.xlu0 %7012
  %7014 = vadd.xlane.f32.xlu0 %v6992
  %v7015 = vpop.xlane.xlu0 %7014
  %7016 = vadd.xlane.f32.xlu0 %v6993
  %v7017 = vpop.xlane.xlu0 %7016
  %7018 = vadd.xlane.f32.xlu0 %v6994
  %v7019 = vpop.xlane.xlu0 %7018
  %7020 = vadd.xlane.f32.xlu0 %v6995
  %v7021 = vpop.xlane.xlu0 %7020
  %7022 = vadd.xlane.f32.xlu0 %v6996
  %v7023 = vpop.xlane.xlu0 %7022
  %7024 = vadd.xlane.f32.xlu0 %v6997
  %v7025 = vpop.xlane.xlu0 %7024
  %7026 = vadd.xlane.f32.xlu0 %v6998
  %v7027 = vpop.xlane.xlu0 %7026
  %7028 = vadd.xlane.f32.xlu0 %v6999
  %v7029 = vpop.xlane.xlu0 %7028
  %7030 = vadd.xlane.f32.xlu0 %v7000
  %v7031 = vpop.xlane.xlu0 %7030
  %7032 = vadd.xlane.f32.xlu0 %v7001
  %v7033 = vpop.xlane.xlu0 %7032
  %v7034 = vrcp.pop %v7003
  %v7035 = vrcp.pop %v7005
  %v7036 = vrcp.pop %v7007
  %v7037 = vrcp.pop %v7009
  %v7038 = vrcp.pop %v7011
  %v7039 = vrcp.pop %v7013
  %v7040 = vrcp.pop %v7015
  %v7041 = vrcp.pop %v7017
  %v7042 = vrcp.pop %v7019
  %v7043 = vrcp.pop %v7021
  %v7044 = vrcp.pop %v7023
  %v7045 = vrcp.pop %v7025
  %v7046 = vrcp.pop %v7027
  %v7047 = vrcp.pop %v7029
  %v7048 = vrcp.pop %v7031
  %v7049 = vrcp.pop %v7033
  %7050 = vmatprep.subr.bf16.mxu0 0
  %7051 = vmatpush1.bf16.msra.mxu0 %v6857
  %7052 = vmatprep.subr.bf16.mxu0 0
  %7053 = vmatpush1.bf16.msra.mxu0 %v6855
  %7054 = vmatprep.subr.bf16.mxu0 0
  %7055 = vmatpush1.bf16.msra.mxu0 %v6853
  %7056 = vmatprep.subr.bf16.mxu0 0
  %7057 = vmatpush1.bf16.msra.mxu0 %v6851
  %7058 = vmatprep.subr.bf16.mxu0 0
  %7059 = vmatpush1.bf16.msra.mxu0 %v6849
  %7060 = vmatprep.subr.bf16.mxu0 0
  %7061 = vmatpush1.bf16.msra.mxu0 %v6847
  %7062 = vmatprep.subr.bf16.mxu0 0
  %7063 = vmatpush1.bf16.msra.mxu0 %v6845
  %7064 = vmatprep.subr.bf16.mxu0 0
  %7065 = vmatpush1.bf16.msra.mxu0 %v6843
  %7066 = vmatprep.subr.bf16.mxu0 0
  %7067 = vmatpush2.bf16.msra.mxu0 0
  %7068 = vmatprep.subr.bf16.mxu0 0
  %7069 = vmatpush2.bf16.msra.mxu0 0
  %7070 = vmatprep.subr.bf16.mxu0 0
  %7071 = vmatpush2.bf16.msra.mxu0 0
  %7072 = vmatprep.subr.bf16.mxu0 0
  %7073 = vmatpush2.bf16.msra.mxu0 0
  %7074 = vmatprep.subr.bf16.mxu0 0
  %7075 = vmatpush2.bf16.msra.mxu0 0
  %7076 = vmatprep.subr.bf16.mxu0 0
  %7077 = vmatpush2.bf16.msra.mxu0 0
  %7078 = vmatprep.subr.bf16.mxu0 0
  %7079 = vmatpush2.bf16.msra.mxu0 0
  %7080 = vmatprep.subr.bf16.mxu0 0
  %7081 = vmatpush2.bf16.msra.mxu0 0
  %7082 = vmatprep.mubr.bf16.mxu0 0
  %7083 = vmatmul.mubr.bf16.gmra.mxu0 %v6964
  %v7084 = vpop.f32.mrf.mxu0
  %v7085 = vadd.f32 0.0, %v7084
  %v7086 = vpop.f32.mrf.mxu0
  %v7087 = vpop.f32.mrf.mxu0
  %v7088 = vadd.f32 0.0, %v7087
  %v7089 = vpop.f32.mrf.mxu0
  %7090 = vmatprep.mubr.bf16.mxu0 0
  %7091 = vmatmul.mubr.bf16.gmra.mxu0 %v6967
  %v7092 = vpop.f32.mrf.mxu0
  %v7093 = vadd.f32 0.0, %v7092
  %v7094 = vpop.f32.mrf.mxu0
  %v7095 = vpop.f32.mrf.mxu0
  %v7096 = vadd.f32 0.0, %v7095
  %v7097 = vpop.f32.mrf.mxu0
  %7098 = vmatprep.mubr.bf16.mxu0 0
  %7099 = vmatmul.mubr.bf16.gmra.mxu0 %v6970
  %v7100 = vpop.f32.mrf.mxu0
  %v7101 = vadd.f32 0.0, %v7100
  %v7102 = vpop.f32.mrf.mxu0
  %v7103 = vpop.f32.mrf.mxu0
  %v7104 = vadd.f32 0.0, %v7103
  %v7105 = vpop.f32.mrf.mxu0
  %7106 = vmatprep.mubr.bf16.mxu0 0
  %7107 = vmatmul.mubr.bf16.gmra.mxu0 %v6973
  %v7108 = vpop.f32.mrf.mxu0
  %v7109 = vadd.f32 0.0, %v7108
  %v7110 = vpop.f32.mrf.mxu0
  %v7111 = vpop.f32.mrf.mxu0
  %v7112 = vadd.f32 0.0, %v7111
  %v7113 = vpop.f32.mrf.mxu0
  %7114 = vmatprep.mubr.bf16.mxu0 0
  %7115 = vmatmul.mubr.bf16.gmra.mxu0 %v6976
  %v7116 = vpop.f32.mrf.mxu0
  %v7117 = vadd.f32 0.0, %v7116
  %v7118 = vpop.f32.mrf.mxu0
  %v7119 = vpop.f32.mrf.mxu0
  %v7120 = vadd.f32 0.0, %v7119
  %v7121 = vpop.f32.mrf.mxu0
  %7122 = vmatprep.mubr.bf16.mxu0 0
  %7123 = vmatmul.mubr.bf16.gmra.mxu0 %v6979
  %v7124 = vpop.f32.mrf.mxu0
  %v7125 = vadd.f32 0.0, %v7124
  %v7126 = vpop.f32.mrf.mxu0
  %v7127 = vpop.f32.mrf.mxu0
  %v7128 = vadd.f32 0.0, %v7127
  %v7129 = vpop.f32.mrf.mxu0
  %7130 = vmatprep.mubr.bf16.mxu0 0
  %7131 = vmatmul.mubr.bf16.gmra.mxu0 %v6982
  %v7132 = vpop.f32.mrf.mxu0
  %v7133 = vadd.f32 0.0, %v7132
  %v7134 = vpop.f32.mrf.mxu0
  %v7135 = vpop.f32.mrf.mxu0
  %v7136 = vadd.f32 0.0, %v7135
  %v7137 = vpop.f32.mrf.mxu0
  %7138 = vmatprep.mubr.bf16.mxu0 0
  %7139 = vmatmul.mubr.bf16.gmra.mxu0 %v6985
  %v7140 = vpop.f32.mrf.mxu0
  %v7141 = vadd.f32 0.0, %v7140
  %v7142 = vpop.f32.mrf.mxu0
  %v7143 = vpop.f32.mrf.mxu0
  %v7144 = vadd.f32 0.0, %v7143
  %v7145 = vpop.f32.mrf.mxu0
  %7146 = vdwg.mxu0
  %v7147 = vmul.f32 %v7034, %v7085
  %v7148 = vmul.f32 %v7035, %v7088
  %v7149 = vmul.f32 %v7036, %v7093
  %v7150 = vmul.f32 %v7037, %v7096
  %v7151 = vmul.f32 %v7038, %v7101
  %v7152 = vmul.f32 %v7039, %v7104
  %v7153 = vmul.f32 %v7040, %v7109
  %v7154 = vmul.f32 %v7041, %v7112
  %v7155 = vmul.f32 %v7042, %v7117
  %v7156 = vmul.f32 %v7043, %v7120
  %v7157 = vmul.f32 %v7044, %v7125
  %v7158 = vmul.f32 %v7045, %v7128
  %v7159 = vmul.f32 %v7046, %v7133
  %v7160 = vmul.f32 %v7047, %v7136
  %v7161 = vmul.f32 %v7048, %v7141
  %v7162 = vmul.f32 %v7049, %v7144
  %v7163 = vadd.f32 %v7147, 0.0
  %v7164 = vadd.f32 %v7148, 0.0
  %v7165 = vadd.f32 %v7149, 0.0
  %v7166 = vadd.f32 %v7150, 0.0
  %v7167 = vadd.f32 %v7151, 0.0
  %v7168 = vadd.f32 %v7152, 0.0
  %v7169 = vadd.f32 %v7153, 0.0
  %v7170 = vadd.f32 %v7154, 0.0
  %v7171 = vadd.f32 %v7155, 0.0
  %v7172 = vadd.f32 %v7156, 0.0
  %v7173 = vadd.f32 %v7157, 0.0
  %v7174 = vadd.f32 %v7158, 0.0
  %v7175 = vadd.f32 %v7159, 0.0
  %v7176 = vadd.f32 %v7160, 0.0
  %v7177 = vadd.f32 %v7161, 0.0
  %v7178 = vadd.f32 %v7162, 0.0
  %7179 = vset.pattern.permute.xlu0 5
  %7180 = vperm.xlu0 %7179, %v6835
  %v7181 = vpop.permute.xlu0 %7180
  %7183 = vset.pattern.permute.xlu0 5
  %7184 = vperm.xlu0 %7183, %v6836
  %v7185 = vpop.permute.xlu0 %7184
  %7187 = vset.pattern.permute.xlu0 5
  %7188 = vperm.xlu0 %7187, %v6837
  %v7189 = vpop.permute.xlu0 %7188
  %7191 = vset.pattern.permute.xlu0 5
  %7192 = vperm.xlu0 %7191, %v6838
  %v7193 = vpop.permute.xlu0 %7192
  %7195 = vset.pattern.permute.xlu0 5
  %7196 = vperm.xlu0 %7195, %v6839
  %v7197 = vpop.permute.xlu0 %7196
  %7199 = vset.pattern.permute.xlu0 5
  %7200 = vperm.xlu0 %7199, %v6840
  %v7201 = vpop.permute.xlu0 %7200
  %7203 = vset.pattern.permute.xlu0 5
  %7204 = vperm.xlu0 %7203, %v6841
  %v7205 = vpop.permute.xlu0 %7204
  %7207 = vset.pattern.permute.xlu0 5
  %7208 = vperm.xlu0 %7207, %v6842
  %v7209 = vpop.permute.xlu0 %7208
  %v7211 = vshrl.u32 %v6834, 16
  %v7212 = vpack.i.b16 %v7211, %v7211
  %v7214 = vlaneseq
  %v7215 = vshrl.u32 %v7214, 7
  %v7216 = vsub.s32 0, %v7215
  %v7217 = vrot.slane %v7212, %v7216
  %v7218 = vadd.bf16 %v7181, %v7217
  %v7219 = vadd.bf16 %v7185, %v7217
  %v7220 = vadd.bf16 %v7189, %v7217
  %v7221 = vadd.bf16 %v7193, %v7217
  %v7222 = vadd.bf16 %v7197, %v7217
  %v7223 = vadd.bf16 %v7201, %v7217
  %v7224 = vadd.bf16 %v7205, %v7217
  %v7225 = vadd.bf16 %v7209, %v7217
  %v7226 = vadd.bf16 %v7218, %v1261
  %v7227 = vadd.bf16 %v7219, %v1262
  %v7228 = vadd.bf16 %v7220, %v1263
  %v7229 = vadd.bf16 %v7221, %v1264
  %v7230 = vadd.bf16 %v7222, %v1265
  %v7231 = vadd.bf16 %v7223, %v1266
  %v7232 = vadd.bf16 %v7224, %v1267
  %v7233 = vadd.bf16 %v7225, %v1268
  %v7234 = vmul.bf16 %v7226, 1045249613
  %v7235 = vmul.bf16 %v7227, 1045249613
  %v7236 = vmul.bf16 %v7228, 1045249613
  %v7237 = vmul.bf16 %v7229, 1045249613
  %v7238 = vmul.bf16 %v7230, 1045249613
  %v7239 = vmul.bf16 %v7231, 1045249613
  %v7240 = vmul.bf16 %v7232, 1045249613
  %v7241 = vmul.bf16 %v7233, 1045249613
  %v7242 = vmax.bf16 %v7226, %v7234
  %v7243 = vmax.bf16 %v7227, %v7235
  %v7244 = vmax.bf16 %v7228, %v7236
  %v7245 = vmax.bf16 %v7229, %v7237
  %v7246 = vmax.bf16 %v7230, %v7238
  %v7247 = vmax.bf16 %v7231, %v7239
  %v7248 = vmax.bf16 %v7232, %v7240
  %v7249 = vmax.bf16 %v7233, %v7241
  %7250 = vmax.xlane.bf16.xlu0 %v7242
  %v7251 = vpop.xlane.xlu0 %7250
  %7252 = vmax.xlane.bf16.xlu0 %v7243
  %v7253 = vpop.xlane.xlu0 %7252
  %7254 = vmax.xlane.bf16.xlu0 %v7244
  %v7255 = vpop.xlane.xlu0 %7254
  %7256 = vmax.xlane.bf16.xlu0 %v7245
  %v7257 = vpop.xlane.xlu0 %7256
  %7258 = vmax.xlane.bf16.xlu0 %v7246
  %v7259 = vpop.xlane.xlu0 %7258
  %7260 = vmax.xlane.bf16.xlu0 %v7247
  %v7261 = vpop.xlane.xlu0 %7260
  %7262 = vmax.xlane.bf16.xlu0 %v7248
  %v7263 = vpop.xlane.xlu0 %7262
  %7264 = vmax.xlane.bf16.xlu0 %v7249
  %v7265 = vpop.xlane.xlu0 %7264
  %v7266 = vsub.bf16 %v7242, %v7251
  %v7267 = vsub.bf16 %v7243, %v7253
  %v7268 = vsub.bf16 %v7244, %v7255
  %v7269 = vsub.bf16 %v7245, %v7257
  %v7270 = vsub.bf16 %v7246, %v7259
  %v7271 = vsub.bf16 %v7247, %v7261
  %v7272 = vsub.bf16 %v7248, %v7263
  %v7273 = vsub.bf16 %v7249, %v7265
  %v7275 = vmul.bf16 %v7266, 1069105081
  %v7276 = vpow.bf16.pop %v7275
  %v7278 = vmul.bf16 %v7267, 1069105081
  %v7279 = vpow.bf16.pop %v7278
  %v7281 = vmul.bf16 %v7268, 1069105081
  %v7282 = vpow.bf16.pop %v7281
  %v7284 = vmul.bf16 %v7269, 1069105081
  %v7285 = vpow.bf16.pop %v7284
  %v7287 = vmul.bf16 %v7270, 1069105081
  %v7288 = vpow.bf16.pop %v7287
  %v7290 = vmul.bf16 %v7271, 1069105081
  %v7291 = vpow.bf16.pop %v7290
  %v7293 = vmul.bf16 %v7272, 1069105081
  %v7294 = vpow.bf16.pop %v7293
  %v7296 = vmul.bf16 %v7273, 1069105081
  %v7297 = vpow.bf16.pop %v7296
  %v7298 = vunpack.c.l.bf16 %v7276
  %v7299 = vunpack.c.h.bf16 %v7276
  %v7300 = vunpack.c.l.bf16 %v7279
  %v7301 = vunpack.c.h.bf16 %v7279
  %v7302 = vunpack.c.l.bf16 %v7282
  %v7303 = vunpack.c.h.bf16 %v7282
  %v7304 = vunpack.c.l.bf16 %v7285
  %v7305 = vunpack.c.h.bf16 %v7285
  %v7306 = vunpack.c.l.bf16 %v7288
  %v7307 = vunpack.c.h.bf16 %v7288
  %v7308 = vunpack.c.l.bf16 %v7291
  %v7309 = vunpack.c.h.bf16 %v7291
  %v7310 = vunpack.c.l.bf16 %v7294
  %v7311 = vunpack.c.h.bf16 %v7294
  %v7312 = vunpack.c.l.bf16 %v7297
  %v7313 = vunpack.c.h.bf16 %v7297
  %7314 = vadd.xlane.f32.xlu0 %v7298
  %v7315 = vpop.xlane.xlu0 %7314
  %7316 = vadd.xlane.f32.xlu0 %v7299
  %v7317 = vpop.xlane.xlu0 %7316
  %7318 = vadd.xlane.f32.xlu0 %v7300
  %v7319 = vpop.xlane.xlu0 %7318
  %7320 = vadd.xlane.f32.xlu0 %v7301
  %v7321 = vpop.xlane.xlu0 %7320
  %7322 = vadd.xlane.f32.xlu0 %v7302
  %v7323 = vpop.xlane.xlu0 %7322
  %7324 = vadd.xlane.f32.xlu0 %v7303
  %v7325 = vpop.xlane.xlu0 %7324
  %7326 = vadd.xlane.f32.xlu0 %v7304
  %v7327 = vpop.xlane.xlu0 %7326
  %7328 = vadd.xlane.f32.xlu0 %v7305
  %v7329 = vpop.xlane.xlu0 %7328
  %7330 = vadd.xlane.f32.xlu0 %v7306
  %v7331 = vpop.xlane.xlu0 %7330
  %7332 = vadd.xlane.f32.xlu0 %v7307
  %v7333 = vpop.xlane.xlu0 %7332
  %7334 = vadd.xlane.f32.xlu0 %v7308
  %v7335 = vpop.xlane.xlu0 %7334
  %7336 = vadd.xlane.f32.xlu0 %v7309
  %v7337 = vpop.xlane.xlu0 %7336
  %7338 = vadd.xlane.f32.xlu0 %v7310
  %v7339 = vpop.xlane.xlu0 %7338
  %7340 = vadd.xlane.f32.xlu0 %v7311
  %v7341 = vpop.xlane.xlu0 %7340
  %7342 = vadd.xlane.f32.xlu0 %v7312
  %v7343 = vpop.xlane.xlu0 %7342
  %7344 = vadd.xlane.f32.xlu0 %v7313
  %v7345 = vpop.xlane.xlu0 %7344
  %v7346 = vrcp.pop %v7315
  %v7347 = vrcp.pop %v7317
  %v7348 = vrcp.pop %v7319
  %v7349 = vrcp.pop %v7321
  %v7350 = vrcp.pop %v7323
  %v7351 = vrcp.pop %v7325
  %v7352 = vrcp.pop %v7327
  %v7353 = vrcp.pop %v7329
  %v7354 = vrcp.pop %v7331
  %v7355 = vrcp.pop %v7333
  %v7356 = vrcp.pop %v7335
  %v7357 = vrcp.pop %v7337
  %v7358 = vrcp.pop %v7339
  %v7359 = vrcp.pop %v7341
  %v7360 = vrcp.pop %v7343
  %v7361 = vrcp.pop %v7345
  %7370 = vrot.lane.b32.xlu0 %v6843, 64
  %v7371 = vpop.permute.xlu0 %7370
  %7372 = vrot.lane.b32.xlu0 %v6845, 64
  %v7373 = vpop.permute.xlu0 %7372
  %7374 = vrot.lane.b32.xlu0 %v6847, 64
  %v7375 = vpop.permute.xlu0 %7374
  %7376 = vrot.lane.b32.xlu0 %v6849, 64
  %v7377 = vpop.permute.xlu0 %7376
  %7378 = vrot.lane.b32.xlu0 %v6851, 64
  %v7379 = vpop.permute.xlu0 %7378
  %7380 = vrot.lane.b32.xlu0 %v6853, 64
  %v7381 = vpop.permute.xlu0 %7380
  %7382 = vrot.lane.b32.xlu0 %v6855, 64
  %v7383 = vpop.permute.xlu0 %7382
  %7384 = vrot.lane.b32.xlu0 %v6857, 64
  %v7385 = vpop.permute.xlu0 %7384
  %7394 = vmatprep.subr.bf16.mxu0 0
  %7395 = vmatpush1.bf16.msra.mxu0 %v7385
  %7396 = vmatprep.subr.bf16.mxu0 0
  %7397 = vmatpush1.bf16.msra.mxu0 %v7383
  %7398 = vmatprep.subr.bf16.mxu0 0
  %7399 = vmatpush1.bf16.msra.mxu0 %v7381
  %7400 = vmatprep.subr.bf16.mxu0 0
  %7401 = vmatpush1.bf16.msra.mxu0 %v7379
  %7402 = vmatprep.subr.bf16.mxu0 0
  %7403 = vmatpush1.bf16.msra.mxu0 %v7377
  %7404 = vmatprep.subr.bf16.mxu0 0
  %7405 = vmatpush1.bf16.msra.mxu0 %v7375
  %7406 = vmatprep.subr.bf16.mxu0 0
  %7407 = vmatpush1.bf16.msra.mxu0 %v7373
  %7408 = vmatprep.subr.bf16.mxu0 0
  %7409 = vmatpush1.bf16.msra.mxu0 %v7371
  %7410 = vmatprep.subr.bf16.mxu0 0
  %7411 = vmatpush2.bf16.msra.mxu0 0
  %7412 = vmatprep.subr.bf16.mxu0 0
  %7413 = vmatpush2.bf16.msra.mxu0 0
  %7414 = vmatprep.subr.bf16.mxu0 0
  %7415 = vmatpush2.bf16.msra.mxu0 0
  %7416 = vmatprep.subr.bf16.mxu0 0
  %7417 = vmatpush2.bf16.msra.mxu0 0
  %7418 = vmatprep.subr.bf16.mxu0 0
  %7419 = vmatpush2.bf16.msra.mxu0 0
  %7420 = vmatprep.subr.bf16.mxu0 0
  %7421 = vmatpush2.bf16.msra.mxu0 0
  %7422 = vmatprep.subr.bf16.mxu0 0
  %7423 = vmatpush2.bf16.msra.mxu0 0
  %7424 = vmatprep.subr.bf16.mxu0 0
  %7425 = vmatpush2.bf16.msra.mxu0 0
  %7426 = vmatprep.mubr.bf16.mxu0 0
  %7427 = vmatmul.mubr.bf16.gmra.mxu0 %v7276
  %v7428 = vpop.f32.mrf.mxu0
  %v7429 = vadd.f32 0.0, %v7428
  %v7430 = vpop.f32.mrf.mxu0
  %v7431 = vpop.f32.mrf.mxu0
  %v7432 = vadd.f32 0.0, %v7431
  %v7433 = vpop.f32.mrf.mxu0
  %7434 = vmatprep.mubr.bf16.mxu0 0
  %7435 = vmatmul.mubr.bf16.gmra.mxu0 %v7279
  %v7436 = vpop.f32.mrf.mxu0
  %v7437 = vadd.f32 0.0, %v7436
  %v7438 = vpop.f32.mrf.mxu0
  %v7439 = vpop.f32.mrf.mxu0
  %v7440 = vadd.f32 0.0, %v7439
  %v7441 = vpop.f32.mrf.mxu0
  %7442 = vmatprep.mubr.bf16.mxu0 0
  %7443 = vmatmul.mubr.bf16.gmra.mxu0 %v7282
  %v7444 = vpop.f32.mrf.mxu0
  %v7445 = vadd.f32 0.0, %v7444
  %v7446 = vpop.f32.mrf.mxu0
  %v7447 = vpop.f32.mrf.mxu0
  %v7448 = vadd.f32 0.0, %v7447
  %v7449 = vpop.f32.mrf.mxu0
  %7450 = vmatprep.mubr.bf16.mxu0 0
  %7451 = vmatmul.mubr.bf16.gmra.mxu0 %v7285
  %v7452 = vpop.f32.mrf.mxu0
  %v7453 = vadd.f32 0.0, %v7452
  %v7454 = vpop.f32.mrf.mxu0
  %v7455 = vpop.f32.mrf.mxu0
  %v7456 = vadd.f32 0.0, %v7455
  %v7457 = vpop.f32.mrf.mxu0
  %7458 = vmatprep.mubr.bf16.mxu0 0
  %7459 = vmatmul.mubr.bf16.gmra.mxu0 %v7288
  %v7460 = vpop.f32.mrf.mxu0
  %v7461 = vadd.f32 0.0, %v7460
  %v7462 = vpop.f32.mrf.mxu0
  %v7463 = vpop.f32.mrf.mxu0
  %v7464 = vadd.f32 0.0, %v7463
  %v7465 = vpop.f32.mrf.mxu0
  %7466 = vmatprep.mubr.bf16.mxu0 0
  %7467 = vmatmul.mubr.bf16.gmra.mxu0 %v7291
  %v7468 = vpop.f32.mrf.mxu0
  %v7469 = vadd.f32 0.0, %v7468
  %v7470 = vpop.f32.mrf.mxu0
  %v7471 = vpop.f32.mrf.mxu0
  %v7472 = vadd.f32 0.0, %v7471
  %v7473 = vpop.f32.mrf.mxu0
  %7474 = vmatprep.mubr.bf16.mxu0 0
  %7475 = vmatmul.mubr.bf16.gmra.mxu0 %v7294
  %v7476 = vpop.f32.mrf.mxu0
  %v7477 = vadd.f32 0.0, %v7476
  %v7478 = vpop.f32.mrf.mxu0
  %v7479 = vpop.f32.mrf.mxu0
  %v7480 = vadd.f32 0.0, %v7479
  %v7481 = vpop.f32.mrf.mxu0
  %7482 = vmatprep.mubr.bf16.mxu0 0
  %7483 = vmatmul.mubr.bf16.gmra.mxu0 %v7297
  %v7484 = vpop.f32.mrf.mxu0
  %v7485 = vadd.f32 0.0, %v7484
  %v7486 = vpop.f32.mrf.mxu0
  %v7487 = vpop.f32.mrf.mxu0
  %v7488 = vadd.f32 0.0, %v7487
  %v7489 = vpop.f32.mrf.mxu0
  %7490 = vdwg.mxu0
  %v7491 = vmul.f32 %v7346, %v7429
  %v7492 = vmul.f32 %v7347, %v7432
  %v7493 = vmul.f32 %v7348, %v7437
  %v7494 = vmul.f32 %v7349, %v7440
  %v7495 = vmul.f32 %v7350, %v7445
  %v7496 = vmul.f32 %v7351, %v7448
  %v7497 = vmul.f32 %v7352, %v7453
  %v7498 = vmul.f32 %v7353, %v7456
  %v7499 = vmul.f32 %v7354, %v7461
  %v7500 = vmul.f32 %v7355, %v7464
  %v7501 = vmul.f32 %v7356, %v7469
  %v7502 = vmul.f32 %v7357, %v7472
  %v7503 = vmul.f32 %v7358, %v7477
  %v7504 = vmul.f32 %v7359, %v7480
  %v7505 = vmul.f32 %v7360, %v7485
  %v7506 = vmul.f32 %v7361, %v7488
  %v7507 = vadd.f32 %v7163, %v7491
  %v7508 = vadd.f32 %v7164, %v7492
  %v7509 = vadd.f32 %v7165, %v7493
  %v7510 = vadd.f32 %v7166, %v7494
  %v7511 = vadd.f32 %v7167, %v7495
  %v7512 = vadd.f32 %v7168, %v7496
  %v7513 = vadd.f32 %v7169, %v7497
  %v7514 = vadd.f32 %v7170, %v7498
  %v7515 = vadd.f32 %v7171, %v7499
  %v7516 = vadd.f32 %v7172, %v7500
  %v7517 = vadd.f32 %v7173, %v7501
  %v7518 = vadd.f32 %v7174, %v7502
  %v7519 = vadd.f32 %v7175, %v7503
  %v7520 = vadd.f32 %v7176, %v7504
  %v7521 = vadd.f32 %v7177, %v7505
  %v7522 = vadd.f32 %v7178, %v7506
  %7523 = vset.pattern.permute.xlu0 6
  %7524 = vperm.xlu0 %7523, %v6835
  %v7525 = vpop.permute.xlu0 %7524
  %7527 = vset.pattern.permute.xlu0 6
  %7528 = vperm.xlu0 %7527, %v6836
  %v7529 = vpop.permute.xlu0 %7528
  %7531 = vset.pattern.permute.xlu0 6
  %7532 = vperm.xlu0 %7531, %v6837
  %v7533 = vpop.permute.xlu0 %7532
  %7535 = vset.pattern.permute.xlu0 6
  %7536 = vperm.xlu0 %7535, %v6838
  %v7537 = vpop.permute.xlu0 %7536
  %7539 = vset.pattern.permute.xlu0 6
  %7540 = vperm.xlu0 %7539, %v6839
  %v7541 = vpop.permute.xlu0 %7540
  %7543 = vset.pattern.permute.xlu0 6
  %7544 = vperm.xlu0 %7543, %v6840
  %v7545 = vpop.permute.xlu0 %7544
  %7547 = vset.pattern.permute.xlu0 6
  %7548 = vperm.xlu0 %7547, %v6841
  %v7549 = vpop.permute.xlu0 %7548
  %7551 = vset.pattern.permute.xlu0 6
  %7552 = vperm.xlu0 %7551, %v6842
  %v7553 = vpop.permute.xlu0 %7552
  %v7555 = vlaneseq
  %v7556 = vshrl.u32 %v7555, 7
  %v7557 = vsub.s32 1, %v7556
  %v7558 = vrot.slane %v6900, %v7557
  %v7559 = vadd.bf16 %v7525, %v7558
  %v7560 = vadd.bf16 %v7529, %v7558
  %v7561 = vadd.bf16 %v7533, %v7558
  %v7562 = vadd.bf16 %v7537, %v7558
  %v7563 = vadd.bf16 %v7541, %v7558
  %v7564 = vadd.bf16 %v7545, %v7558
  %v7565 = vadd.bf16 %v7549, %v7558
  %v7566 = vadd.bf16 %v7553, %v7558
  %v7567 = vadd.bf16 %v7559, %v1261
  %v7568 = vadd.bf16 %v7560, %v1262
  %v7569 = vadd.bf16 %v7561, %v1263
  %v7570 = vadd.bf16 %v7562, %v1264
  %v7571 = vadd.bf16 %v7563, %v1265
  %v7572 = vadd.bf16 %v7564, %v1266
  %v7573 = vadd.bf16 %v7565, %v1267
  %v7574 = vadd.bf16 %v7566, %v1268
  %v7575 = vmul.bf16 %v7567, 1045249613
  %v7576 = vmul.bf16 %v7568, 1045249613
  %v7577 = vmul.bf16 %v7569, 1045249613
  %v7578 = vmul.bf16 %v7570, 1045249613
  %v7579 = vmul.bf16 %v7571, 1045249613
  %v7580 = vmul.bf16 %v7572, 1045249613
  %v7581 = vmul.bf16 %v7573, 1045249613
  %v7582 = vmul.bf16 %v7574, 1045249613
  %v7583 = vmax.bf16 %v7567, %v7575
  %v7584 = vmax.bf16 %v7568, %v7576
  %v7585 = vmax.bf16 %v7569, %v7577
  %v7586 = vmax.bf16 %v7570, %v7578
  %v7587 = vmax.bf16 %v7571, %v7579
  %v7588 = vmax.bf16 %v7572, %v7580
  %v7589 = vmax.bf16 %v7573, %v7581
  %v7590 = vmax.bf16 %v7574, %v7582
  %7591 = vmax.xlane.bf16.xlu0 %v7583
  %v7592 = vpop.xlane.xlu0 %7591
  %7593 = vmax.xlane.bf16.xlu0 %v7584
  %v7594 = vpop.xlane.xlu0 %7593
  %7595 = vmax.xlane.bf16.xlu0 %v7585
  %v7596 = vpop.xlane.xlu0 %7595
  %7597 = vmax.xlane.bf16.xlu0 %v7586
  %v7598 = vpop.xlane.xlu0 %7597
  %7599 = vmax.xlane.bf16.xlu0 %v7587
  %v7600 = vpop.xlane.xlu0 %7599
  %7601 = vmax.xlane.bf16.xlu0 %v7588
  %v7602 = vpop.xlane.xlu0 %7601
  %7603 = vmax.xlane.bf16.xlu0 %v7589
  %v7604 = vpop.xlane.xlu0 %7603
  %7605 = vmax.xlane.bf16.xlu0 %v7590
  %v7606 = vpop.xlane.xlu0 %7605
  %v7607 = vsub.bf16 %v7583, %v7592
  %v7608 = vsub.bf16 %v7584, %v7594
  %v7609 = vsub.bf16 %v7585, %v7596
  %v7610 = vsub.bf16 %v7586, %v7598
  %v7611 = vsub.bf16 %v7587, %v7600
  %v7612 = vsub.bf16 %v7588, %v7602
  %v7613 = vsub.bf16 %v7589, %v7604
  %v7614 = vsub.bf16 %v7590, %v7606
  %v7616 = vmul.bf16 %v7607, 1069105081
  %v7617 = vpow.bf16.pop %v7616
  %v7619 = vmul.bf16 %v7608, 1069105081
  %v7620 = vpow.bf16.pop %v7619
  %v7622 = vmul.bf16 %v7609, 1069105081
  %v7623 = vpow.bf16.pop %v7622
  %v7625 = vmul.bf16 %v7610, 1069105081
  %v7626 = vpow.bf16.pop %v7625
  %v7628 = vmul.bf16 %v7611, 1069105081
  %v7629 = vpow.bf16.pop %v7628
  %v7631 = vmul.bf16 %v7612, 1069105081
  %v7632 = vpow.bf16.pop %v7631
  %v7634 = vmul.bf16 %v7613, 1069105081
  %v7635 = vpow.bf16.pop %v7634
  %v7637 = vmul.bf16 %v7614, 1069105081
  %v7638 = vpow.bf16.pop %v7637
  %v7639 = vunpack.c.l.bf16 %v7617
  %v7640 = vunpack.c.h.bf16 %v7617
  %v7641 = vunpack.c.l.bf16 %v7620
  %v7642 = vunpack.c.h.bf16 %v7620
  %v7643 = vunpack.c.l.bf16 %v7623
  %v7644 = vunpack.c.h.bf16 %v7623
  %v7645 = vunpack.c.l.bf16 %v7626
  %v7646 = vunpack.c.h.bf16 %v7626
  %v7647 = vunpack.c.l.bf16 %v7629
  %v7648 = vunpack.c.h.bf16 %v7629
  %v7649 = vunpack.c.l.bf16 %v7632
  %v7650 = vunpack.c.h.bf16 %v7632
  %v7651 = vunpack.c.l.bf16 %v7635
  %v7652 = vunpack.c.h.bf16 %v7635
  %v7653 = vunpack.c.l.bf16 %v7638
  %v7654 = vunpack.c.h.bf16 %v7638
  %7655 = vadd.xlane.f32.xlu0 %v7639
  %v7656 = vpop.xlane.xlu0 %7655
  %7657 = vadd.xlane.f32.xlu0 %v7640
  %v7658 = vpop.xlane.xlu0 %7657
  %7659 = vadd.xlane.f32.xlu0 %v7641
  %v7660 = vpop.xlane.xlu0 %7659
  %7661 = vadd.xlane.f32.xlu0 %v7642
  %v7662 = vpop.xlane.xlu0 %7661
  %7663 = vadd.xlane.f32.xlu0 %v7643
  %v7664 = vpop.xlane.xlu0 %7663
  %7665 = vadd.xlane.f32.xlu0 %v7644
  %v7666 = vpop.xlane.xlu0 %7665
  %7667 = vadd.xlane.f32.xlu0 %v7645
  %v7668 = vpop.xlane.xlu0 %7667
  %7669 = vadd.xlane.f32.xlu0 %v7646
  %v7670 = vpop.xlane.xlu0 %7669
  %7671 = vadd.xlane.f32.xlu0 %v7647
  %v7672 = vpop.xlane.xlu0 %7671
  %7673 = vadd.xlane.f32.xlu0 %v7648
  %v7674 = vpop.xlane.xlu0 %7673
  %7675 = vadd.xlane.f32.xlu0 %v7649
  %v7676 = vpop.xlane.xlu0 %7675
  %7677 = vadd.xlane.f32.xlu0 %v7650
  %v7678 = vpop.xlane.xlu0 %7677
  %7679 = vadd.xlane.f32.xlu0 %v7651
  %v7680 = vpop.xlane.xlu0 %7679
  %7681 = vadd.xlane.f32.xlu0 %v7652
  %v7682 = vpop.xlane.xlu0 %7681
  %7683 = vadd.xlane.f32.xlu0 %v7653
  %v7684 = vpop.xlane.xlu0 %7683
  %7685 = vadd.xlane.f32.xlu0 %v7654
  %v7686 = vpop.xlane.xlu0 %7685
  %v7687 = vrcp.pop %v7656
  %v7688 = vrcp.pop %v7658
  %v7689 = vrcp.pop %v7660
  %v7690 = vrcp.pop %v7662
  %v7691 = vrcp.pop %v7664
  %v7692 = vrcp.pop %v7666
  %v7693 = vrcp.pop %v7668
  %v7694 = vrcp.pop %v7670
  %v7695 = vrcp.pop %v7672
  %v7696 = vrcp.pop %v7674
  %v7697 = vrcp.pop %v7676
  %v7698 = vrcp.pop %v7678
  %v7699 = vrcp.pop %v7680
  %v7700 = vrcp.pop %v7682
  %v7701 = vrcp.pop %v7684
  %v7702 = vrcp.pop %v7686
  %7703 = vmatprep.subr.bf16.mxu0 0
  %7704 = vmatpush1.bf16.msra.mxu0 %v6858
  %7705 = vmatprep.subr.bf16.mxu0 0
  %7706 = vmatpush1.bf16.msra.mxu0 %v6856
  %7707 = vmatprep.subr.bf16.mxu0 0
  %7708 = vmatpush1.bf16.msra.mxu0 %v6854
  %7709 = vmatprep.subr.bf16.mxu0 0
  %7710 = vmatpush1.bf16.msra.mxu0 %v6852
  %7711 = vmatprep.subr.bf16.mxu0 0
  %7712 = vmatpush1.bf16.msra.mxu0 %v6850
  %7713 = vmatprep.subr.bf16.mxu0 0
  %7714 = vmatpush1.bf16.msra.mxu0 %v6848
  %7715 = vmatprep.subr.bf16.mxu0 0
  %7716 = vmatpush1.bf16.msra.mxu0 %v6846
  %7717 = vmatprep.subr.bf16.mxu0 0
  %7718 = vmatpush1.bf16.msra.mxu0 %v6844
  %7719 = vmatprep.subr.bf16.mxu0 0
  %7720 = vmatpush2.bf16.msra.mxu0 0
  %7721 = vmatprep.subr.bf16.mxu0 0
  %7722 = vmatpush2.bf16.msra.mxu0 0
  %7723 = vmatprep.subr.bf16.mxu0 0
  %7724 = vmatpush2.bf16.msra.mxu0 0
  %7725 = vmatprep.subr.bf16.mxu0 0
  %7726 = vmatpush2.bf16.msra.mxu0 0
  %7727 = vmatprep.subr.bf16.mxu0 0
  %7728 = vmatpush2.bf16.msra.mxu0 0
  %7729 = vmatprep.subr.bf16.mxu0 0
  %7730 = vmatpush2.bf16.msra.mxu0 0
  %7731 = vmatprep.subr.bf16.mxu0 0
  %7732 = vmatpush2.bf16.msra.mxu0 0
  %7733 = vmatprep.subr.bf16.mxu0 0
  %7734 = vmatpush2.bf16.msra.mxu0 0
  %7735 = vmatprep.mubr.bf16.mxu0 0
  %7736 = vmatmul.mubr.bf16.gmra.mxu0 %v7617
  %v7737 = vpop.f32.mrf.mxu0
  %v7738 = vadd.f32 0.0, %v7737
  %v7739 = vpop.f32.mrf.mxu0
  %v7740 = vpop.f32.mrf.mxu0
  %v7741 = vadd.f32 0.0, %v7740
  %v7742 = vpop.f32.mrf.mxu0
  %7743 = vmatprep.mubr.bf16.mxu0 0
  %7744 = vmatmul.mubr.bf16.gmra.mxu0 %v7620
  %v7745 = vpop.f32.mrf.mxu0
  %v7746 = vadd.f32 0.0, %v7745
  %v7747 = vpop.f32.mrf.mxu0
  %v7748 = vpop.f32.mrf.mxu0
  %v7749 = vadd.f32 0.0, %v7748
  %v7750 = vpop.f32.mrf.mxu0
  %7751 = vmatprep.mubr.bf16.mxu0 0
  %7752 = vmatmul.mubr.bf16.gmra.mxu0 %v7623
  %v7753 = vpop.f32.mrf.mxu0
  %v7754 = vadd.f32 0.0, %v7753
  %v7755 = vpop.f32.mrf.mxu0
  %v7756 = vpop.f32.mrf.mxu0
  %v7757 = vadd.f32 0.0, %v7756
  %v7758 = vpop.f32.mrf.mxu0
  %7759 = vmatprep.mubr.bf16.mxu0 0
  %7760 = vmatmul.mubr.bf16.gmra.mxu0 %v7626
  %v7761 = vpop.f32.mrf.mxu0
  %v7762 = vadd.f32 0.0, %v7761
  %v7763 = vpop.f32.mrf.mxu0
  %v7764 = vpop.f32.mrf.mxu0
  %v7765 = vadd.f32 0.0, %v7764
  %v7766 = vpop.f32.mrf.mxu0
  %7767 = vmatprep.mubr.bf16.mxu0 0
  %7768 = vmatmul.mubr.bf16.gmra.mxu0 %v7629
  %v7769 = vpop.f32.mrf.mxu0
  %v7770 = vadd.f32 0.0, %v7769
  %v7771 = vpop.f32.mrf.mxu0
  %v7772 = vpop.f32.mrf.mxu0
  %v7773 = vadd.f32 0.0, %v7772
  %v7774 = vpop.f32.mrf.mxu0
  %7775 = vmatprep.mubr.bf16.mxu0 0
  %7776 = vmatmul.mubr.bf16.gmra.mxu0 %v7632
  %v7777 = vpop.f32.mrf.mxu0
  %v7778 = vadd.f32 0.0, %v7777
  %v7779 = vpop.f32.mrf.mxu0
  %v7780 = vpop.f32.mrf.mxu0
  %v7781 = vadd.f32 0.0, %v7780
  %v7782 = vpop.f32.mrf.mxu0
  %7783 = vmatprep.mubr.bf16.mxu0 0
  %7784 = vmatmul.mubr.bf16.gmra.mxu0 %v7635
  %v7785 = vpop.f32.mrf.mxu0
  %v7786 = vadd.f32 0.0, %v7785
  %v7787 = vpop.f32.mrf.mxu0
  %v7788 = vpop.f32.mrf.mxu0
  %v7789 = vadd.f32 0.0, %v7788
  %v7790 = vpop.f32.mrf.mxu0
  %7791 = vmatprep.mubr.bf16.mxu0 0
  %7792 = vmatmul.mubr.bf16.gmra.mxu0 %v7638
  %v7793 = vpop.f32.mrf.mxu0
  %v7794 = vadd.f32 0.0, %v7793
  %v7795 = vpop.f32.mrf.mxu0
  %v7796 = vpop.f32.mrf.mxu0
  %v7797 = vadd.f32 0.0, %v7796
  %v7798 = vpop.f32.mrf.mxu0
  %7799 = vdwg.mxu0
  %v7800 = vmul.f32 %v7687, %v7738
  %v7801 = vmul.f32 %v7688, %v7741
  %v7802 = vmul.f32 %v7689, %v7746
  %v7803 = vmul.f32 %v7690, %v7749
  %v7804 = vmul.f32 %v7691, %v7754
  %v7805 = vmul.f32 %v7692, %v7757
  %v7806 = vmul.f32 %v7693, %v7762
  %v7807 = vmul.f32 %v7694, %v7765
  %v7808 = vmul.f32 %v7695, %v7770
  %v7809 = vmul.f32 %v7696, %v7773
  %v7810 = vmul.f32 %v7697, %v7778
  %v7811 = vmul.f32 %v7698, %v7781
  %v7812 = vmul.f32 %v7699, %v7786
  %v7813 = vmul.f32 %v7700, %v7789
  %v7814 = vmul.f32 %v7701, %v7794
  %v7815 = vmul.f32 %v7702, %v7797
  %v7816 = vadd.f32 %v7507, %v7800
  %v7817 = vadd.f32 %v7508, %v7801
  %v7818 = vadd.f32 %v7509, %v7802
  %v7819 = vadd.f32 %v7510, %v7803
  %v7820 = vadd.f32 %v7511, %v7804
  %v7821 = vadd.f32 %v7512, %v7805
  %v7822 = vadd.f32 %v7513, %v7806
  %v7823 = vadd.f32 %v7514, %v7807
  %v7824 = vadd.f32 %v7515, %v7808
  %v7825 = vadd.f32 %v7516, %v7809
  %v7826 = vadd.f32 %v7517, %v7810
  %v7827 = vadd.f32 %v7518, %v7811
  %v7828 = vadd.f32 %v7519, %v7812
  %v7829 = vadd.f32 %v7520, %v7813
  %v7830 = vadd.f32 %v7521, %v7814
  %v7831 = vadd.f32 %v7522, %v7815
  %7832 = vset.pattern.permute.xlu0 7
  %7833 = vperm.xlu0 %7832, %v6835
  %v7834 = vpop.permute.xlu0 %7833
  %7836 = vset.pattern.permute.xlu0 7
  %7837 = vperm.xlu0 %7836, %v6836
  %v7838 = vpop.permute.xlu0 %7837
  %7840 = vset.pattern.permute.xlu0 7
  %7841 = vperm.xlu0 %7840, %v6837
  %v7842 = vpop.permute.xlu0 %7841
  %7844 = vset.pattern.permute.xlu0 7
  %7845 = vperm.xlu0 %7844, %v6838
  %v7846 = vpop.permute.xlu0 %7845
  %7848 = vset.pattern.permute.xlu0 7
  %7849 = vperm.xlu0 %7848, %v6839
  %v7850 = vpop.permute.xlu0 %7849
  %7852 = vset.pattern.permute.xlu0 7
  %7853 = vperm.xlu0 %7852, %v6840
  %v7854 = vpop.permute.xlu0 %7853
  %7856 = vset.pattern.permute.xlu0 7
  %7857 = vperm.xlu0 %7856, %v6841
  %v7858 = vpop.permute.xlu0 %7857
  %7860 = vset.pattern.permute.xlu0 7
  %7861 = vperm.xlu0 %7860, %v6842
  %v7862 = vpop.permute.xlu0 %7861
  %v7864 = vlaneseq
  %v7865 = vshrl.u32 %v7864, 7
  %v7866 = vsub.s32 1, %v7865
  %v7867 = vrot.slane %v7212, %v7866
  %v7868 = vadd.bf16 %v7834, %v7867
  %v7869 = vadd.bf16 %v7838, %v7867
  %v7870 = vadd.bf16 %v7842, %v7867
  %v7871 = vadd.bf16 %v7846, %v7867
  %v7872 = vadd.bf16 %v7850, %v7867
  %v7873 = vadd.bf16 %v7854, %v7867
  %v7874 = vadd.bf16 %v7858, %v7867
  %v7875 = vadd.bf16 %v7862, %v7867
  %v7876 = vadd.bf16 %v7868, %v1261
  %v7877 = vadd.bf16 %v7869, %v1262
  %v7878 = vadd.bf16 %v7870, %v1263
  %v7879 = vadd.bf16 %v7871, %v1264
  %v7880 = vadd.bf16 %v7872, %v1265
  %v7881 = vadd.bf16 %v7873, %v1266
  %v7882 = vadd.bf16 %v7874, %v1267
  %v7883 = vadd.bf16 %v7875, %v1268
  %v7884 = vmul.bf16 %v7876, 1045249613
  %v7885 = vmul.bf16 %v7877, 1045249613
  %v7886 = vmul.bf16 %v7878, 1045249613
  %v7887 = vmul.bf16 %v7879, 1045249613
  %v7888 = vmul.bf16 %v7880, 1045249613
  %v7889 = vmul.bf16 %v7881, 1045249613
  %v7890 = vmul.bf16 %v7882, 1045249613
  %v7891 = vmul.bf16 %v7883, 1045249613
  %v7892 = vmax.bf16 %v7876, %v7884
  %v7893 = vmax.bf16 %v7877, %v7885
  %v7894 = vmax.bf16 %v7878, %v7886
  %v7895 = vmax.bf16 %v7879, %v7887
  %v7896 = vmax.bf16 %v7880, %v7888
  %v7897 = vmax.bf16 %v7881, %v7889
  %v7898 = vmax.bf16 %v7882, %v7890
  %v7899 = vmax.bf16 %v7883, %v7891
  %7900 = vmax.xlane.bf16.xlu0 %v7892
  %v7901 = vpop.xlane.xlu0 %7900
  %7902 = vmax.xlane.bf16.xlu0 %v7893
  %v7903 = vpop.xlane.xlu0 %7902
  %7904 = vmax.xlane.bf16.xlu0 %v7894
  %v7905 = vpop.xlane.xlu0 %7904
  %7906 = vmax.xlane.bf16.xlu0 %v7895
  %v7907 = vpop.xlane.xlu0 %7906
  %7908 = vmax.xlane.bf16.xlu0 %v7896
  %v7909 = vpop.xlane.xlu0 %7908
  %7910 = vmax.xlane.bf16.xlu0 %v7897
  %v7911 = vpop.xlane.xlu0 %7910
  %7912 = vmax.xlane.bf16.xlu0 %v7898
  %v7913 = vpop.xlane.xlu0 %7912
  %7914 = vmax.xlane.bf16.xlu0 %v7899
  %v7915 = vpop.xlane.xlu0 %7914
  %v7916 = vsub.bf16 %v7892, %v7901
  %v7917 = vsub.bf16 %v7893, %v7903
  %v7918 = vsub.bf16 %v7894, %v7905
  %v7919 = vsub.bf16 %v7895, %v7907
  %v7920 = vsub.bf16 %v7896, %v7909
  %v7921 = vsub.bf16 %v7897, %v7911
  %v7922 = vsub.bf16 %v7898, %v7913
  %v7923 = vsub.bf16 %v7899, %v7915
  %v7925 = vmul.bf16 %v7916, 1069105081
  %v7926 = vpow.bf16.pop %v7925
  %v7928 = vmul.bf16 %v7917, 1069105081
  %v7929 = vpow.bf16.pop %v7928
  %v7931 = vmul.bf16 %v7918, 1069105081
  %v7932 = vpow.bf16.pop %v7931
  %v7934 = vmul.bf16 %v7919, 1069105081
  %v7935 = vpow.bf16.pop %v7934
  %v7937 = vmul.bf16 %v7920, 1069105081
  %v7938 = vpow.bf16.pop %v7937
  %v7940 = vmul.bf16 %v7921, 1069105081
  %v7941 = vpow.bf16.pop %v7940
  %v7943 = vmul.bf16 %v7922, 1069105081
  %v7944 = vpow.bf16.pop %v7943
  %v7946 = vmul.bf16 %v7923, 1069105081
  %v7947 = vpow.bf16.pop %v7946
  %v7948 = vunpack.c.l.bf16 %v7926
  %v7949 = vunpack.c.h.bf16 %v7926
  %v7950 = vunpack.c.l.bf16 %v7929
  %v7951 = vunpack.c.h.bf16 %v7929
  %v7952 = vunpack.c.l.bf16 %v7932
  %v7953 = vunpack.c.h.bf16 %v7932
  %v7954 = vunpack.c.l.bf16 %v7935
  %v7955 = vunpack.c.h.bf16 %v7935
  %v7956 = vunpack.c.l.bf16 %v7938
  %v7957 = vunpack.c.h.bf16 %v7938
  %v7958 = vunpack.c.l.bf16 %v7941
  %v7959 = vunpack.c.h.bf16 %v7941
  %v7960 = vunpack.c.l.bf16 %v7944
  %v7961 = vunpack.c.h.bf16 %v7944
  %v7962 = vunpack.c.l.bf16 %v7947
  %v7963 = vunpack.c.h.bf16 %v7947
  %7964 = vadd.xlane.f32.xlu0 %v7948
  %v7965 = vpop.xlane.xlu0 %7964
  %7966 = vadd.xlane.f32.xlu0 %v7949
  %v7967 = vpop.xlane.xlu0 %7966
  %7968 = vadd.xlane.f32.xlu0 %v7950
  %v7969 = vpop.xlane.xlu0 %7968
  %7970 = vadd.xlane.f32.xlu0 %v7951
  %v7971 = vpop.xlane.xlu0 %7970
  %7972 = vadd.xlane.f32.xlu0 %v7952
  %v7973 = vpop.xlane.xlu0 %7972
  %7974 = vadd.xlane.f32.xlu0 %v7953
  %v7975 = vpop.xlane.xlu0 %7974
  %7976 = vadd.xlane.f32.xlu0 %v7954
  %v7977 = vpop.xlane.xlu0 %7976
  %7978 = vadd.xlane.f32.xlu0 %v7955
  %v7979 = vpop.xlane.xlu0 %7978
  %7980 = vadd.xlane.f32.xlu0 %v7956
  %v7981 = vpop.xlane.xlu0 %7980
  %7982 = vadd.xlane.f32.xlu0 %v7957
  %v7983 = vpop.xlane.xlu0 %7982
  %7984 = vadd.xlane.f32.xlu0 %v7958
  %v7985 = vpop.xlane.xlu0 %7984
  %7986 = vadd.xlane.f32.xlu0 %v7959
  %v7987 = vpop.xlane.xlu0 %7986
  %7988 = vadd.xlane.f32.xlu0 %v7960
  %v7989 = vpop.xlane.xlu0 %7988
  %7990 = vadd.xlane.f32.xlu0 %v7961
  %v7991 = vpop.xlane.xlu0 %7990
  %7992 = vadd.xlane.f32.xlu0 %v7962
  %v7993 = vpop.xlane.xlu0 %7992
  %7994 = vadd.xlane.f32.xlu0 %v7963
  %v7995 = vpop.xlane.xlu0 %7994
  %v7996 = vrcp.pop %v7965
  %v7997 = vrcp.pop %v7967
  %v7998 = vrcp.pop %v7969
  %v7999 = vrcp.pop %v7971
  %v8000 = vrcp.pop %v7973
  %v8001 = vrcp.pop %v7975
  %v8002 = vrcp.pop %v7977
  %v8003 = vrcp.pop %v7979
  %v8004 = vrcp.pop %v7981
  %v8005 = vrcp.pop %v7983
  %v8006 = vrcp.pop %v7985
  %v8007 = vrcp.pop %v7987
  %v8008 = vrcp.pop %v7989
  %v8009 = vrcp.pop %v7991
  %v8010 = vrcp.pop %v7993
  %v8011 = vrcp.pop %v7995
  %8020 = vrot.lane.b32.xlu0 %v6844, 64
  %v8021 = vpop.permute.xlu0 %8020
  %8022 = vrot.lane.b32.xlu0 %v6846, 64
  %v8023 = vpop.permute.xlu0 %8022
  %8024 = vrot.lane.b32.xlu0 %v6848, 64
  %v8025 = vpop.permute.xlu0 %8024
  %8026 = vrot.lane.b32.xlu0 %v6850, 64
  %v8027 = vpop.permute.xlu0 %8026
  %8028 = vrot.lane.b32.xlu0 %v6852, 64
  %v8029 = vpop.permute.xlu0 %8028
  %8030 = vrot.lane.b32.xlu0 %v6854, 64
  %v8031 = vpop.permute.xlu0 %8030
  %8032 = vrot.lane.b32.xlu0 %v6856, 64
  %v8033 = vpop.permute.xlu0 %8032
  %8034 = vrot.lane.b32.xlu0 %v6858, 64
  %v8035 = vpop.permute.xlu0 %8034
  %8044 = vmatprep.subr.bf16.mxu0 0
  %8045 = vmatpush1.bf16.msra.mxu0 %v8035
  %8046 = vmatprep.subr.bf16.mxu0 0
  %8047 = vmatpush1.bf16.msra.mxu0 %v8033
  %8048 = vmatprep.subr.bf16.mxu0 0
  %8049 = vmatpush1.bf16.msra.mxu0 %v8031
  %8050 = vmatprep.subr.bf16.mxu0 0
  %8051 = vmatpush1.bf16.msra.mxu0 %v8029
  %8052 = vmatprep.subr.bf16.mxu0 0
  %8053 = vmatpush1.bf16.msra.mxu0 %v8027
  %8054 = vmatprep.subr.bf16.mxu0 0
  %8055 = vmatpush1.bf16.msra.mxu0 %v8025
  %8056 = vmatprep.subr.bf16.mxu0 0
  %8057 = vmatpush1.bf16.msra.mxu0 %v8023
  %8058 = vmatprep.subr.bf16.mxu0 0
  %8059 = vmatpush1.bf16.msra.mxu0 %v8021
  %8060 = vmatprep.subr.bf16.mxu0 0
  %8061 = vmatpush2.bf16.msra.mxu0 0
  %8062 = vmatprep.subr.bf16.mxu0 0
  %8063 = vmatpush2.bf16.msra.mxu0 0
  %8064 = vmatprep.subr.bf16.mxu0 0
  %8065 = vmatpush2.bf16.msra.mxu0 0
  %8066 = vmatprep.subr.bf16.mxu0 0
  %8067 = vmatpush2.bf16.msra.mxu0 0
  %8068 = vmatprep.subr.bf16.mxu0 0
  %8069 = vmatpush2.bf16.msra.mxu0 0
  %8070 = vmatprep.subr.bf16.mxu0 0
  %8071 = vmatpush2.bf16.msra.mxu0 0
  %8072 = vmatprep.subr.bf16.mxu0 0
  %8073 = vmatpush2.bf16.msra.mxu0 0
  %8074 = vmatprep.subr.bf16.mxu0 0
  %8075 = vmatpush2.bf16.msra.mxu0 0
  %8076 = vmatprep.mubr.bf16.mxu0 0
  %8077 = vmatmul.mubr.bf16.gmra.mxu0 %v7926
  %v8078 = vpop.f32.mrf.mxu0
  %v8079 = vadd.f32 0.0, %v8078
  %v8080 = vpop.f32.mrf.mxu0
  %v8081 = vpop.f32.mrf.mxu0
  %v8082 = vadd.f32 0.0, %v8081
  %v8083 = vpop.f32.mrf.mxu0
  %8084 = vmatprep.mubr.bf16.mxu0 0
  %8085 = vmatmul.mubr.bf16.gmra.mxu0 %v7929
  %v8086 = vpop.f32.mrf.mxu0
  %v8087 = vadd.f32 0.0, %v8086
  %v8088 = vpop.f32.mrf.mxu0
  %v8089 = vpop.f32.mrf.mxu0
  %v8090 = vadd.f32 0.0, %v8089
  %v8091 = vpop.f32.mrf.mxu0
  %8092 = vmatprep.mubr.bf16.mxu0 0
  %8093 = vmatmul.mubr.bf16.gmra.mxu0 %v7932
  %v8094 = vpop.f32.mrf.mxu0
  %v8095 = vadd.f32 0.0, %v8094
  %v8096 = vpop.f32.mrf.mxu0
  %v8097 = vpop.f32.mrf.mxu0
  %v8098 = vadd.f32 0.0, %v8097
  %v8099 = vpop.f32.mrf.mxu0
  %8100 = vmatprep.mubr.bf16.mxu0 0
  %8101 = vmatmul.mubr.bf16.gmra.mxu0 %v7935
  %v8102 = vpop.f32.mrf.mxu0
  %v8103 = vadd.f32 0.0, %v8102
  %v8104 = vpop.f32.mrf.mxu0
  %v8105 = vpop.f32.mrf.mxu0
  %v8106 = vadd.f32 0.0, %v8105
  %v8107 = vpop.f32.mrf.mxu0
  %8108 = vmatprep.mubr.bf16.mxu0 0
  %8109 = vmatmul.mubr.bf16.gmra.mxu0 %v7938
  %v8110 = vpop.f32.mrf.mxu0
  %v8111 = vadd.f32 0.0, %v8110
  %v8112 = vpop.f32.mrf.mxu0
  %v8113 = vpop.f32.mrf.mxu0
  %v8114 = vadd.f32 0.0, %v8113
  %v8115 = vpop.f32.mrf.mxu0
  %8116 = vmatprep.mubr.bf16.mxu0 0
  %8117 = vmatmul.mubr.bf16.gmra.mxu0 %v7941
  %v8118 = vpop.f32.mrf.mxu0
  %v8119 = vadd.f32 0.0, %v8118
  %v8120 = vpop.f32.mrf.mxu0
  %v8121 = vpop.f32.mrf.mxu0
  %v8122 = vadd.f32 0.0, %v8121
  %v8123 = vpop.f32.mrf.mxu0
  %8124 = vmatprep.mubr.bf16.mxu0 0
  %8125 = vmatmul.mubr.bf16.gmra.mxu0 %v7944
  %v8126 = vpop.f32.mrf.mxu0
  %v8127 = vadd.f32 0.0, %v8126
  %v8128 = vpop.f32.mrf.mxu0
  %v8129 = vpop.f32.mrf.mxu0
  %v8130 = vadd.f32 0.0, %v8129
  %v8131 = vpop.f32.mrf.mxu0
  %8132 = vmatprep.mubr.bf16.mxu0 0
  %8133 = vmatmul.mubr.bf16.gmra.mxu0 %v7947
  %v8134 = vpop.f32.mrf.mxu0
  %v8135 = vadd.f32 0.0, %v8134
  %v8136 = vpop.f32.mrf.mxu0
  %v8137 = vpop.f32.mrf.mxu0
  %v8138 = vadd.f32 0.0, %v8137
  %v8139 = vpop.f32.mrf.mxu0
  %8140 = vdwg.mxu0
  %v8141 = vmul.f32 %v7996, %v8079
  %v8142 = vmul.f32 %v7997, %v8082
  %v8143 = vmul.f32 %v7998, %v8087
  %v8144 = vmul.f32 %v7999, %v8090
  %v8145 = vmul.f32 %v8000, %v8095
  %v8146 = vmul.f32 %v8001, %v8098
  %v8147 = vmul.f32 %v8002, %v8103
  %v8148 = vmul.f32 %v8003, %v8106
  %v8149 = vmul.f32 %v8004, %v8111
  %v8150 = vmul.f32 %v8005, %v8114
  %v8151 = vmul.f32 %v8006, %v8119
  %v8152 = vmul.f32 %v8007, %v8122
  %v8153 = vmul.f32 %v8008, %v8127
  %v8154 = vmul.f32 %v8009, %v8130
  %v8155 = vmul.f32 %v8010, %v8135
  %v8156 = vmul.f32 %v8011, %v8138
  %v8157 = vadd.f32 %v7816, %v8141
  %v8158 = vadd.f32 %v7817, %v8142
  %v8159 = vadd.f32 %v7818, %v8143
  %v8160 = vadd.f32 %v7819, %v8144
  %v8161 = vadd.f32 %v7820, %v8145
  %v8162 = vadd.f32 %v7821, %v8146
  %v8163 = vadd.f32 %v7822, %v8147
  %v8164 = vadd.f32 %v7823, %v8148
  %v8165 = vadd.f32 %v7824, %v8149
  %v8166 = vadd.f32 %v7825, %v8150
  %v8167 = vadd.f32 %v7826, %v8151
  %v8168 = vadd.f32 %v7827, %v8152
  %v8169 = vadd.f32 %v7828, %v8153
  %v8170 = vadd.f32 %v7829, %v8154
  %v8171 = vadd.f32 %v7830, %v8155
  %v8172 = vadd.f32 %v7831, %v8156
  %v8173 = vmul.f32 %v8157, 0.25
  %v8174 = vmul.f32 %v8158, 0.25
  %v8175 = vmul.f32 %v8159, 0.25
  %v8176 = vmul.f32 %v8160, 0.25
  %v8177 = vmul.f32 %v8161, 0.25
  %v8178 = vmul.f32 %v8162, 0.25
  %v8179 = vmul.f32 %v8163, 0.25
  %v8180 = vmul.f32 %v8164, 0.25
  %v8181 = vmul.f32 %v8165, 0.25
  %v8182 = vmul.f32 %v8166, 0.25
  %v8183 = vmul.f32 %v8167, 0.25
  %v8184 = vmul.f32 %v8168, 0.25
  %v8185 = vmul.f32 %v8169, 0.25
  %v8186 = vmul.f32 %v8170, 0.25
  %v8187 = vmul.f32 %v8171, 0.25
  %v8188 = vmul.f32 %v8172, 0.25
  %v8190 = vlaneseq
  %v8191 = vshrl.u32 %v8190, 7
  %v8192 = vsub.s32 0, %v8191
  %v8193 = vrot.slane %v6471, %v8192
  %v8195 = vadd.f32 %v8173, %v8193
  %v8196 = vadd.f32 %v8174, %v8193
  %v8197 = vadd.f32 %v8175, %v8193
  %v8198 = vadd.f32 %v8176, %v8193
  %v8199 = vadd.f32 %v8177, %v8193
  %v8200 = vadd.f32 %v8178, %v8193
  %v8201 = vadd.f32 %v8179, %v8193
  %v8202 = vadd.f32 %v8180, %v8193
  %v8203 = vadd.f32 %v8181, %v8193
  %v8204 = vadd.f32 %v8182, %v8193
  %v8205 = vadd.f32 %v8183, %v8193
  %v8206 = vadd.f32 %v8184, %v8193
  %v8207 = vadd.f32 %v8185, %v8193
  %v8208 = vadd.f32 %v8186, %v8193
  %v8209 = vadd.f32 %v8187, %v8193
  %v8210 = vadd.f32 %v8188, %v8193
  %vm8211 = vcmp.gt.f32.partialorder %v8195, 0.0
  %vm8212 = vcmp.gt.f32.partialorder %v8196, 0.0
  %vm8213 = vcmp.gt.f32.partialorder %v8197, 0.0
  %vm8214 = vcmp.gt.f32.partialorder %v8198, 0.0
  %vm8215 = vcmp.gt.f32.partialorder %v8199, 0.0
  %vm8216 = vcmp.gt.f32.partialorder %v8200, 0.0
  %vm8217 = vcmp.gt.f32.partialorder %v8201, 0.0
  %vm8218 = vcmp.gt.f32.partialorder %v8202, 0.0
  %vm8219 = vcmp.gt.f32.partialorder %v8203, 0.0
  %vm8220 = vcmp.gt.f32.partialorder %v8204, 0.0
  %vm8221 = vcmp.gt.f32.partialorder %v8205, 0.0
  %vm8222 = vcmp.gt.f32.partialorder %v8206, 0.0
  %vm8223 = vcmp.gt.f32.partialorder %v8207, 0.0
  %vm8224 = vcmp.gt.f32.partialorder %v8208, 0.0
  %vm8225 = vcmp.gt.f32.partialorder %v8209, 0.0
  %vm8226 = vcmp.gt.f32.partialorder %v8210, 0.0
  %v8227 = vmin.f32 %v8195, 0.0
  %v8228 = vmin.f32 %v8196, 0.0
  %v8229 = vmin.f32 %v8197, 0.0
  %v8230 = vmin.f32 %v8198, 0.0
  %v8231 = vmin.f32 %v8199, 0.0
  %v8232 = vmin.f32 %v8200, 0.0
  %v8233 = vmin.f32 %v8201, 0.0
  %v8234 = vmin.f32 %v8202, 0.0
  %v8235 = vmin.f32 %v8203, 0.0
  %v8236 = vmin.f32 %v8204, 0.0
  %v8237 = vmin.f32 %v8205, 0.0
  %v8238 = vmin.f32 %v8206, 0.0
  %v8239 = vmin.f32 %v8207, 0.0
  %v8240 = vmin.f32 %v8208, 0.0
  %v8241 = vmin.f32 %v8209, 0.0
  %v8242 = vmin.f32 %v8210, 0.0
  %v8243 = vmul.f32 %v8227, 1.442695
  %v8244 = vpow.pop %v8243
  %v8245 = vmul.f32 %v8228, 1.442695
  %v8246 = vpow.pop %v8245
  %v8247 = vmul.f32 %v8229, 1.442695
  %v8248 = vpow.pop %v8247
  %v8249 = vmul.f32 %v8230, 1.442695
  %v8250 = vpow.pop %v8249
  %v8251 = vmul.f32 %v8231, 1.442695
  %v8252 = vpow.pop %v8251
  %v8253 = vmul.f32 %v8232, 1.442695
  %v8254 = vpow.pop %v8253
  %v8255 = vmul.f32 %v8233, 1.442695
  %v8256 = vpow.pop %v8255
  %v8257 = vmul.f32 %v8234, 1.442695
  %v8258 = vpow.pop %v8257
  %v8259 = vmul.f32 %v8235, 1.442695
  %v8260 = vpow.pop %v8259
  %v8261 = vmul.f32 %v8236, 1.442695
  %v8262 = vpow.pop %v8261
  %v8263 = vmul.f32 %v8237, 1.442695
  %v8264 = vpow.pop %v8263
  %v8265 = vmul.f32 %v8238, 1.442695
  %v8266 = vpow.pop %v8265
  %v8267 = vmul.f32 %v8239, 1.442695
  %v8268 = vpow.pop %v8267
  %v8269 = vmul.f32 %v8240, 1.442695
  %v8270 = vpow.pop %v8269
  %v8271 = vmul.f32 %v8241, 1.442695
  %v8272 = vpow.pop %v8271
  %v8273 = vmul.f32 %v8242, 1.442695
  %v8274 = vpow.pop %v8273
  %v8275 = vsub.f32 %v8244, 1.0
  %v8276 = vsub.f32 %v8246, 1.0
  %v8277 = vsub.f32 %v8248, 1.0
  %v8278 = vsub.f32 %v8250, 1.0
  %v8279 = vsub.f32 %v8252, 1.0
  %v8280 = vsub.f32 %v8254, 1.0
  %v8281 = vsub.f32 %v8256, 1.0
  %v8282 = vsub.f32 %v8258, 1.0
  %v8283 = vsub.f32 %v8260, 1.0
  %v8284 = vsub.f32 %v8262, 1.0
  %v8285 = vsub.f32 %v8264, 1.0
  %v8286 = vsub.f32 %v8266, 1.0
  %v8287 = vsub.f32 %v8268, 1.0
  %v8288 = vsub.f32 %v8270, 1.0
  %v8289 = vsub.f32 %v8272, 1.0
  %v8290 = vsub.f32 %v8274, 1.0
  %v8291 = vsel %vm8211, %v8195, %v8275
  %v8292 = vsel %vm8212, %v8196, %v8276
  %v8293 = vsel %vm8213, %v8197, %v8277
  %v8294 = vsel %vm8214, %v8198, %v8278
  %v8295 = vsel %vm8215, %v8199, %v8279
  %v8296 = vsel %vm8216, %v8200, %v8280
  %v8297 = vsel %vm8217, %v8201, %v8281
  %v8298 = vsel %vm8218, %v8202, %v8282
  %v8299 = vsel %vm8219, %v8203, %v8283
  %v8300 = vsel %vm8220, %v8204, %v8284
  %v8301 = vsel %vm8221, %v8205, %v8285
  %v8302 = vsel %vm8222, %v8206, %v8286
  %v8303 = vsel %vm8223, %v8207, %v8287
  %v8304 = vsel %vm8224, %v8208, %v8288
  %v8305 = vsel %vm8225, %v8209, %v8289
  %v8306 = vsel %vm8226, %v8210, %v8290
  %v8307 = vld [vmem:[%s9] sm:$0xff]
  %v8308 = vld [vmem:[%s9 + $0x8] sm:$0xff]
  %v8309 = vld [vmem:[%s9 + $0x10] sm:$0xff]
  %v8310 = vld [vmem:[%s9 + $0x18] sm:$0xff]
  %v8311 = vld [vmem:[%s9 + $0x20] sm:$0xff]
  %v8312 = vld [vmem:[%s9 + $0x28] sm:$0xff]
  %v8313 = vld [vmem:[%s9 + $0x30] sm:$0xff]
  %v8314 = vld [vmem:[%s9 + $0x38] sm:$0xff]
  %v8315 = vld [vmem:[%s10] sm:$0x1]
  %v8317 = vlaneseq
  %v8318 = vshrl.u32 %v8317, 7
  %v8319 = vsub.s32 0, %v8318
  %v8320 = vrot.slane %v8315, %v8319
  %v8323 = vsel %vm436, %v8291, 0
  %v8326 = vsel %vm436, %v8292, 0
  %v8329 = vsel %vm436, %v8293, 0
  %v8332 = vsel %vm436, %v8294, 0
  %v8335 = vsel %vm436, %v8295, 0
  %v8338 = vsel %vm436, %v8296, 0
  %v8341 = vsel %vm436, %v8297, 0
  %v8344 = vsel %vm436, %v8298, 0
  %v8347 = vsel %vm436, %v8299, 0
  %v8350 = vsel %vm436, %v8300, 0
  %v8353 = vsel %vm436, %v8301, 0
  %v8356 = vsel %vm436, %v8302, 0
  %v8359 = vsel %vm436, %v8303, 0
  %v8362 = vsel %vm436, %v8304, 0
  %v8365 = vsel %vm436, %v8305, 0
  %v8368 = vsel %vm436, %v8306, 0
  %8370 = vmatprep.subr.mxu0 0.0
  %8371 = vmatpush1.msra.mxu0 0.0
  %8372 = vmatprep.subr.mxu0 0.0
  %8373 = vmatpush1.msra.mxu0 0.0
  %8374 = vmatprep.subr.mxu0 0.0
  %8375 = vmatpush1.msra.mxu0 0.0
  %8376 = vmatprep.subr.mxu0 0.0
  %8377 = vmatpush1.msra.mxu0 0.0
  %8378 = vmatprep.subr.mxu0 0.0
  %8379 = vmatpush1.msra.mxu0 0.0
  %8380 = vmatprep.subr.mxu0 0.0
  %8381 = vmatpush1.msra.mxu0 0.0
  %8382 = vmatprep.subr.mxu0 0.0
  %8383 = vmatpush1.msra.mxu0 0.0
  %8384 = vmatprep.subr.mxu0 0.0
  %8385 = vmatpush1.msra.mxu0 0.0
  %8386 = vmatprep.subr.mxu0 0.0
  %8387 = vmatpush1.msra.mxu0 %v8314
  %8388 = vmatprep.subr.mxu0 0.0
  %8389 = vmatpush1.msra.mxu0 %v8313
  %8390 = vmatprep.subr.mxu0 0.0
  %8391 = vmatpush1.msra.mxu0 %v8312
  %8392 = vmatprep.subr.mxu0 0.0
  %8393 = vmatpush1.msra.mxu0 %v8311
  %8394 = vmatprep.subr.mxu0 0.0
  %8395 = vmatpush1.msra.mxu0 %v8310
  %8396 = vmatprep.subr.mxu0 0.0
  %8397 = vmatpush1.msra.mxu0 %v8309
  %8398 = vmatprep.subr.mxu0 0.0
  %8399 = vmatpush1.msra.mxu0 %v8308
  %8400 = vmatprep.subr.mxu0 0.0
  %8401 = vmatpush1.msra.mxu0 %v8307
  %8402 = vmatprep.subr.mxu0 0.0
  %8403 = vmatpush2.msra.mxu0 0.0
  %8404 = vmatprep.subr.mxu0 0.0
  %8405 = vmatpush2.msra.mxu0 0.0
  %8406 = vmatprep.subr.mxu0 0.0
  %8407 = vmatpush2.msra.mxu0 0.0
  %8408 = vmatprep.subr.mxu0 0.0
  %8409 = vmatpush2.msra.mxu0 0.0
  %8410 = vmatprep.subr.mxu0 0.0
  %8411 = vmatpush2.msra.mxu0 0.0
  %8412 = vmatprep.subr.mxu0 0.0
  %8413 = vmatpush2.msra.mxu0 0.0
  %8414 = vmatprep.subr.mxu0 0.0
  %8415 = vmatpush2.msra.mxu0 0.0
  %8416 = vmatprep.subr.mxu0 0.0
  %8417 = vmatpush2.msra.mxu0 0.0
  %8418 = vmatprep.subr.mxu0 0.0
  %8419 = vmatpush2.msra.mxu0 0.0
  %8420 = vmatprep.subr.mxu0 0.0
  %8421 = vmatpush2.msra.mxu0 0.0
  %8422 = vmatprep.subr.mxu0 0.0
  %8423 = vmatpush2.msra.mxu0 0.0
  %8424 = vmatprep.subr.mxu0 0.0
  %8425 = vmatpush2.msra.mxu0 0.0
  %8426 = vmatprep.subr.mxu0 0.0
  %8427 = vmatpush2.msra.mxu0 0.0
  %8428 = vmatprep.subr.mxu0 0.0
  %8429 = vmatpush2.msra.mxu0 0.0
  %8430 = vmatprep.subr.mxu0 0.0
  %8431 = vmatpush2.msra.mxu0 0.0
  %8432 = vmatprep.subr.mxu0 0.0
  %8433 = vmatpush2.msra.mxu0 0.0
  %8434 = vmatprep.mubr.f32.mxu0 0.0
  %8435 = vmatmul.mubr.f32.gmra.mxu0 %v8323
  %v8436 = vpop.f32.mrf.mxu0
  %v8437 = vadd.f32 %v8320, %v8436
  %v8438 = vpop.f32.mrf.mxu0
  %8439 = vmatprep.mubr.f32.mxu0 0.0
  %8440 = vmatmul.mubr.f32.gmra.mxu0 %v8326
  %v8441 = vpop.f32.mrf.mxu0
  %v8442 = vadd.f32 %v8320, %v8441
  %v8443 = vpop.f32.mrf.mxu0
  %8444 = vmatprep.mubr.f32.mxu0 0.0
  %8445 = vmatmul.mubr.f32.gmra.mxu0 %v8329
  %v8446 = vpop.f32.mrf.mxu0
  %v8447 = vadd.f32 %v8320, %v8446
  %v8448 = vpop.f32.mrf.mxu0
  %8449 = vmatprep.mubr.f32.mxu0 0.0
  %8450 = vmatmul.mubr.f32.gmra.mxu0 %v8332
  %v8451 = vpop.f32.mrf.mxu0
  %v8452 = vadd.f32 %v8320, %v8451
  %v8453 = vpop.f32.mrf.mxu0
  %8454 = vmatprep.mubr.f32.mxu0 0.0
  %8455 = vmatmul.mubr.f32.gmra.mxu0 %v8335
  %v8456 = vpop.f32.mrf.mxu0
  %v8457 = vadd.f32 %v8320, %v8456
  %v8458 = vpop.f32.mrf.mxu0
  %8459 = vmatprep.mubr.f32.mxu0 0.0
  %8460 = vmatmul.mubr.f32.gmra.mxu0 %v8338
  %v8461 = vpop.f32.mrf.mxu0
  %v8462 = vadd.f32 %v8320, %v8461
  %v8463 = vpop.f32.mrf.mxu0
  %8464 = vmatprep.mubr.f32.mxu0 0.0
  %8465 = vmatmul.mubr.f32.gmra.mxu0 %v8341
  %v8466 = vpop.f32.mrf.mxu0
  %v8467 = vadd.f32 %v8320, %v8466
  %v8468 = vpop.f32.mrf.mxu0
  %8469 = vmatprep.mubr.f32.mxu0 0.0
  %8470 = vmatmul.mubr.f32.gmra.mxu0 %v8344
  %v8471 = vpop.f32.mrf.mxu0
  %v8472 = vadd.f32 %v8320, %v8471
  %v8473 = vpop.f32.mrf.mxu0
  %8474 = vmatprep.mubr.f32.mxu0 0.0
  %8475 = vmatmul.mubr.f32.gmra.mxu0 %v8347
  %v8476 = vpop.f32.mrf.mxu0
  %v8477 = vadd.f32 %v8320, %v8476
  %v8478 = vpop.f32.mrf.mxu0
  %8479 = vmatprep.mubr.f32.mxu0 0.0
  %8480 = vmatmul.mubr.f32.gmra.mxu0 %v8350
  %v8481 = vpop.f32.mrf.mxu0
  %v8482 = vadd.f32 %v8320, %v8481
  %v8483 = vpop.f32.mrf.mxu0
  %8484 = vmatprep.mubr.f32.mxu0 0.0
  %8485 = vmatmul.mubr.f32.gmra.mxu0 %v8353
  %v8486 = vpop.f32.mrf.mxu0
  %v8487 = vadd.f32 %v8320, %v8486
  %v8488 = vpop.f32.mrf.mxu0
  %8489 = vmatprep.mubr.f32.mxu0 0.0
  %8490 = vmatmul.mubr.f32.gmra.mxu0 %v8356
  %v8491 = vpop.f32.mrf.mxu0
  %v8492 = vadd.f32 %v8320, %v8491
  %v8493 = vpop.f32.mrf.mxu0
  %8494 = vmatprep.mubr.f32.mxu0 0.0
  %8495 = vmatmul.mubr.f32.gmra.mxu0 %v8359
  %v8496 = vpop.f32.mrf.mxu0
  %v8497 = vadd.f32 %v8320, %v8496
  %v8498 = vpop.f32.mrf.mxu0
  %8499 = vmatprep.mubr.f32.mxu0 0.0
  %8500 = vmatmul.mubr.f32.gmra.mxu0 %v8362
  %v8501 = vpop.f32.mrf.mxu0
  %v8502 = vadd.f32 %v8320, %v8501
  %v8503 = vpop.f32.mrf.mxu0
  %8504 = vmatprep.mubr.f32.mxu0 0.0
  %8505 = vmatmul.mubr.f32.gmra.mxu0 %v8365
  %v8506 = vpop.f32.mrf.mxu0
  %v8507 = vadd.f32 %v8320, %v8506
  %v8508 = vpop.f32.mrf.mxu0
  %8509 = vmatprep.mubr.f32.mxu0 0.0
  %8510 = vmatmul.mubr.f32.gmra.mxu0 %v8368
  %v8511 = vpop.f32.mrf.mxu0
  %v8512 = vadd.f32 %v8320, %v8511
  %v8513 = vpop.f32.mrf.mxu0
  %8514 = vdwg.mxu0
  %vm8515 = vcmp.gt.f32.partialorder %v8437, 0.0
  %vm8516 = vcmp.gt.f32.partialorder %v8442, 0.0
  %vm8517 = vcmp.gt.f32.partialorder %v8447, 0.0
  %vm8518 = vcmp.gt.f32.partialorder %v8452, 0.0
  %vm8519 = vcmp.gt.f32.partialorder %v8457, 0.0
  %vm8520 = vcmp.gt.f32.partialorder %v8462, 0.0
  %vm8521 = vcmp.gt.f32.partialorder %v8467, 0.0
  %vm8522 = vcmp.gt.f32.partialorder %v8472, 0.0
  %vm8523 = vcmp.gt.f32.partialorder %v8477, 0.0
  %vm8524 = vcmp.gt.f32.partialorder %v8482, 0.0
  %vm8525 = vcmp.gt.f32.partialorder %v8487, 0.0
  %vm8526 = vcmp.gt.f32.partialorder %v8492, 0.0
  %vm8527 = vcmp.gt.f32.partialorder %v8497, 0.0
  %vm8528 = vcmp.gt.f32.partialorder %v8502, 0.0
  %vm8529 = vcmp.gt.f32.partialorder %v8507, 0.0
  %vm8530 = vcmp.gt.f32.partialorder %v8512, 0.0
  %v8531 = vmin.f32 %v8437, 0.0
  %v8532 = vmin.f32 %v8442, 0.0
  %v8533 = vmin.f32 %v8447, 0.0
  %v8534 = vmin.f32 %v8452, 0.0
  %v8535 = vmin.f32 %v8457, 0.0
  %v8536 = vmin.f32 %v8462, 0.0
  %v8537 = vmin.f32 %v8467, 0.0
  %v8538 = vmin.f32 %v8472, 0.0
  %v8539 = vmin.f32 %v8477, 0.0
  %v8540 = vmin.f32 %v8482, 0.0
  %v8541 = vmin.f32 %v8487, 0.0
  %v8542 = vmin.f32 %v8492, 0.0
  %v8543 = vmin.f32 %v8497, 0.0
  %v8544 = vmin.f32 %v8502, 0.0
  %v8545 = vmin.f32 %v8507, 0.0
  %v8546 = vmin.f32 %v8512, 0.0
  %v8547 = vmul.f32 %v8531, 1.442695
  %v8548 = vpow.pop %v8547
  %v8549 = vmul.f32 %v8532, 1.442695
  %v8550 = vpow.pop %v8549
  %v8551 = vmul.f32 %v8533, 1.442695
  %v8552 = vpow.pop %v8551
  %v8553 = vmul.f32 %v8534, 1.442695
  %v8554 = vpow.pop %v8553
  %v8555 = vmul.f32 %v8535, 1.442695
  %v8556 = vpow.pop %v8555
  %v8557 = vmul.f32 %v8536, 1.442695
  %v8558 = vpow.pop %v8557
  %v8559 = vmul.f32 %v8537, 1.442695
  %v8560 = vpow.pop %v8559
  %v8561 = vmul.f32 %v8538, 1.442695
  %v8562 = vpow.pop %v8561
  %v8563 = vmul.f32 %v8539, 1.442695
  %v8564 = vpow.pop %v8563
  %v8565 = vmul.f32 %v8540, 1.442695
  %v8566 = vpow.pop %v8565
  %v8567 = vmul.f32 %v8541, 1.442695
  %v8568 = vpow.pop %v8567
  %v8569 = vmul.f32 %v8542, 1.442695
  %v8570 = vpow.pop %v8569
  %v8571 = vmul.f32 %v8543, 1.442695
  %v8572 = vpow.pop %v8571
  %v8573 = vmul.f32 %v8544, 1.442695
  %v8574 = vpow.pop %v8573
  %v8575 = vmul.f32 %v8545, 1.442695
  %v8576 = vpow.pop %v8575
  %v8577 = vmul.f32 %v8546, 1.442695
  %v8578 = vpow.pop %v8577
  %v8579 = vsub.f32 %v8548, 1.0
  %v8580 = vsub.f32 %v8550, 1.0
  %v8581 = vsub.f32 %v8552, 1.0
  %v8582 = vsub.f32 %v8554, 1.0
  %v8583 = vsub.f32 %v8556, 1.0
  %v8584 = vsub.f32 %v8558, 1.0
  %v8585 = vsub.f32 %v8560, 1.0
  %v8586 = vsub.f32 %v8562, 1.0
  %v8587 = vsub.f32 %v8564, 1.0
  %v8588 = vsub.f32 %v8566, 1.0
  %v8589 = vsub.f32 %v8568, 1.0
  %v8590 = vsub.f32 %v8570, 1.0
  %v8591 = vsub.f32 %v8572, 1.0
  %v8592 = vsub.f32 %v8574, 1.0
  %v8593 = vsub.f32 %v8576, 1.0
  %v8594 = vsub.f32 %v8578, 1.0
  %v8595 = vsel %vm8515, %v8437, %v8579
  %v8596 = vsel %vm8516, %v8442, %v8580
  %v8597 = vsel %vm8517, %v8447, %v8581
  %v8598 = vsel %vm8518, %v8452, %v8582
  %v8599 = vsel %vm8519, %v8457, %v8583
  %v8600 = vsel %vm8520, %v8462, %v8584
  %v8601 = vsel %vm8521, %v8467, %v8585
  %v8602 = vsel %vm8522, %v8472, %v8586
  %v8603 = vsel %vm8523, %v8477, %v8587
  %v8604 = vsel %vm8524, %v8482, %v8588
  %v8605 = vsel %vm8525, %v8487, %v8589
  %v8606 = vsel %vm8526, %v8492, %v8590
  %v8607 = vsel %vm8527, %v8497, %v8591
  %v8608 = vsel %vm8528, %v8502, %v8592
  %v8609 = vsel %vm8529, %v8507, %v8593
  %v8610 = vsel %vm8530, %v8512, %v8594
  %v8611 = vld [vmem:[%s11] sm:$0xff]
  %v8612 = vld [vmem:[%s11 + $0x8] sm:$0xff]
  %v8613 = vld [vmem:[%s11 + $0x10] sm:$0xff]
  %v8614 = vld [vmem:[%s11 + $0x18] sm:$0xff]
  %v8615 = vld [vmem:[%s11 + $0x20] sm:$0xff]
  %v8616 = vld [vmem:[%s11 + $0x28] sm:$0xff]
  %v8617 = vld [vmem:[%s11 + $0x30] sm:$0xff]
  %v8618 = vld [vmem:[%s11 + $0x38] sm:$0xff]
  %v8619 = vld [vmem:[%s12] sm:$0x1]
  %v8621 = vlaneseq
  %v8622 = vshrl.u32 %v8621, 7
  %v8623 = vsub.s32 0, %v8622
  %v8624 = vrot.slane %v8619, %v8623
  %v8627 = vsel %vm436, %v8595, 0
  %v8630 = vsel %vm436, %v8596, 0
  %v8633 = vsel %vm436, %v8597, 0
  %v8636 = vsel %vm436, %v8598, 0
  %v8639 = vsel %vm436, %v8599, 0
  %v8642 = vsel %vm436, %v8600, 0
  %v8645 = vsel %vm436, %v8601, 0
  %v8648 = vsel %vm436, %v8602, 0
  %v8651 = vsel %vm436, %v8603, 0
  %v8654 = vsel %vm436, %v8604, 0
  %v8657 = vsel %vm436, %v8605, 0
  %v8660 = vsel %vm436, %v8606, 0
  %v8663 = vsel %vm436, %v8607, 0
  %v8666 = vsel %vm436, %v8608, 0
  %v8669 = vsel %vm436, %v8609, 0
  %v8672 = vsel %vm436, %v8610, 0
  %8674 = vmatprep.subr.mxu0 0.0
  %8675 = vmatpush1.msra.mxu0 0.0
  %8676 = vmatprep.subr.mxu0 0.0
  %8677 = vmatpush1.msra.mxu0 0.0
  %8678 = vmatprep.subr.mxu0 0.0
  %8679 = vmatpush1.msra.mxu0 0.0
  %8680 = vmatprep.subr.mxu0 0.0
  %8681 = vmatpush1.msra.mxu0 0.0
  %8682 = vmatprep.subr.mxu0 0.0
  %8683 = vmatpush1.msra.mxu0 0.0
  %8684 = vmatprep.subr.mxu0 0.0
  %8685 = vmatpush1.msra.mxu0 0.0
  %8686 = vmatprep.subr.mxu0 0.0
  %8687 = vmatpush1.msra.mxu0 0.0
  %8688 = vmatprep.subr.mxu0 0.0
  %8689 = vmatpush1.msra.mxu0 0.0
  %8690 = vmatprep.subr.mxu0 0.0
  %8691 = vmatpush1.msra.mxu0 %v8618
  %8692 = vmatprep.subr.mxu0 0.0
  %8693 = vmatpush1.msra.mxu0 %v8617
  %8694 = vmatprep.subr.mxu0 0.0
  %8695 = vmatpush1.msra.mxu0 %v8616
  %8696 = vmatprep.subr.mxu0 0.0
  %8697 = vmatpush1.msra.mxu0 %v8615
  %8698 = vmatprep.subr.mxu0 0.0
  %8699 = vmatpush1.msra.mxu0 %v8614
  %8700 = vmatprep.subr.mxu0 0.0
  %8701 = vmatpush1.msra.mxu0 %v8613
  %8702 = vmatprep.subr.mxu0 0.0
  %8703 = vmatpush1.msra.mxu0 %v8612
  %8704 = vmatprep.subr.mxu0 0.0
  %8705 = vmatpush1.msra.mxu0 %v8611
  %8706 = vmatprep.subr.mxu0 0.0
  %8707 = vmatpush2.msra.mxu0 0.0
  %8708 = vmatprep.subr.mxu0 0.0
  %8709 = vmatpush2.msra.mxu0 0.0
  %8710 = vmatprep.subr.mxu0 0.0
  %8711 = vmatpush2.msra.mxu0 0.0
  %8712 = vmatprep.subr.mxu0 0.0
  %8713 = vmatpush2.msra.mxu0 0.0
  %8714 = vmatprep.subr.mxu0 0.0
  %8715 = vmatpush2.msra.mxu0 0.0
  %8716 = vmatprep.subr.mxu0 0.0
  %8717 = vmatpush2.msra.mxu0 0.0
  %8718 = vmatprep.subr.mxu0 0.0
  %8719 = vmatpush2.msra.mxu0 0.0
  %8720 = vmatprep.subr.mxu0 0.0
  %8721 = vmatpush2.msra.mxu0 0.0
  %8722 = vmatprep.subr.mxu0 0.0
  %8723 = vmatpush2.msra.mxu0 0.0
  %8724 = vmatprep.subr.mxu0 0.0
  %8725 = vmatpush2.msra.mxu0 0.0
  %8726 = vmatprep.subr.mxu0 0.0
  %8727 = vmatpush2.msra.mxu0 0.0
  %8728 = vmatprep.subr.mxu0 0.0
  %8729 = vmatpush2.msra.mxu0 0.0
  %8730 = vmatprep.subr.mxu0 0.0
  %8731 = vmatpush2.msra.mxu0 0.0
  %8732 = vmatprep.subr.mxu0 0.0
  %8733 = vmatpush2.msra.mxu0 0.0
  %8734 = vmatprep.subr.mxu0 0.0
  %8735 = vmatpush2.msra.mxu0 0.0
  %8736 = vmatprep.subr.mxu0 0.0
  %8737 = vmatpush2.msra.mxu0 0.0
  %8738 = vmatprep.mubr.f32.mxu0 0.0
  %8739 = vmatmul.mubr.f32.gmra.mxu0 %v8627
  %v8740 = vpop.f32.mrf.mxu0
  %v8741 = vadd.f32 %v8624, %v8740
  %v8742 = vpop.f32.mrf.mxu0
  %8743 = vmatprep.mubr.f32.mxu0 0.0
  %8744 = vmatmul.mubr.f32.gmra.mxu0 %v8630
  %v8745 = vpop.f32.mrf.mxu0
  %v8746 = vadd.f32 %v8624, %v8745
  %v8747 = vpop.f32.mrf.mxu0
  %8748 = vmatprep.mubr.f32.mxu0 0.0
  %8749 = vmatmul.mubr.f32.gmra.mxu0 %v8633
  %v8750 = vpop.f32.mrf.mxu0
  %v8751 = vadd.f32 %v8624, %v8750
  %v8752 = vpop.f32.mrf.mxu0
  %8753 = vmatprep.mubr.f32.mxu0 0.0
  %8754 = vmatmul.mubr.f32.gmra.mxu0 %v8636
  %v8755 = vpop.f32.mrf.mxu0
  %v8756 = vadd.f32 %v8624, %v8755
  %v8757 = vpop.f32.mrf.mxu0
  %8758 = vmatprep.mubr.f32.mxu0 0.0
  %8759 = vmatmul.mubr.f32.gmra.mxu0 %v8639
  %v8760 = vpop.f32.mrf.mxu0
  %v8761 = vadd.f32 %v8624, %v8760
  %v8762 = vpop.f32.mrf.mxu0
  %8763 = vmatprep.mubr.f32.mxu0 0.0
  %8764 = vmatmul.mubr.f32.gmra.mxu0 %v8642
  %v8765 = vpop.f32.mrf.mxu0
  %v8766 = vadd.f32 %v8624, %v8765
  %v8767 = vpop.f32.mrf.mxu0
  %8768 = vmatprep.mubr.f32.mxu0 0.0
  %8769 = vmatmul.mubr.f32.gmra.mxu0 %v8645
  %v8770 = vpop.f32.mrf.mxu0
  %v8771 = vadd.f32 %v8624, %v8770
  %v8772 = vpop.f32.mrf.mxu0
  %8773 = vmatprep.mubr.f32.mxu0 0.0
  %8774 = vmatmul.mubr.f32.gmra.mxu0 %v8648
  %v8775 = vpop.f32.mrf.mxu0
  %v8776 = vadd.f32 %v8624, %v8775
  %v8777 = vpop.f32.mrf.mxu0
  %8778 = vmatprep.mubr.f32.mxu0 0.0
  %8779 = vmatmul.mubr.f32.gmra.mxu0 %v8651
  %v8780 = vpop.f32.mrf.mxu0
  %v8781 = vadd.f32 %v8624, %v8780
  %v8782 = vpop.f32.mrf.mxu0
  %8783 = vmatprep.mubr.f32.mxu0 0.0
  %8784 = vmatmul.mubr.f32.gmra.mxu0 %v8654
  %v8785 = vpop.f32.mrf.mxu0
  %v8786 = vadd.f32 %v8624, %v8785
  %v8787 = vpop.f32.mrf.mxu0
  %8788 = vmatprep.mubr.f32.mxu0 0.0
  %8789 = vmatmul.mubr.f32.gmra.mxu0 %v8657
  %v8790 = vpop.f32.mrf.mxu0
  %v8791 = vadd.f32 %v8624, %v8790
  %v8792 = vpop.f32.mrf.mxu0
  %8793 = vmatprep.mubr.f32.mxu0 0.0
  %8794 = vmatmul.mubr.f32.gmra.mxu0 %v8660
  %v8795 = vpop.f32.mrf.mxu0
  %v8796 = vadd.f32 %v8624, %v8795
  %v8797 = vpop.f32.mrf.mxu0
  %8798 = vmatprep.mubr.f32.mxu0 0.0
  %8799 = vmatmul.mubr.f32.gmra.mxu0 %v8663
  %v8800 = vpop.f32.mrf.mxu0
  %v8801 = vadd.f32 %v8624, %v8800
  %v8802 = vpop.f32.mrf.mxu0
  %8803 = vmatprep.mubr.f32.mxu0 0.0
  %8804 = vmatmul.mubr.f32.gmra.mxu0 %v8666
  %v8805 = vpop.f32.mrf.mxu0
  %v8806 = vadd.f32 %v8624, %v8805
  %v8807 = vpop.f32.mrf.mxu0
  %8808 = vmatprep.mubr.f32.mxu0 0.0
  %8809 = vmatmul.mubr.f32.gmra.mxu0 %v8669
  %v8810 = vpop.f32.mrf.mxu0
  %v8811 = vadd.f32 %v8624, %v8810
  %v8812 = vpop.f32.mrf.mxu0
  %8813 = vmatprep.mubr.f32.mxu0 0.0
  %8814 = vmatmul.mubr.f32.gmra.mxu0 %v8672
  %v8815 = vpop.f32.mrf.mxu0
  %v8816 = vadd.f32 %v8624, %v8815
  %v8817 = vpop.f32.mrf.mxu0
  %8818 = vdwg.mxu0
  %vm8819 = vcmp.gt.f32.partialorder %v8741, 0.0
  %vm8820 = vcmp.gt.f32.partialorder %v8746, 0.0
  %vm8821 = vcmp.gt.f32.partialorder %v8751, 0.0
  %vm8822 = vcmp.gt.f32.partialorder %v8756, 0.0
  %vm8823 = vcmp.gt.f32.partialorder %v8761, 0.0
  %vm8824 = vcmp.gt.f32.partialorder %v8766, 0.0
  %vm8825 = vcmp.gt.f32.partialorder %v8771, 0.0
  %vm8826 = vcmp.gt.f32.partialorder %v8776, 0.0
  %vm8827 = vcmp.gt.f32.partialorder %v8781, 0.0
  %vm8828 = vcmp.gt.f32.partialorder %v8786, 0.0
  %vm8829 = vcmp.gt.f32.partialorder %v8791, 0.0
  %vm8830 = vcmp.gt.f32.partialorder %v8796, 0.0
  %vm8831 = vcmp.gt.f32.partialorder %v8801, 0.0
  %vm8832 = vcmp.gt.f32.partialorder %v8806, 0.0
  %vm8833 = vcmp.gt.f32.partialorder %v8811, 0.0
  %vm8834 = vcmp.gt.f32.partialorder %v8816, 0.0
  %v8835 = vmin.f32 %v8741, 0.0
  %v8836 = vmin.f32 %v8746, 0.0
  %v8837 = vmin.f32 %v8751, 0.0
  %v8838 = vmin.f32 %v8756, 0.0
  %v8839 = vmin.f32 %v8761, 0.0
  %v8840 = vmin.f32 %v8766, 0.0
  %v8841 = vmin.f32 %v8771, 0.0
  %v8842 = vmin.f32 %v8776, 0.0
  %v8843 = vmin.f32 %v8781, 0.0
  %v8844 = vmin.f32 %v8786, 0.0
  %v8845 = vmin.f32 %v8791, 0.0
  %v8846 = vmin.f32 %v8796, 0.0
  %v8847 = vmin.f32 %v8801, 0.0
  %v8848 = vmin.f32 %v8806, 0.0
  %v8849 = vmin.f32 %v8811, 0.0
  %v8850 = vmin.f32 %v8816, 0.0
  %v8851 = vmul.f32 %v8835, 1.442695
  %v8852 = vpow.pop %v8851
  %v8853 = vmul.f32 %v8836, 1.442695
  %v8854 = vpow.pop %v8853
  %v8855 = vmul.f32 %v8837, 1.442695
  %v8856 = vpow.pop %v8855
  %v8857 = vmul.f32 %v8838, 1.442695
  %v8858 = vpow.pop %v8857
  %v8859 = vmul.f32 %v8839, 1.442695
  %v8860 = vpow.pop %v8859
  %v8861 = vmul.f32 %v8840, 1.442695
  %v8862 = vpow.pop %v8861
  %v8863 = vmul.f32 %v8841, 1.442695
  %v8864 = vpow.pop %v8863
  %v8865 = vmul.f32 %v8842, 1.442695
  %v8866 = vpow.pop %v8865
  %v8867 = vmul.f32 %v8843, 1.442695
  %v8868 = vpow.pop %v8867
  %v8869 = vmul.f32 %v8844, 1.442695
  %v8870 = vpow.pop %v8869
  %v8871 = vmul.f32 %v8845, 1.442695
  %v8872 = vpow.pop %v8871
  %v8873 = vmul.f32 %v8846, 1.442695
  %v8874 = vpow.pop %v8873
  %v8875 = vmul.f32 %v8847, 1.442695
  %v8876 = vpow.pop %v8875
  %v8877 = vmul.f32 %v8848, 1.442695
  %v8878 = vpow.pop %v8877
  %v8879 = vmul.f32 %v8849, 1.442695
  %v8880 = vpow.pop %v8879
  %v8881 = vmul.f32 %v8850, 1.442695
  %v8882 = vpow.pop %v8881
  %v8883 = vsub.f32 %v8852, 1.0
  %v8884 = vsub.f32 %v8854, 1.0
  %v8885 = vsub.f32 %v8856, 1.0
  %v8886 = vsub.f32 %v8858, 1.0
  %v8887 = vsub.f32 %v8860, 1.0
  %v8888 = vsub.f32 %v8862, 1.0
  %v8889 = vsub.f32 %v8864, 1.0
  %v8890 = vsub.f32 %v8866, 1.0
  %v8891 = vsub.f32 %v8868, 1.0
  %v8892 = vsub.f32 %v8870, 1.0
  %v8893 = vsub.f32 %v8872, 1.0
  %v8894 = vsub.f32 %v8874, 1.0
  %v8895 = vsub.f32 %v8876, 1.0
  %v8896 = vsub.f32 %v8878, 1.0
  %v8897 = vsub.f32 %v8880, 1.0
  %v8898 = vsub.f32 %v8882, 1.0
  %v8899 = vsel %vm8819, %v8741, %v8883
  %v8900 = vsel %vm8820, %v8746, %v8884
  %v8901 = vsel %vm8821, %v8751, %v8885
  %v8902 = vsel %vm8822, %v8756, %v8886
  %v8903 = vsel %vm8823, %v8761, %v8887
  %v8904 = vsel %vm8824, %v8766, %v8888
  %v8905 = vsel %vm8825, %v8771, %v8889
  %v8906 = vsel %vm8826, %v8776, %v8890
  %v8907 = vsel %vm8827, %v8781, %v8891
  %v8908 = vsel %vm8828, %v8786, %v8892
  %v8909 = vsel %vm8829, %v8791, %v8893
  %v8910 = vsel %vm8830, %v8796, %v8894
  %v8911 = vsel %vm8831, %v8801, %v8895
  %v8912 = vsel %vm8832, %v8806, %v8896
  %v8913 = vsel %vm8833, %v8811, %v8897
  %v8914 = vsel %vm8834, %v8816, %v8898
  %v8915 = vld [vmem:[%s13] sm:$0xff]
  %v8916 = vld [vmem:[%s13 + $0x8] sm:$0xff]
  %v8917 = vld [vmem:[%s13 + $0x10] sm:$0xff]
  %v8918 = vld [vmem:[%s13 + $0x18] sm:$0xff]
  %v8919 = vld [vmem:[%s14] sm:$0x1]
  %v8921 = vlaneseq
  %v8922 = vshrl.u32 %v8921, 7
  %v8923 = vsub.s32 0, %v8922
  %v8924 = vrot.slane %v8919, %v8923
  %vm8926 = vcmask 261120
  %v8928 = vsel %vm8926, %v8899, 0
  %v8931 = vsel %vm8926, %v8900, 0
  %v8934 = vsel %vm8926, %v8901, 0
  %v8937 = vsel %vm8926, %v8902, 0
  %v8940 = vsel %vm8926, %v8903, 0
  %v8943 = vsel %vm8926, %v8904, 0
  %v8946 = vsel %vm8926, %v8905, 0
  %v8949 = vsel %vm8926, %v8906, 0
  %v8952 = vsel %vm8926, %v8907, 0
  %v8955 = vsel %vm8926, %v8908, 0
  %v8958 = vsel %vm8926, %v8909, 0
  %v8961 = vsel %vm8926, %v8910, 0
  %v8964 = vsel %vm8926, %v8911, 0
  %v8967 = vsel %vm8926, %v8912, 0
  %v8970 = vsel %vm8926, %v8913, 0
  %v8973 = vsel %vm8926, %v8914, 0
  %8975 = vmatprep.subr.mxu0 0.0
  %8976 = vmatpush1.msra.mxu0 0.0
  %8977 = vmatprep.subr.mxu0 0.0
  %8978 = vmatpush1.msra.mxu0 0.0
  %8979 = vmatprep.subr.mxu0 0.0
  %8980 = vmatpush1.msra.mxu0 0.0
  %8981 = vmatprep.subr.mxu0 0.0
  %8982 = vmatpush1.msra.mxu0 0.0
  %8983 = vmatprep.subr.mxu0 0.0
  %8984 = vmatpush1.msra.mxu0 0.0
  %8985 = vmatprep.subr.mxu0 0.0
  %8986 = vmatpush1.msra.mxu0 0.0
  %8987 = vmatprep.subr.mxu0 0.0
  %8988 = vmatpush1.msra.mxu0 0.0
  %8989 = vmatprep.subr.mxu0 0.0
  %8990 = vmatpush1.msra.mxu0 0.0
  %8991 = vmatprep.subr.mxu0 0.0
  %8992 = vmatpush1.msra.mxu0 0.0
  %8993 = vmatprep.subr.mxu0 0.0
  %8994 = vmatpush1.msra.mxu0 0.0
  %8995 = vmatprep.subr.mxu0 0.0
  %8996 = vmatpush1.msra.mxu0 0.0
  %8997 = vmatprep.subr.mxu0 0.0
  %8998 = vmatpush1.msra.mxu0 0.0
  %8999 = vmatprep.subr.mxu0 0.0
  %9000 = vmatpush1.msra.mxu0 %v8918
  %9001 = vmatprep.subr.mxu0 0.0
  %9002 = vmatpush1.msra.mxu0 %v8917
  %9003 = vmatprep.subr.mxu0 0.0
  %9004 = vmatpush1.msra.mxu0 %v8916
  %9005 = vmatprep.subr.mxu0 0.0
  %9006 = vmatpush1.msra.mxu0 %v8915
  %9007 = vmatprep.subr.mxu0 0.0
  %9008 = vmatpush2.msra.mxu0 0.0
  %9009 = vmatprep.subr.mxu0 0.0
  %9010 = vmatpush2.msra.mxu0 0.0
  %9011 = vmatprep.subr.mxu0 0.0
  %9012 = vmatpush2.msra.mxu0 0.0
  %9013 = vmatprep.subr.mxu0 0.0
  %9014 = vmatpush2.msra.mxu0 0.0
  %9015 = vmatprep.subr.mxu0 0.0
  %9016 = vmatpush2.msra.mxu0 0.0
  %9017 = vmatprep.subr.mxu0 0.0
  %9018 = vmatpush2.msra.mxu0 0.0
  %9019 = vmatprep.subr.mxu0 0.0
  %9020 = vmatpush2.msra.mxu0 0.0
  %9021 = vmatprep.subr.mxu0 0.0
  %9022 = vmatpush2.msra.mxu0 0.0
  %9023 = vmatprep.subr.mxu0 0.0
  %9024 = vmatpush2.msra.mxu0 0.0
  %9025 = vmatprep.subr.mxu0 0.0
  %9026 = vmatpush2.msra.mxu0 0.0
  %9027 = vmatprep.subr.mxu0 0.0
  %9028 = vmatpush2.msra.mxu0 0.0
  %9029 = vmatprep.subr.mxu0 0.0
  %9030 = vmatpush2.msra.mxu0 0.0
  %9031 = vmatprep.subr.mxu0 0.0
  %9032 = vmatpush2.msra.mxu0 0.0
  %9033 = vmatprep.subr.mxu0 0.0
  %9034 = vmatpush2.msra.mxu0 0.0
  %9035 = vmatprep.subr.mxu0 0.0
  %9036 = vmatpush2.msra.mxu0 0.0
  %9037 = vmatprep.subr.mxu0 0.0
  %9038 = vmatpush2.msra.mxu0 0.0
  %9039 = vmatprep.mubr.f32.mxu0 0.0
  %9040 = vmatmul.mubr.f32.gmra.mxu0 %v8928
  %v9041 = vpop.f32.mrf.mxu0
  %v9042 = vadd.f32 %v8924, %v9041
  %v9043 = vpop.f32.mrf.mxu0
  %9044 = vmatprep.mubr.f32.mxu0 0.0
  %9045 = vmatmul.mubr.f32.gmra.mxu0 %v8931
  %v9046 = vpop.f32.mrf.mxu0
  %v9047 = vadd.f32 %v8924, %v9046
  %v9048 = vpop.f32.mrf.mxu0
  %9049 = vmatprep.mubr.f32.mxu0 0.0
  %9050 = vmatmul.mubr.f32.gmra.mxu0 %v8934
  %v9051 = vpop.f32.mrf.mxu0
  %v9052 = vadd.f32 %v8924, %v9051
  %v9053 = vpop.f32.mrf.mxu0
  %9054 = vmatprep.mubr.f32.mxu0 0.0
  %9055 = vmatmul.mubr.f32.gmra.mxu0 %v8937
  %v9056 = vpop.f32.mrf.mxu0
  %v9057 = vadd.f32 %v8924, %v9056
  %v9058 = vpop.f32.mrf.mxu0
  %9059 = vmatprep.mubr.f32.mxu0 0.0
  %9060 = vmatmul.mubr.f32.gmra.mxu0 %v8940
  %v9061 = vpop.f32.mrf.mxu0
  %v9062 = vadd.f32 %v8924, %v9061
  %v9063 = vpop.f32.mrf.mxu0
  %9064 = vmatprep.mubr.f32.mxu0 0.0
  %9065 = vmatmul.mubr.f32.gmra.mxu0 %v8943
  %v9066 = vpop.f32.mrf.mxu0
  %v9067 = vadd.f32 %v8924, %v9066
  %v9068 = vpop.f32.mrf.mxu0
  %9069 = vmatprep.mubr.f32.mxu0 0.0
  %9070 = vmatmul.mubr.f32.gmra.mxu0 %v8946
  %v9071 = vpop.f32.mrf.mxu0
  %v9072 = vadd.f32 %v8924, %v9071
  %v9073 = vpop.f32.mrf.mxu0
  %9074 = vmatprep.mubr.f32.mxu0 0.0
  %9075 = vmatmul.mubr.f32.gmra.mxu0 %v8949
  %v9076 = vpop.f32.mrf.mxu0
  %v9077 = vadd.f32 %v8924, %v9076
  %v9078 = vpop.f32.mrf.mxu0
  %9079 = vmatprep.mubr.f32.mxu0 0.0
  %9080 = vmatmul.mubr.f32.gmra.mxu0 %v8952
  %v9081 = vpop.f32.mrf.mxu0
  %v9082 = vadd.f32 %v8924, %v9081
  %v9083 = vpop.f32.mrf.mxu0
  %9084 = vmatprep.mubr.f32.mxu0 0.0
  %9085 = vmatmul.mubr.f32.gmra.mxu0 %v8955
  %v9086 = vpop.f32.mrf.mxu0
  %v9087 = vadd.f32 %v8924, %v9086
  %v9088 = vpop.f32.mrf.mxu0
  %9089 = vmatprep.mubr.f32.mxu0 0.0
  %9090 = vmatmul.mubr.f32.gmra.mxu0 %v8958
  %v9091 = vpop.f32.mrf.mxu0
  %v9092 = vadd.f32 %v8924, %v9091
  %v9093 = vpop.f32.mrf.mxu0
  %9094 = vmatprep.mubr.f32.mxu0 0.0
  %9095 = vmatmul.mubr.f32.gmra.mxu0 %v8961
  %v9096 = vpop.f32.mrf.mxu0
  %v9097 = vadd.f32 %v8924, %v9096
  %v9098 = vpop.f32.mrf.mxu0
  %9099 = vmatprep.mubr.f32.mxu0 0.0
  %9100 = vmatmul.mubr.f32.gmra.mxu0 %v8964
  %v9101 = vpop.f32.mrf.mxu0
  %v9102 = vadd.f32 %v8924, %v9101
  %v9103 = vpop.f32.mrf.mxu0
  %9104 = vmatprep.mubr.f32.mxu0 0.0
  %9105 = vmatmul.mubr.f32.gmra.mxu0 %v8967
  %v9106 = vpop.f32.mrf.mxu0
  %v9107 = vadd.f32 %v8924, %v9106
  %v9108 = vpop.f32.mrf.mxu0
  %9109 = vmatprep.mubr.f32.mxu0 0.0
  %9110 = vmatmul.mubr.f32.gmra.mxu0 %v8970
  %v9111 = vpop.f32.mrf.mxu0
  %v9112 = vadd.f32 %v8924, %v9111
  %v9113 = vpop.f32.mrf.mxu0
  %9114 = vmatprep.mubr.f32.mxu0 0.0
  %9115 = vmatmul.mubr.f32.gmra.mxu0 %v8973
  %v9116 = vpop.f32.mrf.mxu0
  %v9117 = vadd.f32 %v8924, %v9116
  %v9118 = vpop.f32.mrf.mxu0
  %9119 = vdwg.mxu0
  %9120 = vst.msk [vmem:[%s15] sm:$0xff] %vm131, %v9042
  %9121 = vst.msk [vmem:[%s15 + $0x8] sm:$0xff] %vm131, %v9047
  %9122 = vst.msk [vmem:[%s15 + $0x10] sm:$0xff] %vm131, %v9052
  %9123 = vst.msk [vmem:[%s15 + $0x18] sm:$0xff] %vm131, %v9057
  %9124 = vst.msk [vmem:[%s15 + $0x20] sm:$0xff] %vm131, %v9062
  %9125 = vst.msk [vmem:[%s15 + $0x28] sm:$0xff] %vm131, %v9067
  %9126 = vst.msk [vmem:[%s15 + $0x30] sm:$0xff] %vm131, %v9072
  %9127 = vst.msk [vmem:[%s15 + $0x38] sm:$0xff] %vm131, %v9077
  %9128 = vst.msk [vmem:[%s15 + $0x40] sm:$0xff] %vm131, %v9082
  %9129 = vst.msk [vmem:[%s15 + $0x48] sm:$0xff] %vm131, %v9087
  %9130 = vst.msk [vmem:[%s15 + $0x50] sm:$0xff] %vm131, %v9092
  %9131 = vst.msk [vmem:[%s15 + $0x58] sm:$0xff] %vm131, %v9097
  %9132 = vst.msk [vmem:[%s15 + $0x60] sm:$0xff] %vm131, %v9102
  %9133 = vst.msk [vmem:[%s15 + $0x68] sm:$0xff] %vm131, %v9107
  %9134 = vst.msk [vmem:[%s15 + $0x70] sm:$0xff] %vm131, %v9112
  %9135 = vst.msk [vmem:[%s15 + $0x78] sm:$0xff] %vm131, %v9117
  // Predicated region
  $region92: #{tpu_custom_call.1} parent=0 // pred_check
    _
  $region93: #{tpu_custom_call.1} parent=0 // pred_check_branch
    %9137 = sbr.rel (0) target = $region95
  $region94: #{tpu_custom_call.1} parent=0 // pred_region
    _
  $region95: #{tpu_custom_call.1} parent=0 // pred_fallthru
    _
  // Predicated region
  $region96: #{tpu_custom_call.1} parent=0 // pred_check
    _
  $region97: #{tpu_custom_call.1} parent=0 // pred_check_branch
    %9139 = sbr.rel (0) target = $region99
  $region98: #{tpu_custom_call.1} parent=0 // pred_region
    _
  $region99: #{tpu_custom_call.1} parent=0 // pred_fallthru
    _
  %9140 = vsyncmov [#allocation3]
  %s9141 = vpop.sfrf %9140
  %p9142 = scmp.eq.s32.totalorder %s9141, 0
  %p9143 = pneg %p9142
  %9145 = shalt.err (%p9143)

</llo_original>
